<compile_context>
chip_gen: v7x
topology: tpu7x:2x2x1
jax: 0.10.0
libtpu: 0.0.40
codegen_flags: <defaults>
</compile_context>

<pallas_src>
import functools
import math

import numpy as np
import jax
import jax.numpy as jnp
from jax.experimental import pallas as pl
from jax.experimental.pallas import tpu as pltpu


_BN_EPS = 1e-5


# ---------------------------------------------------------------------------
# 3x3 tap selection matrices: taps[t, j, p] = 1  iff  pixel j is the (dh,dw)
# neighbour of pixel p (zero padding outside HxW), raster tap order.
# (x @ taps[t])[c, p] == x[c, (r+dh)*W + (col+dw)]  with zero padding.
# ---------------------------------------------------------------------------
def _tap_matrices(H, W):
    HW = H * W
    mats = np.zeros((9, HW, HW), np.float32)
    t = 0
    for dh in (-1, 0, 1):
        for dw in (-1, 0, 1):
            for p in range(HW):
                r, c = divmod(p, W)
                rr, cc = r + dh, c + dw
                if 0 <= rr < H and 0 <= cc < W:
                    mats[t, rr * W + cc, p] = 1.0
            t += 1
    return jnp.asarray(mats)


# ---------------------------------------------------------------------------
# Fused CrossAtt kernel (one batch element per grid step)
# ---------------------------------------------------------------------------
def _cross_att_kernel(gamma_ref, in1_ref, in2_ref, taps_ref,
                      qwp_ref, qps_ref, qpb_ref, qwd_ref, qds_ref, qdb_ref,
                      cwp1_ref, cwp2_ref, cps_ref, cpb_ref, cwd_ref, cds_ref, cdb_ref,
                      cfs_ref, cfb_ref,
                      feat_ref, o1_ref, o2_ref,
                      qkv_buf,
                      *, HW, nq, nk, nv, oq, ok, ov, npc):
    g = gamma_ref[0]                              # scalar gamma from SMEM
    x1 = in1_ref[...]                             # (C, HW) NCHW-flat tile
    x2 = in2_ref[...]

    def shift(x, t):
        # zero-padded 3x3 spatial tap t as a lane-space matmul (MXU).
        return jnp.dot(x, taps_ref[t], preferred_element_type=jnp.float32)

    def depthwise3x3(x, wd):
        acc = jnp.zeros_like(x)
        for t in range(9):
            acc = acc + shift(x, t) * wd[:, t:t + 1]
        return acc

    # ---- fused [q|k|v] GhostModules per input --------------------------------------
    def fused_qkv_ghost(i, x):
        prim = jnp.dot(qwp_ref[i], x, preferred_element_type=jnp.float32)  # 1x1 conv
        prim = jnp.maximum(prim * qps_ref[i] + qpb_ref[i], 0.0)            # BN + ReLU
        cheap = depthwise3x3(prim, qwd_ref[i])                             # cheap op
        cheap = jnp.maximum(cheap * qds_ref[i] + qdb_ref[i], 0.0)          # BN + ReLU
        return prim, cheap

    # Assemble ghost outputs with static row stores into one scratch buffer
    # (row layout [q1 | q2 | k1 | k2 | v1 | v2]); avoids unaligned sublane concats.
    q_off, k_off, v_off = 0, 2 * oq, 2 * oq + 2 * ok
    for i, x in ((0, x1), (1, x2)):
        prim, cheap = fused_qkv_ghost(i, x)
        qkv_buf[q_off + i * oq:      q_off + i * oq + nq, :] = prim[0:nq]
        qkv_buf[q_off + i * oq + nq: q_off + (i + 1) * oq, :] = cheap[0:nq]
        qkv_buf[k_off + i * ok:      k_off + i * ok + nk, :] = prim[nq:nq + nk]
        qkv_buf[k_off + i * ok + nk: k_off + (i + 1) * ok, :] = cheap[nq:nq + nk]
        qkv_buf[v_off + i * ov:      v_off + i * ov + nv, :] = prim[nq + nk:nq + nk + nv]
        qkv_buf[v_off + i * ov + nv: v_off + (i + 1) * ov, :] = cheap[nq + nk:nq + nk + nv]

    q = qkv_buf[q_off:q_off + 2 * oq, :]          # (2*oq, HW)  == cat([q1, q2], C)
    k1 = qkv_buf[k_off:k_off + ok, :]             # (ok, HW)
    k2 = qkv_buf[k_off + ok:k_off + 2 * ok, :]
    v1 = qkv_buf[v_off:v_off + ov, :]             # (ov, HW)
    v2 = qkv_buf[v_off + ov:v_off + 2 * ov, :]

    # ---- dual cross-attention -------------------------------------------------------
    dim_tlhs = (((0,), (0,)), ((), ()))           # q^T @ k   (contract channel dim)
    dim_trhs = (((1,), (1,)), ((), ()))           # v @ a^T   (contract spatial dim)

    def softmax_rows(s):
        m = jnp.max(s, axis=-1, keepdims=True)
        e = jnp.exp(s - m)
        return e * pl.reciprocal(jnp.sum(e, axis=-1, keepdims=True), approx=True)

    a1 = softmax_rows(jax.lax.dot_general(q, k1, dim_tlhs,
                                          preferred_element_type=jnp.float32))
    a2 = softmax_rows(jax.lax.dot_general(q, k2, dim_tlhs,
                                          preferred_element_type=jnp.float32))
    att1 = jax.lax.dot_general(v1, a1, dim_trhs, preferred_element_type=jnp.float32)
    att2 = jax.lax.dot_general(v2, a2, dim_trhs, preferred_element_type=jnp.float32)

    out1 = g * att1 + x1
    out2 = g * att2 + x2
    o1_ref[...] = out1
    o2_ref[...] = out2

    # ---- conv_cat GhostModule (3x3 primary conv) + outer BN + ReLU -------------------
    # channel concat [out1|out2] folded into split weights; shift commutes with the
    # channel mix, so do the (cheap) channel-mix matmul first, then the tap shift.
    acc = jnp.zeros((npc, HW), jnp.float32)
    for t in range(9):
        mixed = (jnp.dot(cwp1_ref[t], out1, preferred_element_type=jnp.float32)
                 + jnp.dot(cwp2_ref[t], out2, preferred_element_type=jnp.float32))
        acc = acc + jnp.dot(mixed, taps_ref[t], preferred_element_type=jnp.float32)
    prim = jnp.maximum(acc * cps_ref[...] + cpb_ref[...], 0.0)

    cheap = depthwise3x3(prim, cwd_ref[...])
    cheap = jnp.maximum(cheap * cds_ref[...] + cdb_ref[...], 0.0)

    # ghost concat [prim|cheap][:oc] + outer BatchNorm + ReLU, written per half
    feat_ref[0:npc, :] = jnp.maximum(prim * cfs_ref[0] + cfb_ref[0], 0.0)
    feat_ref[npc:2 * npc, :] = jnp.maximum(cheap * cfs_ref[1] + cfb_ref[1], 0.0)


# ---------------------------------------------------------------------------
# pallas_call wrapper (works on NCHW-flat (B, C, HW) arrays)
# ---------------------------------------------------------------------------
def _cross_att_pallas(in1, in2, params, H, W):
    B, C, HW = in1.shape
    NP = params["qkv_wp"].shape[1]
    oq, ok, ov = C // 8, C // 4, C
    # TODO(synk): odd GhostModule output widths (ceil split) not implemented here.
    assert oq % 2 == 0 and ok % 2 == 0 and ov % 2 == 0
    nq, nk, nv = oq // 2, ok // 2, ov // 2
    assert NP == nq + nk + nv
    npc = params["cat_wp1"].shape[1]
    oc = 2 * npc

    taps = _tap_matrices(H, W)

    kernel = functools.partial(_cross_att_kernel, HW=HW, nq=nq, nk=nk, nv=nv,
                               oq=oq, ok=ok, ov=ov, npc=npc)

    def whole(a):
        nd = a.ndim
        return pl.BlockSpec(a.shape, lambda b, _nd=nd: (0,) * _nd)

    batch_in = pl.BlockSpec((None, C, HW), lambda b: (b, 0, 0))
    batch_out = pl.BlockSpec((None, oc, HW), lambda b: (b, 0, 0))

    return pl.pallas_call(
        kernel,
        out_shape=(jax.ShapeDtypeStruct((B, oc, HW), jnp.float32),
                   jax.ShapeDtypeStruct((B, C, HW), jnp.float32),
                   jax.ShapeDtypeStruct((B, C, HW), jnp.float32)),
        grid=(B,),
        in_specs=[
            pl.BlockSpec(memory_space=pltpu.MemorySpace.SMEM),     # gamma (scalar)
            batch_in, batch_in,                                    # input1 / input2
            whole(taps),                                           # 3x3 shift matrices
            whole(params["qkv_wp"]),                               # fused q|k|v 1x1 W
            whole(params["qkv_pscale"]), whole(params["qkv_pshift"]),
            whole(params["qkv_wd"]),                               # depthwise weights
            whole(params["qkv_dscale"]), whole(params["qkv_dshift"]),
            whole(params["cat_wp1"]), whole(params["cat_wp2"]),    # conv_cat 3x3 (split)
            whole(params["cat_pscale"]), whole(params["cat_pshift"]),
            whole(params["cat_wd"]),
            whole(params["cat_dscale"]), whole(params["cat_dshift"]),
            whole(params["cat_fscale"]), whole(params["cat_fshift"]),
        ],
        out_specs=(batch_out, batch_in, batch_in),
        scratch_shapes=[pltpu.VMEM((2 * (oq + ok + ov), HW), jnp.float32)],
        compiler_params=pltpu.CompilerParams(
            dimension_semantics=("parallel",)),
    )(params["gamma"], in1, in2, taps,
      params["qkv_wp"], params["qkv_pscale"], params["qkv_pshift"],
      params["qkv_wd"], params["qkv_dscale"], params["qkv_dshift"],
      params["cat_wp1"], params["cat_wp2"],
      params["cat_pscale"], params["cat_pshift"],
      params["cat_wd"], params["cat_dscale"], params["cat_dshift"],
      params["cat_fscale"], params["cat_fshift"])


def cross_att_forward(input1, input2, params):
    B, C, H, W = input1.shape
    HW = H * W
    in1 = input1.reshape(B, C, HW)          # NCHW -> (B, C, HW): contiguous, free
    in2 = input2.reshape(B, C, HW)
    feat, out1, out2 = _cross_att_pallas(in1, in2, params, H, W)
    oc = feat.shape[1]
    return (feat.reshape(B, oc, H, W),
            out1.reshape(B, C, H, W),
            out2.reshape(B, C, H, W))


# ---------------------------------------------------------------------------
# Deterministic parameter init (BN eval mode, default stats -> folded scale/shift)
# ---------------------------------------------------------------------------
def init_cross_att_params(key, in_channels, out_channels):
    C = in_channels
    oq, ok, ov = C // 8, C // 4, C
    assert oq % 2 == 0 and ok % 2 == 0 and ov % 2 == 0 and out_channels % 2 == 0
    nq, nk, nv = oq // 2, ok // 2, ov // 2
    NP = nq + nk + nv                      # fused primary channels per input (q|k|v)
    npc = out_channels // 2                # conv_cat ghost init channels

    k0, k1, k2, k3, k4 = jax.random.split(key, 5)
    bn_scale = 1.0 / math.sqrt(1.0 + _BN_EPS)

    return dict(
        gamma=jnp.zeros((1,), jnp.float32),                 # nn.Parameter(zeros(1))
        qkv_wp=jax.random.normal(k0, (2, NP, C), jnp.float32) / math.sqrt(C),
        qkv_pscale=jnp.full((2, NP, 1), bn_scale, jnp.float32),
        qkv_pshift=jnp.zeros((2, NP, 1), jnp.float32),
        qkv_wd=jax.random.normal(k1, (2, NP, 9), jnp.float32) / 3.0,
        qkv_dscale=jnp.full((2, NP, 1), bn_scale, jnp.float32),
        qkv_dshift=jnp.zeros((2, NP, 1), jnp.float32),
        cat_wp1=jax.random.normal(k2, (9, npc, C), jnp.float32) / math.sqrt(18.0 * C),
        cat_wp2=jax.random.normal(k3, (9, npc, C), jnp.float32) / math.sqrt(18.0 * C),
        cat_pscale=jnp.full((npc, 1), bn_scale, jnp.float32),
        cat_pshift=jnp.zeros((npc, 1), jnp.float32),
        cat_wd=jax.random.normal(k4, (npc, 9), jnp.float32) / 3.0,
        cat_dscale=jnp.full((npc, 1), bn_scale, jnp.float32),
        cat_dshift=jnp.zeros((npc, 1), jnp.float32),
        cat_fscale=jnp.full((2, npc, 1), bn_scale, jnp.float32),
        cat_fshift=jnp.zeros((2, npc, 1), jnp.float32),
    )


if __name__ == "__main__":
    B, C, H, W = 2, 16, 8, 8
    out_channels = 16

    key = jax.random.PRNGKey(0)
    k_in1, k_in2, k_par = jax.random.split(key, 3)
    input1 = jax.random.normal(k_in1, (B, C, H, W), jnp.float32)
    input2 = jax.random.normal(k_in2, (B, C, H, W), jnp.float32)
    params = init_cross_att_params(k_par, C, out_channels)

    feat_sum, out1, out2 = cross_att_forward(input1, input2, params)
    jax.block_until_ready((feat_sum, out1, out2))

    assert feat_sum.shape == (B, out_channels, H, W)
    assert out1.shape == (B, C, H, W) and out2.shape == (B, C, H, W)
    assert bool(jnp.all(jnp.isfinite(feat_sum)))
    # gamma == 0 at init  =>  out1/out2 must equal the inputs exactly (module semantics)
    assert bool(jnp.allclose(out1, input1)) and bool(jnp.allclose(out2, input2))
    print("KERNEL_OK")
</pallas_src>

<mosaic_0001>
module attributes {stable_mosaic.version = 11 : i64} {
  func.func @_cross_att_kernel(%arg0: i32, %arg1: memref<1xf32, #tpu.memory_space<smem>>, %arg2: memref<1x16x64xf32, #tpu.memory_space<vmem>>, %arg3: memref<1x16x64xf32, #tpu.memory_space<vmem>>, %arg4: memref<9x64x64xf32, #tpu.memory_space<vmem>>, %arg5: memref<2x11x16xf32, #tpu.memory_space<vmem>>, %arg6: memref<2x11x1xf32, #tpu.memory_space<vmem>>, %arg7: memref<2x11x1xf32, #tpu.memory_space<vmem>>, %arg8: memref<2x11x9xf32, #tpu.memory_space<vmem>>, %arg9: memref<2x11x1xf32, #tpu.memory_space<vmem>>, %arg10: memref<2x11x1xf32, #tpu.memory_space<vmem>>, %arg11: memref<9x8x16xf32, #tpu.memory_space<vmem>>, %arg12: memref<9x8x16xf32, #tpu.memory_space<vmem>>, %arg13: memref<8x1xf32, #tpu.memory_space<vmem>>, %arg14: memref<8x1xf32, #tpu.memory_space<vmem>>, %arg15: memref<8x9xf32, #tpu.memory_space<vmem>>, %arg16: memref<8x1xf32, #tpu.memory_space<vmem>>, %arg17: memref<8x1xf32, #tpu.memory_space<vmem>>, %arg18: memref<2x8x1xf32, #tpu.memory_space<vmem>>, %arg19: memref<2x8x1xf32, #tpu.memory_space<vmem>>, %arg20: memref<1x16x64xf32, #tpu.memory_space<vmem>>, %arg21: memref<1x16x64xf32, #tpu.memory_space<vmem>>, %arg22: memref<1x16x64xf32, #tpu.memory_space<vmem>>, %arg23: memref<44x64xf32, #tpu.memory_space<vmem>>) attributes {dimension_semantics = [#tpu.dimension_semantics<parallel>], iteration_bounds = array<i64: 2>, scalar_prefetch = 0 : i64, scratch_operands = 1 : i64, tpu.core_type = #tpu.core_type<tc>, window_params = [{transform_indices = @transform_0, window_bounds = array<i64: 1>}, {transform_indices = @transform_1, window_bounds = array<i64: 1, 16, 64>}, {transform_indices = @transform_2, window_bounds = array<i64: 1, 16, 64>}, {pipeline_mode = #tpu.pipeline_mode<synchronous>, transform_indices = @transform_3, window_bounds = array<i64: 9, 64, 64>}, {pipeline_mode = #tpu.pipeline_mode<synchronous>, transform_indices = @transform_4, window_bounds = array<i64: 2, 11, 16>}, {pipeline_mode = #tpu.pipeline_mode<synchronous>, transform_indices = @transform_5, window_bounds = array<i64: 2, 11, 1>}, {pipeline_mode = #tpu.pipeline_mode<synchronous>, transform_indices = @transform_6, window_bounds = array<i64: 2, 11, 1>}, {pipeline_mode = #tpu.pipeline_mode<synchronous>, transform_indices = @transform_7, window_bounds = array<i64: 2, 11, 9>}, {pipeline_mode = #tpu.pipeline_mode<synchronous>, transform_indices = @transform_8, window_bounds = array<i64: 2, 11, 1>}, {pipeline_mode = #tpu.pipeline_mode<synchronous>, transform_indices = @transform_9, window_bounds = array<i64: 2, 11, 1>}, {pipeline_mode = #tpu.pipeline_mode<synchronous>, transform_indices = @transform_10, window_bounds = array<i64: 9, 8, 16>}, {pipeline_mode = #tpu.pipeline_mode<synchronous>, transform_indices = @transform_11, window_bounds = array<i64: 9, 8, 16>}, {pipeline_mode = #tpu.pipeline_mode<synchronous>, transform_indices = @transform_12, window_bounds = array<i64: 8, 1>}, {pipeline_mode = #tpu.pipeline_mode<synchronous>, transform_indices = @transform_13, window_bounds = array<i64: 8, 1>}, {pipeline_mode = #tpu.pipeline_mode<synchronous>, transform_indices = @transform_14, window_bounds = array<i64: 8, 9>}, {pipeline_mode = #tpu.pipeline_mode<synchronous>, transform_indices = @transform_15, window_bounds = array<i64: 8, 1>}, {pipeline_mode = #tpu.pipeline_mode<synchronous>, transform_indices = @transform_16, window_bounds = array<i64: 8, 1>}, {pipeline_mode = #tpu.pipeline_mode<synchronous>, transform_indices = @transform_17, window_bounds = array<i64: 2, 8, 1>}, {pipeline_mode = #tpu.pipeline_mode<synchronous>, transform_indices = @transform_18, window_bounds = array<i64: 2, 8, 1>}, {transform_indices = @transform_19, window_bounds = array<i64: 1, 16, 64>}, {transform_indices = @transform_20, window_bounds = array<i64: 1, 16, 64>}, {transform_indices = @transform_21, window_bounds = array<i64: 1, 16, 64>}]} {
    %c0 = arith.constant 0 : index
    %0 = memref.load %arg1[%c0] : memref<1xf32, #tpu.memory_space<smem>>
    %c0_0 = arith.constant 0 : index
    %c0_1 = arith.constant 0 : index
    %c0_2 = arith.constant 0 : index
    %1 = vector.load %arg2[%c0_0, %c0_1, %c0_2] : memref<1x16x64xf32, #tpu.memory_space<vmem>>, vector<1x16x64xf32>
    %2 = vector.shape_cast %1 : vector<1x16x64xf32> to vector<16x64xf32>
    %c0_3 = arith.constant 0 : index
    %c0_4 = arith.constant 0 : index
    %c0_5 = arith.constant 0 : index
    %3 = vector.load %arg3[%c0_3, %c0_4, %c0_5] : memref<1x16x64xf32, #tpu.memory_space<vmem>>, vector<1x16x64xf32>
    %4 = vector.shape_cast %3 : vector<1x16x64xf32> to vector<16x64xf32>
    %c0_6 = arith.constant 0 : index
    %c0_7 = arith.constant 0 : index
    %c0_8 = arith.constant 0 : index
    %5 = vector.load %arg5[%c0_6, %c0_7, %c0_8] : memref<2x11x16xf32, #tpu.memory_space<vmem>>, vector<1x11x16xf32>
    %6 = vector.shape_cast %5 : vector<1x11x16xf32> to vector<11x16xf32>
    %cst = arith.constant dense<0.000000e+00> : vector<11x64xf32>
    %7 = tpu.matmul %6, %2, %cst {dimension_numbers = #tpu.dot_dimension_numbers<[1], [0], [0], [1], [0, 0, 1, 1], [], []>} : vector<11x16xf32>, vector<16x64xf32>, vector<11x64xf32> -> vector<11x64xf32>
    %c0_9 = arith.constant 0 : index
    %c0_10 = arith.constant 0 : index
    %c0_11 = arith.constant 0 : index
    %8 = vector.load %arg6[%c0_9, %c0_10, %c0_11] : memref<2x11x1xf32, #tpu.memory_space<vmem>>, vector<1x11x1xf32>
    %9 = vector.shape_cast %8 : vector<1x11x1xf32> to vector<11x1xf32>
    %10 = vector.broadcast %9 : vector<11x1xf32> to vector<11x64xf32>
    %11 = arith.mulf %7, %10 : vector<11x64xf32>
    %c0_12 = arith.constant 0 : index
    %c0_13 = arith.constant 0 : index
    %c0_14 = arith.constant 0 : index
    %12 = vector.load %arg7[%c0_12, %c0_13, %c0_14] : memref<2x11x1xf32, #tpu.memory_space<vmem>>, vector<1x11x1xf32>
    %13 = vector.shape_cast %12 : vector<1x11x1xf32> to vector<11x1xf32>
    %14 = vector.broadcast %13 : vector<11x1xf32> to vector<11x64xf32>
    %15 = arith.addf %11, %14 : vector<11x64xf32>
    %cst_15 = arith.constant 0.000000e+00 : f32
    %16 = vector.broadcast %cst_15 : f32 to vector<11x64xf32>
    %17 = arith.maximumf %15, %16 : vector<11x64xf32>
    %c0_16 = arith.constant 0 : index
    %c0_17 = arith.constant 0 : index
    %c0_18 = arith.constant 0 : index
    %18 = vector.load %arg8[%c0_16, %c0_17, %c0_18] : memref<2x11x9xf32, #tpu.memory_space<vmem>>, vector<1x11x9xf32>
    %19 = vector.shape_cast %18 : vector<1x11x9xf32> to vector<11x9xf32>
    %cst_19 = arith.constant 0.000000e+00 : f32
    %20 = vector.broadcast %cst_19 : f32 to vector<11x64xf32>
    %c0_20 = arith.constant 0 : index
    %c0_21 = arith.constant 0 : index
    %c0_22 = arith.constant 0 : index
    %21 = vector.load %arg4[%c0_20, %c0_21, %c0_22] : memref<9x64x64xf32, #tpu.memory_space<vmem>>, vector<1x64x64xf32>
    %22 = vector.shape_cast %21 : vector<1x64x64xf32> to vector<64x64xf32>
    %cst_23 = arith.constant dense<0.000000e+00> : vector<11x64xf32>
    %23 = tpu.matmul %17, %22, %cst_23 {dimension_numbers = #tpu.dot_dimension_numbers<[1], [0], [0], [1], [0, 0, 1, 1], [], []>} : vector<11x64xf32>, vector<64x64xf32>, vector<11x64xf32> -> vector<11x64xf32>
    %24 = vector.extract_strided_slice %19 {offsets = [0, 0], sizes = [11, 1], strides = [1, 1]} : vector<11x9xf32> to vector<11x1xf32>
    %25 = vector.broadcast %24 : vector<11x1xf32> to vector<11x64xf32>
    %26 = arith.mulf %23, %25 : vector<11x64xf32>
    %27 = arith.addf %20, %26 : vector<11x64xf32>
    %c1 = arith.constant 1 : index
    %c0_24 = arith.constant 0 : index
    %c0_25 = arith.constant 0 : index
    %28 = vector.load %arg4[%c1, %c0_24, %c0_25] : memref<9x64x64xf32, #tpu.memory_space<vmem>>, vector<1x64x64xf32>
    %29 = vector.shape_cast %28 : vector<1x64x64xf32> to vector<64x64xf32>
    %cst_26 = arith.constant dense<0.000000e+00> : vector<11x64xf32>
    %30 = tpu.matmul %17, %29, %cst_26 {dimension_numbers = #tpu.dot_dimension_numbers<[1], [0], [0], [1], [0, 0, 1, 1], [], []>} : vector<11x64xf32>, vector<64x64xf32>, vector<11x64xf32> -> vector<11x64xf32>
    %31 = vector.extract_strided_slice %19 {offsets = [0, 1], sizes = [11, 1], strides = [1, 1]} : vector<11x9xf32> to vector<11x1xf32>
    %32 = vector.broadcast %31 : vector<11x1xf32> to vector<11x64xf32>
    %33 = arith.mulf %30, %32 : vector<11x64xf32>
    %34 = arith.addf %27, %33 : vector<11x64xf32>
    %c2 = arith.constant 2 : index
    %c0_27 = arith.constant 0 : index
    %c0_28 = arith.constant 0 : index
    %35 = vector.load %arg4[%c2, %c0_27, %c0_28] : memref<9x64x64xf32, #tpu.memory_space<vmem>>, vector<1x64x64xf32>
    %36 = vector.shape_cast %35 : vector<1x64x64xf32> to vector<64x64xf32>
    %cst_29 = arith.constant dense<0.000000e+00> : vector<11x64xf32>
    %37 = tpu.matmul %17, %36, %cst_29 {dimension_numbers = #tpu.dot_dimension_numbers<[1], [0], [0], [1], [0, 0, 1, 1], [], []>} : vector<11x64xf32>, vector<64x64xf32>, vector<11x64xf32> -> vector<11x64xf32>
    %38 = vector.extract_strided_slice %19 {offsets = [0, 2], sizes = [11, 1], strides = [1, 1]} : vector<11x9xf32> to vector<11x1xf32>
    %39 = vector.broadcast %38 : vector<11x1xf32> to vector<11x64xf32>
    %40 = arith.mulf %37, %39 : vector<11x64xf32>
    %41 = arith.addf %34, %40 : vector<11x64xf32>
    %c3 = arith.constant 3 : index
    %c0_30 = arith.constant 0 : index
    %c0_31 = arith.constant 0 : index
    %42 = vector.load %arg4[%c3, %c0_30, %c0_31] : memref<9x64x64xf32, #tpu.memory_space<vmem>>, vector<1x64x64xf32>
    %43 = vector.shape_cast %42 : vector<1x64x64xf32> to vector<64x64xf32>
    %cst_32 = arith.constant dense<0.000000e+00> : vector<11x64xf32>
    %44 = tpu.matmul %17, %43, %cst_32 {dimension_numbers = #tpu.dot_dimension_numbers<[1], [0], [0], [1], [0, 0, 1, 1], [], []>} : vector<11x64xf32>, vector<64x64xf32>, vector<11x64xf32> -> vector<11x64xf32>
    %45 = vector.extract_strided_slice %19 {offsets = [0, 3], sizes = [11, 1], strides = [1, 1]} : vector<11x9xf32> to vector<11x1xf32>
    %46 = vector.broadcast %45 : vector<11x1xf32> to vector<11x64xf32>
    %47 = arith.mulf %44, %46 : vector<11x64xf32>
    %48 = arith.addf %41, %47 : vector<11x64xf32>
    %c4 = arith.constant 4 : index
    %c0_33 = arith.constant 0 : index
    %c0_34 = arith.constant 0 : index
    %49 = vector.load %arg4[%c4, %c0_33, %c0_34] : memref<9x64x64xf32, #tpu.memory_space<vmem>>, vector<1x64x64xf32>
    %50 = vector.shape_cast %49 : vector<1x64x64xf32> to vector<64x64xf32>
    %cst_35 = arith.constant dense<0.000000e+00> : vector<11x64xf32>
    %51 = tpu.matmul %17, %50, %cst_35 {dimension_numbers = #tpu.dot_dimension_numbers<[1], [0], [0], [1], [0, 0, 1, 1], [], []>} : vector<11x64xf32>, vector<64x64xf32>, vector<11x64xf32> -> vector<11x64xf32>
    %52 = vector.extract_strided_slice %19 {offsets = [0, 4], sizes = [11, 1], strides = [1, 1]} : vector<11x9xf32> to vector<11x1xf32>
    %53 = vector.broadcast %52 : vector<11x1xf32> to vector<11x64xf32>
    %54 = arith.mulf %51, %53 : vector<11x64xf32>
    %55 = arith.addf %48, %54 : vector<11x64xf32>
    %c5 = arith.constant 5 : index
    %c0_36 = arith.constant 0 : index
    %c0_37 = arith.constant 0 : index
    %56 = vector.load %arg4[%c5, %c0_36, %c0_37] : memref<9x64x64xf32, #tpu.memory_space<vmem>>, vector<1x64x64xf32>
    %57 = vector.shape_cast %56 : vector<1x64x64xf32> to vector<64x64xf32>
    %cst_38 = arith.constant dense<0.000000e+00> : vector<11x64xf32>
    %58 = tpu.matmul %17, %57, %cst_38 {dimension_numbers = #tpu.dot_dimension_numbers<[1], [0], [0], [1], [0, 0, 1, 1], [], []>} : vector<11x64xf32>, vector<64x64xf32>, vector<11x64xf32> -> vector<11x64xf32>
    %59 = vector.extract_strided_slice %19 {offsets = [0, 5], sizes = [11, 1], strides = [1, 1]} : vector<11x9xf32> to vector<11x1xf32>
    %60 = vector.broadcast %59 : vector<11x1xf32> to vector<11x64xf32>
    %61 = arith.mulf %58, %60 : vector<11x64xf32>
    %62 = arith.addf %55, %61 : vector<11x64xf32>
    %c6 = arith.constant 6 : index
    %c0_39 = arith.constant 0 : index
    %c0_40 = arith.constant 0 : index
    %63 = vector.load %arg4[%c6, %c0_39, %c0_40] : memref<9x64x64xf32, #tpu.memory_space<vmem>>, vector<1x64x64xf32>
    %64 = vector.shape_cast %63 : vector<1x64x64xf32> to vector<64x64xf32>
    %cst_41 = arith.constant dense<0.000000e+00> : vector<11x64xf32>
    %65 = tpu.matmul %17, %64, %cst_41 {dimension_numbers = #tpu.dot_dimension_numbers<[1], [0], [0], [1], [0, 0, 1, 1], [], []>} : vector<11x64xf32>, vector<64x64xf32>, vector<11x64xf32> -> vector<11x64xf32>
    %66 = vector.extract_strided_slice %19 {offsets = [0, 6], sizes = [11, 1], strides = [1, 1]} : vector<11x9xf32> to vector<11x1xf32>
    %67 = vector.broadcast %66 : vector<11x1xf32> to vector<11x64xf32>
    %68 = arith.mulf %65, %67 : vector<11x64xf32>
    %69 = arith.addf %62, %68 : vector<11x64xf32>
    %c7 = arith.constant 7 : index
    %c0_42 = arith.constant 0 : index
    %c0_43 = arith.constant 0 : index
    %70 = vector.load %arg4[%c7, %c0_42, %c0_43] : memref<9x64x64xf32, #tpu.memory_space<vmem>>, vector<1x64x64xf32>
    %71 = vector.shape_cast %70 : vector<1x64x64xf32> to vector<64x64xf32>
    %cst_44 = arith.constant dense<0.000000e+00> : vector<11x64xf32>
    %72 = tpu.matmul %17, %71, %cst_44 {dimension_numbers = #tpu.dot_dimension_numbers<[1], [0], [0], [1], [0, 0, 1, 1], [], []>} : vector<11x64xf32>, vector<64x64xf32>, vector<11x64xf32> -> vector<11x64xf32>
    %73 = vector.extract_strided_slice %19 {offsets = [0, 7], sizes = [11, 1], strides = [1, 1]} : vector<11x9xf32> to vector<11x1xf32>
    %74 = vector.broadcast %73 : vector<11x1xf32> to vector<11x64xf32>
    %75 = arith.mulf %72, %74 : vector<11x64xf32>
    %76 = arith.addf %69, %75 : vector<11x64xf32>
    %c8 = arith.constant 8 : index
    %c0_45 = arith.constant 0 : index
    %c0_46 = arith.constant 0 : index
    %77 = vector.load %arg4[%c8, %c0_45, %c0_46] : memref<9x64x64xf32, #tpu.memory_space<vmem>>, vector<1x64x64xf32>
    %78 = vector.shape_cast %77 : vector<1x64x64xf32> to vector<64x64xf32>
    %cst_47 = arith.constant dense<0.000000e+00> : vector<11x64xf32>
    %79 = tpu.matmul %17, %78, %cst_47 {dimension_numbers = #tpu.dot_dimension_numbers<[1], [0], [0], [1], [0, 0, 1, 1], [], []>} : vector<11x64xf32>, vector<64x64xf32>, vector<11x64xf32> -> vector<11x64xf32>
    %80 = vector.extract_strided_slice %19 {offsets = [0, 8], sizes = [11, 1], strides = [1, 1]} : vector<11x9xf32> to vector<11x1xf32>
    %81 = vector.broadcast %80 : vector<11x1xf32> to vector<11x64xf32>
    %82 = arith.mulf %79, %81 : vector<11x64xf32>
    %83 = arith.addf %76, %82 : vector<11x64xf32>
    %c0_48 = arith.constant 0 : index
    %c0_49 = arith.constant 0 : index
    %c0_50 = arith.constant 0 : index
    %84 = vector.load %arg9[%c0_48, %c0_49, %c0_50] : memref<2x11x1xf32, #tpu.memory_space<vmem>>, vector<1x11x1xf32>
    %85 = vector.shape_cast %84 : vector<1x11x1xf32> to vector<11x1xf32>
    %86 = vector.broadcast %85 : vector<11x1xf32> to vector<11x64xf32>
    %87 = arith.mulf %83, %86 : vector<11x64xf32>
    %c0_51 = arith.constant 0 : index
    %c0_52 = arith.constant 0 : index
    %c0_53 = arith.constant 0 : index
    %88 = vector.load %arg10[%c0_51, %c0_52, %c0_53] : memref<2x11x1xf32, #tpu.memory_space<vmem>>, vector<1x11x1xf32>
    %89 = vector.shape_cast %88 : vector<1x11x1xf32> to vector<11x1xf32>
    %90 = vector.broadcast %89 : vector<11x1xf32> to vector<11x64xf32>
    %91 = arith.addf %87, %90 : vector<11x64xf32>
    %cst_54 = arith.constant 0.000000e+00 : f32
    %92 = vector.broadcast %cst_54 : f32 to vector<11x64xf32>
    %93 = arith.maximumf %91, %92 : vector<11x64xf32>
    %94 = vector.extract_strided_slice %17 {offsets = [0, 0], sizes = [1, 64], strides = [1, 1]} : vector<11x64xf32> to vector<1x64xf32>
    %c0_55 = arith.constant 0 : index
    %c0_56 = arith.constant 0 : index
    %95 = vector.load %arg23[%c0_55, %c0_56] : memref<44x64xf32, #tpu.memory_space<vmem>>, vector<1x64xf32>
    tpu.vector_store %arg23[%c0_55, %c0_56], %94 {strides = array<i32>} : memref<44x64xf32, #tpu.memory_space<vmem>>, vector<1x64xf32>,
    %96 = vector.extract_strided_slice %93 {offsets = [0, 0], sizes = [1, 64], strides = [1, 1]} : vector<11x64xf32> to vector<1x64xf32>
    %c1_57 = arith.constant 1 : index
    %c0_58 = arith.constant 0 : index
    %97 = vector.load %arg23[%c1_57, %c0_58] : memref<44x64xf32, #tpu.memory_space<vmem>>, vector<1x64xf32>
    tpu.vector_store %arg23[%c1_57, %c0_58], %96 {strides = array<i32>} : memref<44x64xf32, #tpu.memory_space<vmem>>, vector<1x64xf32>,
    %98 = vector.extract_strided_slice %17 {offsets = [1, 0], sizes = [2, 64], strides = [1, 1]} : vector<11x64xf32> to vector<2x64xf32>
    %c4_59 = arith.constant 4 : index
    %c0_60 = arith.constant 0 : index
    %99 = vector.load %arg23[%c4_59, %c0_60] : memref<44x64xf32, #tpu.memory_space<vmem>>, vector<2x64xf32>
    tpu.vector_store %arg23[%c4_59, %c0_60], %98 {strides = array<i32>} : memref<44x64xf32, #tpu.memory_space<vmem>>, vector<2x64xf32>,
    %100 = vector.extract_strided_slice %93 {offsets = [1, 0], sizes = [2, 64], strides = [1, 1]} : vector<11x64xf32> to vector<2x64xf32>
    %c6_61 = arith.constant 6 : index
    %c0_62 = arith.constant 0 : index
    %101 = vector.load %arg23[%c6_61, %c0_62] : memref<44x64xf32, #tpu.memory_space<vmem>>, vector<2x64xf32>
    tpu.vector_store %arg23[%c6_61, %c0_62], %100 {strides = array<i32>} : memref<44x64xf32, #tpu.memory_space<vmem>>, vector<2x64xf32>,
    %102 = vector.extract_strided_slice %17 {offsets = [3, 0], sizes = [8, 64], strides = [1, 1]} : vector<11x64xf32> to vector<8x64xf32>
    %c12 = arith.constant 12 : index
    %c0_63 = arith.constant 0 : index
    %103 = vector.load %arg23[%c12, %c0_63] : memref<44x64xf32, #tpu.memory_space<vmem>>, vector<8x64xf32>
    tpu.vector_store %arg23[%c12, %c0_63], %102 {strides = array<i32>} : memref<44x64xf32, #tpu.memory_space<vmem>>, vector<8x64xf32>,
    %104 = vector.extract_strided_slice %93 {offsets = [3, 0], sizes = [8, 64], strides = [1, 1]} : vector<11x64xf32> to vector<8x64xf32>
    %c20 = arith.constant 20 : index
    %c0_64 = arith.constant 0 : index
    %105 = vector.load %arg23[%c20, %c0_64] : memref<44x64xf32, #tpu.memory_space<vmem>>, vector<8x64xf32>
    tpu.vector_store %arg23[%c20, %c0_64], %104 {strides = array<i32>} : memref<44x64xf32, #tpu.memory_space<vmem>>, vector<8x64xf32>,
    %c1_65 = arith.constant 1 : index
    %c0_66 = arith.constant 0 : index
    %c0_67 = arith.constant 0 : index
    %106 = vector.load %arg5[%c1_65, %c0_66, %c0_67] : memref<2x11x16xf32, #tpu.memory_space<vmem>>, vector<1x11x16xf32>
    %107 = vector.shape_cast %106 : vector<1x11x16xf32> to vector<11x16xf32>
    %cst_68 = arith.constant dense<0.000000e+00> : vector<11x64xf32>
    %108 = tpu.matmul %107, %4, %cst_68 {dimension_numbers = #tpu.dot_dimension_numbers<[1], [0], [0], [1], [0, 0, 1, 1], [], []>} : vector<11x16xf32>, vector<16x64xf32>, vector<11x64xf32> -> vector<11x64xf32>
    %c1_69 = arith.constant 1 : index
    %c0_70 = arith.constant 0 : index
    %c0_71 = arith.constant 0 : index
    %109 = vector.load %arg6[%c1_69, %c0_70, %c0_71] : memref<2x11x1xf32, #tpu.memory_space<vmem>>, vector<1x11x1xf32>
    %110 = vector.shape_cast %109 : vector<1x11x1xf32> to vector<11x1xf32>
    %111 = vector.broadcast %110 : vector<11x1xf32> to vector<11x64xf32>
    %112 = arith.mulf %108, %111 : vector<11x64xf32>
    %c1_72 = arith.constant 1 : index
    %c0_73 = arith.constant 0 : index
    %c0_74 = arith.constant 0 : index
    %113 = vector.load %arg7[%c1_72, %c0_73, %c0_74] : memref<2x11x1xf32, #tpu.memory_space<vmem>>, vector<1x11x1xf32>
    %114 = vector.shape_cast %113 : vector<1x11x1xf32> to vector<11x1xf32>
    %115 = vector.broadcast %114 : vector<11x1xf32> to vector<11x64xf32>
    %116 = arith.addf %112, %115 : vector<11x64xf32>
    %cst_75 = arith.constant 0.000000e+00 : f32
    %117 = vector.broadcast %cst_75 : f32 to vector<11x64xf32>
    %118 = arith.maximumf %116, %117 : vector<11x64xf32>
    %c1_76 = arith.constant 1 : index
    %c0_77 = arith.constant 0 : index
    %c0_78 = arith.constant 0 : index
    %119 = vector.load %arg8[%c1_76, %c0_77, %c0_78] : memref<2x11x9xf32, #tpu.memory_space<vmem>>, vector<1x11x9xf32>
    %120 = vector.shape_cast %119 : vector<1x11x9xf32> to vector<11x9xf32>
    %cst_79 = arith.constant 0.000000e+00 : f32
    %121 = vector.broadcast %cst_79 : f32 to vector<11x64xf32>
    %c0_80 = arith.constant 0 : index
    %c0_81 = arith.constant 0 : index
    %c0_82 = arith.constant 0 : index
    %122 = vector.load %arg4[%c0_80, %c0_81, %c0_82] : memref<9x64x64xf32, #tpu.memory_space<vmem>>, vector<1x64x64xf32>
    %123 = vector.shape_cast %122 : vector<1x64x64xf32> to vector<64x64xf32>
    %cst_83 = arith.constant dense<0.000000e+00> : vector<11x64xf32>
    %124 = tpu.matmul %118, %123, %cst_83 {dimension_numbers = #tpu.dot_dimension_numbers<[1], [0], [0], [1], [0, 0, 1, 1], [], []>} : vector<11x64xf32>, vector<64x64xf32>, vector<11x64xf32> -> vector<11x64xf32>
    %125 = vector.extract_strided_slice %120 {offsets = [0, 0], sizes = [11, 1], strides = [1, 1]} : vector<11x9xf32> to vector<11x1xf32>
    %126 = vector.broadcast %125 : vector<11x1xf32> to vector<11x64xf32>
    %127 = arith.mulf %124, %126 : vector<11x64xf32>
    %128 = arith.addf %121, %127 : vector<11x64xf32>
    %c1_84 = arith.constant 1 : index
    %c0_85 = arith.constant 0 : index
    %c0_86 = arith.constant 0 : index
    %129 = vector.load %arg4[%c1_84, %c0_85, %c0_86] : memref<9x64x64xf32, #tpu.memory_space<vmem>>, vector<1x64x64xf32>
    %130 = vector.shape_cast %129 : vector<1x64x64xf32> to vector<64x64xf32>
    %cst_87 = arith.constant dense<0.000000e+00> : vector<11x64xf32>
    %131 = tpu.matmul %118, %130, %cst_87 {dimension_numbers = #tpu.dot_dimension_numbers<[1], [0], [0], [1], [0, 0, 1, 1], [], []>} : vector<11x64xf32>, vector<64x64xf32>, vector<11x64xf32> -> vector<11x64xf32>
    %132 = vector.extract_strided_slice %120 {offsets = [0, 1], sizes = [11, 1], strides = [1, 1]} : vector<11x9xf32> to vector<11x1xf32>
    %133 = vector.broadcast %132 : vector<11x1xf32> to vector<11x64xf32>
    %134 = arith.mulf %131, %133 : vector<11x64xf32>
    %135 = arith.addf %128, %134 : vector<11x64xf32>
    %c2_88 = arith.constant 2 : index
    %c0_89 = arith.constant 0 : index
    %c0_90 = arith.constant 0 : index
    %136 = vector.load %arg4[%c2_88, %c0_89, %c0_90] : memref<9x64x64xf32, #tpu.memory_space<vmem>>, vector<1x64x64xf32>
    %137 = vector.shape_cast %136 : vector<1x64x64xf32> to vector<64x64xf32>
    %cst_91 = arith.constant dense<0.000000e+00> : vector<11x64xf32>
    %138 = tpu.matmul %118, %137, %cst_91 {dimension_numbers = #tpu.dot_dimension_numbers<[1], [0], [0], [1], [0, 0, 1, 1], [], []>} : vector<11x64xf32>, vector<64x64xf32>, vector<11x64xf32> -> vector<11x64xf32>
    %139 = vector.extract_strided_slice %120 {offsets = [0, 2], sizes = [11, 1], strides = [1, 1]} : vector<11x9xf32> to vector<11x1xf32>
    %140 = vector.broadcast %139 : vector<11x1xf32> to vector<11x64xf32>
    %141 = arith.mulf %138, %140 : vector<11x64xf32>
    %142 = arith.addf %135, %141 : vector<11x64xf32>
    %c3_92 = arith.constant 3 : index
    %c0_93 = arith.constant 0 : index
    %c0_94 = arith.constant 0 : index
    %143 = vector.load %arg4[%c3_92, %c0_93, %c0_94] : memref<9x64x64xf32, #tpu.memory_space<vmem>>, vector<1x64x64xf32>
    %144 = vector.shape_cast %143 : vector<1x64x64xf32> to vector<64x64xf32>
    %cst_95 = arith.constant dense<0.000000e+00> : vector<11x64xf32>
    %145 = tpu.matmul %118, %144, %cst_95 {dimension_numbers = #tpu.dot_dimension_numbers<[1], [0], [0], [1], [0, 0, 1, 1], [], []>} : vector<11x64xf32>, vector<64x64xf32>, vector<11x64xf32> -> vector<11x64xf32>
    %146 = vector.extract_strided_slice %120 {offsets = [0, 3], sizes = [11, 1], strides = [1, 1]} : vector<11x9xf32> to vector<11x1xf32>
    %147 = vector.broadcast %146 : vector<11x1xf32> to vector<11x64xf32>
    %148 = arith.mulf %145, %147 : vector<11x64xf32>
    %149 = arith.addf %142, %148 : vector<11x64xf32>
    %c4_96 = arith.constant 4 : index
    %c0_97 = arith.constant 0 : index
    %c0_98 = arith.constant 0 : index
    %150 = vector.load %arg4[%c4_96, %c0_97, %c0_98] : memref<9x64x64xf32, #tpu.memory_space<vmem>>, vector<1x64x64xf32>
    %151 = vector.shape_cast %150 : vector<1x64x64xf32> to vector<64x64xf32>
    %cst_99 = arith.constant dense<0.000000e+00> : vector<11x64xf32>
    %152 = tpu.matmul %118, %151, %cst_99 {dimension_numbers = #tpu.dot_dimension_numbers<[1], [0], [0], [1], [0, 0, 1, 1], [], []>} : vector<11x64xf32>, vector<64x64xf32>, vector<11x64xf32> -> vector<11x64xf32>
    %153 = vector.extract_strided_slice %120 {offsets = [0, 4], sizes = [11, 1], strides = [1, 1]} : vector<11x9xf32> to vector<11x1xf32>
    %154 = vector.broadcast %153 : vector<11x1xf32> to vector<11x64xf32>
    %155 = arith.mulf %152, %154 : vector<11x64xf32>
    %156 = arith.addf %149, %155 : vector<11x64xf32>
    %c5_100 = arith.constant 5 : index
    %c0_101 = arith.constant 0 : index
    %c0_102 = arith.constant 0 : index
    %157 = vector.load %arg4[%c5_100, %c0_101, %c0_102] : memref<9x64x64xf32, #tpu.memory_space<vmem>>, vector<1x64x64xf32>
    %158 = vector.shape_cast %157 : vector<1x64x64xf32> to vector<64x64xf32>
    %cst_103 = arith.constant dense<0.000000e+00> : vector<11x64xf32>
    %159 = tpu.matmul %118, %158, %cst_103 {dimension_numbers = #tpu.dot_dimension_numbers<[1], [0], [0], [1], [0, 0, 1, 1], [], []>} : vector<11x64xf32>, vector<64x64xf32>, vector<11x64xf32> -> vector<11x64xf32>
    %160 = vector.extract_strided_slice %120 {offsets = [0, 5], sizes = [11, 1], strides = [1, 1]} : vector<11x9xf32> to vector<11x1xf32>
    %161 = vector.broadcast %160 : vector<11x1xf32> to vector<11x64xf32>
    %162 = arith.mulf %159, %161 : vector<11x64xf32>
    %163 = arith.addf %156, %162 : vector<11x64xf32>
    %c6_104 = arith.constant 6 : index
    %c0_105 = arith.constant 0 : index
    %c0_106 = arith.constant 0 : index
    %164 = vector.load %arg4[%c6_104, %c0_105, %c0_106] : memref<9x64x64xf32, #tpu.memory_space<vmem>>, vector<1x64x64xf32>
    %165 = vector.shape_cast %164 : vector<1x64x64xf32> to vector<64x64xf32>
    %cst_107 = arith.constant dense<0.000000e+00> : vector<11x64xf32>
    %166 = tpu.matmul %118, %165, %cst_107 {dimension_numbers = #tpu.dot_dimension_numbers<[1], [0], [0], [1], [0, 0, 1, 1], [], []>} : vector<11x64xf32>, vector<64x64xf32>, vector<11x64xf32> -> vector<11x64xf32>
    %167 = vector.extract_strided_slice %120 {offsets = [0, 6], sizes = [11, 1], strides = [1, 1]} : vector<11x9xf32> to vector<11x1xf32>
    %168 = vector.broadcast %167 : vector<11x1xf32> to vector<11x64xf32>
    %169 = arith.mulf %166, %168 : vector<11x64xf32>
    %170 = arith.addf %163, %169 : vector<11x64xf32>
    %c7_108 = arith.constant 7 : index
    %c0_109 = arith.constant 0 : index
    %c0_110 = arith.constant 0 : index
    %171 = vector.load %arg4[%c7_108, %c0_109, %c0_110] : memref<9x64x64xf32, #tpu.memory_space<vmem>>, vector<1x64x64xf32>
    %172 = vector.shape_cast %171 : vector<1x64x64xf32> to vector<64x64xf32>
    %cst_111 = arith.constant dense<0.000000e+00> : vector<11x64xf32>
    %173 = tpu.matmul %118, %172, %cst_111 {dimension_numbers = #tpu.dot_dimension_numbers<[1], [0], [0], [1], [0, 0, 1, 1], [], []>} : vector<11x64xf32>, vector<64x64xf32>, vector<11x64xf32> -> vector<11x64xf32>
    %174 = vector.extract_strided_slice %120 {offsets = [0, 7], sizes = [11, 1], strides = [1, 1]} : vector<11x9xf32> to vector<11x1xf32>
    %175 = vector.broadcast %174 : vector<11x1xf32> to vector<11x64xf32>
    %176 = arith.mulf %173, %175 : vector<11x64xf32>
    %177 = arith.addf %170, %176 : vector<11x64xf32>
    %c8_112 = arith.constant 8 : index
    %c0_113 = arith.constant 0 : index
    %c0_114 = arith.constant 0 : index
    %178 = vector.load %arg4[%c8_112, %c0_113, %c0_114] : memref<9x64x64xf32, #tpu.memory_space<vmem>>, vector<1x64x64xf32>
    %179 = vector.shape_cast %178 : vector<1x64x64xf32> to vector<64x64xf32>
    %cst_115 = arith.constant dense<0.000000e+00> : vector<11x64xf32>
    %180 = tpu.matmul %118, %179, %cst_115 {dimension_numbers = #tpu.dot_dimension_numbers<[1], [0], [0], [1], [0, 0, 1, 1], [], []>} : vector<11x64xf32>, vector<64x64xf32>, vector<11x64xf32> -> vector<11x64xf32>
    %181 = vector.extract_strided_slice %120 {offsets = [0, 8], sizes = [11, 1], strides = [1, 1]} : vector<11x9xf32> to vector<11x1xf32>
    %182 = vector.broadcast %181 : vector<11x1xf32> to vector<11x64xf32>
    %183 = arith.mulf %180, %182 : vector<11x64xf32>
    %184 = arith.addf %177, %183 : vector<11x64xf32>
    %c1_116 = arith.constant 1 : index
    %c0_117 = arith.constant 0 : index
    %c0_118 = arith.constant 0 : index
    %185 = vector.load %arg9[%c1_116, %c0_117, %c0_118] : memref<2x11x1xf32, #tpu.memory_space<vmem>>, vector<1x11x1xf32>
    %186 = vector.shape_cast %185 : vector<1x11x1xf32> to vector<11x1xf32>
    %187 = vector.broadcast %186 : vector<11x1xf32> to vector<11x64xf32>
    %188 = arith.mulf %184, %187 : vector<11x64xf32>
    %c1_119 = arith.constant 1 : index
    %c0_120 = arith.constant 0 : index
    %c0_121 = arith.constant 0 : index
    %189 = vector.load %arg10[%c1_119, %c0_120, %c0_121] : memref<2x11x1xf32, #tpu.memory_space<vmem>>, vector<1x11x1xf32>
    %190 = vector.shape_cast %189 : vector<1x11x1xf32> to vector<11x1xf32>
    %191 = vector.broadcast %190 : vector<11x1xf32> to vector<11x64xf32>
    %192 = arith.addf %188, %191 : vector<11x64xf32>
    %cst_122 = arith.constant 0.000000e+00 : f32
    %193 = vector.broadcast %cst_122 : f32 to vector<11x64xf32>
    %194 = arith.maximumf %192, %193 : vector<11x64xf32>
    %195 = vector.extract_strided_slice %118 {offsets = [0, 0], sizes = [1, 64], strides = [1, 1]} : vector<11x64xf32> to vector<1x64xf32>
    %c2_123 = arith.constant 2 : index
    %c0_124 = arith.constant 0 : index
    %196 = vector.load %arg23[%c2_123, %c0_124] : memref<44x64xf32, #tpu.memory_space<vmem>>, vector<1x64xf32>
    tpu.vector_store %arg23[%c2_123, %c0_124], %195 {strides = array<i32>} : memref<44x64xf32, #tpu.memory_space<vmem>>, vector<1x64xf32>,
    %197 = vector.extract_strided_slice %194 {offsets = [0, 0], sizes = [1, 64], strides = [1, 1]} : vector<11x64xf32> to vector<1x64xf32>
    %c3_125 = arith.constant 3 : index
    %c0_126 = arith.constant 0 : index
    %198 = vector.load %arg23[%c3_125, %c0_126] : memref<44x64xf32, #tpu.memory_space<vmem>>, vector<1x64xf32>
    tpu.vector_store %arg23[%c3_125, %c0_126], %197 {strides = array<i32>} : memref<44x64xf32, #tpu.memory_space<vmem>>, vector<1x64xf32>,
    %199 = vector.extract_strided_slice %118 {offsets = [1, 0], sizes = [2, 64], strides = [1, 1]} : vector<11x64xf32> to vector<2x64xf32>
    %c8_127 = arith.constant 8 : index
    %c0_128 = arith.constant 0 : index
    %200 = vector.load %arg23[%c8_127, %c0_128] : memref<44x64xf32, #tpu.memory_space<vmem>>, vector<2x64xf32>
    tpu.vector_store %arg23[%c8_127, %c0_128], %199 {strides = array<i32>} : memref<44x64xf32, #tpu.memory_space<vmem>>, vector<2x64xf32>,
    %201 = vector.extract_strided_slice %194 {offsets = [1, 0], sizes = [2, 64], strides = [1, 1]} : vector<11x64xf32> to vector<2x64xf32>
    %c10 = arith.constant 10 : index
    %c0_129 = arith.constant 0 : index
    %202 = vector.load %arg23[%c10, %c0_129] : memref<44x64xf32, #tpu.memory_space<vmem>>, vector<2x64xf32>
    tpu.vector_store %arg23[%c10, %c0_129], %201 {strides = array<i32>} : memref<44x64xf32, #tpu.memory_space<vmem>>, vector<2x64xf32>,
    %203 = vector.extract_strided_slice %118 {offsets = [3, 0], sizes = [8, 64], strides = [1, 1]} : vector<11x64xf32> to vector<8x64xf32>
    %c28 = arith.constant 28 : index
    %c0_130 = arith.constant 0 : index
    %204 = vector.load %arg23[%c28, %c0_130] : memref<44x64xf32, #tpu.memory_space<vmem>>, vector<8x64xf32>
    tpu.vector_store %arg23[%c28, %c0_130], %203 {strides = array<i32>} : memref<44x64xf32, #tpu.memory_space<vmem>>, vector<8x64xf32>,
    %205 = vector.extract_strided_slice %194 {offsets = [3, 0], sizes = [8, 64], strides = [1, 1]} : vector<11x64xf32> to vector<8x64xf32>
    %c36 = arith.constant 36 : index
    %c0_131 = arith.constant 0 : index
    %206 = vector.load %arg23[%c36, %c0_131] : memref<44x64xf32, #tpu.memory_space<vmem>>, vector<8x64xf32>
    tpu.vector_store %arg23[%c36, %c0_131], %205 {strides = array<i32>} : memref<44x64xf32, #tpu.memory_space<vmem>>, vector<8x64xf32>,
    %c0_132 = arith.constant 0 : index
    %c0_133 = arith.constant 0 : index
    %207 = vector.load %arg23[%c0_132, %c0_133] : memref<44x64xf32, #tpu.memory_space<vmem>>, vector<4x64xf32>
    %c4_134 = arith.constant 4 : index
    %c0_135 = arith.constant 0 : index
    %208 = vector.load %arg23[%c4_134, %c0_135] : memref<44x64xf32, #tpu.memory_space<vmem>>, vector<4x64xf32>
    %c8_136 = arith.constant 8 : index
    %c0_137 = arith.constant 0 : index
    %209 = vector.load %arg23[%c8_136, %c0_137] : memref<44x64xf32, #tpu.memory_space<vmem>>, vector<4x64xf32>
    %c12_138 = arith.constant 12 : index
    %c0_139 = arith.constant 0 : index
    %210 = vector.load %arg23[%c12_138, %c0_139] : memref<44x64xf32, #tpu.memory_space<vmem>>, vector<16x64xf32>
    %c28_140 = arith.constant 28 : index
    %c0_141 = arith.constant 0 : index
    %211 = vector.load %arg23[%c28_140, %c0_141] : memref<44x64xf32, #tpu.memory_space<vmem>>, vector<16x64xf32>
    %cst_142 = arith.constant dense<0.000000e+00> : vector<64x64xf32>
    %212 = tpu.matmul %207, %208, %cst_142 {dimension_numbers = #tpu.dot_dimension_numbers<[0], [0], [1], [1], [0, 1, 1, 1], [], []>} : vector<4x64xf32>, vector<4x64xf32>, vector<64x64xf32> -> vector<64x64xf32>
    %cst_143 = arith.constant dense<0xFF800000> : vector<64xf32>
    %213 = vector.multi_reduction <maximumf>, %212, %cst_143 [1] : vector<64x64xf32> to vector<64xf32>
    %214 = vector.shape_cast %213 : vector<64xf32> to vector<64x1xf32>
    %215 = vector.broadcast %214 : vector<64x1xf32> to vector<64x64xf32>
    %216 = arith.subf %212, %215 : vector<64x64xf32>
    %217 = math.exp %216 : vector<64x64xf32>
    %cst_144 = arith.constant dense<0.000000e+00> : vector<64xf32>
    %218 = vector.multi_reduction <add>, %217, %cst_144 [1] : vector<64x64xf32> to vector<64xf32>
    %219 = vector.shape_cast %218 : vector<64xf32> to vector<64x1xf32>
    %220 = tpu.reciprocal %219 {approx = true} : vector<64x1xf32> -> vector<64x1xf32>
    %221 = vector.broadcast %220 : vector<64x1xf32> to vector<64x64xf32>
    %222 = arith.mulf %217, %221 : vector<64x64xf32>
    %cst_145 = arith.constant dense<0.000000e+00> : vector<64x64xf32>
    %223 = tpu.matmul %207, %209, %cst_145 {dimension_numbers = #tpu.dot_dimension_numbers<[0], [0], [1], [1], [0, 1, 1, 1], [], []>} : vector<4x64xf32>, vector<4x64xf32>, vector<64x64xf32> -> vector<64x64xf32>
    %cst_146 = arith.constant dense<0xFF800000> : vector<64xf32>
    %224 = vector.multi_reduction <maximumf>, %223, %cst_146 [1] : vector<64x64xf32> to vector<64xf32>
    %225 = vector.shape_cast %224 : vector<64xf32> to vector<64x1xf32>
    %226 = vector.broadcast %225 : vector<64x1xf32> to vector<64x64xf32>
    %227 = arith.subf %223, %226 : vector<64x64xf32>
    %228 = math.exp %227 : vector<64x64xf32>
    %cst_147 = arith.constant dense<0.000000e+00> : vector<64xf32>
    %229 = vector.multi_reduction <add>, %228, %cst_147 [1] : vector<64x64xf32> to vector<64xf32>
    %230 = vector.shape_cast %229 : vector<64xf32> to vector<64x1xf32>
    %231 = tpu.reciprocal %230 {approx = true} : vector<64x1xf32> -> vector<64x1xf32>
    %232 = vector.broadcast %231 : vector<64x1xf32> to vector<64x64xf32>
    %233 = arith.mulf %228, %232 : vector<64x64xf32>
    %cst_148 = arith.constant dense<0.000000e+00> : vector<16x64xf32>
    %234 = tpu.matmul %210, %222, %cst_148 {dimension_numbers = #tpu.dot_dimension_numbers<[1], [1], [0], [0], [0, 0, 1, 0], [], []>} : vector<16x64xf32>, vector<64x64xf32>, vector<16x64xf32> -> vector<16x64xf32>
    %cst_149 = arith.constant dense<0.000000e+00> : vector<16x64xf32>
    %235 = tpu.matmul %211, %233, %cst_149 {dimension_numbers = #tpu.dot_dimension_numbers<[1], [1], [0], [0], [0, 0, 1, 0], [], []>} : vector<16x64xf32>, vector<64x64xf32>, vector<16x64xf32> -> vector<16x64xf32>
    %236 = vector.broadcast %0 : f32 to vector<16x64xf32>
    %237 = arith.mulf %236, %234 : vector<16x64xf32>
    %238 = arith.addf %237, %2 : vector<16x64xf32>
    %239 = vector.broadcast %0 : f32 to vector<16x64xf32>
    %240 = arith.mulf %239, %235 : vector<16x64xf32>
    %241 = arith.addf %240, %4 : vector<16x64xf32>
    %c0_150 = arith.constant 0 : index
    %c0_151 = arith.constant 0 : index
    %c0_152 = arith.constant 0 : index
    %242 = vector.load %arg21[%c0_150, %c0_151, %c0_152] : memref<1x16x64xf32, #tpu.memory_space<vmem>>, vector<1x16x64xf32>
    %243 = vector.shape_cast %242 : vector<1x16x64xf32> to vector<16x64xf32>
    %244 = vector.shape_cast %238 : vector<16x64xf32> to vector<1x16x64xf32>
    tpu.vector_store %arg21[%c0_150, %c0_151, %c0_152], %244 {strides = array<i32>} : memref<1x16x64xf32, #tpu.memory_space<vmem>>, vector<1x16x64xf32>,
    %c0_153 = arith.constant 0 : index
    %c0_154 = arith.constant 0 : index
    %c0_155 = arith.constant 0 : index
    %245 = vector.load %arg22[%c0_153, %c0_154, %c0_155] : memref<1x16x64xf32, #tpu.memory_space<vmem>>, vector<1x16x64xf32>
    %246 = vector.shape_cast %245 : vector<1x16x64xf32> to vector<16x64xf32>
    %247 = vector.shape_cast %241 : vector<16x64xf32> to vector<1x16x64xf32>
    tpu.vector_store %arg22[%c0_153, %c0_154, %c0_155], %247 {strides = array<i32>} : memref<1x16x64xf32, #tpu.memory_space<vmem>>, vector<1x16x64xf32>,
    %cst_156 = arith.constant 0.000000e+00 : f32
    %248 = vector.broadcast %cst_156 : f32 to vector<8x64xf32>
    %c0_157 = arith.constant 0 : index
    %c0_158 = arith.constant 0 : index
    %c0_159 = arith.constant 0 : index
    %249 = vector.load %arg11[%c0_157, %c0_158, %c0_159] : memref<9x8x16xf32, #tpu.memory_space<vmem>>, vector<1x8x16xf32>
    %250 = vector.shape_cast %249 : vector<1x8x16xf32> to vector<8x16xf32>
    %cst_160 = arith.constant dense<0.000000e+00> : vector<8x64xf32>
    %251 = tpu.matmul %250, %238, %cst_160 {dimension_numbers = #tpu.dot_dimension_numbers<[1], [0], [0], [1], [0, 0, 1, 1], [], []>} : vector<8x16xf32>, vector<16x64xf32>, vector<8x64xf32> -> vector<8x64xf32>
    %c0_161 = arith.constant 0 : index
    %c0_162 = arith.constant 0 : index
    %c0_163 = arith.constant 0 : index
    %252 = vector.load %arg12[%c0_161, %c0_162, %c0_163] : memref<9x8x16xf32, #tpu.memory_space<vmem>>, vector<1x8x16xf32>
    %253 = vector.shape_cast %252 : vector<1x8x16xf32> to vector<8x16xf32>
    %cst_164 = arith.constant dense<0.000000e+00> : vector<8x64xf32>
    %254 = tpu.matmul %253, %241, %cst_164 {dimension_numbers = #tpu.dot_dimension_numbers<[1], [0], [0], [1], [0, 0, 1, 1], [], []>} : vector<8x16xf32>, vector<16x64xf32>, vector<8x64xf32> -> vector<8x64xf32>
    %255 = arith.addf %251, %254 : vector<8x64xf32>
    %c0_165 = arith.constant 0 : index
    %c0_166 = arith.constant 0 : index
    %c0_167 = arith.constant 0 : index
    %256 = vector.load %arg4[%c0_165, %c0_166, %c0_167] : memref<9x64x64xf32, #tpu.memory_space<vmem>>, vector<1x64x64xf32>
    %257 = vector.shape_cast %256 : vector<1x64x64xf32> to vector<64x64xf32>
    %cst_168 = arith.constant dense<0.000000e+00> : vector<8x64xf32>
    %258 = tpu.matmul %255, %257, %cst_168 {dimension_numbers = #tpu.dot_dimension_numbers<[1], [0], [0], [1], [0, 0, 1, 1], [], []>} : vector<8x64xf32>, vector<64x64xf32>, vector<8x64xf32> -> vector<8x64xf32>
    %259 = arith.addf %248, %258 : vector<8x64xf32>
    %c1_169 = arith.constant 1 : index
    %c0_170 = arith.constant 0 : index
    %c0_171 = arith.constant 0 : index
    %260 = vector.load %arg11[%c1_169, %c0_170, %c0_171] : memref<9x8x16xf32, #tpu.memory_space<vmem>>, vector<1x8x16xf32>
    %261 = vector.shape_cast %260 : vector<1x8x16xf32> to vector<8x16xf32>
    %cst_172 = arith.constant dense<0.000000e+00> : vector<8x64xf32>
    %262 = tpu.matmul %261, %238, %cst_172 {dimension_numbers = #tpu.dot_dimension_numbers<[1], [0], [0], [1], [0, 0, 1, 1], [], []>} : vector<8x16xf32>, vector<16x64xf32>, vector<8x64xf32> -> vector<8x64xf32>
    %c1_173 = arith.constant 1 : index
    %c0_174 = arith.constant 0 : index
    %c0_175 = arith.constant 0 : index
    %263 = vector.load %arg12[%c1_173, %c0_174, %c0_175] : memref<9x8x16xf32, #tpu.memory_space<vmem>>, vector<1x8x16xf32>
    %264 = vector.shape_cast %263 : vector<1x8x16xf32> to vector<8x16xf32>
    %cst_176 = arith.constant dense<0.000000e+00> : vector<8x64xf32>
    %265 = tpu.matmul %264, %241, %cst_176 {dimension_numbers = #tpu.dot_dimension_numbers<[1], [0], [0], [1], [0, 0, 1, 1], [], []>} : vector<8x16xf32>, vector<16x64xf32>, vector<8x64xf32> -> vector<8x64xf32>
    %266 = arith.addf %262, %265 : vector<8x64xf32>
    %c1_177 = arith.constant 1 : index
    %c0_178 = arith.constant 0 : index
    %c0_179 = arith.constant 0 : index
    %267 = vector.load %arg4[%c1_177, %c0_178, %c0_179] : memref<9x64x64xf32, #tpu.memory_space<vmem>>, vector<1x64x64xf32>
    %268 = vector.shape_cast %267 : vector<1x64x64xf32> to vector<64x64xf32>
    %cst_180 = arith.constant dense<0.000000e+00> : vector<8x64xf32>
    %269 = tpu.matmul %266, %268, %cst_180 {dimension_numbers = #tpu.dot_dimension_numbers<[1], [0], [0], [1], [0, 0, 1, 1], [], []>} : vector<8x64xf32>, vector<64x64xf32>, vector<8x64xf32> -> vector<8x64xf32>
    %270 = arith.addf %259, %269 : vector<8x64xf32>
    %c2_181 = arith.constant 2 : index
    %c0_182 = arith.constant 0 : index
    %c0_183 = arith.constant 0 : index
    %271 = vector.load %arg11[%c2_181, %c0_182, %c0_183] : memref<9x8x16xf32, #tpu.memory_space<vmem>>, vector<1x8x16xf32>
    %272 = vector.shape_cast %271 : vector<1x8x16xf32> to vector<8x16xf32>
    %cst_184 = arith.constant dense<0.000000e+00> : vector<8x64xf32>
    %273 = tpu.matmul %272, %238, %cst_184 {dimension_numbers = #tpu.dot_dimension_numbers<[1], [0], [0], [1], [0, 0, 1, 1], [], []>} : vector<8x16xf32>, vector<16x64xf32>, vector<8x64xf32> -> vector<8x64xf32>
    %c2_185 = arith.constant 2 : index
    %c0_186 = arith.constant 0 : index
    %c0_187 = arith.constant 0 : index
    %274 = vector.load %arg12[%c2_185, %c0_186, %c0_187] : memref<9x8x16xf32, #tpu.memory_space<vmem>>, vector<1x8x16xf32>
    %275 = vector.shape_cast %274 : vector<1x8x16xf32> to vector<8x16xf32>
    %cst_188 = arith.constant dense<0.000000e+00> : vector<8x64xf32>
    %276 = tpu.matmul %275, %241, %cst_188 {dimension_numbers = #tpu.dot_dimension_numbers<[1], [0], [0], [1], [0, 0, 1, 1], [], []>} : vector<8x16xf32>, vector<16x64xf32>, vector<8x64xf32> -> vector<8x64xf32>
    %277 = arith.addf %273, %276 : vector<8x64xf32>
    %c2_189 = arith.constant 2 : index
    %c0_190 = arith.constant 0 : index
    %c0_191 = arith.constant 0 : index
    %278 = vector.load %arg4[%c2_189, %c0_190, %c0_191] : memref<9x64x64xf32, #tpu.memory_space<vmem>>, vector<1x64x64xf32>
    %279 = vector.shape_cast %278 : vector<1x64x64xf32> to vector<64x64xf32>
    %cst_192 = arith.constant dense<0.000000e+00> : vector<8x64xf32>
    %280 = tpu.matmul %277, %279, %cst_192 {dimension_numbers = #tpu.dot_dimension_numbers<[1], [0], [0], [1], [0, 0, 1, 1], [], []>} : vector<8x64xf32>, vector<64x64xf32>, vector<8x64xf32> -> vector<8x64xf32>
    %281 = arith.addf %270, %280 : vector<8x64xf32>
    %c3_193 = arith.constant 3 : index
    %c0_194 = arith.constant 0 : index
    %c0_195 = arith.constant 0 : index
    %282 = vector.load %arg11[%c3_193, %c0_194, %c0_195] : memref<9x8x16xf32, #tpu.memory_space<vmem>>, vector<1x8x16xf32>
    %283 = vector.shape_cast %282 : vector<1x8x16xf32> to vector<8x16xf32>
    %cst_196 = arith.constant dense<0.000000e+00> : vector<8x64xf32>
    %284 = tpu.matmul %283, %238, %cst_196 {dimension_numbers = #tpu.dot_dimension_numbers<[1], [0], [0], [1], [0, 0, 1, 1], [], []>} : vector<8x16xf32>, vector<16x64xf32>, vector<8x64xf32> -> vector<8x64xf32>
    %c3_197 = arith.constant 3 : index
    %c0_198 = arith.constant 0 : index
    %c0_199 = arith.constant 0 : index
    %285 = vector.load %arg12[%c3_197, %c0_198, %c0_199] : memref<9x8x16xf32, #tpu.memory_space<vmem>>, vector<1x8x16xf32>
    %286 = vector.shape_cast %285 : vector<1x8x16xf32> to vector<8x16xf32>
    %cst_200 = arith.constant dense<0.000000e+00> : vector<8x64xf32>
    %287 = tpu.matmul %286, %241, %cst_200 {dimension_numbers = #tpu.dot_dimension_numbers<[1], [0], [0], [1], [0, 0, 1, 1], [], []>} : vector<8x16xf32>, vector<16x64xf32>, vector<8x64xf32> -> vector<8x64xf32>
    %288 = arith.addf %284, %287 : vector<8x64xf32>
    %c3_201 = arith.constant 3 : index
    %c0_202 = arith.constant 0 : index
    %c0_203 = arith.constant 0 : index
    %289 = vector.load %arg4[%c3_201, %c0_202, %c0_203] : memref<9x64x64xf32, #tpu.memory_space<vmem>>, vector<1x64x64xf32>
    %290 = vector.shape_cast %289 : vector<1x64x64xf32> to vector<64x64xf32>
    %cst_204 = arith.constant dense<0.000000e+00> : vector<8x64xf32>
    %291 = tpu.matmul %288, %290, %cst_204 {dimension_numbers = #tpu.dot_dimension_numbers<[1], [0], [0], [1], [0, 0, 1, 1], [], []>} : vector<8x64xf32>, vector<64x64xf32>, vector<8x64xf32> -> vector<8x64xf32>
    %292 = arith.addf %281, %291 : vector<8x64xf32>
    %c4_205 = arith.constant 4 : index
    %c0_206 = arith.constant 0 : index
    %c0_207 = arith.constant 0 : index
    %293 = vector.load %arg11[%c4_205, %c0_206, %c0_207] : memref<9x8x16xf32, #tpu.memory_space<vmem>>, vector<1x8x16xf32>
    %294 = vector.shape_cast %293 : vector<1x8x16xf32> to vector<8x16xf32>
    %cst_208 = arith.constant dense<0.000000e+00> : vector<8x64xf32>
    %295 = tpu.matmul %294, %238, %cst_208 {dimension_numbers = #tpu.dot_dimension_numbers<[1], [0], [0], [1], [0, 0, 1, 1], [], []>} : vector<8x16xf32>, vector<16x64xf32>, vector<8x64xf32> -> vector<8x64xf32>
    %c4_209 = arith.constant 4 : index
    %c0_210 = arith.constant 0 : index
    %c0_211 = arith.constant 0 : index
    %296 = vector.load %arg12[%c4_209, %c0_210, %c0_211] : memref<9x8x16xf32, #tpu.memory_space<vmem>>, vector<1x8x16xf32>
    %297 = vector.shape_cast %296 : vector<1x8x16xf32> to vector<8x16xf32>
    %cst_212 = arith.constant dense<0.000000e+00> : vector<8x64xf32>
    %298 = tpu.matmul %297, %241, %cst_212 {dimension_numbers = #tpu.dot_dimension_numbers<[1], [0], [0], [1], [0, 0, 1, 1], [], []>} : vector<8x16xf32>, vector<16x64xf32>, vector<8x64xf32> -> vector<8x64xf32>
    %299 = arith.addf %295, %298 : vector<8x64xf32>
    %c4_213 = arith.constant 4 : index
    %c0_214 = arith.constant 0 : index
    %c0_215 = arith.constant 0 : index
    %300 = vector.load %arg4[%c4_213, %c0_214, %c0_215] : memref<9x64x64xf32, #tpu.memory_space<vmem>>, vector<1x64x64xf32>
    %301 = vector.shape_cast %300 : vector<1x64x64xf32> to vector<64x64xf32>
    %cst_216 = arith.constant dense<0.000000e+00> : vector<8x64xf32>
    %302 = tpu.matmul %299, %301, %cst_216 {dimension_numbers = #tpu.dot_dimension_numbers<[1], [0], [0], [1], [0, 0, 1, 1], [], []>} : vector<8x64xf32>, vector<64x64xf32>, vector<8x64xf32> -> vector<8x64xf32>
    %303 = arith.addf %292, %302 : vector<8x64xf32>
    %c5_217 = arith.constant 5 : index
    %c0_218 = arith.constant 0 : index
    %c0_219 = arith.constant 0 : index
    %304 = vector.load %arg11[%c5_217, %c0_218, %c0_219] : memref<9x8x16xf32, #tpu.memory_space<vmem>>, vector<1x8x16xf32>
    %305 = vector.shape_cast %304 : vector<1x8x16xf32> to vector<8x16xf32>
    %cst_220 = arith.constant dense<0.000000e+00> : vector<8x64xf32>
    %306 = tpu.matmul %305, %238, %cst_220 {dimension_numbers = #tpu.dot_dimension_numbers<[1], [0], [0], [1], [0, 0, 1, 1], [], []>} : vector<8x16xf32>, vector<16x64xf32>, vector<8x64xf32> -> vector<8x64xf32>
    %c5_221 = arith.constant 5 : index
    %c0_222 = arith.constant 0 : index
    %c0_223 = arith.constant 0 : index
    %307 = vector.load %arg12[%c5_221, %c0_222, %c0_223] : memref<9x8x16xf32, #tpu.memory_space<vmem>>, vector<1x8x16xf32>
    %308 = vector.shape_cast %307 : vector<1x8x16xf32> to vector<8x16xf32>
    %cst_224 = arith.constant dense<0.000000e+00> : vector<8x64xf32>
    %309 = tpu.matmul %308, %241, %cst_224 {dimension_numbers = #tpu.dot_dimension_numbers<[1], [0], [0], [1], [0, 0, 1, 1], [], []>} : vector<8x16xf32>, vector<16x64xf32>, vector<8x64xf32> -> vector<8x64xf32>
    %310 = arith.addf %306, %309 : vector<8x64xf32>
    %c5_225 = arith.constant 5 : index
    %c0_226 = arith.constant 0 : index
    %c0_227 = arith.constant 0 : index
    %311 = vector.load %arg4[%c5_225, %c0_226, %c0_227] : memref<9x64x64xf32, #tpu.memory_space<vmem>>, vector<1x64x64xf32>
    %312 = vector.shape_cast %311 : vector<1x64x64xf32> to vector<64x64xf32>
    %cst_228 = arith.constant dense<0.000000e+00> : vector<8x64xf32>
    %313 = tpu.matmul %310, %312, %cst_228 {dimension_numbers = #tpu.dot_dimension_numbers<[1], [0], [0], [1], [0, 0, 1, 1], [], []>} : vector<8x64xf32>, vector<64x64xf32>, vector<8x64xf32> -> vector<8x64xf32>
    %314 = arith.addf %303, %313 : vector<8x64xf32>
    %c6_229 = arith.constant 6 : index
    %c0_230 = arith.constant 0 : index
    %c0_231 = arith.constant 0 : index
    %315 = vector.load %arg11[%c6_229, %c0_230, %c0_231] : memref<9x8x16xf32, #tpu.memory_space<vmem>>, vector<1x8x16xf32>
    %316 = vector.shape_cast %315 : vector<1x8x16xf32> to vector<8x16xf32>
    %cst_232 = arith.constant dense<0.000000e+00> : vector<8x64xf32>
    %317 = tpu.matmul %316, %238, %cst_232 {dimension_numbers = #tpu.dot_dimension_numbers<[1], [0], [0], [1], [0, 0, 1, 1], [], []>} : vector<8x16xf32>, vector<16x64xf32>, vector<8x64xf32> -> vector<8x64xf32>
    %c6_233 = arith.constant 6 : index
    %c0_234 = arith.constant 0 : index
    %c0_235 = arith.constant 0 : index
    %318 = vector.load %arg12[%c6_233, %c0_234, %c0_235] : memref<9x8x16xf32, #tpu.memory_space<vmem>>, vector<1x8x16xf32>
    %319 = vector.shape_cast %318 : vector<1x8x16xf32> to vector<8x16xf32>
    %cst_236 = arith.constant dense<0.000000e+00> : vector<8x64xf32>
    %320 = tpu.matmul %319, %241, %cst_236 {dimension_numbers = #tpu.dot_dimension_numbers<[1], [0], [0], [1], [0, 0, 1, 1], [], []>} : vector<8x16xf32>, vector<16x64xf32>, vector<8x64xf32> -> vector<8x64xf32>
    %321 = arith.addf %317, %320 : vector<8x64xf32>
    %c6_237 = arith.constant 6 : index
    %c0_238 = arith.constant 0 : index
    %c0_239 = arith.constant 0 : index
    %322 = vector.load %arg4[%c6_237, %c0_238, %c0_239] : memref<9x64x64xf32, #tpu.memory_space<vmem>>, vector<1x64x64xf32>
    %323 = vector.shape_cast %322 : vector<1x64x64xf32> to vector<64x64xf32>
    %cst_240 = arith.constant dense<0.000000e+00> : vector<8x64xf32>
    %324 = tpu.matmul %321, %323, %cst_240 {dimension_numbers = #tpu.dot_dimension_numbers<[1], [0], [0], [1], [0, 0, 1, 1], [], []>} : vector<8x64xf32>, vector<64x64xf32>, vector<8x64xf32> -> vector<8x64xf32>
    %325 = arith.addf %314, %324 : vector<8x64xf32>
    %c7_241 = arith.constant 7 : index
    %c0_242 = arith.constant 0 : index
    %c0_243 = arith.constant 0 : index
    %326 = vector.load %arg11[%c7_241, %c0_242, %c0_243] : memref<9x8x16xf32, #tpu.memory_space<vmem>>, vector<1x8x16xf32>
    %327 = vector.shape_cast %326 : vector<1x8x16xf32> to vector<8x16xf32>
    %cst_244 = arith.constant dense<0.000000e+00> : vector<8x64xf32>
    %328 = tpu.matmul %327, %238, %cst_244 {dimension_numbers = #tpu.dot_dimension_numbers<[1], [0], [0], [1], [0, 0, 1, 1], [], []>} : vector<8x16xf32>, vector<16x64xf32>, vector<8x64xf32> -> vector<8x64xf32>
    %c7_245 = arith.constant 7 : index
    %c0_246 = arith.constant 0 : index
    %c0_247 = arith.constant 0 : index
    %329 = vector.load %arg12[%c7_245, %c0_246, %c0_247] : memref<9x8x16xf32, #tpu.memory_space<vmem>>, vector<1x8x16xf32>
    %330 = vector.shape_cast %329 : vector<1x8x16xf32> to vector<8x16xf32>
    %cst_248 = arith.constant dense<0.000000e+00> : vector<8x64xf32>
    %331 = tpu.matmul %330, %241, %cst_248 {dimension_numbers = #tpu.dot_dimension_numbers<[1], [0], [0], [1], [0, 0, 1, 1], [], []>} : vector<8x16xf32>, vector<16x64xf32>, vector<8x64xf32> -> vector<8x64xf32>
    %332 = arith.addf %328, %331 : vector<8x64xf32>
    %c7_249 = arith.constant 7 : index
    %c0_250 = arith.constant 0 : index
    %c0_251 = arith.constant 0 : index
    %333 = vector.load %arg4[%c7_249, %c0_250, %c0_251] : memref<9x64x64xf32, #tpu.memory_space<vmem>>, vector<1x64x64xf32>
    %334 = vector.shape_cast %333 : vector<1x64x64xf32> to vector<64x64xf32>
    %cst_252 = arith.constant dense<0.000000e+00> : vector<8x64xf32>
    %335 = tpu.matmul %332, %334, %cst_252 {dimension_numbers = #tpu.dot_dimension_numbers<[1], [0], [0], [1], [0, 0, 1, 1], [], []>} : vector<8x64xf32>, vector<64x64xf32>, vector<8x64xf32> -> vector<8x64xf32>
    %336 = arith.addf %325, %335 : vector<8x64xf32>
    %c8_253 = arith.constant 8 : index
    %c0_254 = arith.constant 0 : index
    %c0_255 = arith.constant 0 : index
    %337 = vector.load %arg11[%c8_253, %c0_254, %c0_255] : memref<9x8x16xf32, #tpu.memory_space<vmem>>, vector<1x8x16xf32>
    %338 = vector.shape_cast %337 : vector<1x8x16xf32> to vector<8x16xf32>
    %cst_256 = arith.constant dense<0.000000e+00> : vector<8x64xf32>
    %339 = tpu.matmul %338, %238, %cst_256 {dimension_numbers = #tpu.dot_dimension_numbers<[1], [0], [0], [1], [0, 0, 1, 1], [], []>} : vector<8x16xf32>, vector<16x64xf32>, vector<8x64xf32> -> vector<8x64xf32>
    %c8_257 = arith.constant 8 : index
    %c0_258 = arith.constant 0 : index
    %c0_259 = arith.constant 0 : index
    %340 = vector.load %arg12[%c8_257, %c0_258, %c0_259] : memref<9x8x16xf32, #tpu.memory_space<vmem>>, vector<1x8x16xf32>
    %341 = vector.shape_cast %340 : vector<1x8x16xf32> to vector<8x16xf32>
    %cst_260 = arith.constant dense<0.000000e+00> : vector<8x64xf32>
    %342 = tpu.matmul %341, %241, %cst_260 {dimension_numbers = #tpu.dot_dimension_numbers<[1], [0], [0], [1], [0, 0, 1, 1], [], []>} : vector<8x16xf32>, vector<16x64xf32>, vector<8x64xf32> -> vector<8x64xf32>
    %343 = arith.addf %339, %342 : vector<8x64xf32>
    %c8_261 = arith.constant 8 : index
    %c0_262 = arith.constant 0 : index
    %c0_263 = arith.constant 0 : index
    %344 = vector.load %arg4[%c8_261, %c0_262, %c0_263] : memref<9x64x64xf32, #tpu.memory_space<vmem>>, vector<1x64x64xf32>
    %345 = vector.shape_cast %344 : vector<1x64x64xf32> to vector<64x64xf32>
    %cst_264 = arith.constant dense<0.000000e+00> : vector<8x64xf32>
    %346 = tpu.matmul %343, %345, %cst_264 {dimension_numbers = #tpu.dot_dimension_numbers<[1], [0], [0], [1], [0, 0, 1, 1], [], []>} : vector<8x64xf32>, vector<64x64xf32>, vector<8x64xf32> -> vector<8x64xf32>
    %347 = arith.addf %336, %346 : vector<8x64xf32>
    %c0_265 = arith.constant 0 : index
    %c0_266 = arith.constant 0 : index
    %348 = vector.load %arg13[%c0_265, %c0_266] : memref<8x1xf32, #tpu.memory_space<vmem>>, vector<8x1xf32>
    %349 = vector.broadcast %348 : vector<8x1xf32> to vector<8x64xf32>
    %350 = arith.mulf %347, %349 : vector<8x64xf32>
    %c0_267 = arith.constant 0 : index
    %c0_268 = arith.constant 0 : index
    %351 = vector.load %arg14[%c0_267, %c0_268] : memref<8x1xf32, #tpu.memory_space<vmem>>, vector<8x1xf32>
    %352 = vector.broadcast %351 : vector<8x1xf32> to vector<8x64xf32>
    %353 = arith.addf %350, %352 : vector<8x64xf32>
    %cst_269 = arith.constant 0.000000e+00 : f32
    %354 = vector.broadcast %cst_269 : f32 to vector<8x64xf32>
    %355 = arith.maximumf %353, %354 : vector<8x64xf32>
    %c0_270 = arith.constant 0 : index
    %c0_271 = arith.constant 0 : index
    %356 = vector.load %arg15[%c0_270, %c0_271] : memref<8x9xf32, #tpu.memory_space<vmem>>, vector<8x9xf32>
    %cst_272 = arith.constant 0.000000e+00 : f32
    %357 = vector.broadcast %cst_272 : f32 to vector<8x64xf32>
    %c0_273 = arith.constant 0 : index
    %c0_274 = arith.constant 0 : index
    %c0_275 = arith.constant 0 : index
    %358 = vector.load %arg4[%c0_273, %c0_274, %c0_275] : memref<9x64x64xf32, #tpu.memory_space<vmem>>, vector<1x64x64xf32>
    %359 = vector.shape_cast %358 : vector<1x64x64xf32> to vector<64x64xf32>
    %cst_276 = arith.constant dense<0.000000e+00> : vector<8x64xf32>
    %360 = tpu.matmul %355, %359, %cst_276 {dimension_numbers = #tpu.dot_dimension_numbers<[1], [0], [0], [1], [0, 0, 1, 1], [], []>} : vector<8x64xf32>, vector<64x64xf32>, vector<8x64xf32> -> vector<8x64xf32>
    %361 = vector.extract_strided_slice %356 {offsets = [0, 0], sizes = [8, 1], strides = [1, 1]} : vector<8x9xf32> to vector<8x1xf32>
    %362 = vector.broadcast %361 : vector<8x1xf32> to vector<8x64xf32>
    %363 = arith.mulf %360, %362 : vector<8x64xf32>
    %364 = arith.addf %357, %363 : vector<8x64xf32>
    %c1_277 = arith.constant 1 : index
    %c0_278 = arith.constant 0 : index
    %c0_279 = arith.constant 0 : index
    %365 = vector.load %arg4[%c1_277, %c0_278, %c0_279] : memref<9x64x64xf32, #tpu.memory_space<vmem>>, vector<1x64x64xf32>
    %366 = vector.shape_cast %365 : vector<1x64x64xf32> to vector<64x64xf32>
    %cst_280 = arith.constant dense<0.000000e+00> : vector<8x64xf32>
    %367 = tpu.matmul %355, %366, %cst_280 {dimension_numbers = #tpu.dot_dimension_numbers<[1], [0], [0], [1], [0, 0, 1, 1], [], []>} : vector<8x64xf32>, vector<64x64xf32>, vector<8x64xf32> -> vector<8x64xf32>
    %368 = vector.extract_strided_slice %356 {offsets = [0, 1], sizes = [8, 1], strides = [1, 1]} : vector<8x9xf32> to vector<8x1xf32>
    %369 = vector.broadcast %368 : vector<8x1xf32> to vector<8x64xf32>
    %370 = arith.mulf %367, %369 : vector<8x64xf32>
    %371 = arith.addf %364, %370 : vector<8x64xf32>
    %c2_281 = arith.constant 2 : index
    %c0_282 = arith.constant 0 : index
    %c0_283 = arith.constant 0 : index
    %372 = vector.load %arg4[%c2_281, %c0_282, %c0_283] : memref<9x64x64xf32, #tpu.memory_space<vmem>>, vector<1x64x64xf32>
    %373 = vector.shape_cast %372 : vector<1x64x64xf32> to vector<64x64xf32>
    %cst_284 = arith.constant dense<0.000000e+00> : vector<8x64xf32>
    %374 = tpu.matmul %355, %373, %cst_284 {dimension_numbers = #tpu.dot_dimension_numbers<[1], [0], [0], [1], [0, 0, 1, 1], [], []>} : vector<8x64xf32>, vector<64x64xf32>, vector<8x64xf32> -> vector<8x64xf32>
    %375 = vector.extract_strided_slice %356 {offsets = [0, 2], sizes = [8, 1], strides = [1, 1]} : vector<8x9xf32> to vector<8x1xf32>
    %376 = vector.broadcast %375 : vector<8x1xf32> to vector<8x64xf32>
    %377 = arith.mulf %374, %376 : vector<8x64xf32>
    %378 = arith.addf %371, %377 : vector<8x64xf32>
    %c3_285 = arith.constant 3 : index
    %c0_286 = arith.constant 0 : index
    %c0_287 = arith.constant 0 : index
    %379 = vector.load %arg4[%c3_285, %c0_286, %c0_287] : memref<9x64x64xf32, #tpu.memory_space<vmem>>, vector<1x64x64xf32>
    %380 = vector.shape_cast %379 : vector<1x64x64xf32> to vector<64x64xf32>
    %cst_288 = arith.constant dense<0.000000e+00> : vector<8x64xf32>
    %381 = tpu.matmul %355, %380, %cst_288 {dimension_numbers = #tpu.dot_dimension_numbers<[1], [0], [0], [1], [0, 0, 1, 1], [], []>} : vector<8x64xf32>, vector<64x64xf32>, vector<8x64xf32> -> vector<8x64xf32>
    %382 = vector.extract_strided_slice %356 {offsets = [0, 3], sizes = [8, 1], strides = [1, 1]} : vector<8x9xf32> to vector<8x1xf32>
    %383 = vector.broadcast %382 : vector<8x1xf32> to vector<8x64xf32>
    %384 = arith.mulf %381, %383 : vector<8x64xf32>
    %385 = arith.addf %378, %384 : vector<8x64xf32>
    %c4_289 = arith.constant 4 : index
    %c0_290 = arith.constant 0 : index
    %c0_291 = arith.constant 0 : index
    %386 = vector.load %arg4[%c4_289, %c0_290, %c0_291] : memref<9x64x64xf32, #tpu.memory_space<vmem>>, vector<1x64x64xf32>
    %387 = vector.shape_cast %386 : vector<1x64x64xf32> to vector<64x64xf32>
    %cst_292 = arith.constant dense<0.000000e+00> : vector<8x64xf32>
    %388 = tpu.matmul %355, %387, %cst_292 {dimension_numbers = #tpu.dot_dimension_numbers<[1], [0], [0], [1], [0, 0, 1, 1], [], []>} : vector<8x64xf32>, vector<64x64xf32>, vector<8x64xf32> -> vector<8x64xf32>
    %389 = vector.extract_strided_slice %356 {offsets = [0, 4], sizes = [8, 1], strides = [1, 1]} : vector<8x9xf32> to vector<8x1xf32>
    %390 = vector.broadcast %389 : vector<8x1xf32> to vector<8x64xf32>
    %391 = arith.mulf %388, %390 : vector<8x64xf32>
    %392 = arith.addf %385, %391 : vector<8x64xf32>
    %c5_293 = arith.constant 5 : index
    %c0_294 = arith.constant 0 : index
    %c0_295 = arith.constant 0 : index
    %393 = vector.load %arg4[%c5_293, %c0_294, %c0_295] : memref<9x64x64xf32, #tpu.memory_space<vmem>>, vector<1x64x64xf32>
    %394 = vector.shape_cast %393 : vector<1x64x64xf32> to vector<64x64xf32>
    %cst_296 = arith.constant dense<0.000000e+00> : vector<8x64xf32>
    %395 = tpu.matmul %355, %394, %cst_296 {dimension_numbers = #tpu.dot_dimension_numbers<[1], [0], [0], [1], [0, 0, 1, 1], [], []>} : vector<8x64xf32>, vector<64x64xf32>, vector<8x64xf32> -> vector<8x64xf32>
    %396 = vector.extract_strided_slice %356 {offsets = [0, 5], sizes = [8, 1], strides = [1, 1]} : vector<8x9xf32> to vector<8x1xf32>
    %397 = vector.broadcast %396 : vector<8x1xf32> to vector<8x64xf32>
    %398 = arith.mulf %395, %397 : vector<8x64xf32>
    %399 = arith.addf %392, %398 : vector<8x64xf32>
    %c6_297 = arith.constant 6 : index
    %c0_298 = arith.constant 0 : index
    %c0_299 = arith.constant 0 : index
    %400 = vector.load %arg4[%c6_297, %c0_298, %c0_299] : memref<9x64x64xf32, #tpu.memory_space<vmem>>, vector<1x64x64xf32>
    %401 = vector.shape_cast %400 : vector<1x64x64xf32> to vector<64x64xf32>
    %cst_300 = arith.constant dense<0.000000e+00> : vector<8x64xf32>
    %402 = tpu.matmul %355, %401, %cst_300 {dimension_numbers = #tpu.dot_dimension_numbers<[1], [0], [0], [1], [0, 0, 1, 1], [], []>} : vector<8x64xf32>, vector<64x64xf32>, vector<8x64xf32> -> vector<8x64xf32>
    %403 = vector.extract_strided_slice %356 {offsets = [0, 6], sizes = [8, 1], strides = [1, 1]} : vector<8x9xf32> to vector<8x1xf32>
    %404 = vector.broadcast %403 : vector<8x1xf32> to vector<8x64xf32>
    %405 = arith.mulf %402, %404 : vector<8x64xf32>
    %406 = arith.addf %399, %405 : vector<8x64xf32>
    %c7_301 = arith.constant 7 : index
    %c0_302 = arith.constant 0 : index
    %c0_303 = arith.constant 0 : index
    %407 = vector.load %arg4[%c7_301, %c0_302, %c0_303] : memref<9x64x64xf32, #tpu.memory_space<vmem>>, vector<1x64x64xf32>
    %408 = vector.shape_cast %407 : vector<1x64x64xf32> to vector<64x64xf32>
    %cst_304 = arith.constant dense<0.000000e+00> : vector<8x64xf32>
    %409 = tpu.matmul %355, %408, %cst_304 {dimension_numbers = #tpu.dot_dimension_numbers<[1], [0], [0], [1], [0, 0, 1, 1], [], []>} : vector<8x64xf32>, vector<64x64xf32>, vector<8x64xf32> -> vector<8x64xf32>
    %410 = vector.extract_strided_slice %356 {offsets = [0, 7], sizes = [8, 1], strides = [1, 1]} : vector<8x9xf32> to vector<8x1xf32>
    %411 = vector.broadcast %410 : vector<8x1xf32> to vector<8x64xf32>
    %412 = arith.mulf %409, %411 : vector<8x64xf32>
    %413 = arith.addf %406, %412 : vector<8x64xf32>
    %c8_305 = arith.constant 8 : index
    %c0_306 = arith.constant 0 : index
    %c0_307 = arith.constant 0 : index
    %414 = vector.load %arg4[%c8_305, %c0_306, %c0_307] : memref<9x64x64xf32, #tpu.memory_space<vmem>>, vector<1x64x64xf32>
    %415 = vector.shape_cast %414 : vector<1x64x64xf32> to vector<64x64xf32>
    %cst_308 = arith.constant dense<0.000000e+00> : vector<8x64xf32>
    %416 = tpu.matmul %355, %415, %cst_308 {dimension_numbers = #tpu.dot_dimension_numbers<[1], [0], [0], [1], [0, 0, 1, 1], [], []>} : vector<8x64xf32>, vector<64x64xf32>, vector<8x64xf32> -> vector<8x64xf32>
    %417 = vector.extract_strided_slice %356 {offsets = [0, 8], sizes = [8, 1], strides = [1, 1]} : vector<8x9xf32> to vector<8x1xf32>
    %418 = vector.broadcast %417 : vector<8x1xf32> to vector<8x64xf32>
    %419 = arith.mulf %416, %418 : vector<8x64xf32>
    %420 = arith.addf %413, %419 : vector<8x64xf32>
    %c0_309 = arith.constant 0 : index
    %c0_310 = arith.constant 0 : index
    %421 = vector.load %arg16[%c0_309, %c0_310] : memref<8x1xf32, #tpu.memory_space<vmem>>, vector<8x1xf32>
    %422 = vector.broadcast %421 : vector<8x1xf32> to vector<8x64xf32>
    %423 = arith.mulf %420, %422 : vector<8x64xf32>
    %c0_311 = arith.constant 0 : index
    %c0_312 = arith.constant 0 : index
    %424 = vector.load %arg17[%c0_311, %c0_312] : memref<8x1xf32, #tpu.memory_space<vmem>>, vector<8x1xf32>
    %425 = vector.broadcast %424 : vector<8x1xf32> to vector<8x64xf32>
    %426 = arith.addf %423, %425 : vector<8x64xf32>
    %cst_313 = arith.constant 0.000000e+00 : f32
    %427 = vector.broadcast %cst_313 : f32 to vector<8x64xf32>
    %428 = arith.maximumf %426, %427 : vector<8x64xf32>
    %c0_314 = arith.constant 0 : index
    %c0_315 = arith.constant 0 : index
    %c0_316 = arith.constant 0 : index
    %429 = vector.load %arg18[%c0_314, %c0_315, %c0_316] : memref<2x8x1xf32, #tpu.memory_space<vmem>>, vector<1x8x1xf32>
    %430 = vector.shape_cast %429 : vector<1x8x1xf32> to vector<8x1xf32>
    %431 = vector.broadcast %430 : vector<8x1xf32> to vector<8x64xf32>
    %432 = arith.mulf %355, %431 : vector<8x64xf32>
    %c0_317 = arith.constant 0 : index
    %c0_318 = arith.constant 0 : index
    %c0_319 = arith.constant 0 : index
    %433 = vector.load %arg19[%c0_317, %c0_318, %c0_319] : memref<2x8x1xf32, #tpu.memory_space<vmem>>, vector<1x8x1xf32>
    %434 = vector.shape_cast %433 : vector<1x8x1xf32> to vector<8x1xf32>
    %435 = vector.broadcast %434 : vector<8x1xf32> to vector<8x64xf32>
    %436 = arith.addf %432, %435 : vector<8x64xf32>
    %cst_320 = arith.constant 0.000000e+00 : f32
    %437 = vector.broadcast %cst_320 : f32 to vector<8x64xf32>
    %438 = arith.maximumf %436, %437 : vector<8x64xf32>
    %c0_321 = arith.constant 0 : index
    %c0_322 = arith.constant 0 : index
    %c0_323 = arith.constant 0 : index
    %439 = vector.load %arg20[%c0_321, %c0_322, %c0_323] : memref<1x16x64xf32, #tpu.memory_space<vmem>>, vector<1x8x64xf32>
    %440 = vector.shape_cast %439 : vector<1x8x64xf32> to vector<8x64xf32>
    %441 = vector.shape_cast %438 : vector<8x64xf32> to vector<1x8x64xf32>
    tpu.vector_store %arg20[%c0_321, %c0_322, %c0_323], %441 {strides = array<i32>} : memref<1x16x64xf32, #tpu.memory_space<vmem>>, vector<1x8x64xf32>,
    %c1_324 = arith.constant 1 : index
    %c0_325 = arith.constant 0 : index
    %c0_326 = arith.constant 0 : index
    %442 = vector.load %arg18[%c1_324, %c0_325, %c0_326] : memref<2x8x1xf32, #tpu.memory_space<vmem>>, vector<1x8x1xf32>
    %443 = vector.shape_cast %442 : vector<1x8x1xf32> to vector<8x1xf32>
    %444 = vector.broadcast %443 : vector<8x1xf32> to vector<8x64xf32>
    %445 = arith.mulf %428, %444 : vector<8x64xf32>
    %c1_327 = arith.constant 1 : index
    %c0_328 = arith.constant 0 : index
    %c0_329 = arith.constant 0 : index
    %446 = vector.load %arg19[%c1_327, %c0_328, %c0_329] : memref<2x8x1xf32, #tpu.memory_space<vmem>>, vector<1x8x1xf32>
    %447 = vector.shape_cast %446 : vector<1x8x1xf32> to vector<8x1xf32>
    %448 = vector.broadcast %447 : vector<8x1xf32> to vector<8x64xf32>
    %449 = arith.addf %445, %448 : vector<8x64xf32>
    %cst_330 = arith.constant 0.000000e+00 : f32
    %450 = vector.broadcast %cst_330 : f32 to vector<8x64xf32>
    %451 = arith.maximumf %449, %450 : vector<8x64xf32>
    %c0_331 = arith.constant 0 : index
    %c8_332 = arith.constant 8 : index
    %c0_333 = arith.constant 0 : index
    %452 = vector.load %arg20[%c0_331, %c8_332, %c0_333] : memref<1x16x64xf32, #tpu.memory_space<vmem>>, vector<1x8x64xf32>
    %453 = vector.shape_cast %452 : vector<1x8x64xf32> to vector<8x64xf32>
    %454 = vector.shape_cast %451 : vector<8x64xf32> to vector<1x8x64xf32>
    tpu.vector_store %arg20[%c0_331, %c8_332, %c0_333], %454 {strides = array<i32>} : memref<1x16x64xf32, #tpu.memory_space<vmem>>, vector<1x8x64xf32>,
    return
  }
  func.func @transform_0(%arg0: i32) -> i32 {
    %c0_i32 = arith.constant 0 : i32
    %c0_i32_0 = arith.constant 0 : i32
    return %c0_i32 : i32
  }
  func.func @transform_1(%arg0: i32) -> (i32, i32, i32) {
    %c0_i32 = arith.constant 0 : i32
    %c0_i32_0 = arith.constant 0 : i32
    %c0_i32_1 = arith.constant 0 : i32
    return %arg0, %c0_i32, %c0_i32_0 : i32, i32, i32
  }
  func.func @transform_2(%arg0: i32) -> (i32, i32, i32) {
    %c0_i32 = arith.constant 0 : i32
    %c0_i32_0 = arith.constant 0 : i32
    %c0_i32_1 = arith.constant 0 : i32
    return %arg0, %c0_i32, %c0_i32_0 : i32, i32, i32
  }
  func.func @transform_3(%arg0: i32) -> (i32, i32, i32) {
    %c0_i32 = arith.constant 0 : i32
    %c0_i32_0 = arith.constant 0 : i32
    %c0_i32_1 = arith.constant 0 : i32
    %c0_i32_2 = arith.constant 0 : i32
    return %c0_i32, %c0_i32_0, %c0_i32_1 : i32, i32, i32
  }
  func.func @transform_4(%arg0: i32) -> (i32, i32, i32) {
    %c0_i32 = arith.constant 0 : i32
    %c0_i32_0 = arith.constant 0 : i32
    %c0_i32_1 = arith.constant 0 : i32
    %c0_i32_2 = arith.constant 0 : i32
    return %c0_i32, %c0_i32_0, %c0_i32_1 : i32, i32, i32
  }
  func.func @transform_5(%arg0: i32) -> (i32, i32, i32) {
    %c0_i32 = arith.constant 0 : i32
    %c0_i32_0 = arith.constant 0 : i32
    %c0_i32_1 = arith.constant 0 : i32
    %c0_i32_2 = arith.constant 0 : i32
    return %c0_i32, %c0_i32_0, %c0_i32_1 : i32, i32, i32
  }
  func.func @transform_6(%arg0: i32) -> (i32, i32, i32) {
    %c0_i32 = arith.constant 0 : i32
    %c0_i32_0 = arith.constant 0 : i32
    %c0_i32_1 = arith.constant 0 : i32
    %c0_i32_2 = arith.constant 0 : i32
    return %c0_i32, %c0_i32_0, %c0_i32_1 : i32, i32, i32
  }
  func.func @transform_7(%arg0: i32) -> (i32, i32, i32) {
    %c0_i32 = arith.constant 0 : i32
    %c0_i32_0 = arith.constant 0 : i32
    %c0_i32_1 = arith.constant 0 : i32
    %c0_i32_2 = arith.constant 0 : i32
    return %c0_i32, %c0_i32_0, %c0_i32_1 : i32, i32, i32
  }
  func.func @transform_8(%arg0: i32) -> (i32, i32, i32) {
    %c0_i32 = arith.constant 0 : i32
    %c0_i32_0 = arith.constant 0 : i32
    %c0_i32_1 = arith.constant 0 : i32
    %c0_i32_2 = arith.constant 0 : i32
    return %c0_i32, %c0_i32_0, %c0_i32_1 : i32, i32, i32
  }
  func.func @transform_9(%arg0: i32) -> (i32, i32, i32) {
    %c0_i32 = arith.constant 0 : i32
    %c0_i32_0 = arith.constant 0 : i32
    %c0_i32_1 = arith.constant 0 : i32
    %c0_i32_2 = arith.constant 0 : i32
    return %c0_i32, %c0_i32_0, %c0_i32_1 : i32, i32, i32
  }
  func.func @transform_10(%arg0: i32) -> (i32, i32, i32) {
    %c0_i32 = arith.constant 0 : i32
    %c0_i32_0 = arith.constant 0 : i32
    %c0_i32_1 = arith.constant 0 : i32
    %c0_i32_2 = arith.constant 0 : i32
    return %c0_i32, %c0_i32_0, %c0_i32_1 : i32, i32, i32
  }
  func.func @transform_11(%arg0: i32) -> (i32, i32, i32) {
    %c0_i32 = arith.constant 0 : i32
    %c0_i32_0 = arith.constant 0 : i32
    %c0_i32_1 = arith.constant 0 : i32
    %c0_i32_2 = arith.constant 0 : i32
    return %c0_i32, %c0_i32_0, %c0_i32_1 : i32, i32, i32
  }
  func.func @transform_12(%arg0: i32) -> (i32, i32) {
    %c0_i32 = arith.constant 0 : i32
    %c0_i32_0 = arith.constant 0 : i32
    %c0_i32_1 = arith.constant 0 : i32
    return %c0_i32, %c0_i32_0 : i32, i32
  }
  func.func @transform_13(%arg0: i32) -> (i32, i32) {
    %c0_i32 = arith.constant 0 : i32
    %c0_i32_0 = arith.constant 0 : i32
    %c0_i32_1 = arith.constant 0 : i32
    return %c0_i32, %c0_i32_0 : i32, i32
  }
  func.func @transform_14(%arg0: i32) -> (i32, i32) {
    %c0_i32 = arith.constant 0 : i32
    %c0_i32_0 = arith.constant 0 : i32
    %c0_i32_1 = arith.constant 0 : i32
    return %c0_i32, %c0_i32_0 : i32, i32
  }
  func.func @transform_15(%arg0: i32) -> (i32, i32) {
    %c0_i32 = arith.constant 0 : i32
    %c0_i32_0 = arith.constant 0 : i32
    %c0_i32_1 = arith.constant 0 : i32
    return %c0_i32, %c0_i32_0 : i32, i32
  }
  func.func @transform_16(%arg0: i32) -> (i32, i32) {
    %c0_i32 = arith.constant 0 : i32
    %c0_i32_0 = arith.constant 0 : i32
    %c0_i32_1 = arith.constant 0 : i32
    return %c0_i32, %c0_i32_0 : i32, i32
  }
  func.func @transform_17(%arg0: i32) -> (i32, i32, i32) {
    %c0_i32 = arith.constant 0 : i32
    %c0_i32_0 = arith.constant 0 : i32
    %c0_i32_1 = arith.constant 0 : i32
    %c0_i32_2 = arith.constant 0 : i32
    return %c0_i32, %c0_i32_0, %c0_i32_1 : i32, i32, i32
  }
  func.func @transform_18(%arg0: i32) -> (i32, i32, i32) {
    %c0_i32 = arith.constant 0 : i32
    %c0_i32_0 = arith.constant 0 : i32
    %c0_i32_1 = arith.constant 0 : i32
    %c0_i32_2 = arith.constant 0 : i32
    return %c0_i32, %c0_i32_0, %c0_i32_1 : i32, i32, i32
  }
  func.func @transform_19(%arg0: i32) -> (i32, i32, i32) {
    %c0_i32 = arith.constant 0 : i32
    %c0_i32_0 = arith.constant 0 : i32
    %c0_i32_1 = arith.constant 0 : i32
    return %arg0, %c0_i32, %c0_i32_0 : i32, i32, i32
  }
  func.func @transform_20(%arg0: i32) -> (i32, i32, i32) {
    %c0_i32 = arith.constant 0 : i32
    %c0_i32_0 = arith.constant 0 : i32
    %c0_i32_1 = arith.constant 0 : i32
    return %arg0, %c0_i32, %c0_i32_0 : i32, i32, i32
  }
  func.func @transform_21(%arg0: i32) -> (i32, i32, i32) {
    %c0_i32 = arith.constant 0 : i32
    %c0_i32_0 = arith.constant 0 : i32
    %c0_i32_1 = arith.constant 0 : i32
    return %arg0, %c0_i32, %c0_i32_0 : i32, i32, i32
  }
}

</mosaic_0001>

<llo_original>
// kernel: tpu_custom_call.1
$region0: #{tpu_custom_call.1}
  #allocation0 [shape = 'u32[]', space=smem, size = 0x4, offset = 0x4, fixed_abs, tag = 'smem constant byte address 0x4 - core index']
  #allocation1 [shape = 'u32[144,128]{1,0:T(1,128)}', space=vmem, size = 0x12000, scoped, tag = 'internal scratch']
  #allocation2 [shape = 'f32[44,64]{1,0:T(8,128)}', space=vmem, size = 0x6000, scoped, tag = 'scratch operand']
  #allocation3 [shape = 'f32[1]{0:T(128)S(6)}', space=smem, size = 0x200, scoped, tag = 'scoped memory for tpu_custom_call.1']
  %s0 = inlined_call_operand.<no memory space> [shape: f32[1], index: 0, kind: input, shape index: {}]
  %s1 = inlined_call_operand.vmem [shape: f32[2,16,64], index: 1, kind: input, shape index: {}]
  %s2 = inlined_call_operand.vmem [shape: f32[2,16,64], index: 2, kind: input, shape index: {}]
  %s3 = inlined_call_operand.hbm [shape: f32[9,64,64], index: 3, kind: input, shape index: {}]
  %s4 = inlined_call_operand.vmem [shape: f32[2,11,16], index: 4, kind: input, shape index: {}]
  %s5 = inlined_call_operand.vmem [shape: f32[2,11,1], index: 5, kind: input, shape index: {}]
  %s6 = inlined_call_operand.vmem [shape: f32[2,11,1], index: 6, kind: input, shape index: {}]
  %s7 = inlined_call_operand.vmem [shape: f32[2,11,9], index: 7, kind: input, shape index: {}]
  %s8 = inlined_call_operand.vmem [shape: f32[2,11,1], index: 8, kind: input, shape index: {}]
  %s9 = inlined_call_operand.vmem [shape: f32[2,11,1], index: 9, kind: input, shape index: {}]
  %s10 = inlined_call_operand.vmem [shape: f32[9,8,16], index: 10, kind: input, shape index: {}]
  %s11 = inlined_call_operand.vmem [shape: f32[9,8,16], index: 11, kind: input, shape index: {}]
  %s12 = inlined_call_operand.vmem [shape: f32[8,1], index: 12, kind: input, shape index: {}]
  %s13 = inlined_call_operand.vmem [shape: f32[8,1], index: 13, kind: input, shape index: {}]
  %s14 = inlined_call_operand.vmem [shape: f32[8,9], index: 14, kind: input, shape index: {}]
  %s15 = inlined_call_operand.vmem [shape: f32[8,1], index: 15, kind: input, shape index: {}]
  %s16 = inlined_call_operand.vmem [shape: f32[8,1], index: 16, kind: input, shape index: {}]
  %s17 = inlined_call_operand.vmem [shape: f32[2,8,1], index: 17, kind: input, shape index: {}]
  %s18 = inlined_call_operand.vmem [shape: f32[2,8,1], index: 18, kind: input, shape index: {}]
  %s19 = inlined_call_operand.hbm [shape: f32[2,16,64], index: 19, kind: output, shape index: {0}]
  %s20 = inlined_call_operand.hbm [shape: f32[2,16,64], index: 20, kind: output, shape index: {1}]
  %s21 = inlined_call_operand.hbm [shape: f32[2,16,64], index: 21, kind: output, shape index: {2}]
  %22 = xla_tuple %s19, %s20, %s21
  %s23 = sld [smem:[#allocation0]]
  $region129: #{tpu_custom_call.1} parent=0
    _
  %s25 = ssub.s32 1, %s23
  %s26 = scalar_select 0, %s25, %s23
  %27 = sst [smem:[#allocation3]] %s0
  $region1: #{tpu_custom_call.1} parent=0
    #allocation4 [shape = 'u8[294912]{0}', space=vmem, size = 0x48000, scoped, tag = 'input window, operand 3, single buffered']
    #allocation5 [shape = 's32[2]{0}', space=sflag, size = 0x8, scoped, tag = 'scoped memory for tpu_custom_call.1']
    #allocation6 [shape = 's32[2]{0}', space=sflag, size = 0x8, scoped, tag = 'scoped memory for tpu_custom_call.1']
    #allocation7 [shape = 'u8[16384]{0}', space=vmem, size = 0x4000, scoped, tag = 'output window, operand 0']
    #allocation8 [shape = 'u8[16384]{0}', space=vmem, size = 0x4000, scoped, tag = 'output window, operand 1']
    #allocation9 [shape = 's32[2]{0}', space=sflag, size = 0x8, scoped, tag = 'scoped memory for tpu_custom_call.1']
    #allocation10 [shape = 'u8[16384]{0}', space=vmem, size = 0x4000, scoped, tag = 'output window, operand 2']
    %28 = vsyncpa [#allocation5], 0
    %29 = vsyncpa [#allocation6], 0
    %s30 = scalar_lea.sflag [#allocation6], 1
    %31 = vsyncpa %s30, 0
    %32 = vsyncpa [#allocation9], 0
    %s33 = scalar_lea.sflag [#allocation9], 1
    %34 = vsyncpa %s33, 0
    loop: start=0, step=1, limit=4
    $region2: #{tpu_custom_call.1} parent=1 // loop_pre_header
      _
    $region3: #{tpu_custom_call.1} parent=1 // loop_header
      %s36 = sphi 0, %s40
      %p37 = scmp.ge.s32.totalorder %s36, 4
      %s44 = sphi 0, %s44
      %s46 = sphi 0, %s44
      %s47 = sphi 0, %s46
      %s61 = sphi 0, %s47
      %s67 = sphi 0, %s69
      %s70 = sphi 0, %s67
      %s71 = sphi 0, %s70
      %s87 = sphi 0, %s71
      %s93 = sphi 0, %s95
      %s96 = sphi 0, %s93
      %s97 = sphi 0, %s96
      %s113 = sphi 0, %s97
      %s117 = sphi 0, %s117
      %s119 = sphi 0, %s117
      %s120 = sphi 0, %s119
      %s134 = sphi 0, %s120
      %s138 = sphi 0, %s138
      %s140 = sphi 0, %s138
      %s141 = sphi 0, %s140
      %s155 = sphi 0, %s141
      %s159 = sphi 0, %s159
      %s161 = sphi 0, %s159
      %s162 = sphi 0, %s161
      %s176 = sphi 0, %s162
      %s180 = sphi 0, %s180
      %s182 = sphi 0, %s180
      %s183 = sphi 0, %s182
      %s197 = sphi 0, %s183
      %s201 = sphi 0, %s201
      %s203 = sphi 0, %s201
      %s204 = sphi 0, %s203
      %s218 = sphi 0, %s204
      %s222 = sphi 0, %s222
      %s224 = sphi 0, %s222
      %s225 = sphi 0, %s224
      %s239 = sphi 0, %s225
      %s243 = sphi 0, %s243
      %s245 = sphi 0, %s243
      %s246 = sphi 0, %s245
      %s260 = sphi 0, %s246
      %s264 = sphi 0, %s264
      %s266 = sphi 0, %s264
      %s267 = sphi 0, %s266
      %s281 = sphi 0, %s267
      %s285 = sphi 0, %s285
      %s287 = sphi 0, %s285
      %s288 = sphi 0, %s287
      %s302 = sphi 0, %s288
      %s306 = sphi 0, %s306
      %s308 = sphi 0, %s306
      %s309 = sphi 0, %s308
      %s323 = sphi 0, %s309
      %s327 = sphi 0, %s327
      %s329 = sphi 0, %s327
      %s330 = sphi 0, %s329
      %s344 = sphi 0, %s330
      %s348 = sphi 0, %s348
      %s350 = sphi 0, %s348
      %s351 = sphi 0, %s350
      %s365 = sphi 0, %s351
      %s369 = sphi 0, %s369
      %s371 = sphi 0, %s369
      %s372 = sphi 0, %s371
      %s386 = sphi 0, %s372
      %s390 = sphi 0, %s390
      %s392 = sphi 0, %s390
      %s393 = sphi 0, %s392
      %s407 = sphi 0, %s393
      %s411 = sphi 0, %s411
      %s413 = sphi 0, %s411
      %s414 = sphi 0, %s413
      %s428 = sphi 0, %s414
      %s432 = sphi 0, %s432
      %s434 = sphi 0, %s432
      %s435 = sphi 0, %s434
      %s449 = sphi 0, %s435
      %s455 = sphi 0, %s457
      %s458 = sphi 0, %s455
      %s459 = sphi 0, %s458
      %s475 = sphi 0, %s459
      %s481 = sphi 0, %s483
      %s484 = sphi 0, %s481
      %s485 = sphi 0, %s484
      %s501 = sphi 0, %s485
      %s507 = sphi 0, %s509
      %s510 = sphi 0, %s507
      %s511 = sphi 0, %s510
      %s527 = sphi 0, %s511
    $region4: #{tpu_custom_call.1} parent=1 // loop_header_branch
      %39 = sbr.rel (%p37) target = $region8
    $region5: #{tpu_custom_call.1} parent=1 // loop_body
      %s41 = ssub.s32 %s36, 1
      %s42 = ssub.s32 %s36, 2
      %s43 = sadd.s32 %s36, 1
      %s45 = sadd.s32 %s44, 1
      %p48 = scmp.eq.s32.totalorder %s36, 1
      %p49 = scmp.ne.s32.totalorder %s44, %s46
      %p50 = scmp.eq.s32.totalorder %s36, 0
      %p51 = por %p49, %p50
      %p52 = scmp.ne.s32.totalorder %s44, %s46
      %p53 = scmp.eq.s32.totalorder %s41, 1
      %p54 = por %p52, %p53
      %p55 = scmp.ne.s32.totalorder %s46, %s47
      %p56 = scmp.eq.s32.totalorder %s41, 0
      %p57 = por %p55, %p56
      %p58 = scmp.ne.s32.totalorder %s46, %s47
      %p59 = scmp.eq.s32.totalorder %s42, 1
      %p60 = por %p58, %p59
      %p62 = scmp.ne.s32.totalorder %s47, %s61
      %p63 = scmp.eq.s32.totalorder %s42, 0
      %p64 = por %p62, %p63
      %s65 = ssub.s32 %s36, %s43
      %p66 = scmp.eq.s32.totalorder %s65, 0
      %s68 = sadd.s32 %s67, 1
      %s69 = scalar_select %p66, %s67, %s68
      %p72 = pneg %p66
      %p73 = scmp.eq.s32.totalorder %s36, 1
      %p74 = por %p72, %p73
      %p75 = scmp.ne.s32.totalorder %s67, %s70
      %p76 = scmp.eq.s32.totalorder %s36, 0
      %p77 = por %p75, %p76
      %p78 = scmp.ne.s32.totalorder %s67, %s70
      %p79 = scmp.eq.s32.totalorder %s41, 1
      %p80 = por %p78, %p79
      %p81 = scmp.ne.s32.totalorder %s70, %s71
      %p82 = scmp.eq.s32.totalorder %s41, 0
      %p83 = por %p81, %p82
      %p84 = scmp.ne.s32.totalorder %s70, %s71
      %p85 = scmp.eq.s32.totalorder %s42, 1
      %p86 = por %p84, %p85
      %p88 = scmp.ne.s32.totalorder %s71, %s87
      %p89 = scmp.eq.s32.totalorder %s42, 0
      %p90 = por %p88, %p89
      %s91 = ssub.s32 %s36, %s43
      %p92 = scmp.eq.s32.totalorder %s91, 0
      %s94 = sadd.s32 %s93, 1
      %s95 = scalar_select %p92, %s93, %s94
      %p98 = pneg %p92
      %p99 = scmp.eq.s32.totalorder %s36, 1
      %p100 = por %p98, %p99
      %p101 = scmp.ne.s32.totalorder %s93, %s96
      %p102 = scmp.eq.s32.totalorder %s36, 0
      %p103 = por %p101, %p102
      %p104 = scmp.ne.s32.totalorder %s93, %s96
      %p105 = scmp.eq.s32.totalorder %s41, 1
      %p106 = por %p104, %p105
      %p107 = scmp.ne.s32.totalorder %s96, %s97
      %p108 = scmp.eq.s32.totalorder %s41, 0
      %p109 = por %p107, %p108
      %p110 = scmp.ne.s32.totalorder %s96, %s97
      %p111 = scmp.eq.s32.totalorder %s42, 1
      %p112 = por %p110, %p111
      %p114 = scmp.ne.s32.totalorder %s97, %s113
      %p115 = scmp.eq.s32.totalorder %s42, 0
      %p116 = por %p114, %p115
      %s118 = sadd.s32 %s117, 1
      %p121 = scmp.eq.s32.totalorder %s36, 1
      %p122 = scmp.ne.s32.totalorder %s117, %s119
      %p123 = scmp.eq.s32.totalorder %s36, 0
      %p124 = por %p122, %p123
      %p125 = scmp.ne.s32.totalorder %s117, %s119
      %p126 = scmp.eq.s32.totalorder %s41, 1
      %p127 = por %p125, %p126
      %p128 = scmp.ne.s32.totalorder %s119, %s120
      %p129 = scmp.eq.s32.totalorder %s41, 0
      %p130 = por %p128, %p129
      %p131 = scmp.ne.s32.totalorder %s119, %s120
      %p132 = scmp.eq.s32.totalorder %s42, 1
      %p133 = por %p131, %p132
      %p135 = scmp.ne.s32.totalorder %s120, %s134
      %p136 = scmp.eq.s32.totalorder %s42, 0
      %p137 = por %p135, %p136
      %s139 = sadd.s32 %s138, 1
      %p142 = scmp.eq.s32.totalorder %s36, 1
      %p143 = scmp.ne.s32.totalorder %s138, %s140
      %p144 = scmp.eq.s32.totalorder %s36, 0
      %p145 = por %p143, %p144
      %p146 = scmp.ne.s32.totalorder %s138, %s140
      %p147 = scmp.eq.s32.totalorder %s41, 1
      %p148 = por %p146, %p147
      %p149 = scmp.ne.s32.totalorder %s140, %s141
      %p150 = scmp.eq.s32.totalorder %s41, 0
      %p151 = por %p149, %p150
      %p152 = scmp.ne.s32.totalorder %s140, %s141
      %p153 = scmp.eq.s32.totalorder %s42, 1
      %p154 = por %p152, %p153
      %p156 = scmp.ne.s32.totalorder %s141, %s155
      %p157 = scmp.eq.s32.totalorder %s42, 0
      %p158 = por %p156, %p157
      %s160 = sadd.s32 %s159, 1
      %p163 = scmp.eq.s32.totalorder %s36, 1
      %p164 = scmp.ne.s32.totalorder %s159, %s161
      %p165 = scmp.eq.s32.totalorder %s36, 0
      %p166 = por %p164, %p165
      %p167 = scmp.ne.s32.totalorder %s159, %s161
      %p168 = scmp.eq.s32.totalorder %s41, 1
      %p169 = por %p167, %p168
      %p170 = scmp.ne.s32.totalorder %s161, %s162
      %p171 = scmp.eq.s32.totalorder %s41, 0
      %p172 = por %p170, %p171
      %p173 = scmp.ne.s32.totalorder %s161, %s162
      %p174 = scmp.eq.s32.totalorder %s42, 1
      %p175 = por %p173, %p174
      %p177 = scmp.ne.s32.totalorder %s162, %s176
      %p178 = scmp.eq.s32.totalorder %s42, 0
      %p179 = por %p177, %p178
      %s181 = sadd.s32 %s180, 1
      %p184 = scmp.eq.s32.totalorder %s36, 1
      %p185 = scmp.ne.s32.totalorder %s180, %s182
      %p186 = scmp.eq.s32.totalorder %s36, 0
      %p187 = por %p185, %p186
      %p188 = scmp.ne.s32.totalorder %s180, %s182
      %p189 = scmp.eq.s32.totalorder %s41, 1
      %p190 = por %p188, %p189
      %p191 = scmp.ne.s32.totalorder %s182, %s183
      %p192 = scmp.eq.s32.totalorder %s41, 0
      %p193 = por %p191, %p192
      %p194 = scmp.ne.s32.totalorder %s182, %s183
      %p195 = scmp.eq.s32.totalorder %s42, 1
      %p196 = por %p194, %p195
      %p198 = scmp.ne.s32.totalorder %s183, %s197
      %p199 = scmp.eq.s32.totalorder %s42, 0
      %p200 = por %p198, %p199
      %s202 = sadd.s32 %s201, 1
      %p205 = scmp.eq.s32.totalorder %s36, 1
      %p206 = scmp.ne.s32.totalorder %s201, %s203
      %p207 = scmp.eq.s32.totalorder %s36, 0
      %p208 = por %p206, %p207
      %p209 = scmp.ne.s32.totalorder %s201, %s203
      %p210 = scmp.eq.s32.totalorder %s41, 1
      %p211 = por %p209, %p210
      %p212 = scmp.ne.s32.totalorder %s203, %s204
      %p213 = scmp.eq.s32.totalorder %s41, 0
      %p214 = por %p212, %p213
      %p215 = scmp.ne.s32.totalorder %s203, %s204
      %p216 = scmp.eq.s32.totalorder %s42, 1
      %p217 = por %p215, %p216
      %p219 = scmp.ne.s32.totalorder %s204, %s218
      %p220 = scmp.eq.s32.totalorder %s42, 0
      %p221 = por %p219, %p220
      %s223 = sadd.s32 %s222, 1
      %p226 = scmp.eq.s32.totalorder %s36, 1
      %p227 = scmp.ne.s32.totalorder %s222, %s224
      %p228 = scmp.eq.s32.totalorder %s36, 0
      %p229 = por %p227, %p228
      %p230 = scmp.ne.s32.totalorder %s222, %s224
      %p231 = scmp.eq.s32.totalorder %s41, 1
      %p232 = por %p230, %p231
      %p233 = scmp.ne.s32.totalorder %s224, %s225
      %p234 = scmp.eq.s32.totalorder %s41, 0
      %p235 = por %p233, %p234
      %p236 = scmp.ne.s32.totalorder %s224, %s225
      %p237 = scmp.eq.s32.totalorder %s42, 1
      %p238 = por %p236, %p237
      %p240 = scmp.ne.s32.totalorder %s225, %s239
      %p241 = scmp.eq.s32.totalorder %s42, 0
      %p242 = por %p240, %p241
      %s244 = sadd.s32 %s243, 1
      %p247 = scmp.eq.s32.totalorder %s36, 1
      %p248 = scmp.ne.s32.totalorder %s243, %s245
      %p249 = scmp.eq.s32.totalorder %s36, 0
      %p250 = por %p248, %p249
      %p251 = scmp.ne.s32.totalorder %s243, %s245
      %p252 = scmp.eq.s32.totalorder %s41, 1
      %p253 = por %p251, %p252
      %p254 = scmp.ne.s32.totalorder %s245, %s246
      %p255 = scmp.eq.s32.totalorder %s41, 0
      %p256 = por %p254, %p255
      %p257 = scmp.ne.s32.totalorder %s245, %s246
      %p258 = scmp.eq.s32.totalorder %s42, 1
      %p259 = por %p257, %p258
      %p261 = scmp.ne.s32.totalorder %s246, %s260
      %p262 = scmp.eq.s32.totalorder %s42, 0
      %p263 = por %p261, %p262
      %s265 = sadd.s32 %s264, 1
      %p268 = scmp.eq.s32.totalorder %s36, 1
      %p269 = scmp.ne.s32.totalorder %s264, %s266
      %p270 = scmp.eq.s32.totalorder %s36, 0
      %p271 = por %p269, %p270
      %p272 = scmp.ne.s32.totalorder %s264, %s266
      %p273 = scmp.eq.s32.totalorder %s41, 1
      %p274 = por %p272, %p273
      %p275 = scmp.ne.s32.totalorder %s266, %s267
      %p276 = scmp.eq.s32.totalorder %s41, 0
      %p277 = por %p275, %p276
      %p278 = scmp.ne.s32.totalorder %s266, %s267
      %p279 = scmp.eq.s32.totalorder %s42, 1
      %p280 = por %p278, %p279
      %p282 = scmp.ne.s32.totalorder %s267, %s281
      %p283 = scmp.eq.s32.totalorder %s42, 0
      %p284 = por %p282, %p283
      %s286 = sadd.s32 %s285, 1
      %p289 = scmp.eq.s32.totalorder %s36, 1
      %p290 = scmp.ne.s32.totalorder %s285, %s287
      %p291 = scmp.eq.s32.totalorder %s36, 0
      %p292 = por %p290, %p291
      %p293 = scmp.ne.s32.totalorder %s285, %s287
      %p294 = scmp.eq.s32.totalorder %s41, 1
      %p295 = por %p293, %p294
      %p296 = scmp.ne.s32.totalorder %s287, %s288
      %p297 = scmp.eq.s32.totalorder %s41, 0
      %p298 = por %p296, %p297
      %p299 = scmp.ne.s32.totalorder %s287, %s288
      %p300 = scmp.eq.s32.totalorder %s42, 1
      %p301 = por %p299, %p300
      %p303 = scmp.ne.s32.totalorder %s288, %s302
      %p304 = scmp.eq.s32.totalorder %s42, 0
      %p305 = por %p303, %p304
      %s307 = sadd.s32 %s306, 1
      %p310 = scmp.eq.s32.totalorder %s36, 1
      %p311 = scmp.ne.s32.totalorder %s306, %s308
      %p312 = scmp.eq.s32.totalorder %s36, 0
      %p313 = por %p311, %p312
      %p314 = scmp.ne.s32.totalorder %s306, %s308
      %p315 = scmp.eq.s32.totalorder %s41, 1
      %p316 = por %p314, %p315
      %p317 = scmp.ne.s32.totalorder %s308, %s309
      %p318 = scmp.eq.s32.totalorder %s41, 0
      %p319 = por %p317, %p318
      %p320 = scmp.ne.s32.totalorder %s308, %s309
      %p321 = scmp.eq.s32.totalorder %s42, 1
      %p322 = por %p320, %p321
      %p324 = scmp.ne.s32.totalorder %s309, %s323
      %p325 = scmp.eq.s32.totalorder %s42, 0
      %p326 = por %p324, %p325
      %s328 = sadd.s32 %s327, 1
      %p331 = scmp.eq.s32.totalorder %s36, 1
      %p332 = scmp.ne.s32.totalorder %s327, %s329
      %p333 = scmp.eq.s32.totalorder %s36, 0
      %p334 = por %p332, %p333
      %p335 = scmp.ne.s32.totalorder %s327, %s329
      %p336 = scmp.eq.s32.totalorder %s41, 1
      %p337 = por %p335, %p336
      %p338 = scmp.ne.s32.totalorder %s329, %s330
      %p339 = scmp.eq.s32.totalorder %s41, 0
      %p340 = por %p338, %p339
      %p341 = scmp.ne.s32.totalorder %s329, %s330
      %p342 = scmp.eq.s32.totalorder %s42, 1
      %p343 = por %p341, %p342
      %p345 = scmp.ne.s32.totalorder %s330, %s344
      %p346 = scmp.eq.s32.totalorder %s42, 0
      %p347 = por %p345, %p346
      %s349 = sadd.s32 %s348, 1
      %p352 = scmp.eq.s32.totalorder %s36, 1
      %p353 = scmp.ne.s32.totalorder %s348, %s350
      %p354 = scmp.eq.s32.totalorder %s36, 0
      %p355 = por %p353, %p354
      %p356 = scmp.ne.s32.totalorder %s348, %s350
      %p357 = scmp.eq.s32.totalorder %s41, 1
      %p358 = por %p356, %p357
      %p359 = scmp.ne.s32.totalorder %s350, %s351
      %p360 = scmp.eq.s32.totalorder %s41, 0
      %p361 = por %p359, %p360
      %p362 = scmp.ne.s32.totalorder %s350, %s351
      %p363 = scmp.eq.s32.totalorder %s42, 1
      %p364 = por %p362, %p363
      %p366 = scmp.ne.s32.totalorder %s351, %s365
      %p367 = scmp.eq.s32.totalorder %s42, 0
      %p368 = por %p366, %p367
      %s370 = sadd.s32 %s369, 1
      %p373 = scmp.eq.s32.totalorder %s36, 1
      %p374 = scmp.ne.s32.totalorder %s369, %s371
      %p375 = scmp.eq.s32.totalorder %s36, 0
      %p376 = por %p374, %p375
      %p377 = scmp.ne.s32.totalorder %s369, %s371
      %p378 = scmp.eq.s32.totalorder %s41, 1
      %p379 = por %p377, %p378
      %p380 = scmp.ne.s32.totalorder %s371, %s372
      %p381 = scmp.eq.s32.totalorder %s41, 0
      %p382 = por %p380, %p381
      %p383 = scmp.ne.s32.totalorder %s371, %s372
      %p384 = scmp.eq.s32.totalorder %s42, 1
      %p385 = por %p383, %p384
      %p387 = scmp.ne.s32.totalorder %s372, %s386
      %p388 = scmp.eq.s32.totalorder %s42, 0
      %p389 = por %p387, %p388
      %s391 = sadd.s32 %s390, 1
      %p394 = scmp.eq.s32.totalorder %s36, 1
      %p395 = scmp.ne.s32.totalorder %s390, %s392
      %p396 = scmp.eq.s32.totalorder %s36, 0
      %p397 = por %p395, %p396
      %p398 = scmp.ne.s32.totalorder %s390, %s392
      %p399 = scmp.eq.s32.totalorder %s41, 1
      %p400 = por %p398, %p399
      %p401 = scmp.ne.s32.totalorder %s392, %s393
      %p402 = scmp.eq.s32.totalorder %s41, 0
      %p403 = por %p401, %p402
      %p404 = scmp.ne.s32.totalorder %s392, %s393
      %p405 = scmp.eq.s32.totalorder %s42, 1
      %p406 = por %p404, %p405
      %p408 = scmp.ne.s32.totalorder %s393, %s407
      %p409 = scmp.eq.s32.totalorder %s42, 0
      %p410 = por %p408, %p409
      %s412 = sadd.s32 %s411, 1
      %p415 = scmp.eq.s32.totalorder %s36, 1
      %p416 = scmp.ne.s32.totalorder %s411, %s413
      %p417 = scmp.eq.s32.totalorder %s36, 0
      %p418 = por %p416, %p417
      %p419 = scmp.ne.s32.totalorder %s411, %s413
      %p420 = scmp.eq.s32.totalorder %s41, 1
      %p421 = por %p419, %p420
      %p422 = scmp.ne.s32.totalorder %s413, %s414
      %p423 = scmp.eq.s32.totalorder %s41, 0
      %p424 = por %p422, %p423
      %p425 = scmp.ne.s32.totalorder %s413, %s414
      %p426 = scmp.eq.s32.totalorder %s42, 1
      %p427 = por %p425, %p426
      %p429 = scmp.ne.s32.totalorder %s414, %s428
      %p430 = scmp.eq.s32.totalorder %s42, 0
      %p431 = por %p429, %p430
      %s433 = sadd.s32 %s432, 1
      %p436 = scmp.eq.s32.totalorder %s36, 1
      %p437 = scmp.ne.s32.totalorder %s432, %s434
      %p438 = scmp.eq.s32.totalorder %s36, 0
      %p439 = por %p437, %p438
      %p440 = scmp.ne.s32.totalorder %s432, %s434
      %p441 = scmp.eq.s32.totalorder %s41, 1
      %p442 = por %p440, %p441
      %p443 = scmp.ne.s32.totalorder %s434, %s435
      %p444 = scmp.eq.s32.totalorder %s41, 0
      %p445 = por %p443, %p444
      %p446 = scmp.ne.s32.totalorder %s434, %s435
      %p447 = scmp.eq.s32.totalorder %s42, 1
      %p448 = por %p446, %p447
      %p450 = scmp.ne.s32.totalorder %s435, %s449
      %p451 = scmp.eq.s32.totalorder %s42, 0
      %p452 = por %p450, %p451
      %s453 = ssub.s32 %s36, %s43
      %p454 = scmp.eq.s32.totalorder %s453, 0
      %s456 = sadd.s32 %s455, 1
      %s457 = scalar_select %p454, %s455, %s456
      %p460 = pneg %p454
      %p461 = scmp.eq.s32.totalorder %s36, 1
      %p462 = por %p460, %p461
      %p463 = scmp.ne.s32.totalorder %s455, %s458
      %p464 = scmp.eq.s32.totalorder %s36, 0
      %p465 = por %p463, %p464
      %p466 = scmp.ne.s32.totalorder %s455, %s458
      %p467 = scmp.eq.s32.totalorder %s41, 1
      %p468 = por %p466, %p467
      %p469 = scmp.ne.s32.totalorder %s458, %s459
      %p470 = scmp.eq.s32.totalorder %s41, 0
      %p471 = por %p469, %p470
      %p472 = scmp.ne.s32.totalorder %s458, %s459
      %p473 = scmp.eq.s32.totalorder %s42, 1
      %p474 = por %p472, %p473
      %p476 = scmp.ne.s32.totalorder %s459, %s475
      %p477 = scmp.eq.s32.totalorder %s42, 0
      %p478 = por %p476, %p477
      %s479 = ssub.s32 %s36, %s43
      %p480 = scmp.eq.s32.totalorder %s479, 0
      %s482 = sadd.s32 %s481, 1
      %s483 = scalar_select %p480, %s481, %s482
      %p486 = pneg %p480
      %p487 = scmp.eq.s32.totalorder %s36, 1
      %p488 = por %p486, %p487
      %p489 = scmp.ne.s32.totalorder %s481, %s484
      %p490 = scmp.eq.s32.totalorder %s36, 0
      %p491 = por %p489, %p490
      %p492 = scmp.ne.s32.totalorder %s481, %s484
      %p493 = scmp.eq.s32.totalorder %s41, 1
      %p494 = por %p492, %p493
      %p495 = scmp.ne.s32.totalorder %s484, %s485
      %p496 = scmp.eq.s32.totalorder %s41, 0
      %p497 = por %p495, %p496
      %p498 = scmp.ne.s32.totalorder %s484, %s485
      %p499 = scmp.eq.s32.totalorder %s42, 1
      %p500 = por %p498, %p499
      %p502 = scmp.ne.s32.totalorder %s485, %s501
      %p503 = scmp.eq.s32.totalorder %s42, 0
      %p504 = por %p502, %p503
      %s505 = ssub.s32 %s36, %s43
      %p506 = scmp.eq.s32.totalorder %s505, 0
      %s508 = sadd.s32 %s507, 1
      %s509 = scalar_select %p506, %s507, %s508
      %p512 = pneg %p506
      %p513 = scmp.eq.s32.totalorder %s36, 1
      %p514 = por %p512, %p513
      %p515 = scmp.ne.s32.totalorder %s507, %s510
      %p516 = scmp.eq.s32.totalorder %s36, 0
      %p517 = por %p515, %p516
      %p518 = scmp.ne.s32.totalorder %s507, %s510
      %p519 = scmp.eq.s32.totalorder %s41, 1
      %p520 = por %p518, %p519
      %p521 = scmp.ne.s32.totalorder %s510, %s511
      %p522 = scmp.eq.s32.totalorder %s41, 0
      %p523 = por %p521, %p522
      %p524 = scmp.ne.s32.totalorder %s510, %s511
      %p525 = scmp.eq.s32.totalorder %s42, 1
      %p526 = por %p524, %p525
      %p528 = scmp.ne.s32.totalorder %s511, %s527
      %p529 = scmp.eq.s32.totalorder %s42, 0
      %p530 = por %p528, %p529
      %p531 = scmp.le.s32.totalorder 1, %s36
      %p532 = scmp.lt.s32.totalorder %s36, 3
      %p533 = pnand %p531, %p532
      %p534 = pneg %p533
      // Predicated region
      $region9: #{tpu_custom_call.1} parent=5 // pred_check
        _
      $region10: #{tpu_custom_call.1} parent=5 // pred_check_branch
        %536 = sbr.rel (%p533) target = $region12
      $region11: #{tpu_custom_call.1} parent=5 // pred_region
        %s537 = ssub.s32 %s36, 1
        // Predicated region
        $region13: #{tpu_custom_call.1} parent=11 // pred_check
          %p538 = pneg %p57
        $region14: #{tpu_custom_call.1} parent=11 // pred_check_branch
          %540 = sbr.rel (%p538) target = $region16
        $region15: #{tpu_custom_call.1} parent=11 // pred_region
          _
        $region16: #{tpu_custom_call.1} parent=11 // pred_fallthru
          _
        // Predicated region
        $region17: #{tpu_custom_call.1} parent=11 // pred_check
          %p541 = pneg %p130
        $region18: #{tpu_custom_call.1} parent=11 // pred_check_branch
          %543 = sbr.rel (%p541) target = $region20
        $region19: #{tpu_custom_call.1} parent=11 // pred_region
          %s545 = ssub.s32 9216, 9216
          %546 = vsyncadd [#allocation5], %s545
          %s547 = sshll.u32 [#allocation4], 4
          %s548 = int_to_ptr.vmem [resolvable:$true] %s547
          %553 = dma.hbm_to_vmem [thread:$0]  %s3, 9216, %s548, [#allocation5], 128, 128, 8
        $region20: #{tpu_custom_call.1} parent=11 // pred_fallthru
          _
        // Predicated region
        $region21: #{tpu_custom_call.1} parent=11 // pred_check
          %p554 = pneg %p151
        $region22: #{tpu_custom_call.1} parent=11 // pred_check_branch
          %556 = sbr.rel (%p554) target = $region24
        $region23: #{tpu_custom_call.1} parent=11 // pred_region
          _
        $region24: #{tpu_custom_call.1} parent=11 // pred_fallthru
          _
        // Predicated region
        $region25: #{tpu_custom_call.1} parent=11 // pred_check
          %p557 = pneg %p172
        $region26: #{tpu_custom_call.1} parent=11 // pred_check_branch
          %559 = sbr.rel (%p557) target = $region28
        $region27: #{tpu_custom_call.1} parent=11 // pred_region
          _
        $region28: #{tpu_custom_call.1} parent=11 // pred_fallthru
          _
        // Predicated region
        $region29: #{tpu_custom_call.1} parent=11 // pred_check
          %p560 = pneg %p193
        $region30: #{tpu_custom_call.1} parent=11 // pred_check_branch
          %562 = sbr.rel (%p560) target = $region32
        $region31: #{tpu_custom_call.1} parent=11 // pred_region
          _
        $region32: #{tpu_custom_call.1} parent=11 // pred_fallthru
          _
        // Predicated region
        $region33: #{tpu_custom_call.1} parent=11 // pred_check
          %p563 = pneg %p214
        $region34: #{tpu_custom_call.1} parent=11 // pred_check_branch
          %565 = sbr.rel (%p563) target = $region36
        $region35: #{tpu_custom_call.1} parent=11 // pred_region
          _
        $region36: #{tpu_custom_call.1} parent=11 // pred_fallthru
          _
        // Predicated region
        $region37: #{tpu_custom_call.1} parent=11 // pred_check
          %p566 = pneg %p235
        $region38: #{tpu_custom_call.1} parent=11 // pred_check_branch
          %568 = sbr.rel (%p566) target = $region40
        $region39: #{tpu_custom_call.1} parent=11 // pred_region
          _
        $region40: #{tpu_custom_call.1} parent=11 // pred_fallthru
          _
        // Predicated region
        $region41: #{tpu_custom_call.1} parent=11 // pred_check
          %p569 = pneg %p256
        $region42: #{tpu_custom_call.1} parent=11 // pred_check_branch
          %571 = sbr.rel (%p569) target = $region44
        $region43: #{tpu_custom_call.1} parent=11 // pred_region
          _
        $region44: #{tpu_custom_call.1} parent=11 // pred_fallthru
          _
        // Predicated region
        $region45: #{tpu_custom_call.1} parent=11 // pred_check
          %p572 = pneg %p277
        $region46: #{tpu_custom_call.1} parent=11 // pred_check_branch
          %574 = sbr.rel (%p572) target = $region48
        $region47: #{tpu_custom_call.1} parent=11 // pred_region
          _
        $region48: #{tpu_custom_call.1} parent=11 // pred_fallthru
          _
        // Predicated region
        $region49: #{tpu_custom_call.1} parent=11 // pred_check
          %p575 = pneg %p298
        $region50: #{tpu_custom_call.1} parent=11 // pred_check_branch
          %577 = sbr.rel (%p575) target = $region52
        $region51: #{tpu_custom_call.1} parent=11 // pred_region
          _
        $region52: #{tpu_custom_call.1} parent=11 // pred_fallthru
          _
        // Predicated region
        $region53: #{tpu_custom_call.1} parent=11 // pred_check
          %p578 = pneg %p319
        $region54: #{tpu_custom_call.1} parent=11 // pred_check_branch
          %580 = sbr.rel (%p578) target = $region56
        $region55: #{tpu_custom_call.1} parent=11 // pred_region
          _
        $region56: #{tpu_custom_call.1} parent=11 // pred_fallthru
          _
        // Predicated region
        $region57: #{tpu_custom_call.1} parent=11 // pred_check
          %p581 = pneg %p340
        $region58: #{tpu_custom_call.1} parent=11 // pred_check_branch
          %583 = sbr.rel (%p581) target = $region60
        $region59: #{tpu_custom_call.1} parent=11 // pred_region
          _
        $region60: #{tpu_custom_call.1} parent=11 // pred_fallthru
          _
        // Predicated region
        $region61: #{tpu_custom_call.1} parent=11 // pred_check
          %p584 = pneg %p361
        $region62: #{tpu_custom_call.1} parent=11 // pred_check_branch
          %586 = sbr.rel (%p584) target = $region64
        $region63: #{tpu_custom_call.1} parent=11 // pred_region
          _
        $region64: #{tpu_custom_call.1} parent=11 // pred_fallthru
          _
        // Predicated region
        $region65: #{tpu_custom_call.1} parent=11 // pred_check
          %p587 = pneg %p382
        $region66: #{tpu_custom_call.1} parent=11 // pred_check_branch
          %589 = sbr.rel (%p587) target = $region68
        $region67: #{tpu_custom_call.1} parent=11 // pred_region
          _
        $region68: #{tpu_custom_call.1} parent=11 // pred_fallthru
          _
        // Predicated region
        $region69: #{tpu_custom_call.1} parent=11 // pred_check
          %p590 = pneg %p403
        $region70: #{tpu_custom_call.1} parent=11 // pred_check_branch
          %592 = sbr.rel (%p590) target = $region72
        $region71: #{tpu_custom_call.1} parent=11 // pred_region
          _
        $region72: #{tpu_custom_call.1} parent=11 // pred_fallthru
          _
        // Predicated region
        $region73: #{tpu_custom_call.1} parent=11 // pred_check
          %p593 = pneg %p424
        $region74: #{tpu_custom_call.1} parent=11 // pred_check_branch
          %595 = sbr.rel (%p593) target = $region76
        $region75: #{tpu_custom_call.1} parent=11 // pred_region
          _
        $region76: #{tpu_custom_call.1} parent=11 // pred_fallthru
          _
        // Predicated region
        $region77: #{tpu_custom_call.1} parent=11 // pred_check
          %p596 = pneg %p445
        $region78: #{tpu_custom_call.1} parent=11 // pred_check_branch
          %598 = sbr.rel (%p596) target = $region80
        $region79: #{tpu_custom_call.1} parent=11 // pred_region
          _
        $region80: #{tpu_custom_call.1} parent=11 // pred_fallthru
          _
      $region12: #{tpu_custom_call.1} parent=5 // pred_fallthru
        _
      %p599 = scmp.lt.s32.totalorder %s36, 2
      // Predicated region
      $region81: #{tpu_custom_call.1} parent=5 // pred_check
        %p600 = pneg %p599
      $region82: #{tpu_custom_call.1} parent=5 // pred_check_branch
        %602 = sbr.rel (%p600) target = $region84
      $region83: #{tpu_custom_call.1} parent=5 // pred_region
        // Predicated region
        $region85: #{tpu_custom_call.1} parent=83 // pred_check
          %p603 = pneg %p77
        $region86: #{tpu_custom_call.1} parent=83 // pred_check_branch
          %605 = sbr.rel (%p603) target = $region88
        $region87: #{tpu_custom_call.1} parent=83 // pred_region
          %p606 = scmp.lt.s32.totalorder %s36, 1
          %s607 = scalar_select %p606, %s36, 1
          %s608 = smul.addr %s607, 2
          %s609 = smul.addr %s608, 8
          %s610 = scalar_lea.vmem %s1, %s609
        $region88: #{tpu_custom_call.1} parent=83 // pred_fallthru
          _
        // Predicated region
        $region89: #{tpu_custom_call.1} parent=83 // pred_check
          %p611 = pneg %p103
        $region90: #{tpu_custom_call.1} parent=83 // pred_check_branch
          %613 = sbr.rel (%p611) target = $region92
        $region91: #{tpu_custom_call.1} parent=83 // pred_region
          %p614 = scmp.lt.s32.totalorder %s36, 1
          %s615 = scalar_select %p614, %s36, 1
          %s616 = smul.addr %s615, 2
          %s617 = smul.addr %s616, 8
          %s618 = scalar_lea.vmem %s2, %s617
        $region92: #{tpu_custom_call.1} parent=83 // pred_fallthru
          _
      $region84: #{tpu_custom_call.1} parent=5 // pred_fallthru
        _
      %p619 = scmp.le.s32.totalorder 1, %s36
      %p620 = scmp.lt.s32.totalorder %s36, 3
      %p621 = pnand %p619, %p620
      %p622 = pneg %p621
      // Predicated region
      $region93: #{tpu_custom_call.1} parent=5 // pred_check
        _
      $region94: #{tpu_custom_call.1} parent=5 // pred_check_branch
        %624 = sbr.rel (%p621) target = $region96
      $region95: #{tpu_custom_call.1} parent=5 // pred_region
        %s625 = ssub.s32 %s36, 1
        // Predicated region
        $region97: #{tpu_custom_call.1} parent=95 // pred_check
          %p626 = pneg %p130
        $region98: #{tpu_custom_call.1} parent=95 // pred_check_branch
          %628 = sbr.rel (%p626) target = $region100
        $region99: #{tpu_custom_call.1} parent=95 // pred_region
          %629 = dma.done [#allocation5], 9216
        $region100: #{tpu_custom_call.1} parent=95 // pred_fallthru
          _
        %p630 = pneg %p57
        %p631 = pneg %p54
        %p632 = scmp.lt.s32.totalorder %s41, 1
        %s633 = scalar_select %p632, %s41, 1
        %s634 = smul.addr %s633, 2
        %s635 = smul.addr %s634, 8
        %s636 = scalar_lea.vmem %s1, %s635
        %p637 = pneg %p83
        %p638 = pneg %p80
        %p639 = scmp.lt.s32.totalorder %s41, 1
        %s640 = scalar_select %p639, %s41, 1
        %s641 = smul.addr %s640, 2
        %s642 = smul.addr %s641, 8
        %s643 = scalar_lea.vmem %s2, %s642
        %p644 = pneg %p109
        %p645 = pneg %p106
        %p646 = pneg %p130
        %p647 = pneg %p127
        %p648 = pneg %p151
        %p649 = pneg %p148
        %p650 = pneg %p172
        %p651 = pneg %p169
        %p652 = pneg %p193
        %p653 = pneg %p190
        %p654 = pneg %p214
        %p655 = pneg %p211
        %p656 = pneg %p235
        %p657 = pneg %p232
        %p658 = pneg %p256
        %p659 = pneg %p253
        %p660 = pneg %p277
        %p661 = pneg %p274
        %p662 = pneg %p298
        %p663 = pneg %p295
        %p664 = pneg %p319
        %p665 = pneg %p316
        %p666 = pneg %p340
        %p667 = pneg %p337
        %p668 = pneg %p361
        %p669 = pneg %p358
        %p670 = pneg %p382
        %p671 = pneg %p379
        %p672 = pneg %p403
        %p673 = pneg %p400
        %p674 = pneg %p424
        %p675 = pneg %p421
        %p676 = pneg %p445
        %p677 = pneg %p442
        %p678 = pneg %p471
        %p679 = pneg %p468
        %s680 = sand.u32 %s458, 1
        %s681 = scalar_lea.sflag [#allocation6], %s680
        %s682 = sand.u32 %s458, 1
        %s683 = smul.addr %s682, 16
        %s684 = scalar_lea.vmem [#allocation7], %s683
        %p685 = pneg %p497
        %p686 = pneg %p494
        %s687 = sand.u32 %s41, 1
        %s688 = scalar_lea.sflag [#allocation9], %s687
        %s689 = sand.u32 %s484, 1
        %s690 = smul.addr %s689, 16
        %s691 = scalar_lea.vmem [#allocation8], %s690
        %p692 = pneg %p523
        %p693 = pneg %p520
        %s694 = sand.u32 %s41, 1
        %s695 = scalar_lea.sflag [#allocation9], %s694
        %s696 = sand.u32 %s510, 1
        %s697 = smul.addr %s696, 16
        %s698 = scalar_lea.vmem [#allocation10], %s697
        %p699 = scmp.lt.s32.totalorder %s41, 1
        %s700 = scalar_select %p699, %s41, 1
        %s701 = smul.addr %s700, 2
        %s702 = smul.addr %s701, 8
        %s703 = scalar_lea.vmem %s1, %s702
        %p704 = scmp.lt.s32.totalorder %s41, 1
        %s705 = scalar_select %p704, %s41, 1
        %s706 = smul.addr %s705, 2
        %s707 = smul.addr %s706, 8
        %s708 = scalar_lea.vmem %s2, %s707
        %s709 = sld [smem:[#allocation3]]
        %v710 = vld [vmem:[%s703] sm:$0xff]
        %v711 = vld [vmem:[%s703 + $0x8] sm:$0xff]
        %v712 = vld [vmem:[%s708] sm:$0xff]
        %v713 = vld [vmem:[%s708 + $0x8] sm:$0xff]
        %v714 = vld [vmem:[%s4] sm:$0xff]
        %v715 = vld [vmem:[%s4 + $0x8] sm:$0x7]
        %vm716 = vcmask 130048
        %v718 = vsel %vm716, %v714, 0
        %v721 = vsel %vm716, %v715, 0
        %723 = vmatprep.subr.mxu0 0.0
        %724 = vmatpush1.msra.mxu0 %v710
        %725 = vmatprep.subr.mxu0 0.0
        %726 = vmatpush1.msra.mxu0 %v711
        %727 = vmatprep.subr.mxu0 0.0
        %728 = vmatpush1.msra.mxu0 0.0
        %729 = vmatprep.subr.mxu0 0.0
        %730 = vmatpush1.msra.mxu0 0.0
        %731 = vmatprep.subr.mxu0 0.0
        %732 = vmatpush1.msra.mxu0 0.0
        %733 = vmatprep.subr.mxu0 0.0
        %734 = vmatpush1.msra.mxu0 0.0
        %735 = vmatprep.subr.mxu0 0.0
        %736 = vmatpush1.msra.mxu0 0.0
        %737 = vmatprep.subr.mxu0 0.0
        %738 = vmatpush1.msra.mxu0 0.0
        %739 = vmatprep.subr.mxu0 0.0
        %740 = vmatpush1.msra.mxu0 0.0
        %741 = vmatprep.subr.mxu0 0.0
        %742 = vmatpush1.msra.mxu0 0.0
        %743 = vmatprep.subr.mxu0 0.0
        %744 = vmatpush1.msra.mxu0 0.0
        %745 = vmatprep.subr.mxu0 0.0
        %746 = vmatpush1.msra.mxu0 0.0
        %747 = vmatprep.subr.mxu0 0.0
        %748 = vmatpush1.msra.mxu0 0.0
        %749 = vmatprep.subr.mxu0 0.0
        %750 = vmatpush1.msra.mxu0 0.0
        %751 = vmatprep.subr.mxu0 0.0
        %752 = vmatpush1.msra.mxu0 0.0
        %753 = vmatprep.subr.mxu0 0.0
        %754 = vmatpush1.msra.mxu0 0.0
        %755 = vmatprep.subr.mxu0 0.0
        %756 = vmatpush1.msra.mxu0 0.0
        %757 = vmatprep.subr.mxu0 0.0
        %758 = vmatpush1.msra.mxu0 0.0
        %759 = vmatprep.subr.mxu0 0.0
        %760 = vmatpush1.msra.mxu0 0.0
        %761 = vmatprep.subr.mxu0 0.0
        %762 = vmatpush1.msra.mxu0 0.0
        %763 = vmatprep.subr.mxu0 0.0
        %764 = vmatpush1.msra.mxu0 0.0
        %765 = vmatprep.subr.mxu0 0.0
        %766 = vmatpush1.msra.mxu0 0.0
        %767 = vmatprep.subr.mxu0 0.0
        %768 = vmatpush1.msra.mxu0 0.0
        %769 = vmatprep.subr.mxu0 0.0
        %770 = vmatpush1.msra.mxu0 0.0
        %771 = vmatprep.subr.mxu0 0.0
        %772 = vmatpush1.msra.mxu0 0.0
        %773 = vmatprep.subr.mxu0 0.0
        %774 = vmatpush1.msra.mxu0 0.0
        %775 = vmatprep.subr.mxu0 0.0
        %776 = vmatpush1.msra.mxu0 0.0
        %777 = vmatprep.subr.mxu0 0.0
        %778 = vmatpush1.msra.mxu0 0.0
        %779 = vmatprep.subr.mxu0 0.0
        %780 = vmatpush1.msra.mxu0 0.0
        %781 = vmatprep.subr.mxu0 0.0
        %782 = vmatpush1.msra.mxu0 0.0
        %783 = vmatprep.subr.mxu0 0.0
        %784 = vmatpush1.msra.mxu0 0.0
        %785 = vmatprep.subr.mxu0 0.0
        %786 = vmatpush1.msra.mxu0 0.0
        %787 = vmatprep.mubr.f32.mxu0 0.0
        %788 = vmatmul.mubr.f32.gmra.mrb[0].mxu0 %v718
        %v789 = vpop.f32.mrb[0].mxu0
        %v790 = vadd.f32 0.0, %v789
        %v791 = vpop.f32.mrb[0].mxu0
        %792 = vmatprep.mubr.f32.mxu0 0.0
        %793 = vmatmul.mubr.f32.gmra.mrb[0].mxu0 %v721
        %v794 = vpop.f32.mrb[0].mxu0
        %v795 = vadd.f32 0.0, %v794
        %v796 = vpop.f32.mrb[0].mxu0
        %797 = vdwg.mxu0
        %v798 = vld [vmem:[%s5] sm:$0xff]
        %v799 = vld [vmem:[%s5 + $0x8] sm:$0x7]
        %801 = vset.pattern.permute.xlu0 0
        %802 = vperm.xlu0 %801, %v798
        %v803 = vpop.permute.xlu0 %802
        %806 = vset.pattern.permute.xlu0 0
        %807 = vperm.xlu0 %806, %v799
        %v808 = vpop.permute.xlu0 %807
        %v810 = vmul.f32 %v790, %v803
        %v811 = vmul.f32 %v795, %v808
        %v812 = vld [vmem:[%s6] sm:$0xff]
        %v813 = vld [vmem:[%s6 + $0x8] sm:$0x7]
        %815 = vset.pattern.permute.xlu0 0
        %816 = vperm.xlu0 %815, %v812
        %v817 = vpop.permute.xlu0 %816
        %820 = vset.pattern.permute.xlu0 0
        %821 = vperm.xlu0 %820, %v813
        %v822 = vpop.permute.xlu0 %821
        %v824 = vadd.f32 %v810, %v817
        %v825 = vadd.f32 %v811, %v822
        %v826 = vmax.f32 %v824, 0.0
        %v827 = vmax.f32 %v825, 0.0
        %v828 = vld [vmem:[%s7] sm:$0xff]
        %v829 = vld [vmem:[%s7 + $0x8] sm:$0x7]
        %v830 = vld [vmem:[#allocation4] sm:$0xff]
        %v831 = vld [vmem:[#allocation4 + $0x8] sm:$0xff]
        %v832 = vld [vmem:[#allocation4 + $0x10] sm:$0xff]
        %v833 = vld [vmem:[#allocation4 + $0x18] sm:$0xff]
        %v834 = vld [vmem:[#allocation4 + $0x20] sm:$0xff]
        %v835 = vld [vmem:[#allocation4 + $0x28] sm:$0xff]
        %v836 = vld [vmem:[#allocation4 + $0x30] sm:$0xff]
        %v837 = vld [vmem:[#allocation4 + $0x38] sm:$0xff]
        %vm838 = vcmask 523264
        %v840 = vsel %vm838, %v826, 0
        %v843 = vsel %vm838, %v827, 0
        %845 = vmatprep.subr.mxu0 0.0
        %846 = vmatpush1.msra.mxu0 %v830
        %847 = vmatprep.subr.mxu0 0.0
        %848 = vmatpush1.msra.mxu0 %v831
        %849 = vmatprep.subr.mxu0 0.0
        %850 = vmatpush1.msra.mxu0 %v832
        %851 = vmatprep.subr.mxu0 0.0
        %852 = vmatpush1.msra.mxu0 %v833
        %853 = vmatprep.subr.mxu0 0.0
        %854 = vmatpush1.msra.mxu0 %v834
        %855 = vmatprep.subr.mxu0 0.0
        %856 = vmatpush1.msra.mxu0 %v835
        %857 = vmatprep.subr.mxu0 0.0
        %858 = vmatpush1.msra.mxu0 %v836
        %859 = vmatprep.subr.mxu0 0.0
        %860 = vmatpush1.msra.mxu0 %v837
        %861 = vmatprep.subr.mxu0 0.0
        %862 = vmatpush1.msra.mxu0 0.0
        %863 = vmatprep.subr.mxu0 0.0
        %864 = vmatpush1.msra.mxu0 0.0
        %865 = vmatprep.subr.mxu0 0.0
        %866 = vmatpush1.msra.mxu0 0.0
        %867 = vmatprep.subr.mxu0 0.0
        %868 = vmatpush1.msra.mxu0 0.0
        %869 = vmatprep.subr.mxu0 0.0
        %870 = vmatpush1.msra.mxu0 0.0
        %871 = vmatprep.subr.mxu0 0.0
        %872 = vmatpush1.msra.mxu0 0.0
        %873 = vmatprep.subr.mxu0 0.0
        %874 = vmatpush1.msra.mxu0 0.0
        %875 = vmatprep.subr.mxu0 0.0
        %876 = vmatpush1.msra.mxu0 0.0
        %877 = vmatprep.subr.mxu0 0.0
        %878 = vmatpush1.msra.mxu0 0.0
        %879 = vmatprep.subr.mxu0 0.0
        %880 = vmatpush1.msra.mxu0 0.0
        %881 = vmatprep.subr.mxu0 0.0
        %882 = vmatpush1.msra.mxu0 0.0
        %883 = vmatprep.subr.mxu0 0.0
        %884 = vmatpush1.msra.mxu0 0.0
        %885 = vmatprep.subr.mxu0 0.0
        %886 = vmatpush1.msra.mxu0 0.0
        %887 = vmatprep.subr.mxu0 0.0
        %888 = vmatpush1.msra.mxu0 0.0
        %889 = vmatprep.subr.mxu0 0.0
        %890 = vmatpush1.msra.mxu0 0.0
        %891 = vmatprep.subr.mxu0 0.0
        %892 = vmatpush1.msra.mxu0 0.0
        %893 = vmatprep.subr.mxu0 0.0
        %894 = vmatpush1.msra.mxu0 0.0
        %895 = vmatprep.subr.mxu0 0.0
        %896 = vmatpush1.msra.mxu0 0.0
        %897 = vmatprep.subr.mxu0 0.0
        %898 = vmatpush1.msra.mxu0 0.0
        %899 = vmatprep.subr.mxu0 0.0
        %900 = vmatpush1.msra.mxu0 0.0
        %901 = vmatprep.subr.mxu0 0.0
        %902 = vmatpush1.msra.mxu0 0.0
        %903 = vmatprep.subr.mxu0 0.0
        %904 = vmatpush1.msra.mxu0 0.0
        %905 = vmatprep.subr.mxu0 0.0
        %906 = vmatpush1.msra.mxu0 0.0
        %907 = vmatprep.subr.mxu0 0.0
        %908 = vmatpush1.msra.mxu0 0.0
        %909 = vmatprep.mubr.f32.mxu0 0.0
        %910 = vmatmul.mubr.f32.gmra.mrb[0].mxu0 %v840
        %v911 = vpop.f32.mrb[0].mxu0
        %v912 = vadd.f32 0.0, %v911
        %v913 = vpop.f32.mrb[0].mxu0
        %914 = vmatprep.mubr.f32.mxu0 0.0
        %915 = vmatmul.mubr.f32.gmra.mrb[0].mxu0 %v843
        %v916 = vpop.f32.mrb[0].mxu0
        %v917 = vadd.f32 0.0, %v916
        %v918 = vpop.f32.mrb[0].mxu0
        %919 = vdwg.mxu0
        %921 = vset.pattern.permute.xlu0 0
        %922 = vperm.xlu0 %921, %v828
        %v923 = vpop.permute.xlu0 %922
        %926 = vset.pattern.permute.xlu0 0
        %927 = vperm.xlu0 %926, %v829
        %v928 = vpop.permute.xlu0 %927
        %v930 = vmul.f32 %v912, %v923
        %v931 = vmul.f32 %v917, %v928
        %v932 = vadd.f32 %v930, 0.0
        %v933 = vadd.f32 %v931, 0.0
        %s934 = scalar_lea.vmem [#allocation4], 64
        %v935 = vld [vmem:[%s934] sm:$0xff]
        %v936 = vld [vmem:[%s934 + $0x8] sm:$0xff]
        %v937 = vld [vmem:[%s934 + $0x10] sm:$0xff]
        %v938 = vld [vmem:[%s934 + $0x18] sm:$0xff]
        %v939 = vld [vmem:[%s934 + $0x20] sm:$0xff]
        %v940 = vld [vmem:[%s934 + $0x28] sm:$0xff]
        %v941 = vld [vmem:[%s934 + $0x30] sm:$0xff]
        %v942 = vld [vmem:[%s934 + $0x38] sm:$0xff]
        %943 = vmatprep.subr.mxu0 0.0
        %944 = vmatpush1.msra.mxu0 %v935
        %945 = vmatprep.subr.mxu0 0.0
        %946 = vmatpush1.msra.mxu0 %v936
        %947 = vmatprep.subr.mxu0 0.0
        %948 = vmatpush1.msra.mxu0 %v937
        %949 = vmatprep.subr.mxu0 0.0
        %950 = vmatpush1.msra.mxu0 %v938
        %951 = vmatprep.subr.mxu0 0.0
        %952 = vmatpush1.msra.mxu0 %v939
        %953 = vmatprep.subr.mxu0 0.0
        %954 = vmatpush1.msra.mxu0 %v940
        %955 = vmatprep.subr.mxu0 0.0
        %956 = vmatpush1.msra.mxu0 %v941
        %957 = vmatprep.subr.mxu0 0.0
        %958 = vmatpush1.msra.mxu0 %v942
        %959 = vmatprep.subr.mxu0 0.0
        %960 = vmatpush1.msra.mxu0 0.0
        %961 = vmatprep.subr.mxu0 0.0
        %962 = vmatpush1.msra.mxu0 0.0
        %963 = vmatprep.subr.mxu0 0.0
        %964 = vmatpush1.msra.mxu0 0.0
        %965 = vmatprep.subr.mxu0 0.0
        %966 = vmatpush1.msra.mxu0 0.0
        %967 = vmatprep.subr.mxu0 0.0
        %968 = vmatpush1.msra.mxu0 0.0
        %969 = vmatprep.subr.mxu0 0.0
        %970 = vmatpush1.msra.mxu0 0.0
        %971 = vmatprep.subr.mxu0 0.0
        %972 = vmatpush1.msra.mxu0 0.0
        %973 = vmatprep.subr.mxu0 0.0
        %974 = vmatpush1.msra.mxu0 0.0
        %975 = vmatprep.subr.mxu0 0.0
        %976 = vmatpush1.msra.mxu0 0.0
        %977 = vmatprep.subr.mxu0 0.0
        %978 = vmatpush1.msra.mxu0 0.0
        %979 = vmatprep.subr.mxu0 0.0
        %980 = vmatpush1.msra.mxu0 0.0
        %981 = vmatprep.subr.mxu0 0.0
        %982 = vmatpush1.msra.mxu0 0.0
        %983 = vmatprep.subr.mxu0 0.0
        %984 = vmatpush1.msra.mxu0 0.0
        %985 = vmatprep.subr.mxu0 0.0
        %986 = vmatpush1.msra.mxu0 0.0
        %987 = vmatprep.subr.mxu0 0.0
        %988 = vmatpush1.msra.mxu0 0.0
        %989 = vmatprep.subr.mxu0 0.0
        %990 = vmatpush1.msra.mxu0 0.0
        %991 = vmatprep.subr.mxu0 0.0
        %992 = vmatpush1.msra.mxu0 0.0
        %993 = vmatprep.subr.mxu0 0.0
        %994 = vmatpush1.msra.mxu0 0.0
        %995 = vmatprep.subr.mxu0 0.0
        %996 = vmatpush1.msra.mxu0 0.0
        %997 = vmatprep.subr.mxu0 0.0
        %998 = vmatpush1.msra.mxu0 0.0
        %999 = vmatprep.subr.mxu0 0.0
        %1000 = vmatpush1.msra.mxu0 0.0
        %1001 = vmatprep.subr.mxu0 0.0
        %1002 = vmatpush1.msra.mxu0 0.0
        %1003 = vmatprep.subr.mxu0 0.0
        %1004 = vmatpush1.msra.mxu0 0.0
        %1005 = vmatprep.subr.mxu0 0.0
        %1006 = vmatpush1.msra.mxu0 0.0
        %1007 = vmatprep.mubr.f32.mxu0 0.0
        %1008 = vmatmul.mubr.f32.gmra.mrb[0].mxu0 %v840
        %v1009 = vpop.f32.mrb[0].mxu0
        %v1010 = vadd.f32 0.0, %v1009
        %v1011 = vpop.f32.mrb[0].mxu0
        %1012 = vmatprep.mubr.f32.mxu0 0.0
        %1013 = vmatmul.mubr.f32.gmra.mrb[0].mxu0 %v843
        %v1014 = vpop.f32.mrb[0].mxu0
        %v1015 = vadd.f32 0.0, %v1014
        %v1016 = vpop.f32.mrb[0].mxu0
        %1017 = vdwg.mxu0
        %1018 = vset.pattern.permute.xlu0 1
        %1019 = vperm.xlu0 %1018, %v828
        %v1020 = vpop.permute.xlu0 %1019
        %1022 = vset.pattern.permute.xlu0 1
        %1023 = vperm.xlu0 %1022, %v829
        %v1024 = vpop.permute.xlu0 %1023
        %v1026 = vmul.f32 %v1010, %v1020
        %v1027 = vmul.f32 %v1015, %v1024
        %v1028 = vadd.f32 %v932, %v1026
        %v1029 = vadd.f32 %v933, %v1027
        %s1030 = scalar_lea.vmem [#allocation4], 128
        %v1031 = vld [vmem:[%s1030] sm:$0xff]
        %v1032 = vld [vmem:[%s1030 + $0x8] sm:$0xff]
        %v1033 = vld [vmem:[%s1030 + $0x10] sm:$0xff]
        %v1034 = vld [vmem:[%s1030 + $0x18] sm:$0xff]
        %v1035 = vld [vmem:[%s1030 + $0x20] sm:$0xff]
        %v1036 = vld [vmem:[%s1030 + $0x28] sm:$0xff]
        %v1037 = vld [vmem:[%s1030 + $0x30] sm:$0xff]
        %v1038 = vld [vmem:[%s1030 + $0x38] sm:$0xff]
        %1039 = vmatprep.subr.mxu0 0.0
        %1040 = vmatpush1.msra.mxu0 %v1031
        %1041 = vmatprep.subr.mxu0 0.0
        %1042 = vmatpush1.msra.mxu0 %v1032
        %1043 = vmatprep.subr.mxu0 0.0
        %1044 = vmatpush1.msra.mxu0 %v1033
        %1045 = vmatprep.subr.mxu0 0.0
        %1046 = vmatpush1.msra.mxu0 %v1034
        %1047 = vmatprep.subr.mxu0 0.0
        %1048 = vmatpush1.msra.mxu0 %v1035
        %1049 = vmatprep.subr.mxu0 0.0
        %1050 = vmatpush1.msra.mxu0 %v1036
        %1051 = vmatprep.subr.mxu0 0.0
        %1052 = vmatpush1.msra.mxu0 %v1037
        %1053 = vmatprep.subr.mxu0 0.0
        %1054 = vmatpush1.msra.mxu0 %v1038
        %1055 = vmatprep.subr.mxu0 0.0
        %1056 = vmatpush1.msra.mxu0 0.0
        %1057 = vmatprep.subr.mxu0 0.0
        %1058 = vmatpush1.msra.mxu0 0.0
        %1059 = vmatprep.subr.mxu0 0.0
        %1060 = vmatpush1.msra.mxu0 0.0
        %1061 = vmatprep.subr.mxu0 0.0
        %1062 = vmatpush1.msra.mxu0 0.0
        %1063 = vmatprep.subr.mxu0 0.0
        %1064 = vmatpush1.msra.mxu0 0.0
        %1065 = vmatprep.subr.mxu0 0.0
        %1066 = vmatpush1.msra.mxu0 0.0
        %1067 = vmatprep.subr.mxu0 0.0
        %1068 = vmatpush1.msra.mxu0 0.0
        %1069 = vmatprep.subr.mxu0 0.0
        %1070 = vmatpush1.msra.mxu0 0.0
        %1071 = vmatprep.subr.mxu0 0.0
        %1072 = vmatpush1.msra.mxu0 0.0
        %1073 = vmatprep.subr.mxu0 0.0
        %1074 = vmatpush1.msra.mxu0 0.0
        %1075 = vmatprep.subr.mxu0 0.0
        %1076 = vmatpush1.msra.mxu0 0.0
        %1077 = vmatprep.subr.mxu0 0.0
        %1078 = vmatpush1.msra.mxu0 0.0
        %1079 = vmatprep.subr.mxu0 0.0
        %1080 = vmatpush1.msra.mxu0 0.0
        %1081 = vmatprep.subr.mxu0 0.0
        %1082 = vmatpush1.msra.mxu0 0.0
        %1083 = vmatprep.subr.mxu0 0.0
        %1084 = vmatpush1.msra.mxu0 0.0
        %1085 = vmatprep.subr.mxu0 0.0
        %1086 = vmatpush1.msra.mxu0 0.0
        %1087 = vmatprep.subr.mxu0 0.0
        %1088 = vmatpush1.msra.mxu0 0.0
        %1089 = vmatprep.subr.mxu0 0.0
        %1090 = vmatpush1.msra.mxu0 0.0
        %1091 = vmatprep.subr.mxu0 0.0
        %1092 = vmatpush1.msra.mxu0 0.0
        %1093 = vmatprep.subr.mxu0 0.0
        %1094 = vmatpush1.msra.mxu0 0.0
        %1095 = vmatprep.subr.mxu0 0.0
        %1096 = vmatpush1.msra.mxu0 0.0
        %1097 = vmatprep.subr.mxu0 0.0
        %1098 = vmatpush1.msra.mxu0 0.0
        %1099 = vmatprep.subr.mxu0 0.0
        %1100 = vmatpush1.msra.mxu0 0.0
        %1101 = vmatprep.subr.mxu0 0.0
        %1102 = vmatpush1.msra.mxu0 0.0
        %1103 = vmatprep.mubr.f32.mxu0 0.0
        %1104 = vmatmul.mubr.f32.gmra.mrb[0].mxu0 %v840
        %v1105 = vpop.f32.mrb[0].mxu0
        %v1106 = vadd.f32 0.0, %v1105
        %v1107 = vpop.f32.mrb[0].mxu0
        %1108 = vmatprep.mubr.f32.mxu0 0.0
        %1109 = vmatmul.mubr.f32.gmra.mrb[0].mxu0 %v843
        %v1110 = vpop.f32.mrb[0].mxu0
        %v1111 = vadd.f32 0.0, %v1110
        %v1112 = vpop.f32.mrb[0].mxu0
        %1113 = vdwg.mxu0
        %1114 = vset.pattern.permute.xlu0 2
        %1115 = vperm.xlu0 %1114, %v828
        %v1116 = vpop.permute.xlu0 %1115
        %1118 = vset.pattern.permute.xlu0 2
        %1119 = vperm.xlu0 %1118, %v829
        %v1120 = vpop.permute.xlu0 %1119
        %v1122 = vmul.f32 %v1106, %v1116
        %v1123 = vmul.f32 %v1111, %v1120
        %v1124 = vadd.f32 %v1028, %v1122
        %v1125 = vadd.f32 %v1029, %v1123
        %s1126 = scalar_lea.vmem [#allocation4], 192
        %v1127 = vld [vmem:[%s1126] sm:$0xff]
        %v1128 = vld [vmem:[%s1126 + $0x8] sm:$0xff]
        %v1129 = vld [vmem:[%s1126 + $0x10] sm:$0xff]
        %v1130 = vld [vmem:[%s1126 + $0x18] sm:$0xff]
        %v1131 = vld [vmem:[%s1126 + $0x20] sm:$0xff]
        %v1132 = vld [vmem:[%s1126 + $0x28] sm:$0xff]
        %v1133 = vld [vmem:[%s1126 + $0x30] sm:$0xff]
        %v1134 = vld [vmem:[%s1126 + $0x38] sm:$0xff]
        %1135 = vmatprep.subr.mxu0 0.0
        %1136 = vmatpush1.msra.mxu0 %v1127
        %1137 = vmatprep.subr.mxu0 0.0
        %1138 = vmatpush1.msra.mxu0 %v1128
        %1139 = vmatprep.subr.mxu0 0.0
        %1140 = vmatpush1.msra.mxu0 %v1129
        %1141 = vmatprep.subr.mxu0 0.0
        %1142 = vmatpush1.msra.mxu0 %v1130
        %1143 = vmatprep.subr.mxu0 0.0
        %1144 = vmatpush1.msra.mxu0 %v1131
        %1145 = vmatprep.subr.mxu0 0.0
        %1146 = vmatpush1.msra.mxu0 %v1132
        %1147 = vmatprep.subr.mxu0 0.0
        %1148 = vmatpush1.msra.mxu0 %v1133
        %1149 = vmatprep.subr.mxu0 0.0
        %1150 = vmatpush1.msra.mxu0 %v1134
        %1151 = vmatprep.subr.mxu0 0.0
        %1152 = vmatpush1.msra.mxu0 0.0
        %1153 = vmatprep.subr.mxu0 0.0
        %1154 = vmatpush1.msra.mxu0 0.0
        %1155 = vmatprep.subr.mxu0 0.0
        %1156 = vmatpush1.msra.mxu0 0.0
        %1157 = vmatprep.subr.mxu0 0.0
        %1158 = vmatpush1.msra.mxu0 0.0
        %1159 = vmatprep.subr.mxu0 0.0
        %1160 = vmatpush1.msra.mxu0 0.0
        %1161 = vmatprep.subr.mxu0 0.0
        %1162 = vmatpush1.msra.mxu0 0.0
        %1163 = vmatprep.subr.mxu0 0.0
        %1164 = vmatpush1.msra.mxu0 0.0
        %1165 = vmatprep.subr.mxu0 0.0
        %1166 = vmatpush1.msra.mxu0 0.0
        %1167 = vmatprep.subr.mxu0 0.0
        %1168 = vmatpush1.msra.mxu0 0.0
        %1169 = vmatprep.subr.mxu0 0.0
        %1170 = vmatpush1.msra.mxu0 0.0
        %1171 = vmatprep.subr.mxu0 0.0
        %1172 = vmatpush1.msra.mxu0 0.0
        %1173 = vmatprep.subr.mxu0 0.0
        %1174 = vmatpush1.msra.mxu0 0.0
        %1175 = vmatprep.subr.mxu0 0.0
        %1176 = vmatpush1.msra.mxu0 0.0
        %1177 = vmatprep.subr.mxu0 0.0
        %1178 = vmatpush1.msra.mxu0 0.0
        %1179 = vmatprep.subr.mxu0 0.0
        %1180 = vmatpush1.msra.mxu0 0.0
        %1181 = vmatprep.subr.mxu0 0.0
        %1182 = vmatpush1.msra.mxu0 0.0
        %1183 = vmatprep.subr.mxu0 0.0
        %1184 = vmatpush1.msra.mxu0 0.0
        %1185 = vmatprep.subr.mxu0 0.0
        %1186 = vmatpush1.msra.mxu0 0.0
        %1187 = vmatprep.subr.mxu0 0.0
        %1188 = vmatpush1.msra.mxu0 0.0
        %1189 = vmatprep.subr.mxu0 0.0
        %1190 = vmatpush1.msra.mxu0 0.0
        %1191 = vmatprep.subr.mxu0 0.0
        %1192 = vmatpush1.msra.mxu0 0.0
        %1193 = vmatprep.subr.mxu0 0.0
        %1194 = vmatpush1.msra.mxu0 0.0
        %1195 = vmatprep.subr.mxu0 0.0
        %1196 = vmatpush1.msra.mxu0 0.0
        %1197 = vmatprep.subr.mxu0 0.0
        %1198 = vmatpush1.msra.mxu0 0.0
        %1199 = vmatprep.mubr.f32.mxu0 0.0
        %1200 = vmatmul.mubr.f32.gmra.mrb[0].mxu0 %v840
        %v1201 = vpop.f32.mrb[0].mxu0
        %v1202 = vadd.f32 0.0, %v1201
        %v1203 = vpop.f32.mrb[0].mxu0
        %1204 = vmatprep.mubr.f32.mxu0 0.0
        %1205 = vmatmul.mubr.f32.gmra.mrb[0].mxu0 %v843
        %v1206 = vpop.f32.mrb[0].mxu0
        %v1207 = vadd.f32 0.0, %v1206
        %v1208 = vpop.f32.mrb[0].mxu0
        %1209 = vdwg.mxu0
        %1210 = vset.pattern.permute.xlu0 3
        %1211 = vperm.xlu0 %1210, %v828
        %v1212 = vpop.permute.xlu0 %1211
        %1214 = vset.pattern.permute.xlu0 3
        %1215 = vperm.xlu0 %1214, %v829
        %v1216 = vpop.permute.xlu0 %1215
        %v1218 = vmul.f32 %v1202, %v1212
        %v1219 = vmul.f32 %v1207, %v1216
        %v1220 = vadd.f32 %v1124, %v1218
        %v1221 = vadd.f32 %v1125, %v1219
        %s1222 = scalar_lea.vmem [#allocation4], 256
        %v1223 = vld [vmem:[%s1222] sm:$0xff]
        %v1224 = vld [vmem:[%s1222 + $0x8] sm:$0xff]
        %v1225 = vld [vmem:[%s1222 + $0x10] sm:$0xff]
        %v1226 = vld [vmem:[%s1222 + $0x18] sm:$0xff]
        %v1227 = vld [vmem:[%s1222 + $0x20] sm:$0xff]
        %v1228 = vld [vmem:[%s1222 + $0x28] sm:$0xff]
        %v1229 = vld [vmem:[%s1222 + $0x30] sm:$0xff]
        %v1230 = vld [vmem:[%s1222 + $0x38] sm:$0xff]
        %1231 = vmatprep.subr.mxu0 0.0
        %1232 = vmatpush1.msra.mxu0 %v1223
        %1233 = vmatprep.subr.mxu0 0.0
        %1234 = vmatpush1.msra.mxu0 %v1224
        %1235 = vmatprep.subr.mxu0 0.0
        %1236 = vmatpush1.msra.mxu0 %v1225
        %1237 = vmatprep.subr.mxu0 0.0
        %1238 = vmatpush1.msra.mxu0 %v1226
        %1239 = vmatprep.subr.mxu0 0.0
        %1240 = vmatpush1.msra.mxu0 %v1227
        %1241 = vmatprep.subr.mxu0 0.0
        %1242 = vmatpush1.msra.mxu0 %v1228
        %1243 = vmatprep.subr.mxu0 0.0
        %1244 = vmatpush1.msra.mxu0 %v1229
        %1245 = vmatprep.subr.mxu0 0.0
        %1246 = vmatpush1.msra.mxu0 %v1230
        %1247 = vmatprep.subr.mxu0 0.0
        %1248 = vmatpush1.msra.mxu0 0.0
        %1249 = vmatprep.subr.mxu0 0.0
        %1250 = vmatpush1.msra.mxu0 0.0
        %1251 = vmatprep.subr.mxu0 0.0
        %1252 = vmatpush1.msra.mxu0 0.0
        %1253 = vmatprep.subr.mxu0 0.0
        %1254 = vmatpush1.msra.mxu0 0.0
        %1255 = vmatprep.subr.mxu0 0.0
        %1256 = vmatpush1.msra.mxu0 0.0
        %1257 = vmatprep.subr.mxu0 0.0
        %1258 = vmatpush1.msra.mxu0 0.0
        %1259 = vmatprep.subr.mxu0 0.0
        %1260 = vmatpush1.msra.mxu0 0.0
        %1261 = vmatprep.subr.mxu0 0.0
        %1262 = vmatpush1.msra.mxu0 0.0
        %1263 = vmatprep.subr.mxu0 0.0
        %1264 = vmatpush1.msra.mxu0 0.0
        %1265 = vmatprep.subr.mxu0 0.0
        %1266 = vmatpush1.msra.mxu0 0.0
        %1267 = vmatprep.subr.mxu0 0.0
        %1268 = vmatpush1.msra.mxu0 0.0
        %1269 = vmatprep.subr.mxu0 0.0
        %1270 = vmatpush1.msra.mxu0 0.0
        %1271 = vmatprep.subr.mxu0 0.0
        %1272 = vmatpush1.msra.mxu0 0.0
        %1273 = vmatprep.subr.mxu0 0.0
        %1274 = vmatpush1.msra.mxu0 0.0
        %1275 = vmatprep.subr.mxu0 0.0
        %1276 = vmatpush1.msra.mxu0 0.0
        %1277 = vmatprep.subr.mxu0 0.0
        %1278 = vmatpush1.msra.mxu0 0.0
        %1279 = vmatprep.subr.mxu0 0.0
        %1280 = vmatpush1.msra.mxu0 0.0
        %1281 = vmatprep.subr.mxu0 0.0
        %1282 = vmatpush1.msra.mxu0 0.0
        %1283 = vmatprep.subr.mxu0 0.0
        %1284 = vmatpush1.msra.mxu0 0.0
        %1285 = vmatprep.subr.mxu0 0.0
        %1286 = vmatpush1.msra.mxu0 0.0
        %1287 = vmatprep.subr.mxu0 0.0
        %1288 = vmatpush1.msra.mxu0 0.0
        %1289 = vmatprep.subr.mxu0 0.0
        %1290 = vmatpush1.msra.mxu0 0.0
        %1291 = vmatprep.subr.mxu0 0.0
        %1292 = vmatpush1.msra.mxu0 0.0
        %1293 = vmatprep.subr.mxu0 0.0
        %1294 = vmatpush1.msra.mxu0 0.0
        %1295 = vmatprep.mubr.f32.mxu0 0.0
        %1296 = vmatmul.mubr.f32.gmra.mrb[0].mxu0 %v840
        %v1297 = vpop.f32.mrb[0].mxu0
        %v1298 = vadd.f32 0.0, %v1297
        %v1299 = vpop.f32.mrb[0].mxu0
        %1300 = vmatprep.mubr.f32.mxu0 0.0
        %1301 = vmatmul.mubr.f32.gmra.mrb[0].mxu0 %v843
        %v1302 = vpop.f32.mrb[0].mxu0
        %v1303 = vadd.f32 0.0, %v1302
        %v1304 = vpop.f32.mrb[0].mxu0
        %1305 = vdwg.mxu0
        %1306 = vset.pattern.permute.xlu0 4
        %1307 = vperm.xlu0 %1306, %v828
        %v1308 = vpop.permute.xlu0 %1307
        %1310 = vset.pattern.permute.xlu0 4
        %1311 = vperm.xlu0 %1310, %v829
        %v1312 = vpop.permute.xlu0 %1311
        %v1314 = vmul.f32 %v1298, %v1308
        %v1315 = vmul.f32 %v1303, %v1312
        %v1316 = vadd.f32 %v1220, %v1314
        %v1317 = vadd.f32 %v1221, %v1315
        %s1318 = scalar_lea.vmem [#allocation4], 320
        %v1319 = vld [vmem:[%s1318] sm:$0xff]
        %v1320 = vld [vmem:[%s1318 + $0x8] sm:$0xff]
        %v1321 = vld [vmem:[%s1318 + $0x10] sm:$0xff]
        %v1322 = vld [vmem:[%s1318 + $0x18] sm:$0xff]
        %v1323 = vld [vmem:[%s1318 + $0x20] sm:$0xff]
        %v1324 = vld [vmem:[%s1318 + $0x28] sm:$0xff]
        %v1325 = vld [vmem:[%s1318 + $0x30] sm:$0xff]
        %v1326 = vld [vmem:[%s1318 + $0x38] sm:$0xff]
        %1327 = vmatprep.subr.mxu0 0.0
        %1328 = vmatpush1.msra.mxu0 %v1319
        %1329 = vmatprep.subr.mxu0 0.0
        %1330 = vmatpush1.msra.mxu0 %v1320
        %1331 = vmatprep.subr.mxu0 0.0
        %1332 = vmatpush1.msra.mxu0 %v1321
        %1333 = vmatprep.subr.mxu0 0.0
        %1334 = vmatpush1.msra.mxu0 %v1322
        %1335 = vmatprep.subr.mxu0 0.0
        %1336 = vmatpush1.msra.mxu0 %v1323
        %1337 = vmatprep.subr.mxu0 0.0
        %1338 = vmatpush1.msra.mxu0 %v1324
        %1339 = vmatprep.subr.mxu0 0.0
        %1340 = vmatpush1.msra.mxu0 %v1325
        %1341 = vmatprep.subr.mxu0 0.0
        %1342 = vmatpush1.msra.mxu0 %v1326
        %1343 = vmatprep.subr.mxu0 0.0
        %1344 = vmatpush1.msra.mxu0 0.0
        %1345 = vmatprep.subr.mxu0 0.0
        %1346 = vmatpush1.msra.mxu0 0.0
        %1347 = vmatprep.subr.mxu0 0.0
        %1348 = vmatpush1.msra.mxu0 0.0
        %1349 = vmatprep.subr.mxu0 0.0
        %1350 = vmatpush1.msra.mxu0 0.0
        %1351 = vmatprep.subr.mxu0 0.0
        %1352 = vmatpush1.msra.mxu0 0.0
        %1353 = vmatprep.subr.mxu0 0.0
        %1354 = vmatpush1.msra.mxu0 0.0
        %1355 = vmatprep.subr.mxu0 0.0
        %1356 = vmatpush1.msra.mxu0 0.0
        %1357 = vmatprep.subr.mxu0 0.0
        %1358 = vmatpush1.msra.mxu0 0.0
        %1359 = vmatprep.subr.mxu0 0.0
        %1360 = vmatpush1.msra.mxu0 0.0
        %1361 = vmatprep.subr.mxu0 0.0
        %1362 = vmatpush1.msra.mxu0 0.0
        %1363 = vmatprep.subr.mxu0 0.0
        %1364 = vmatpush1.msra.mxu0 0.0
        %1365 = vmatprep.subr.mxu0 0.0
        %1366 = vmatpush1.msra.mxu0 0.0
        %1367 = vmatprep.subr.mxu0 0.0
        %1368 = vmatpush1.msra.mxu0 0.0
        %1369 = vmatprep.subr.mxu0 0.0
        %1370 = vmatpush1.msra.mxu0 0.0
        %1371 = vmatprep.subr.mxu0 0.0
        %1372 = vmatpush1.msra.mxu0 0.0
        %1373 = vmatprep.subr.mxu0 0.0
        %1374 = vmatpush1.msra.mxu0 0.0
        %1375 = vmatprep.subr.mxu0 0.0
        %1376 = vmatpush1.msra.mxu0 0.0
        %1377 = vmatprep.subr.mxu0 0.0
        %1378 = vmatpush1.msra.mxu0 0.0
        %1379 = vmatprep.subr.mxu0 0.0
        %1380 = vmatpush1.msra.mxu0 0.0
        %1381 = vmatprep.subr.mxu0 0.0
        %1382 = vmatpush1.msra.mxu0 0.0
        %1383 = vmatprep.subr.mxu0 0.0
        %1384 = vmatpush1.msra.mxu0 0.0
        %1385 = vmatprep.subr.mxu0 0.0
        %1386 = vmatpush1.msra.mxu0 0.0
        %1387 = vmatprep.subr.mxu0 0.0
        %1388 = vmatpush1.msra.mxu0 0.0
        %1389 = vmatprep.subr.mxu0 0.0
        %1390 = vmatpush1.msra.mxu0 0.0
        %1391 = vmatprep.mubr.f32.mxu0 0.0
        %1392 = vmatmul.mubr.f32.gmra.mrb[0].mxu0 %v840
        %v1393 = vpop.f32.mrb[0].mxu0
        %v1394 = vadd.f32 0.0, %v1393
        %v1395 = vpop.f32.mrb[0].mxu0
        %1396 = vmatprep.mubr.f32.mxu0 0.0
        %1397 = vmatmul.mubr.f32.gmra.mrb[0].mxu0 %v843
        %v1398 = vpop.f32.mrb[0].mxu0
        %v1399 = vadd.f32 0.0, %v1398
        %v1400 = vpop.f32.mrb[0].mxu0
        %1401 = vdwg.mxu0
        %1402 = vset.pattern.permute.xlu0 5
        %1403 = vperm.xlu0 %1402, %v828
        %v1404 = vpop.permute.xlu0 %1403
        %1406 = vset.pattern.permute.xlu0 5
        %1407 = vperm.xlu0 %1406, %v829
        %v1408 = vpop.permute.xlu0 %1407
        %v1410 = vmul.f32 %v1394, %v1404
        %v1411 = vmul.f32 %v1399, %v1408
        %v1412 = vadd.f32 %v1316, %v1410
        %v1413 = vadd.f32 %v1317, %v1411
        %s1414 = scalar_lea.vmem [#allocation4], 384
        %v1415 = vld [vmem:[%s1414] sm:$0xff]
        %v1416 = vld [vmem:[%s1414 + $0x8] sm:$0xff]
        %v1417 = vld [vmem:[%s1414 + $0x10] sm:$0xff]
        %v1418 = vld [vmem:[%s1414 + $0x18] sm:$0xff]
        %v1419 = vld [vmem:[%s1414 + $0x20] sm:$0xff]
        %v1420 = vld [vmem:[%s1414 + $0x28] sm:$0xff]
        %v1421 = vld [vmem:[%s1414 + $0x30] sm:$0xff]
        %v1422 = vld [vmem:[%s1414 + $0x38] sm:$0xff]
        %1423 = vmatprep.subr.mxu0 0.0
        %1424 = vmatpush1.msra.mxu0 %v1415
        %1425 = vmatprep.subr.mxu0 0.0
        %1426 = vmatpush1.msra.mxu0 %v1416
        %1427 = vmatprep.subr.mxu0 0.0
        %1428 = vmatpush1.msra.mxu0 %v1417
        %1429 = vmatprep.subr.mxu0 0.0
        %1430 = vmatpush1.msra.mxu0 %v1418
        %1431 = vmatprep.subr.mxu0 0.0
        %1432 = vmatpush1.msra.mxu0 %v1419
        %1433 = vmatprep.subr.mxu0 0.0
        %1434 = vmatpush1.msra.mxu0 %v1420
        %1435 = vmatprep.subr.mxu0 0.0
        %1436 = vmatpush1.msra.mxu0 %v1421
        %1437 = vmatprep.subr.mxu0 0.0
        %1438 = vmatpush1.msra.mxu0 %v1422
        %1439 = vmatprep.subr.mxu0 0.0
        %1440 = vmatpush1.msra.mxu0 0.0
        %1441 = vmatprep.subr.mxu0 0.0
        %1442 = vmatpush1.msra.mxu0 0.0
        %1443 = vmatprep.subr.mxu0 0.0
        %1444 = vmatpush1.msra.mxu0 0.0
        %1445 = vmatprep.subr.mxu0 0.0
        %1446 = vmatpush1.msra.mxu0 0.0
        %1447 = vmatprep.subr.mxu0 0.0
        %1448 = vmatpush1.msra.mxu0 0.0
        %1449 = vmatprep.subr.mxu0 0.0
        %1450 = vmatpush1.msra.mxu0 0.0
        %1451 = vmatprep.subr.mxu0 0.0
        %1452 = vmatpush1.msra.mxu0 0.0
        %1453 = vmatprep.subr.mxu0 0.0
        %1454 = vmatpush1.msra.mxu0 0.0
        %1455 = vmatprep.subr.mxu0 0.0
        %1456 = vmatpush1.msra.mxu0 0.0
        %1457 = vmatprep.subr.mxu0 0.0
        %1458 = vmatpush1.msra.mxu0 0.0
        %1459 = vmatprep.subr.mxu0 0.0
        %1460 = vmatpush1.msra.mxu0 0.0
        %1461 = vmatprep.subr.mxu0 0.0
        %1462 = vmatpush1.msra.mxu0 0.0
        %1463 = vmatprep.subr.mxu0 0.0
        %1464 = vmatpush1.msra.mxu0 0.0
        %1465 = vmatprep.subr.mxu0 0.0
        %1466 = vmatpush1.msra.mxu0 0.0
        %1467 = vmatprep.subr.mxu0 0.0
        %1468 = vmatpush1.msra.mxu0 0.0
        %1469 = vmatprep.subr.mxu0 0.0
        %1470 = vmatpush1.msra.mxu0 0.0
        %1471 = vmatprep.subr.mxu0 0.0
        %1472 = vmatpush1.msra.mxu0 0.0
        %1473 = vmatprep.subr.mxu0 0.0
        %1474 = vmatpush1.msra.mxu0 0.0
        %1475 = vmatprep.subr.mxu0 0.0
        %1476 = vmatpush1.msra.mxu0 0.0
        %1477 = vmatprep.subr.mxu0 0.0
        %1478 = vmatpush1.msra.mxu0 0.0
        %1479 = vmatprep.subr.mxu0 0.0
        %1480 = vmatpush1.msra.mxu0 0.0
        %1481 = vmatprep.subr.mxu0 0.0
        %1482 = vmatpush1.msra.mxu0 0.0
        %1483 = vmatprep.subr.mxu0 0.0
        %1484 = vmatpush1.msra.mxu0 0.0
        %1485 = vmatprep.subr.mxu0 0.0
        %1486 = vmatpush1.msra.mxu0 0.0
        %1487 = vmatprep.mubr.f32.mxu0 0.0
        %1488 = vmatmul.mubr.f32.gmra.mrb[0].mxu0 %v840
        %v1489 = vpop.f32.mrb[0].mxu0
        %v1490 = vadd.f32 0.0, %v1489
        %v1491 = vpop.f32.mrb[0].mxu0
        %1492 = vmatprep.mubr.f32.mxu0 0.0
        %1493 = vmatmul.mubr.f32.gmra.mrb[0].mxu0 %v843
        %v1494 = vpop.f32.mrb[0].mxu0
        %v1495 = vadd.f32 0.0, %v1494
        %v1496 = vpop.f32.mrb[0].mxu0
        %1497 = vdwg.mxu0
        %1498 = vset.pattern.permute.xlu0 6
        %1499 = vperm.xlu0 %1498, %v828
        %v1500 = vpop.permute.xlu0 %1499
        %1502 = vset.pattern.permute.xlu0 6
        %1503 = vperm.xlu0 %1502, %v829
        %v1504 = vpop.permute.xlu0 %1503
        %v1506 = vmul.f32 %v1490, %v1500
        %v1507 = vmul.f32 %v1495, %v1504
        %v1508 = vadd.f32 %v1412, %v1506
        %v1509 = vadd.f32 %v1413, %v1507
        %s1510 = scalar_lea.vmem [#allocation4], 448
        %v1511 = vld [vmem:[%s1510] sm:$0xff]
        %v1512 = vld [vmem:[%s1510 + $0x8] sm:$0xff]
        %v1513 = vld [vmem:[%s1510 + $0x10] sm:$0xff]
        %v1514 = vld [vmem:[%s1510 + $0x18] sm:$0xff]
        %v1515 = vld [vmem:[%s1510 + $0x20] sm:$0xff]
        %v1516 = vld [vmem:[%s1510 + $0x28] sm:$0xff]
        %v1517 = vld [vmem:[%s1510 + $0x30] sm:$0xff]
        %v1518 = vld [vmem:[%s1510 + $0x38] sm:$0xff]
        %1519 = vmatprep.subr.mxu0 0.0
        %1520 = vmatpush1.msra.mxu0 %v1511
        %1521 = vmatprep.subr.mxu0 0.0
        %1522 = vmatpush1.msra.mxu0 %v1512
        %1523 = vmatprep.subr.mxu0 0.0
        %1524 = vmatpush1.msra.mxu0 %v1513
        %1525 = vmatprep.subr.mxu0 0.0
        %1526 = vmatpush1.msra.mxu0 %v1514
        %1527 = vmatprep.subr.mxu0 0.0
        %1528 = vmatpush1.msra.mxu0 %v1515
        %1529 = vmatprep.subr.mxu0 0.0
        %1530 = vmatpush1.msra.mxu0 %v1516
        %1531 = vmatprep.subr.mxu0 0.0
        %1532 = vmatpush1.msra.mxu0 %v1517
        %1533 = vmatprep.subr.mxu0 0.0
        %1534 = vmatpush1.msra.mxu0 %v1518
        %1535 = vmatprep.subr.mxu0 0.0
        %1536 = vmatpush1.msra.mxu0 0.0
        %1537 = vmatprep.subr.mxu0 0.0
        %1538 = vmatpush1.msra.mxu0 0.0
        %1539 = vmatprep.subr.mxu0 0.0
        %1540 = vmatpush1.msra.mxu0 0.0
        %1541 = vmatprep.subr.mxu0 0.0
        %1542 = vmatpush1.msra.mxu0 0.0
        %1543 = vmatprep.subr.mxu0 0.0
        %1544 = vmatpush1.msra.mxu0 0.0
        %1545 = vmatprep.subr.mxu0 0.0
        %1546 = vmatpush1.msra.mxu0 0.0
        %1547 = vmatprep.subr.mxu0 0.0
        %1548 = vmatpush1.msra.mxu0 0.0
        %1549 = vmatprep.subr.mxu0 0.0
        %1550 = vmatpush1.msra.mxu0 0.0
        %1551 = vmatprep.subr.mxu0 0.0
        %1552 = vmatpush1.msra.mxu0 0.0
        %1553 = vmatprep.subr.mxu0 0.0
        %1554 = vmatpush1.msra.mxu0 0.0
        %1555 = vmatprep.subr.mxu0 0.0
        %1556 = vmatpush1.msra.mxu0 0.0
        %1557 = vmatprep.subr.mxu0 0.0
        %1558 = vmatpush1.msra.mxu0 0.0
        %1559 = vmatprep.subr.mxu0 0.0
        %1560 = vmatpush1.msra.mxu0 0.0
        %1561 = vmatprep.subr.mxu0 0.0
        %1562 = vmatpush1.msra.mxu0 0.0
        %1563 = vmatprep.subr.mxu0 0.0
        %1564 = vmatpush1.msra.mxu0 0.0
        %1565 = vmatprep.subr.mxu0 0.0
        %1566 = vmatpush1.msra.mxu0 0.0
        %1567 = vmatprep.subr.mxu0 0.0
        %1568 = vmatpush1.msra.mxu0 0.0
        %1569 = vmatprep.subr.mxu0 0.0
        %1570 = vmatpush1.msra.mxu0 0.0
        %1571 = vmatprep.subr.mxu0 0.0
        %1572 = vmatpush1.msra.mxu0 0.0
        %1573 = vmatprep.subr.mxu0 0.0
        %1574 = vmatpush1.msra.mxu0 0.0
        %1575 = vmatprep.subr.mxu0 0.0
        %1576 = vmatpush1.msra.mxu0 0.0
        %1577 = vmatprep.subr.mxu0 0.0
        %1578 = vmatpush1.msra.mxu0 0.0
        %1579 = vmatprep.subr.mxu0 0.0
        %1580 = vmatpush1.msra.mxu0 0.0
        %1581 = vmatprep.subr.mxu0 0.0
        %1582 = vmatpush1.msra.mxu0 0.0
        %1583 = vmatprep.mubr.f32.mxu0 0.0
        %1584 = vmatmul.mubr.f32.gmra.mrb[0].mxu0 %v840
        %v1585 = vpop.f32.mrb[0].mxu0
        %v1586 = vadd.f32 0.0, %v1585
        %v1587 = vpop.f32.mrb[0].mxu0
        %1588 = vmatprep.mubr.f32.mxu0 0.0
        %1589 = vmatmul.mubr.f32.gmra.mrb[0].mxu0 %v843
        %v1590 = vpop.f32.mrb[0].mxu0
        %v1591 = vadd.f32 0.0, %v1590
        %v1592 = vpop.f32.mrb[0].mxu0
        %1593 = vdwg.mxu0
        %1594 = vset.pattern.permute.xlu0 7
        %1595 = vperm.xlu0 %1594, %v828
        %v1596 = vpop.permute.xlu0 %1595
        %1598 = vset.pattern.permute.xlu0 7
        %1599 = vperm.xlu0 %1598, %v829
        %v1600 = vpop.permute.xlu0 %1599
        %v1602 = vmul.f32 %v1586, %v1596
        %v1603 = vmul.f32 %v1591, %v1600
        %v1604 = vadd.f32 %v1508, %v1602
        %v1605 = vadd.f32 %v1509, %v1603
        %s1606 = scalar_lea.vmem [#allocation4], 512
        %v1607 = vld [vmem:[%s1606] sm:$0xff]
        %v1608 = vld [vmem:[%s1606 + $0x8] sm:$0xff]
        %v1609 = vld [vmem:[%s1606 + $0x10] sm:$0xff]
        %v1610 = vld [vmem:[%s1606 + $0x18] sm:$0xff]
        %v1611 = vld [vmem:[%s1606 + $0x20] sm:$0xff]
        %v1612 = vld [vmem:[%s1606 + $0x28] sm:$0xff]
        %v1613 = vld [vmem:[%s1606 + $0x30] sm:$0xff]
        %v1614 = vld [vmem:[%s1606 + $0x38] sm:$0xff]
        %1615 = vmatprep.subr.mxu0 0.0
        %1616 = vmatpush1.msra.mxu0 %v1607
        %1617 = vmatprep.subr.mxu0 0.0
        %1618 = vmatpush1.msra.mxu0 %v1608
        %1619 = vmatprep.subr.mxu0 0.0
        %1620 = vmatpush1.msra.mxu0 %v1609
        %1621 = vmatprep.subr.mxu0 0.0
        %1622 = vmatpush1.msra.mxu0 %v1610
        %1623 = vmatprep.subr.mxu0 0.0
        %1624 = vmatpush1.msra.mxu0 %v1611
        %1625 = vmatprep.subr.mxu0 0.0
        %1626 = vmatpush1.msra.mxu0 %v1612
        %1627 = vmatprep.subr.mxu0 0.0
        %1628 = vmatpush1.msra.mxu0 %v1613
        %1629 = vmatprep.subr.mxu0 0.0
        %1630 = vmatpush1.msra.mxu0 %v1614
        %1631 = vmatprep.subr.mxu0 0.0
        %1632 = vmatpush1.msra.mxu0 0.0
        %1633 = vmatprep.subr.mxu0 0.0
        %1634 = vmatpush1.msra.mxu0 0.0
        %1635 = vmatprep.subr.mxu0 0.0
        %1636 = vmatpush1.msra.mxu0 0.0
        %1637 = vmatprep.subr.mxu0 0.0
        %1638 = vmatpush1.msra.mxu0 0.0
        %1639 = vmatprep.subr.mxu0 0.0
        %1640 = vmatpush1.msra.mxu0 0.0
        %1641 = vmatprep.subr.mxu0 0.0
        %1642 = vmatpush1.msra.mxu0 0.0
        %1643 = vmatprep.subr.mxu0 0.0
        %1644 = vmatpush1.msra.mxu0 0.0
        %1645 = vmatprep.subr.mxu0 0.0
        %1646 = vmatpush1.msra.mxu0 0.0
        %1647 = vmatprep.subr.mxu0 0.0
        %1648 = vmatpush1.msra.mxu0 0.0
        %1649 = vmatprep.subr.mxu0 0.0
        %1650 = vmatpush1.msra.mxu0 0.0
        %1651 = vmatprep.subr.mxu0 0.0
        %1652 = vmatpush1.msra.mxu0 0.0
        %1653 = vmatprep.subr.mxu0 0.0
        %1654 = vmatpush1.msra.mxu0 0.0
        %1655 = vmatprep.subr.mxu0 0.0
        %1656 = vmatpush1.msra.mxu0 0.0
        %1657 = vmatprep.subr.mxu0 0.0
        %1658 = vmatpush1.msra.mxu0 0.0
        %1659 = vmatprep.subr.mxu0 0.0
        %1660 = vmatpush1.msra.mxu0 0.0
        %1661 = vmatprep.subr.mxu0 0.0
        %1662 = vmatpush1.msra.mxu0 0.0
        %1663 = vmatprep.subr.mxu0 0.0
        %1664 = vmatpush1.msra.mxu0 0.0
        %1665 = vmatprep.subr.mxu0 0.0
        %1666 = vmatpush1.msra.mxu0 0.0
        %1667 = vmatprep.subr.mxu0 0.0
        %1668 = vmatpush1.msra.mxu0 0.0
        %1669 = vmatprep.subr.mxu0 0.0
        %1670 = vmatpush1.msra.mxu0 0.0
        %1671 = vmatprep.subr.mxu0 0.0
        %1672 = vmatpush1.msra.mxu0 0.0
        %1673 = vmatprep.subr.mxu0 0.0
        %1674 = vmatpush1.msra.mxu0 0.0
        %1675 = vmatprep.subr.mxu0 0.0
        %1676 = vmatpush1.msra.mxu0 0.0
        %1677 = vmatprep.subr.mxu0 0.0
        %1678 = vmatpush1.msra.mxu0 0.0
        %1679 = vmatprep.mubr.f32.mxu0 0.0
        %1680 = vmatmul.mubr.f32.gmra.mrb[0].mxu0 %v840
        %v1681 = vpop.f32.mrb[0].mxu0
        %v1682 = vadd.f32 0.0, %v1681
        %v1683 = vpop.f32.mrb[0].mxu0
        %1684 = vmatprep.mubr.f32.mxu0 0.0
        %1685 = vmatmul.mubr.f32.gmra.mrb[0].mxu0 %v843
        %v1686 = vpop.f32.mrb[0].mxu0
        %v1687 = vadd.f32 0.0, %v1686
        %v1688 = vpop.f32.mrb[0].mxu0
        %1689 = vdwg.mxu0
        %1690 = vset.pattern.permute.xlu0 8
        %1691 = vperm.xlu0 %1690, %v828
        %v1692 = vpop.permute.xlu0 %1691
        %1694 = vset.pattern.permute.xlu0 8
        %1695 = vperm.xlu0 %1694, %v829
        %v1696 = vpop.permute.xlu0 %1695
        %v1698 = vmul.f32 %v1682, %v1692
        %v1699 = vmul.f32 %v1687, %v1696
        %v1700 = vadd.f32 %v1604, %v1698
        %v1701 = vadd.f32 %v1605, %v1699
        %v1702 = vld [vmem:[%s8] sm:$0xff]
        %v1703 = vld [vmem:[%s8 + $0x8] sm:$0x7]
        %1705 = vset.pattern.permute.xlu0 0
        %1706 = vperm.xlu0 %1705, %v1702
        %v1707 = vpop.permute.xlu0 %1706
        %1710 = vset.pattern.permute.xlu0 0
        %1711 = vperm.xlu0 %1710, %v1703
        %v1712 = vpop.permute.xlu0 %1711
        %v1714 = vmul.f32 %v1700, %v1707
        %v1715 = vmul.f32 %v1701, %v1712
        %v1716 = vld [vmem:[%s9] sm:$0xff]
        %v1717 = vld [vmem:[%s9 + $0x8] sm:$0x7]
        %1719 = vset.pattern.permute.xlu0 0
        %1720 = vperm.xlu0 %1719, %v1716
        %v1721 = vpop.permute.xlu0 %1720
        %1724 = vset.pattern.permute.xlu0 0
        %1725 = vperm.xlu0 %1724, %v1717
        %v1726 = vpop.permute.xlu0 %1725
        %v1728 = vadd.f32 %v1714, %v1721
        %v1729 = vadd.f32 %v1715, %v1726
        %v1730 = vmax.f32 %v1728, 0.0
        %v1731 = vmax.f32 %v1729, 0.0
        %vm1732 = vcmask 516096
        %1733 = vst.msk [vmem:[#allocation2] sm:$0x1] %vm1732, %v826
        %1734 = vst.msk [vmem:[#allocation2 + $0x1] sm:$0x1] %vm1732, %v1730
        %vm1735 = vcmask 518145
        %1736 = vst.msk [vmem:[#allocation2 + $0x3] sm:$0x6] %vm1735, %v826
        %1737 = vst.msk [vmem:[#allocation2 + $0x5] sm:$0x6] %vm1735, %v1730
        %vm1738 = vcmask 523267
        %1739 = vst.msk [vmem:[#allocation2 + $0x9] sm:$0xf8] %vm1738, %v826
        %vm1740 = vcmask 518144
        %1741 = vst.msk [vmem:[#allocation2 + $0x11] sm:$0x7] %vm1740, %v827
        %1742 = vst.msk [vmem:[#allocation2 + $0x11] sm:$0xf8] %vm1738, %v1730
        %1743 = vst.msk [vmem:[#allocation2 + $0x19] sm:$0x7] %vm1740, %v1731
        %s1744 = scalar_lea.vmem %s4, 16
        %v1745 = vld [vmem:[%s1744] sm:$0xff]
        %v1746 = vld [vmem:[%s1744 + $0x8] sm:$0x7]
        %v1748 = vsel %vm716, %v1745, 0
        %v1751 = vsel %vm716, %v1746, 0
        %1753 = vmatprep.subr.mxu0 0.0
        %1754 = vmatpush1.msra.mxu0 %v712
        %1755 = vmatprep.subr.mxu0 0.0
        %1756 = vmatpush1.msra.mxu0 %v713
        %1757 = vmatprep.subr.mxu0 0.0
        %1758 = vmatpush1.msra.mxu0 0.0
        %1759 = vmatprep.subr.mxu0 0.0
        %1760 = vmatpush1.msra.mxu0 0.0
        %1761 = vmatprep.subr.mxu0 0.0
        %1762 = vmatpush1.msra.mxu0 0.0
        %1763 = vmatprep.subr.mxu0 0.0
        %1764 = vmatpush1.msra.mxu0 0.0
        %1765 = vmatprep.subr.mxu0 0.0
        %1766 = vmatpush1.msra.mxu0 0.0
        %1767 = vmatprep.subr.mxu0 0.0
        %1768 = vmatpush1.msra.mxu0 0.0
        %1769 = vmatprep.subr.mxu0 0.0
        %1770 = vmatpush1.msra.mxu0 0.0
        %1771 = vmatprep.subr.mxu0 0.0
        %1772 = vmatpush1.msra.mxu0 0.0
        %1773 = vmatprep.subr.mxu0 0.0
        %1774 = vmatpush1.msra.mxu0 0.0
        %1775 = vmatprep.subr.mxu0 0.0
        %1776 = vmatpush1.msra.mxu0 0.0
        %1777 = vmatprep.subr.mxu0 0.0
        %1778 = vmatpush1.msra.mxu0 0.0
        %1779 = vmatprep.subr.mxu0 0.0
        %1780 = vmatpush1.msra.mxu0 0.0
        %1781 = vmatprep.subr.mxu0 0.0
        %1782 = vmatpush1.msra.mxu0 0.0
        %1783 = vmatprep.subr.mxu0 0.0
        %1784 = vmatpush1.msra.mxu0 0.0
        %1785 = vmatprep.subr.mxu0 0.0
        %1786 = vmatpush1.msra.mxu0 0.0
        %1787 = vmatprep.subr.mxu0 0.0
        %1788 = vmatpush1.msra.mxu0 0.0
        %1789 = vmatprep.subr.mxu0 0.0
        %1790 = vmatpush1.msra.mxu0 0.0
        %1791 = vmatprep.subr.mxu0 0.0
        %1792 = vmatpush1.msra.mxu0 0.0
        %1793 = vmatprep.subr.mxu0 0.0
        %1794 = vmatpush1.msra.mxu0 0.0
        %1795 = vmatprep.subr.mxu0 0.0
        %1796 = vmatpush1.msra.mxu0 0.0
        %1797 = vmatprep.subr.mxu0 0.0
        %1798 = vmatpush1.msra.mxu0 0.0
        %1799 = vmatprep.subr.mxu0 0.0
        %1800 = vmatpush1.msra.mxu0 0.0
        %1801 = vmatprep.subr.mxu0 0.0
        %1802 = vmatpush1.msra.mxu0 0.0
        %1803 = vmatprep.subr.mxu0 0.0
        %1804 = vmatpush1.msra.mxu0 0.0
        %1805 = vmatprep.subr.mxu0 0.0
        %1806 = vmatpush1.msra.mxu0 0.0
        %1807 = vmatprep.subr.mxu0 0.0
        %1808 = vmatpush1.msra.mxu0 0.0
        %1809 = vmatprep.subr.mxu0 0.0
        %1810 = vmatpush1.msra.mxu0 0.0
        %1811 = vmatprep.subr.mxu0 0.0
        %1812 = vmatpush1.msra.mxu0 0.0
        %1813 = vmatprep.subr.mxu0 0.0
        %1814 = vmatpush1.msra.mxu0 0.0
        %1815 = vmatprep.subr.mxu0 0.0
        %1816 = vmatpush1.msra.mxu0 0.0
        %1817 = vmatprep.mubr.f32.mxu0 0.0
        %1818 = vmatmul.mubr.f32.gmra.mrb[0].mxu0 %v1748
        %v1819 = vpop.f32.mrb[0].mxu0
        %v1820 = vadd.f32 0.0, %v1819
        %v1821 = vpop.f32.mrb[0].mxu0
        %1822 = vmatprep.mubr.f32.mxu0 0.0
        %1823 = vmatmul.mubr.f32.gmra.mrb[0].mxu0 %v1751
        %v1824 = vpop.f32.mrb[0].mxu0
        %v1825 = vadd.f32 0.0, %v1824
        %v1826 = vpop.f32.mrb[0].mxu0
        %1827 = vdwg.mxu0
        %s1828 = scalar_lea.vmem %s5, 16
        %v1829 = vld [vmem:[%s1828] sm:$0xff]
        %v1830 = vld [vmem:[%s1828 + $0x8] sm:$0x7]
        %1832 = vset.pattern.permute.xlu0 0
        %1833 = vperm.xlu0 %1832, %v1829
        %v1834 = vpop.permute.xlu0 %1833
        %1837 = vset.pattern.permute.xlu0 0
        %1838 = vperm.xlu0 %1837, %v1830
        %v1839 = vpop.permute.xlu0 %1838
        %v1841 = vmul.f32 %v1820, %v1834
        %v1842 = vmul.f32 %v1825, %v1839
        %s1843 = scalar_lea.vmem %s6, 16
        %v1844 = vld [vmem:[%s1843] sm:$0xff]
        %v1845 = vld [vmem:[%s1843 + $0x8] sm:$0x7]
        %1847 = vset.pattern.permute.xlu0 0
        %1848 = vperm.xlu0 %1847, %v1844
        %v1849 = vpop.permute.xlu0 %1848
        %1852 = vset.pattern.permute.xlu0 0
        %1853 = vperm.xlu0 %1852, %v1845
        %v1854 = vpop.permute.xlu0 %1853
        %v1856 = vadd.f32 %v1841, %v1849
        %v1857 = vadd.f32 %v1842, %v1854
        %v1858 = vmax.f32 %v1856, 0.0
        %v1859 = vmax.f32 %v1857, 0.0
        %s1860 = scalar_lea.vmem %s7, 16
        %v1861 = vld [vmem:[%s1860] sm:$0xff]
        %v1862 = vld [vmem:[%s1860 + $0x8] sm:$0x7]
        %v1863 = vld [vmem:[#allocation4] sm:$0xff]
        %v1864 = vld [vmem:[#allocation4 + $0x8] sm:$0xff]
        %v1865 = vld [vmem:[#allocation4 + $0x10] sm:$0xff]
        %v1866 = vld [vmem:[#allocation4 + $0x18] sm:$0xff]
        %v1867 = vld [vmem:[#allocation4 + $0x20] sm:$0xff]
        %v1868 = vld [vmem:[#allocation4 + $0x28] sm:$0xff]
        %v1869 = vld [vmem:[#allocation4 + $0x30] sm:$0xff]
        %v1870 = vld [vmem:[#allocation4 + $0x38] sm:$0xff]
        %v1872 = vsel %vm838, %v1858, 0
        %v1875 = vsel %vm838, %v1859, 0
        %1877 = vmatprep.subr.mxu0 0.0
        %1878 = vmatpush1.msra.mxu0 %v1863
        %1879 = vmatprep.subr.mxu0 0.0
        %1880 = vmatpush1.msra.mxu0 %v1864
        %1881 = vmatprep.subr.mxu0 0.0
        %1882 = vmatpush1.msra.mxu0 %v1865
        %1883 = vmatprep.subr.mxu0 0.0
        %1884 = vmatpush1.msra.mxu0 %v1866
        %1885 = vmatprep.subr.mxu0 0.0
        %1886 = vmatpush1.msra.mxu0 %v1867
        %1887 = vmatprep.subr.mxu0 0.0
        %1888 = vmatpush1.msra.mxu0 %v1868
        %1889 = vmatprep.subr.mxu0 0.0
        %1890 = vmatpush1.msra.mxu0 %v1869
        %1891 = vmatprep.subr.mxu0 0.0
        %1892 = vmatpush1.msra.mxu0 %v1870
        %1893 = vmatprep.subr.mxu0 0.0
        %1894 = vmatpush1.msra.mxu0 0.0
        %1895 = vmatprep.subr.mxu0 0.0
        %1896 = vmatpush1.msra.mxu0 0.0
        %1897 = vmatprep.subr.mxu0 0.0
        %1898 = vmatpush1.msra.mxu0 0.0
        %1899 = vmatprep.subr.mxu0 0.0
        %1900 = vmatpush1.msra.mxu0 0.0
        %1901 = vmatprep.subr.mxu0 0.0
        %1902 = vmatpush1.msra.mxu0 0.0
        %1903 = vmatprep.subr.mxu0 0.0
        %1904 = vmatpush1.msra.mxu0 0.0
        %1905 = vmatprep.subr.mxu0 0.0
        %1906 = vmatpush1.msra.mxu0 0.0
        %1907 = vmatprep.subr.mxu0 0.0
        %1908 = vmatpush1.msra.mxu0 0.0
        %1909 = vmatprep.subr.mxu0 0.0
        %1910 = vmatpush1.msra.mxu0 0.0
        %1911 = vmatprep.subr.mxu0 0.0
        %1912 = vmatpush1.msra.mxu0 0.0
        %1913 = vmatprep.subr.mxu0 0.0
        %1914 = vmatpush1.msra.mxu0 0.0
        %1915 = vmatprep.subr.mxu0 0.0
        %1916 = vmatpush1.msra.mxu0 0.0
        %1917 = vmatprep.subr.mxu0 0.0
        %1918 = vmatpush1.msra.mxu0 0.0
        %1919 = vmatprep.subr.mxu0 0.0
        %1920 = vmatpush1.msra.mxu0 0.0
        %1921 = vmatprep.subr.mxu0 0.0
        %1922 = vmatpush1.msra.mxu0 0.0
        %1923 = vmatprep.subr.mxu0 0.0
        %1924 = vmatpush1.msra.mxu0 0.0
        %1925 = vmatprep.subr.mxu0 0.0
        %1926 = vmatpush1.msra.mxu0 0.0
        %1927 = vmatprep.subr.mxu0 0.0
        %1928 = vmatpush1.msra.mxu0 0.0
        %1929 = vmatprep.subr.mxu0 0.0
        %1930 = vmatpush1.msra.mxu0 0.0
        %1931 = vmatprep.subr.mxu0 0.0
        %1932 = vmatpush1.msra.mxu0 0.0
        %1933 = vmatprep.subr.mxu0 0.0
        %1934 = vmatpush1.msra.mxu0 0.0
        %1935 = vmatprep.subr.mxu0 0.0
        %1936 = vmatpush1.msra.mxu0 0.0
        %1937 = vmatprep.subr.mxu0 0.0
        %1938 = vmatpush1.msra.mxu0 0.0
        %1939 = vmatprep.subr.mxu0 0.0
        %1940 = vmatpush1.msra.mxu0 0.0
        %1941 = vmatprep.mubr.f32.mxu0 0.0
        %1942 = vmatmul.mubr.f32.gmra.mrb[0].mxu0 %v1872
        %v1943 = vpop.f32.mrb[0].mxu0
        %v1944 = vadd.f32 0.0, %v1943
        %v1945 = vpop.f32.mrb[0].mxu0
        %1946 = vmatprep.mubr.f32.mxu0 0.0
        %1947 = vmatmul.mubr.f32.gmra.mrb[0].mxu0 %v1875
        %v1948 = vpop.f32.mrb[0].mxu0
        %v1949 = vadd.f32 0.0, %v1948
        %v1950 = vpop.f32.mrb[0].mxu0
        %1951 = vdwg.mxu0
        %1953 = vset.pattern.permute.xlu0 0
        %1954 = vperm.xlu0 %1953, %v1861
        %v1955 = vpop.permute.xlu0 %1954
        %1958 = vset.pattern.permute.xlu0 0
        %1959 = vperm.xlu0 %1958, %v1862
        %v1960 = vpop.permute.xlu0 %1959
        %v1962 = vmul.f32 %v1944, %v1955
        %v1963 = vmul.f32 %v1949, %v1960
        %v1964 = vadd.f32 %v1962, 0.0
        %v1965 = vadd.f32 %v1963, 0.0
        %v1966 = vld [vmem:[%s934] sm:$0xff]
        %v1967 = vld [vmem:[%s934 + $0x8] sm:$0xff]
        %v1968 = vld [vmem:[%s934 + $0x10] sm:$0xff]
        %v1969 = vld [vmem:[%s934 + $0x18] sm:$0xff]
        %v1970 = vld [vmem:[%s934 + $0x20] sm:$0xff]
        %v1971 = vld [vmem:[%s934 + $0x28] sm:$0xff]
        %v1972 = vld [vmem:[%s934 + $0x30] sm:$0xff]
        %v1973 = vld [vmem:[%s934 + $0x38] sm:$0xff]
        %1974 = vmatprep.subr.mxu0 0.0
        %1975 = vmatpush1.msra.mxu0 %v1966
        %1976 = vmatprep.subr.mxu0 0.0
        %1977 = vmatpush1.msra.mxu0 %v1967
        %1978 = vmatprep.subr.mxu0 0.0
        %1979 = vmatpush1.msra.mxu0 %v1968
        %1980 = vmatprep.subr.mxu0 0.0
        %1981 = vmatpush1.msra.mxu0 %v1969
        %1982 = vmatprep.subr.mxu0 0.0
        %1983 = vmatpush1.msra.mxu0 %v1970
        %1984 = vmatprep.subr.mxu0 0.0
        %1985 = vmatpush1.msra.mxu0 %v1971
        %1986 = vmatprep.subr.mxu0 0.0
        %1987 = vmatpush1.msra.mxu0 %v1972
        %1988 = vmatprep.subr.mxu0 0.0
        %1989 = vmatpush1.msra.mxu0 %v1973
        %1990 = vmatprep.subr.mxu0 0.0
        %1991 = vmatpush1.msra.mxu0 0.0
        %1992 = vmatprep.subr.mxu0 0.0
        %1993 = vmatpush1.msra.mxu0 0.0
        %1994 = vmatprep.subr.mxu0 0.0
        %1995 = vmatpush1.msra.mxu0 0.0
        %1996 = vmatprep.subr.mxu0 0.0
        %1997 = vmatpush1.msra.mxu0 0.0
        %1998 = vmatprep.subr.mxu0 0.0
        %1999 = vmatpush1.msra.mxu0 0.0
        %2000 = vmatprep.subr.mxu0 0.0
        %2001 = vmatpush1.msra.mxu0 0.0
        %2002 = vmatprep.subr.mxu0 0.0
        %2003 = vmatpush1.msra.mxu0 0.0
        %2004 = vmatprep.subr.mxu0 0.0
        %2005 = vmatpush1.msra.mxu0 0.0
        %2006 = vmatprep.subr.mxu0 0.0
        %2007 = vmatpush1.msra.mxu0 0.0
        %2008 = vmatprep.subr.mxu0 0.0
        %2009 = vmatpush1.msra.mxu0 0.0
        %2010 = vmatprep.subr.mxu0 0.0
        %2011 = vmatpush1.msra.mxu0 0.0
        %2012 = vmatprep.subr.mxu0 0.0
        %2013 = vmatpush1.msra.mxu0 0.0
        %2014 = vmatprep.subr.mxu0 0.0
        %2015 = vmatpush1.msra.mxu0 0.0
        %2016 = vmatprep.subr.mxu0 0.0
        %2017 = vmatpush1.msra.mxu0 0.0
        %2018 = vmatprep.subr.mxu0 0.0
        %2019 = vmatpush1.msra.mxu0 0.0
        %2020 = vmatprep.subr.mxu0 0.0
        %2021 = vmatpush1.msra.mxu0 0.0
        %2022 = vmatprep.subr.mxu0 0.0
        %2023 = vmatpush1.msra.mxu0 0.0
        %2024 = vmatprep.subr.mxu0 0.0
        %2025 = vmatpush1.msra.mxu0 0.0
        %2026 = vmatprep.subr.mxu0 0.0
        %2027 = vmatpush1.msra.mxu0 0.0
        %2028 = vmatprep.subr.mxu0 0.0
        %2029 = vmatpush1.msra.mxu0 0.0
        %2030 = vmatprep.subr.mxu0 0.0
        %2031 = vmatpush1.msra.mxu0 0.0
        %2032 = vmatprep.subr.mxu0 0.0
        %2033 = vmatpush1.msra.mxu0 0.0
        %2034 = vmatprep.subr.mxu0 0.0
        %2035 = vmatpush1.msra.mxu0 0.0
        %2036 = vmatprep.subr.mxu0 0.0
        %2037 = vmatpush1.msra.mxu0 0.0
        %2038 = vmatprep.mubr.f32.mxu0 0.0
        %2039 = vmatmul.mubr.f32.gmra.mrb[0].mxu0 %v1872
        %v2040 = vpop.f32.mrb[0].mxu0
        %v2041 = vadd.f32 0.0, %v2040
        %v2042 = vpop.f32.mrb[0].mxu0
        %2043 = vmatprep.mubr.f32.mxu0 0.0
        %2044 = vmatmul.mubr.f32.gmra.mrb[0].mxu0 %v1875
        %v2045 = vpop.f32.mrb[0].mxu0
        %v2046 = vadd.f32 0.0, %v2045
        %v2047 = vpop.f32.mrb[0].mxu0
        %2048 = vdwg.mxu0
        %2049 = vset.pattern.permute.xlu0 1
        %2050 = vperm.xlu0 %2049, %v1861
        %v2051 = vpop.permute.xlu0 %2050
        %2053 = vset.pattern.permute.xlu0 1
        %2054 = vperm.xlu0 %2053, %v1862
        %v2055 = vpop.permute.xlu0 %2054
        %v2057 = vmul.f32 %v2041, %v2051
        %v2058 = vmul.f32 %v2046, %v2055
        %v2059 = vadd.f32 %v1964, %v2057
        %v2060 = vadd.f32 %v1965, %v2058
        %v2061 = vld [vmem:[%s1030] sm:$0xff]
        %v2062 = vld [vmem:[%s1030 + $0x8] sm:$0xff]
        %v2063 = vld [vmem:[%s1030 + $0x10] sm:$0xff]
        %v2064 = vld [vmem:[%s1030 + $0x18] sm:$0xff]
        %v2065 = vld [vmem:[%s1030 + $0x20] sm:$0xff]
        %v2066 = vld [vmem:[%s1030 + $0x28] sm:$0xff]
        %v2067 = vld [vmem:[%s1030 + $0x30] sm:$0xff]
        %v2068 = vld [vmem:[%s1030 + $0x38] sm:$0xff]
        %2069 = vmatprep.subr.mxu0 0.0
        %2070 = vmatpush1.msra.mxu0 %v2061
        %2071 = vmatprep.subr.mxu0 0.0
        %2072 = vmatpush1.msra.mxu0 %v2062
        %2073 = vmatprep.subr.mxu0 0.0
        %2074 = vmatpush1.msra.mxu0 %v2063
        %2075 = vmatprep.subr.mxu0 0.0
        %2076 = vmatpush1.msra.mxu0 %v2064
        %2077 = vmatprep.subr.mxu0 0.0
        %2078 = vmatpush1.msra.mxu0 %v2065
        %2079 = vmatprep.subr.mxu0 0.0
        %2080 = vmatpush1.msra.mxu0 %v2066
        %2081 = vmatprep.subr.mxu0 0.0
        %2082 = vmatpush1.msra.mxu0 %v2067
        %2083 = vmatprep.subr.mxu0 0.0
        %2084 = vmatpush1.msra.mxu0 %v2068
        %2085 = vmatprep.subr.mxu0 0.0
        %2086 = vmatpush1.msra.mxu0 0.0
        %2087 = vmatprep.subr.mxu0 0.0
        %2088 = vmatpush1.msra.mxu0 0.0
        %2089 = vmatprep.subr.mxu0 0.0
        %2090 = vmatpush1.msra.mxu0 0.0
        %2091 = vmatprep.subr.mxu0 0.0
        %2092 = vmatpush1.msra.mxu0 0.0
        %2093 = vmatprep.subr.mxu0 0.0
        %2094 = vmatpush1.msra.mxu0 0.0
        %2095 = vmatprep.subr.mxu0 0.0
        %2096 = vmatpush1.msra.mxu0 0.0
        %2097 = vmatprep.subr.mxu0 0.0
        %2098 = vmatpush1.msra.mxu0 0.0
        %2099 = vmatprep.subr.mxu0 0.0
        %2100 = vmatpush1.msra.mxu0 0.0
        %2101 = vmatprep.subr.mxu0 0.0
        %2102 = vmatpush1.msra.mxu0 0.0
        %2103 = vmatprep.subr.mxu0 0.0
        %2104 = vmatpush1.msra.mxu0 0.0
        %2105 = vmatprep.subr.mxu0 0.0
        %2106 = vmatpush1.msra.mxu0 0.0
        %2107 = vmatprep.subr.mxu0 0.0
        %2108 = vmatpush1.msra.mxu0 0.0
        %2109 = vmatprep.subr.mxu0 0.0
        %2110 = vmatpush1.msra.mxu0 0.0
        %2111 = vmatprep.subr.mxu0 0.0
        %2112 = vmatpush1.msra.mxu0 0.0
        %2113 = vmatprep.subr.mxu0 0.0
        %2114 = vmatpush1.msra.mxu0 0.0
        %2115 = vmatprep.subr.mxu0 0.0
        %2116 = vmatpush1.msra.mxu0 0.0
        %2117 = vmatprep.subr.mxu0 0.0
        %2118 = vmatpush1.msra.mxu0 0.0
        %2119 = vmatprep.subr.mxu0 0.0
        %2120 = vmatpush1.msra.mxu0 0.0
        %2121 = vmatprep.subr.mxu0 0.0
        %2122 = vmatpush1.msra.mxu0 0.0
        %2123 = vmatprep.subr.mxu0 0.0
        %2124 = vmatpush1.msra.mxu0 0.0
        %2125 = vmatprep.subr.mxu0 0.0
        %2126 = vmatpush1.msra.mxu0 0.0
        %2127 = vmatprep.subr.mxu0 0.0
        %2128 = vmatpush1.msra.mxu0 0.0
        %2129 = vmatprep.subr.mxu0 0.0
        %2130 = vmatpush1.msra.mxu0 0.0
        %2131 = vmatprep.subr.mxu0 0.0
        %2132 = vmatpush1.msra.mxu0 0.0
        %2133 = vmatprep.mubr.f32.mxu0 0.0
        %2134 = vmatmul.mubr.f32.gmra.mrb[0].mxu0 %v1872
        %v2135 = vpop.f32.mrb[0].mxu0
        %v2136 = vadd.f32 0.0, %v2135
        %v2137 = vpop.f32.mrb[0].mxu0
        %2138 = vmatprep.mubr.f32.mxu0 0.0
        %2139 = vmatmul.mubr.f32.gmra.mrb[0].mxu0 %v1875
        %v2140 = vpop.f32.mrb[0].mxu0
        %v2141 = vadd.f32 0.0, %v2140
        %v2142 = vpop.f32.mrb[0].mxu0
        %2143 = vdwg.mxu0
        %2144 = vset.pattern.permute.xlu0 2
        %2145 = vperm.xlu0 %2144, %v1861
        %v2146 = vpop.permute.xlu0 %2145
        %2148 = vset.pattern.permute.xlu0 2
        %2149 = vperm.xlu0 %2148, %v1862
        %v2150 = vpop.permute.xlu0 %2149
        %v2152 = vmul.f32 %v2136, %v2146
        %v2153 = vmul.f32 %v2141, %v2150
        %v2154 = vadd.f32 %v2059, %v2152
        %v2155 = vadd.f32 %v2060, %v2153
        %v2156 = vld [vmem:[%s1126] sm:$0xff]
        %v2157 = vld [vmem:[%s1126 + $0x8] sm:$0xff]
        %v2158 = vld [vmem:[%s1126 + $0x10] sm:$0xff]
        %v2159 = vld [vmem:[%s1126 + $0x18] sm:$0xff]
        %v2160 = vld [vmem:[%s1126 + $0x20] sm:$0xff]
        %v2161 = vld [vmem:[%s1126 + $0x28] sm:$0xff]
        %v2162 = vld [vmem:[%s1126 + $0x30] sm:$0xff]
        %v2163 = vld [vmem:[%s1126 + $0x38] sm:$0xff]
        %2164 = vmatprep.subr.mxu0 0.0
        %2165 = vmatpush1.msra.mxu0 %v2156
        %2166 = vmatprep.subr.mxu0 0.0
        %2167 = vmatpush1.msra.mxu0 %v2157
        %2168 = vmatprep.subr.mxu0 0.0
        %2169 = vmatpush1.msra.mxu0 %v2158
        %2170 = vmatprep.subr.mxu0 0.0
        %2171 = vmatpush1.msra.mxu0 %v2159
        %2172 = vmatprep.subr.mxu0 0.0
        %2173 = vmatpush1.msra.mxu0 %v2160
        %2174 = vmatprep.subr.mxu0 0.0
        %2175 = vmatpush1.msra.mxu0 %v2161
        %2176 = vmatprep.subr.mxu0 0.0
        %2177 = vmatpush1.msra.mxu0 %v2162
        %2178 = vmatprep.subr.mxu0 0.0
        %2179 = vmatpush1.msra.mxu0 %v2163
        %2180 = vmatprep.subr.mxu0 0.0
        %2181 = vmatpush1.msra.mxu0 0.0
        %2182 = vmatprep.subr.mxu0 0.0
        %2183 = vmatpush1.msra.mxu0 0.0
        %2184 = vmatprep.subr.mxu0 0.0
        %2185 = vmatpush1.msra.mxu0 0.0
        %2186 = vmatprep.subr.mxu0 0.0
        %2187 = vmatpush1.msra.mxu0 0.0
        %2188 = vmatprep.subr.mxu0 0.0
        %2189 = vmatpush1.msra.mxu0 0.0
        %2190 = vmatprep.subr.mxu0 0.0
        %2191 = vmatpush1.msra.mxu0 0.0
        %2192 = vmatprep.subr.mxu0 0.0
        %2193 = vmatpush1.msra.mxu0 0.0
        %2194 = vmatprep.subr.mxu0 0.0
        %2195 = vmatpush1.msra.mxu0 0.0
        %2196 = vmatprep.subr.mxu0 0.0
        %2197 = vmatpush1.msra.mxu0 0.0
        %2198 = vmatprep.subr.mxu0 0.0
        %2199 = vmatpush1.msra.mxu0 0.0
        %2200 = vmatprep.subr.mxu0 0.0
        %2201 = vmatpush1.msra.mxu0 0.0
        %2202 = vmatprep.subr.mxu0 0.0
        %2203 = vmatpush1.msra.mxu0 0.0
        %2204 = vmatprep.subr.mxu0 0.0
        %2205 = vmatpush1.msra.mxu0 0.0
        %2206 = vmatprep.subr.mxu0 0.0
        %2207 = vmatpush1.msra.mxu0 0.0
        %2208 = vmatprep.subr.mxu0 0.0
        %2209 = vmatpush1.msra.mxu0 0.0
        %2210 = vmatprep.subr.mxu0 0.0
        %2211 = vmatpush1.msra.mxu0 0.0
        %2212 = vmatprep.subr.mxu0 0.0
        %2213 = vmatpush1.msra.mxu0 0.0
        %2214 = vmatprep.subr.mxu0 0.0
        %2215 = vmatpush1.msra.mxu0 0.0
        %2216 = vmatprep.subr.mxu0 0.0
        %2217 = vmatpush1.msra.mxu0 0.0
        %2218 = vmatprep.subr.mxu0 0.0
        %2219 = vmatpush1.msra.mxu0 0.0
        %2220 = vmatprep.subr.mxu0 0.0
        %2221 = vmatpush1.msra.mxu0 0.0
        %2222 = vmatprep.subr.mxu0 0.0
        %2223 = vmatpush1.msra.mxu0 0.0
        %2224 = vmatprep.subr.mxu0 0.0
        %2225 = vmatpush1.msra.mxu0 0.0
        %2226 = vmatprep.subr.mxu0 0.0
        %2227 = vmatpush1.msra.mxu0 0.0
        %2228 = vmatprep.mubr.f32.mxu0 0.0
        %2229 = vmatmul.mubr.f32.gmra.mrb[0].mxu0 %v1872
        %v2230 = vpop.f32.mrb[0].mxu0
        %v2231 = vadd.f32 0.0, %v2230
        %v2232 = vpop.f32.mrb[0].mxu0
        %2233 = vmatprep.mubr.f32.mxu0 0.0
        %2234 = vmatmul.mubr.f32.gmra.mrb[0].mxu0 %v1875
        %v2235 = vpop.f32.mrb[0].mxu0
        %v2236 = vadd.f32 0.0, %v2235
        %v2237 = vpop.f32.mrb[0].mxu0
        %2238 = vdwg.mxu0
        %2239 = vset.pattern.permute.xlu0 3
        %2240 = vperm.xlu0 %2239, %v1861
        %v2241 = vpop.permute.xlu0 %2240
        %2243 = vset.pattern.permute.xlu0 3
        %2244 = vperm.xlu0 %2243, %v1862
        %v2245 = vpop.permute.xlu0 %2244
        %v2247 = vmul.f32 %v2231, %v2241
        %v2248 = vmul.f32 %v2236, %v2245
        %v2249 = vadd.f32 %v2154, %v2247
        %v2250 = vadd.f32 %v2155, %v2248
        %v2251 = vld [vmem:[%s1222] sm:$0xff]
        %v2252 = vld [vmem:[%s1222 + $0x8] sm:$0xff]
        %v2253 = vld [vmem:[%s1222 + $0x10] sm:$0xff]
        %v2254 = vld [vmem:[%s1222 + $0x18] sm:$0xff]
        %v2255 = vld [vmem:[%s1222 + $0x20] sm:$0xff]
        %v2256 = vld [vmem:[%s1222 + $0x28] sm:$0xff]
        %v2257 = vld [vmem:[%s1222 + $0x30] sm:$0xff]
        %v2258 = vld [vmem:[%s1222 + $0x38] sm:$0xff]
        %2259 = vmatprep.subr.mxu0 0.0
        %2260 = vmatpush1.msra.mxu0 %v2251
        %2261 = vmatprep.subr.mxu0 0.0
        %2262 = vmatpush1.msra.mxu0 %v2252
        %2263 = vmatprep.subr.mxu0 0.0
        %2264 = vmatpush1.msra.mxu0 %v2253
        %2265 = vmatprep.subr.mxu0 0.0
        %2266 = vmatpush1.msra.mxu0 %v2254
        %2267 = vmatprep.subr.mxu0 0.0
        %2268 = vmatpush1.msra.mxu0 %v2255
        %2269 = vmatprep.subr.mxu0 0.0
        %2270 = vmatpush1.msra.mxu0 %v2256
        %2271 = vmatprep.subr.mxu0 0.0
        %2272 = vmatpush1.msra.mxu0 %v2257
        %2273 = vmatprep.subr.mxu0 0.0
        %2274 = vmatpush1.msra.mxu0 %v2258
        %2275 = vmatprep.subr.mxu0 0.0
        %2276 = vmatpush1.msra.mxu0 0.0
        %2277 = vmatprep.subr.mxu0 0.0
        %2278 = vmatpush1.msra.mxu0 0.0
        %2279 = vmatprep.subr.mxu0 0.0
        %2280 = vmatpush1.msra.mxu0 0.0
        %2281 = vmatprep.subr.mxu0 0.0
        %2282 = vmatpush1.msra.mxu0 0.0
        %2283 = vmatprep.subr.mxu0 0.0
        %2284 = vmatpush1.msra.mxu0 0.0
        %2285 = vmatprep.subr.mxu0 0.0
        %2286 = vmatpush1.msra.mxu0 0.0
        %2287 = vmatprep.subr.mxu0 0.0
        %2288 = vmatpush1.msra.mxu0 0.0
        %2289 = vmatprep.subr.mxu0 0.0
        %2290 = vmatpush1.msra.mxu0 0.0
        %2291 = vmatprep.subr.mxu0 0.0
        %2292 = vmatpush1.msra.mxu0 0.0
        %2293 = vmatprep.subr.mxu0 0.0
        %2294 = vmatpush1.msra.mxu0 0.0
        %2295 = vmatprep.subr.mxu0 0.0
        %2296 = vmatpush1.msra.mxu0 0.0
        %2297 = vmatprep.subr.mxu0 0.0
        %2298 = vmatpush1.msra.mxu0 0.0
        %2299 = vmatprep.subr.mxu0 0.0
        %2300 = vmatpush1.msra.mxu0 0.0
        %2301 = vmatprep.subr.mxu0 0.0
        %2302 = vmatpush1.msra.mxu0 0.0
        %2303 = vmatprep.subr.mxu0 0.0
        %2304 = vmatpush1.msra.mxu0 0.0
        %2305 = vmatprep.subr.mxu0 0.0
        %2306 = vmatpush1.msra.mxu0 0.0
        %2307 = vmatprep.subr.mxu0 0.0
        %2308 = vmatpush1.msra.mxu0 0.0
        %2309 = vmatprep.subr.mxu0 0.0
        %2310 = vmatpush1.msra.mxu0 0.0
        %2311 = vmatprep.subr.mxu0 0.0
        %2312 = vmatpush1.msra.mxu0 0.0
        %2313 = vmatprep.subr.mxu0 0.0
        %2314 = vmatpush1.msra.mxu0 0.0
        %2315 = vmatprep.subr.mxu0 0.0
        %2316 = vmatpush1.msra.mxu0 0.0
        %2317 = vmatprep.subr.mxu0 0.0
        %2318 = vmatpush1.msra.mxu0 0.0
        %2319 = vmatprep.subr.mxu0 0.0
        %2320 = vmatpush1.msra.mxu0 0.0
        %2321 = vmatprep.subr.mxu0 0.0
        %2322 = vmatpush1.msra.mxu0 0.0
        %2323 = vmatprep.mubr.f32.mxu0 0.0
        %2324 = vmatmul.mubr.f32.gmra.mrb[0].mxu0 %v1872
        %v2325 = vpop.f32.mrb[0].mxu0
        %v2326 = vadd.f32 0.0, %v2325
        %v2327 = vpop.f32.mrb[0].mxu0
        %2328 = vmatprep.mubr.f32.mxu0 0.0
        %2329 = vmatmul.mubr.f32.gmra.mrb[0].mxu0 %v1875
        %v2330 = vpop.f32.mrb[0].mxu0
        %v2331 = vadd.f32 0.0, %v2330
        %v2332 = vpop.f32.mrb[0].mxu0
        %2333 = vdwg.mxu0
        %2334 = vset.pattern.permute.xlu0 4
        %2335 = vperm.xlu0 %2334, %v1861
        %v2336 = vpop.permute.xlu0 %2335
        %2338 = vset.pattern.permute.xlu0 4
        %2339 = vperm.xlu0 %2338, %v1862
        %v2340 = vpop.permute.xlu0 %2339
        %v2342 = vmul.f32 %v2326, %v2336
        %v2343 = vmul.f32 %v2331, %v2340
        %v2344 = vadd.f32 %v2249, %v2342
        %v2345 = vadd.f32 %v2250, %v2343
        %v2346 = vld [vmem:[%s1318] sm:$0xff]
        %v2347 = vld [vmem:[%s1318 + $0x8] sm:$0xff]
        %v2348 = vld [vmem:[%s1318 + $0x10] sm:$0xff]
        %v2349 = vld [vmem:[%s1318 + $0x18] sm:$0xff]
        %v2350 = vld [vmem:[%s1318 + $0x20] sm:$0xff]
        %v2351 = vld [vmem:[%s1318 + $0x28] sm:$0xff]
        %v2352 = vld [vmem:[%s1318 + $0x30] sm:$0xff]
        %v2353 = vld [vmem:[%s1318 + $0x38] sm:$0xff]
        %2354 = vmatprep.subr.mxu0 0.0
        %2355 = vmatpush1.msra.mxu0 %v2346
        %2356 = vmatprep.subr.mxu0 0.0
        %2357 = vmatpush1.msra.mxu0 %v2347
        %2358 = vmatprep.subr.mxu0 0.0
        %2359 = vmatpush1.msra.mxu0 %v2348
        %2360 = vmatprep.subr.mxu0 0.0
        %2361 = vmatpush1.msra.mxu0 %v2349
        %2362 = vmatprep.subr.mxu0 0.0
        %2363 = vmatpush1.msra.mxu0 %v2350
        %2364 = vmatprep.subr.mxu0 0.0
        %2365 = vmatpush1.msra.mxu0 %v2351
        %2366 = vmatprep.subr.mxu0 0.0
        %2367 = vmatpush1.msra.mxu0 %v2352
        %2368 = vmatprep.subr.mxu0 0.0
        %2369 = vmatpush1.msra.mxu0 %v2353
        %2370 = vmatprep.subr.mxu0 0.0
        %2371 = vmatpush1.msra.mxu0 0.0
        %2372 = vmatprep.subr.mxu0 0.0
        %2373 = vmatpush1.msra.mxu0 0.0
        %2374 = vmatprep.subr.mxu0 0.0
        %2375 = vmatpush1.msra.mxu0 0.0
        %2376 = vmatprep.subr.mxu0 0.0
        %2377 = vmatpush1.msra.mxu0 0.0
        %2378 = vmatprep.subr.mxu0 0.0
        %2379 = vmatpush1.msra.mxu0 0.0
        %2380 = vmatprep.subr.mxu0 0.0
        %2381 = vmatpush1.msra.mxu0 0.0
        %2382 = vmatprep.subr.mxu0 0.0
        %2383 = vmatpush1.msra.mxu0 0.0
        %2384 = vmatprep.subr.mxu0 0.0
        %2385 = vmatpush1.msra.mxu0 0.0
        %2386 = vmatprep.subr.mxu0 0.0
        %2387 = vmatpush1.msra.mxu0 0.0
        %2388 = vmatprep.subr.mxu0 0.0
        %2389 = vmatpush1.msra.mxu0 0.0
        %2390 = vmatprep.subr.mxu0 0.0
        %2391 = vmatpush1.msra.mxu0 0.0
        %2392 = vmatprep.subr.mxu0 0.0
        %2393 = vmatpush1.msra.mxu0 0.0
        %2394 = vmatprep.subr.mxu0 0.0
        %2395 = vmatpush1.msra.mxu0 0.0
        %2396 = vmatprep.subr.mxu0 0.0
        %2397 = vmatpush1.msra.mxu0 0.0
        %2398 = vmatprep.subr.mxu0 0.0
        %2399 = vmatpush1.msra.mxu0 0.0
        %2400 = vmatprep.subr.mxu0 0.0
        %2401 = vmatpush1.msra.mxu0 0.0
        %2402 = vmatprep.subr.mxu0 0.0
        %2403 = vmatpush1.msra.mxu0 0.0
        %2404 = vmatprep.subr.mxu0 0.0
        %2405 = vmatpush1.msra.mxu0 0.0
        %2406 = vmatprep.subr.mxu0 0.0
        %2407 = vmatpush1.msra.mxu0 0.0
        %2408 = vmatprep.subr.mxu0 0.0
        %2409 = vmatpush1.msra.mxu0 0.0
        %2410 = vmatprep.subr.mxu0 0.0
        %2411 = vmatpush1.msra.mxu0 0.0
        %2412 = vmatprep.subr.mxu0 0.0
        %2413 = vmatpush1.msra.mxu0 0.0
        %2414 = vmatprep.subr.mxu0 0.0
        %2415 = vmatpush1.msra.mxu0 0.0
        %2416 = vmatprep.subr.mxu0 0.0
        %2417 = vmatpush1.msra.mxu0 0.0
        %2418 = vmatprep.mubr.f32.mxu0 0.0
        %2419 = vmatmul.mubr.f32.gmra.mrb[0].mxu0 %v1872
        %v2420 = vpop.f32.mrb[0].mxu0
        %v2421 = vadd.f32 0.0, %v2420
        %v2422 = vpop.f32.mrb[0].mxu0
        %2423 = vmatprep.mubr.f32.mxu0 0.0
        %2424 = vmatmul.mubr.f32.gmra.mrb[0].mxu0 %v1875
        %v2425 = vpop.f32.mrb[0].mxu0
        %v2426 = vadd.f32 0.0, %v2425
        %v2427 = vpop.f32.mrb[0].mxu0
        %2428 = vdwg.mxu0
        %2429 = vset.pattern.permute.xlu0 5
        %2430 = vperm.xlu0 %2429, %v1861
        %v2431 = vpop.permute.xlu0 %2430
        %2433 = vset.pattern.permute.xlu0 5
        %2434 = vperm.xlu0 %2433, %v1862
        %v2435 = vpop.permute.xlu0 %2434
        %v2437 = vmul.f32 %v2421, %v2431
        %v2438 = vmul.f32 %v2426, %v2435
        %v2439 = vadd.f32 %v2344, %v2437
        %v2440 = vadd.f32 %v2345, %v2438
        %v2441 = vld [vmem:[%s1414] sm:$0xff]
        %v2442 = vld [vmem:[%s1414 + $0x8] sm:$0xff]
        %v2443 = vld [vmem:[%s1414 + $0x10] sm:$0xff]
        %v2444 = vld [vmem:[%s1414 + $0x18] sm:$0xff]
        %v2445 = vld [vmem:[%s1414 + $0x20] sm:$0xff]
        %v2446 = vld [vmem:[%s1414 + $0x28] sm:$0xff]
        %v2447 = vld [vmem:[%s1414 + $0x30] sm:$0xff]
        %v2448 = vld [vmem:[%s1414 + $0x38] sm:$0xff]
        %2449 = vmatprep.subr.mxu0 0.0
        %2450 = vmatpush1.msra.mxu0 %v2441
        %2451 = vmatprep.subr.mxu0 0.0
        %2452 = vmatpush1.msra.mxu0 %v2442
        %2453 = vmatprep.subr.mxu0 0.0
        %2454 = vmatpush1.msra.mxu0 %v2443
        %2455 = vmatprep.subr.mxu0 0.0
        %2456 = vmatpush1.msra.mxu0 %v2444
        %2457 = vmatprep.subr.mxu0 0.0
        %2458 = vmatpush1.msra.mxu0 %v2445
        %2459 = vmatprep.subr.mxu0 0.0
        %2460 = vmatpush1.msra.mxu0 %v2446
        %2461 = vmatprep.subr.mxu0 0.0
        %2462 = vmatpush1.msra.mxu0 %v2447
        %2463 = vmatprep.subr.mxu0 0.0
        %2464 = vmatpush1.msra.mxu0 %v2448
        %2465 = vmatprep.subr.mxu0 0.0
        %2466 = vmatpush1.msra.mxu0 0.0
        %2467 = vmatprep.subr.mxu0 0.0
        %2468 = vmatpush1.msra.mxu0 0.0
        %2469 = vmatprep.subr.mxu0 0.0
        %2470 = vmatpush1.msra.mxu0 0.0
        %2471 = vmatprep.subr.mxu0 0.0
        %2472 = vmatpush1.msra.mxu0 0.0
        %2473 = vmatprep.subr.mxu0 0.0
        %2474 = vmatpush1.msra.mxu0 0.0
        %2475 = vmatprep.subr.mxu0 0.0
        %2476 = vmatpush1.msra.mxu0 0.0
        %2477 = vmatprep.subr.mxu0 0.0
        %2478 = vmatpush1.msra.mxu0 0.0
        %2479 = vmatprep.subr.mxu0 0.0
        %2480 = vmatpush1.msra.mxu0 0.0
        %2481 = vmatprep.subr.mxu0 0.0
        %2482 = vmatpush1.msra.mxu0 0.0
        %2483 = vmatprep.subr.mxu0 0.0
        %2484 = vmatpush1.msra.mxu0 0.0
        %2485 = vmatprep.subr.mxu0 0.0
        %2486 = vmatpush1.msra.mxu0 0.0
        %2487 = vmatprep.subr.mxu0 0.0
        %2488 = vmatpush1.msra.mxu0 0.0
        %2489 = vmatprep.subr.mxu0 0.0
        %2490 = vmatpush1.msra.mxu0 0.0
        %2491 = vmatprep.subr.mxu0 0.0
        %2492 = vmatpush1.msra.mxu0 0.0
        %2493 = vmatprep.subr.mxu0 0.0
        %2494 = vmatpush1.msra.mxu0 0.0
        %2495 = vmatprep.subr.mxu0 0.0
        %2496 = vmatpush1.msra.mxu0 0.0
        %2497 = vmatprep.subr.mxu0 0.0
        %2498 = vmatpush1.msra.mxu0 0.0
        %2499 = vmatprep.subr.mxu0 0.0
        %2500 = vmatpush1.msra.mxu0 0.0
        %2501 = vmatprep.subr.mxu0 0.0
        %2502 = vmatpush1.msra.mxu0 0.0
        %2503 = vmatprep.subr.mxu0 0.0
        %2504 = vmatpush1.msra.mxu0 0.0
        %2505 = vmatprep.subr.mxu0 0.0
        %2506 = vmatpush1.msra.mxu0 0.0
        %2507 = vmatprep.subr.mxu0 0.0
        %2508 = vmatpush1.msra.mxu0 0.0
        %2509 = vmatprep.subr.mxu0 0.0
        %2510 = vmatpush1.msra.mxu0 0.0
        %2511 = vmatprep.subr.mxu0 0.0
        %2512 = vmatpush1.msra.mxu0 0.0
        %2513 = vmatprep.mubr.f32.mxu0 0.0
        %2514 = vmatmul.mubr.f32.gmra.mrb[0].mxu0 %v1872
        %v2515 = vpop.f32.mrb[0].mxu0
        %v2516 = vadd.f32 0.0, %v2515
        %v2517 = vpop.f32.mrb[0].mxu0
        %2518 = vmatprep.mubr.f32.mxu0 0.0
        %2519 = vmatmul.mubr.f32.gmra.mrb[0].mxu0 %v1875
        %v2520 = vpop.f32.mrb[0].mxu0
        %v2521 = vadd.f32 0.0, %v2520
        %v2522 = vpop.f32.mrb[0].mxu0
        %2523 = vdwg.mxu0
        %2524 = vset.pattern.permute.xlu0 6
        %2525 = vperm.xlu0 %2524, %v1861
        %v2526 = vpop.permute.xlu0 %2525
        %2528 = vset.pattern.permute.xlu0 6
        %2529 = vperm.xlu0 %2528, %v1862
        %v2530 = vpop.permute.xlu0 %2529
        %v2532 = vmul.f32 %v2516, %v2526
        %v2533 = vmul.f32 %v2521, %v2530
        %v2534 = vadd.f32 %v2439, %v2532
        %v2535 = vadd.f32 %v2440, %v2533
        %v2536 = vld [vmem:[%s1510] sm:$0xff]
        %v2537 = vld [vmem:[%s1510 + $0x8] sm:$0xff]
        %v2538 = vld [vmem:[%s1510 + $0x10] sm:$0xff]
        %v2539 = vld [vmem:[%s1510 + $0x18] sm:$0xff]
        %v2540 = vld [vmem:[%s1510 + $0x20] sm:$0xff]
        %v2541 = vld [vmem:[%s1510 + $0x28] sm:$0xff]
        %v2542 = vld [vmem:[%s1510 + $0x30] sm:$0xff]
        %v2543 = vld [vmem:[%s1510 + $0x38] sm:$0xff]
        %2544 = vmatprep.subr.mxu0 0.0
        %2545 = vmatpush1.msra.mxu0 %v2536
        %2546 = vmatprep.subr.mxu0 0.0
        %2547 = vmatpush1.msra.mxu0 %v2537
        %2548 = vmatprep.subr.mxu0 0.0
        %2549 = vmatpush1.msra.mxu0 %v2538
        %2550 = vmatprep.subr.mxu0 0.0
        %2551 = vmatpush1.msra.mxu0 %v2539
        %2552 = vmatprep.subr.mxu0 0.0
        %2553 = vmatpush1.msra.mxu0 %v2540
        %2554 = vmatprep.subr.mxu0 0.0
        %2555 = vmatpush1.msra.mxu0 %v2541
        %2556 = vmatprep.subr.mxu0 0.0
        %2557 = vmatpush1.msra.mxu0 %v2542
        %2558 = vmatprep.subr.mxu0 0.0
        %2559 = vmatpush1.msra.mxu0 %v2543
        %2560 = vmatprep.subr.mxu0 0.0
        %2561 = vmatpush1.msra.mxu0 0.0
        %2562 = vmatprep.subr.mxu0 0.0
        %2563 = vmatpush1.msra.mxu0 0.0
        %2564 = vmatprep.subr.mxu0 0.0
        %2565 = vmatpush1.msra.mxu0 0.0
        %2566 = vmatprep.subr.mxu0 0.0
        %2567 = vmatpush1.msra.mxu0 0.0
        %2568 = vmatprep.subr.mxu0 0.0
        %2569 = vmatpush1.msra.mxu0 0.0
        %2570 = vmatprep.subr.mxu0 0.0
        %2571 = vmatpush1.msra.mxu0 0.0
        %2572 = vmatprep.subr.mxu0 0.0
        %2573 = vmatpush1.msra.mxu0 0.0
        %2574 = vmatprep.subr.mxu0 0.0
        %2575 = vmatpush1.msra.mxu0 0.0
        %2576 = vmatprep.subr.mxu0 0.0
        %2577 = vmatpush1.msra.mxu0 0.0
        %2578 = vmatprep.subr.mxu0 0.0
        %2579 = vmatpush1.msra.mxu0 0.0
        %2580 = vmatprep.subr.mxu0 0.0
        %2581 = vmatpush1.msra.mxu0 0.0
        %2582 = vmatprep.subr.mxu0 0.0
        %2583 = vmatpush1.msra.mxu0 0.0
        %2584 = vmatprep.subr.mxu0 0.0
        %2585 = vmatpush1.msra.mxu0 0.0
        %2586 = vmatprep.subr.mxu0 0.0
        %2587 = vmatpush1.msra.mxu0 0.0
        %2588 = vmatprep.subr.mxu0 0.0
        %2589 = vmatpush1.msra.mxu0 0.0
        %2590 = vmatprep.subr.mxu0 0.0
        %2591 = vmatpush1.msra.mxu0 0.0
        %2592 = vmatprep.subr.mxu0 0.0
        %2593 = vmatpush1.msra.mxu0 0.0
        %2594 = vmatprep.subr.mxu0 0.0
        %2595 = vmatpush1.msra.mxu0 0.0
        %2596 = vmatprep.subr.mxu0 0.0
        %2597 = vmatpush1.msra.mxu0 0.0
        %2598 = vmatprep.subr.mxu0 0.0
        %2599 = vmatpush1.msra.mxu0 0.0
        %2600 = vmatprep.subr.mxu0 0.0
        %2601 = vmatpush1.msra.mxu0 0.0
        %2602 = vmatprep.subr.mxu0 0.0
        %2603 = vmatpush1.msra.mxu0 0.0
        %2604 = vmatprep.subr.mxu0 0.0
        %2605 = vmatpush1.msra.mxu0 0.0
        %2606 = vmatprep.subr.mxu0 0.0
        %2607 = vmatpush1.msra.mxu0 0.0
        %2608 = vmatprep.mubr.f32.mxu0 0.0
        %2609 = vmatmul.mubr.f32.gmra.mrb[0].mxu0 %v1872
        %v2610 = vpop.f32.mrb[0].mxu0
        %v2611 = vadd.f32 0.0, %v2610
        %v2612 = vpop.f32.mrb[0].mxu0
        %2613 = vmatprep.mubr.f32.mxu0 0.0
        %2614 = vmatmul.mubr.f32.gmra.mrb[0].mxu0 %v1875
        %v2615 = vpop.f32.mrb[0].mxu0
        %v2616 = vadd.f32 0.0, %v2615
        %v2617 = vpop.f32.mrb[0].mxu0
        %2618 = vdwg.mxu0
        %2619 = vset.pattern.permute.xlu0 7
        %2620 = vperm.xlu0 %2619, %v1861
        %v2621 = vpop.permute.xlu0 %2620
        %2623 = vset.pattern.permute.xlu0 7
        %2624 = vperm.xlu0 %2623, %v1862
        %v2625 = vpop.permute.xlu0 %2624
        %v2627 = vmul.f32 %v2611, %v2621
        %v2628 = vmul.f32 %v2616, %v2625
        %v2629 = vadd.f32 %v2534, %v2627
        %v2630 = vadd.f32 %v2535, %v2628
        %v2631 = vld [vmem:[%s1606] sm:$0xff]
        %v2632 = vld [vmem:[%s1606 + $0x8] sm:$0xff]
        %v2633 = vld [vmem:[%s1606 + $0x10] sm:$0xff]
        %v2634 = vld [vmem:[%s1606 + $0x18] sm:$0xff]
        %v2635 = vld [vmem:[%s1606 + $0x20] sm:$0xff]
        %v2636 = vld [vmem:[%s1606 + $0x28] sm:$0xff]
        %v2637 = vld [vmem:[%s1606 + $0x30] sm:$0xff]
        %v2638 = vld [vmem:[%s1606 + $0x38] sm:$0xff]
        %2639 = vmatprep.subr.mxu0 0.0
        %2640 = vmatpush1.msra.mxu0 %v2631
        %2641 = vmatprep.subr.mxu0 0.0
        %2642 = vmatpush1.msra.mxu0 %v2632
        %2643 = vmatprep.subr.mxu0 0.0
        %2644 = vmatpush1.msra.mxu0 %v2633
        %2645 = vmatprep.subr.mxu0 0.0
        %2646 = vmatpush1.msra.mxu0 %v2634
        %2647 = vmatprep.subr.mxu0 0.0
        %2648 = vmatpush1.msra.mxu0 %v2635
        %2649 = vmatprep.subr.mxu0 0.0
        %2650 = vmatpush1.msra.mxu0 %v2636
        %2651 = vmatprep.subr.mxu0 0.0
        %2652 = vmatpush1.msra.mxu0 %v2637
        %2653 = vmatprep.subr.mxu0 0.0
        %2654 = vmatpush1.msra.mxu0 %v2638
        %2655 = vmatprep.subr.mxu0 0.0
        %2656 = vmatpush1.msra.mxu0 0.0
        %2657 = vmatprep.subr.mxu0 0.0
        %2658 = vmatpush1.msra.mxu0 0.0
        %2659 = vmatprep.subr.mxu0 0.0
        %2660 = vmatpush1.msra.mxu0 0.0
        %2661 = vmatprep.subr.mxu0 0.0
        %2662 = vmatpush1.msra.mxu0 0.0
        %2663 = vmatprep.subr.mxu0 0.0
        %2664 = vmatpush1.msra.mxu0 0.0
        %2665 = vmatprep.subr.mxu0 0.0
        %2666 = vmatpush1.msra.mxu0 0.0
        %2667 = vmatprep.subr.mxu0 0.0
        %2668 = vmatpush1.msra.mxu0 0.0
        %2669 = vmatprep.subr.mxu0 0.0
        %2670 = vmatpush1.msra.mxu0 0.0
        %2671 = vmatprep.subr.mxu0 0.0
        %2672 = vmatpush1.msra.mxu0 0.0
        %2673 = vmatprep.subr.mxu0 0.0
        %2674 = vmatpush1.msra.mxu0 0.0
        %2675 = vmatprep.subr.mxu0 0.0
        %2676 = vmatpush1.msra.mxu0 0.0
        %2677 = vmatprep.subr.mxu0 0.0
        %2678 = vmatpush1.msra.mxu0 0.0
        %2679 = vmatprep.subr.mxu0 0.0
        %2680 = vmatpush1.msra.mxu0 0.0
        %2681 = vmatprep.subr.mxu0 0.0
        %2682 = vmatpush1.msra.mxu0 0.0
        %2683 = vmatprep.subr.mxu0 0.0
        %2684 = vmatpush1.msra.mxu0 0.0
        %2685 = vmatprep.subr.mxu0 0.0
        %2686 = vmatpush1.msra.mxu0 0.0
        %2687 = vmatprep.subr.mxu0 0.0
        %2688 = vmatpush1.msra.mxu0 0.0
        %2689 = vmatprep.subr.mxu0 0.0
        %2690 = vmatpush1.msra.mxu0 0.0
        %2691 = vmatprep.subr.mxu0 0.0
        %2692 = vmatpush1.msra.mxu0 0.0
        %2693 = vmatprep.subr.mxu0 0.0
        %2694 = vmatpush1.msra.mxu0 0.0
        %2695 = vmatprep.subr.mxu0 0.0
        %2696 = vmatpush1.msra.mxu0 0.0
        %2697 = vmatprep.subr.mxu0 0.0
        %2698 = vmatpush1.msra.mxu0 0.0
        %2699 = vmatprep.subr.mxu0 0.0
        %2700 = vmatpush1.msra.mxu0 0.0
        %2701 = vmatprep.subr.mxu0 0.0
        %2702 = vmatpush1.msra.mxu0 0.0
        %2703 = vmatprep.mubr.f32.mxu0 0.0
        %2704 = vmatmul.mubr.f32.gmra.mrb[0].mxu0 %v1872
        %v2705 = vpop.f32.mrb[0].mxu0
        %v2706 = vadd.f32 0.0, %v2705
        %v2707 = vpop.f32.mrb[0].mxu0
        %2708 = vmatprep.mubr.f32.mxu0 0.0
        %2709 = vmatmul.mubr.f32.gmra.mrb[0].mxu0 %v1875
        %v2710 = vpop.f32.mrb[0].mxu0
        %v2711 = vadd.f32 0.0, %v2710
        %v2712 = vpop.f32.mrb[0].mxu0
        %2713 = vdwg.mxu0
        %2714 = vset.pattern.permute.xlu0 8
        %2715 = vperm.xlu0 %2714, %v1861
        %v2716 = vpop.permute.xlu0 %2715
        %2718 = vset.pattern.permute.xlu0 8
        %2719 = vperm.xlu0 %2718, %v1862
        %v2720 = vpop.permute.xlu0 %2719
        %v2722 = vmul.f32 %v2706, %v2716
        %v2723 = vmul.f32 %v2711, %v2720
        %v2724 = vadd.f32 %v2629, %v2722
        %v2725 = vadd.f32 %v2630, %v2723
        %s2726 = scalar_lea.vmem %s8, 16
        %v2727 = vld [vmem:[%s2726] sm:$0xff]
        %v2728 = vld [vmem:[%s2726 + $0x8] sm:$0x7]
        %2730 = vset.pattern.permute.xlu0 0
        %2731 = vperm.xlu0 %2730, %v2727
        %v2732 = vpop.permute.xlu0 %2731
        %2735 = vset.pattern.permute.xlu0 0
        %2736 = vperm.xlu0 %2735, %v2728
        %v2737 = vpop.permute.xlu0 %2736
        %v2739 = vmul.f32 %v2724, %v2732
        %v2740 = vmul.f32 %v2725, %v2737
        %s2741 = scalar_lea.vmem %s9, 16
        %v2742 = vld [vmem:[%s2741] sm:$0xff]
        %v2743 = vld [vmem:[%s2741 + $0x8] sm:$0x7]
        %2745 = vset.pattern.permute.xlu0 0
        %2746 = vperm.xlu0 %2745, %v2742
        %v2747 = vpop.permute.xlu0 %2746
        %2750 = vset.pattern.permute.xlu0 0
        %2751 = vperm.xlu0 %2750, %v2743
        %v2752 = vpop.permute.xlu0 %2751
        %v2754 = vadd.f32 %v2739, %v2747
        %v2755 = vadd.f32 %v2740, %v2752
        %v2756 = vmax.f32 %v2754, 0.0
        %v2757 = vmax.f32 %v2755, 0.0
        %2758 = vst.msk [vmem:[#allocation2 + $0x2] sm:$0x1] %vm1732, %v1858
        %2759 = vst.msk [vmem:[#allocation2 + $0x3] sm:$0x1] %vm1732, %v2756
        %2760 = vst.msk [vmem:[#allocation2 + $0x7] sm:$0x6] %vm1735, %v1858
        %2761 = vst.msk [vmem:[#allocation2 + $0x9] sm:$0x6] %vm1735, %v2756
        %2762 = vst.msk [vmem:[#allocation2 + $0x19] sm:$0xf8] %vm1738, %v1858
        %2763 = vst.msk [vmem:[#allocation2 + $0x21] sm:$0x7] %vm1740, %v1859
        %2764 = vst.msk [vmem:[#allocation2 + $0x21] sm:$0xf8] %vm1738, %v2756
        %2765 = vst.msk [vmem:[#allocation2 + $0x29] sm:$0x7] %vm1740, %v2757
        %v2766 = vld [vmem:[#allocation2] sm:$0xf]
        %v2767 = vld [vmem:[#allocation2 + $0x4] sm:$0xf]
        %v2768 = vld [vmem:[#allocation2 + $0x8] sm:$0xf]
        %v2769 = vld [vmem:[#allocation2 + $0xc] sm:$0xff]
        %v2770 = vld [vmem:[#allocation2 + $0x14] sm:$0xff]
        %v2771 = vld [vmem:[#allocation2 + $0x1c] sm:$0xff]
        %v2772 = vld [vmem:[#allocation2 + $0x24] sm:$0xff]
        %2773 = vxpose.xlu0.b32.start [1/16] %v2766, 128
        %2774 = vxpose.xlu0.b32.cont [2/16] 0.0, 128
        %2775 = vxpose.xlu0.b32.cont [3/16] 0.0, 128
        %2776 = vxpose.xlu0.b32.cont [4/16] 0.0, 128
        %2777 = vxpose.xlu0.b32.cont [5/16] 0.0, 128
        %2778 = vxpose.xlu0.b32.cont [6/16] 0.0, 128
        %2779 = vxpose.xlu0.b32.cont [7/16] 0.0, 128
        %2780 = vxpose.xlu0.b32.cont [8/16] 0.0, 128
        %2781 = vxpose.xlu0.b32.cont [9/16] 0.0, 128
        %2782 = vxpose.xlu0.b32.cont [10/16] 0.0, 128
        %2783 = vxpose.xlu0.b32.cont [11/16] 0.0, 128
        %2784 = vxpose.xlu0.b32.cont [12/16] 0.0, 128
        %2785 = vxpose.xlu0.b32.cont [13/16] 0.0, 128
        %2786 = vxpose.xlu0.b32.cont [14/16] 0.0, 128
        %2787 = vxpose.xlu0.b32.cont [15/16] 0.0, 128
        %2788 = vxpose.xlu0.b32.end [16/16] 0.0, 128
        %v2789 = vpop.trf.xlu0
        %v2790 = vpop.trf.xlu0
        %v2791 = vpop.trf.xlu0
        %v2792 = vpop.trf.xlu0
        %v2793 = vpop.trf.xlu0
        %v2794 = vpop.trf.xlu0
        %v2795 = vpop.trf.xlu0
        %v2796 = vpop.trf.xlu0
        %v2797 = vpop.trf.xlu0
        %v2798 = vpop.trf.xlu0
        %v2799 = vpop.trf.xlu0
        %v2800 = vpop.trf.xlu0
        %v2801 = vpop.trf.xlu0
        %v2802 = vpop.trf.xlu0
        %v2803 = vpop.trf.xlu0
        %v2804 = vpop.trf.xlu0
        %vm2805 = vcmask 31744
        %v2807 = vsel %vm2805, %v2789, 0
        %v2810 = vsel %vm2805, %v2790, 0
        %v2813 = vsel %vm2805, %v2791, 0
        %v2816 = vsel %vm2805, %v2792, 0
        %v2819 = vsel %vm2805, %v2793, 0
        %v2822 = vsel %vm2805, %v2794, 0
        %v2825 = vsel %vm2805, %v2795, 0
        %v2828 = vsel %vm2805, %v2796, 0
        %vm2830 = vcmask 1043456
        %v2832 = vsel %vm2830, %v2767, 0
        %2834 = vmatprep.subr.mxu0 0.0
        %2835 = vmatpush1.msra.mxu0 %v2832
        %2836 = vmatprep.subr.mxu0 0.0
        %2837 = vmatpush1.msra.mxu0 0.0
        %2838 = vmatprep.subr.mxu0 0.0
        %2839 = vmatpush1.msra.mxu0 0.0
        %2840 = vmatprep.subr.mxu0 0.0
        %2841 = vmatpush1.msra.mxu0 0.0
        %2842 = vmatprep.subr.mxu0 0.0
        %2843 = vmatpush1.msra.mxu0 0.0
        %2844 = vmatprep.subr.mxu0 0.0
        %2845 = vmatpush1.msra.mxu0 0.0
        %2846 = vmatprep.subr.mxu0 0.0
        %2847 = vmatpush1.msra.mxu0 0.0
        %2848 = vmatprep.subr.mxu0 0.0
        %2849 = vmatpush1.msra.mxu0 0.0
        %2850 = vmatprep.subr.mxu0 0.0
        %2851 = vmatpush1.msra.mxu0 0.0
        %2852 = vmatprep.subr.mxu0 0.0
        %2853 = vmatpush1.msra.mxu0 0.0
        %2854 = vmatprep.subr.mxu0 0.0
        %2855 = vmatpush1.msra.mxu0 0.0
        %2856 = vmatprep.subr.mxu0 0.0
        %2857 = vmatpush1.msra.mxu0 0.0
        %2858 = vmatprep.subr.mxu0 0.0
        %2859 = vmatpush1.msra.mxu0 0.0
        %2860 = vmatprep.subr.mxu0 0.0
        %2861 = vmatpush1.msra.mxu0 0.0
        %2862 = vmatprep.subr.mxu0 0.0
        %2863 = vmatpush1.msra.mxu0 0.0
        %2864 = vmatprep.subr.mxu0 0.0
        %2865 = vmatpush1.msra.mxu0 0.0
        %2866 = vmatprep.subr.mxu0 0.0
        %2867 = vmatpush1.msra.mxu0 0.0
        %2868 = vmatprep.subr.mxu0 0.0
        %2869 = vmatpush1.msra.mxu0 0.0
        %2870 = vmatprep.subr.mxu0 0.0
        %2871 = vmatpush1.msra.mxu0 0.0
        %2872 = vmatprep.subr.mxu0 0.0
        %2873 = vmatpush1.msra.mxu0 0.0
        %2874 = vmatprep.subr.mxu0 0.0
        %2875 = vmatpush1.msra.mxu0 0.0
        %2876 = vmatprep.subr.mxu0 0.0
        %2877 = vmatpush1.msra.mxu0 0.0
        %2878 = vmatprep.subr.mxu0 0.0
        %2879 = vmatpush1.msra.mxu0 0.0
        %2880 = vmatprep.subr.mxu0 0.0
        %2881 = vmatpush1.msra.mxu0 0.0
        %2882 = vmatprep.subr.mxu0 0.0
        %2883 = vmatpush1.msra.mxu0 0.0
        %2884 = vmatprep.subr.mxu0 0.0
        %2885 = vmatpush1.msra.mxu0 0.0
        %2886 = vmatprep.subr.mxu0 0.0
        %2887 = vmatpush1.msra.mxu0 0.0
        %2888 = vmatprep.subr.mxu0 0.0
        %2889 = vmatpush1.msra.mxu0 0.0
        %2890 = vmatprep.subr.mxu0 0.0
        %2891 = vmatpush1.msra.mxu0 0.0
        %2892 = vmatprep.subr.mxu0 0.0
        %2893 = vmatpush1.msra.mxu0 0.0
        %2894 = vmatprep.subr.mxu0 0.0
        %2895 = vmatpush1.msra.mxu0 0.0
        %2896 = vmatprep.subr.mxu0 0.0
        %2897 = vmatpush1.msra.mxu0 0.0
        %2898 = vmatprep.mubr.f32.mxu0 0.0
        %2899 = vmatmul.mubr.f32.gmra.mrb[0].mxu0 %v2807
        %v2900 = vpop.f32.mrb[0].mxu0
        %v2901 = vadd.f32 0.0, %v2900
        %v2902 = vpop.f32.mrb[0].mxu0
        %2903 = vmatprep.mubr.f32.mxu0 0.0
        %2904 = vmatmul.mubr.f32.gmra.mrb[0].mxu0 %v2810
        %v2905 = vpop.f32.mrb[0].mxu0
        %v2906 = vadd.f32 0.0, %v2905
        %v2907 = vpop.f32.mrb[0].mxu0
        %2908 = vmatprep.mubr.f32.mxu0 0.0
        %2909 = vmatmul.mubr.f32.gmra.mrb[0].mxu0 %v2813
        %v2910 = vpop.f32.mrb[0].mxu0
        %v2911 = vadd.f32 0.0, %v2910
        %v2912 = vpop.f32.mrb[0].mxu0
        %2913 = vmatprep.mubr.f32.mxu0 0.0
        %2914 = vmatmul.mubr.f32.gmra.mrb[0].mxu0 %v2816
        %v2915 = vpop.f32.mrb[0].mxu0
        %v2916 = vadd.f32 0.0, %v2915
        %v2917 = vpop.f32.mrb[0].mxu0
        %2918 = vmatprep.mubr.f32.mxu0 0.0
        %2919 = vmatmul.mubr.f32.gmra.mrb[0].mxu0 %v2819
        %v2920 = vpop.f32.mrb[0].mxu0
        %v2921 = vadd.f32 0.0, %v2920
        %v2922 = vpop.f32.mrb[0].mxu0
        %2923 = vmatprep.mubr.f32.mxu0 0.0
        %2924 = vmatmul.mubr.f32.gmra.mrb[0].mxu0 %v2822
        %v2925 = vpop.f32.mrb[0].mxu0
        %v2926 = vadd.f32 0.0, %v2925
        %v2927 = vpop.f32.mrb[0].mxu0
        %2928 = vmatprep.mubr.f32.mxu0 0.0
        %2929 = vmatmul.mubr.f32.gmra.mrb[0].mxu0 %v2825
        %v2930 = vpop.f32.mrb[0].mxu0
        %v2931 = vadd.f32 0.0, %v2930
        %v2932 = vpop.f32.mrb[0].mxu0
        %2933 = vmatprep.mubr.f32.mxu0 0.0
        %2934 = vmatmul.mubr.f32.gmra.mrb[0].mxu0 %v2828
        %v2935 = vpop.f32.mrb[0].mxu0
        %v2936 = vadd.f32 0.0, %v2935
        %v2937 = vpop.f32.mrb[0].mxu0
        %2938 = vdwg.mxu0
        %v2939 = vsel %vm838, %v2901, -inf
        %2940 = vmax.xlane.f32.xlu0 %v2939
        %v2941 = vpop.xlane.xlu0 %2940
        %v2942 = vsel %vm838, %v2906, -inf
        %2943 = vmax.xlane.f32.xlu0 %v2942
        %v2944 = vpop.xlane.xlu0 %2943
        %v2945 = vsel %vm838, %v2911, -inf
        %2946 = vmax.xlane.f32.xlu0 %v2945
        %v2947 = vpop.xlane.xlu0 %2946
        %v2948 = vsel %vm838, %v2916, -inf
        %2949 = vmax.xlane.f32.xlu0 %v2948
        %v2950 = vpop.xlane.xlu0 %2949
        %v2951 = vsel %vm838, %v2921, -inf
        %2952 = vmax.xlane.f32.xlu0 %v2951
        %v2953 = vpop.xlane.xlu0 %2952
        %v2954 = vsel %vm838, %v2926, -inf
        %2955 = vmax.xlane.f32.xlu0 %v2954
        %v2956 = vpop.xlane.xlu0 %2955
        %v2957 = vsel %vm838, %v2931, -inf
        %2958 = vmax.xlane.f32.xlu0 %v2957
        %v2959 = vpop.xlane.xlu0 %2958
        %v2960 = vsel %vm838, %v2936, -inf
        %2961 = vmax.xlane.f32.xlu0 %v2960
        %v2962 = vpop.xlane.xlu0 %2961
        %v2963 = vsub.f32 %v2901, %v2941
        %v2964 = vsub.f32 %v2906, %v2944
        %v2965 = vsub.f32 %v2911, %v2947
        %v2966 = vsub.f32 %v2916, %v2950
        %v2967 = vsub.f32 %v2921, %v2953
        %v2968 = vsub.f32 %v2926, %v2956
        %v2969 = vsub.f32 %v2931, %v2959
        %v2970 = vsub.f32 %v2936, %v2962
        %v2971 = vmul.f32 %v2963, 1.442695
        %v2972 = vpow.pop %v2971
        %v2973 = vmul.f32 %v2964, 1.442695
        %v2974 = vpow.pop %v2973
        %v2975 = vmul.f32 %v2965, 1.442695
        %v2976 = vpow.pop %v2975
        %v2977 = vmul.f32 %v2966, 1.442695
        %v2978 = vpow.pop %v2977
        %v2979 = vmul.f32 %v2967, 1.442695
        %v2980 = vpow.pop %v2979
        %v2981 = vmul.f32 %v2968, 1.442695
        %v2982 = vpow.pop %v2981
        %v2983 = vmul.f32 %v2969, 1.442695
        %v2984 = vpow.pop %v2983
        %v2985 = vmul.f32 %v2970, 1.442695
        %v2986 = vpow.pop %v2985
        %v2987 = vsel %vm838, %v2972, 0.0
        %2988 = vadd.xlane.f32.xlu0 %v2987
        %v2989 = vpop.xlane.xlu0 %2988
        %v2990 = vsel %vm838, %v2974, 0.0
        %2991 = vadd.xlane.f32.xlu0 %v2990
        %v2992 = vpop.xlane.xlu0 %2991
        %v2993 = vsel %vm838, %v2976, 0.0
        %2994 = vadd.xlane.f32.xlu0 %v2993
        %v2995 = vpop.xlane.xlu0 %2994
        %v2996 = vsel %vm838, %v2978, 0.0
        %2997 = vadd.xlane.f32.xlu0 %v2996
        %v2998 = vpop.xlane.xlu0 %2997
        %v2999 = vsel %vm838, %v2980, 0.0
        %3000 = vadd.xlane.f32.xlu0 %v2999
        %v3001 = vpop.xlane.xlu0 %3000
        %v3002 = vsel %vm838, %v2982, 0.0
        %3003 = vadd.xlane.f32.xlu0 %v3002
        %v3004 = vpop.xlane.xlu0 %3003
        %v3005 = vsel %vm838, %v2984, 0.0
        %3006 = vadd.xlane.f32.xlu0 %v3005
        %v3007 = vpop.xlane.xlu0 %3006
        %v3008 = vsel %vm838, %v2986, 0.0
        %3009 = vadd.xlane.f32.xlu0 %v3008
        %v3010 = vpop.xlane.xlu0 %3009
        %v3011 = vrcp.pop %v2989
        %v3012 = vrcp.pop %v2992
        %v3013 = vrcp.pop %v2995
        %v3014 = vrcp.pop %v2998
        %v3015 = vrcp.pop %v3001
        %v3016 = vrcp.pop %v3004
        %v3017 = vrcp.pop %v3007
        %v3018 = vrcp.pop %v3010
        %v3019 = vmul.f32 %v2972, %v3011
        %v3020 = vmul.f32 %v2974, %v3012
        %v3021 = vmul.f32 %v2976, %v3013
        %v3022 = vmul.f32 %v2978, %v3014
        %v3023 = vmul.f32 %v2980, %v3015
        %v3024 = vmul.f32 %v2982, %v3016
        %v3025 = vmul.f32 %v2984, %v3017
        %v3026 = vmul.f32 %v2986, %v3018
        %v3028 = vsel %vm2830, %v2768, 0
        %3030 = vmatprep.subr.mxu0 0.0
        %3031 = vmatpush1.msra.mxu0 %v3028
        %3032 = vmatprep.subr.mxu0 0.0
        %3033 = vmatpush1.msra.mxu0 0.0
        %3034 = vmatprep.subr.mxu0 0.0
        %3035 = vmatpush1.msra.mxu0 0.0
        %3036 = vmatprep.subr.mxu0 0.0
        %3037 = vmatpush1.msra.mxu0 0.0
        %3038 = vmatprep.subr.mxu0 0.0
        %3039 = vmatpush1.msra.mxu0 0.0
        %3040 = vmatprep.subr.mxu0 0.0
        %3041 = vmatpush1.msra.mxu0 0.0
        %3042 = vmatprep.subr.mxu0 0.0
        %3043 = vmatpush1.msra.mxu0 0.0
        %3044 = vmatprep.subr.mxu0 0.0
        %3045 = vmatpush1.msra.mxu0 0.0
        %3046 = vmatprep.subr.mxu0 0.0
        %3047 = vmatpush1.msra.mxu0 0.0
        %3048 = vmatprep.subr.mxu0 0.0
        %3049 = vmatpush1.msra.mxu0 0.0
        %3050 = vmatprep.subr.mxu0 0.0
        %3051 = vmatpush1.msra.mxu0 0.0
        %3052 = vmatprep.subr.mxu0 0.0
        %3053 = vmatpush1.msra.mxu0 0.0
        %3054 = vmatprep.subr.mxu0 0.0
        %3055 = vmatpush1.msra.mxu0 0.0
        %3056 = vmatprep.subr.mxu0 0.0
        %3057 = vmatpush1.msra.mxu0 0.0
        %3058 = vmatprep.subr.mxu0 0.0
        %3059 = vmatpush1.msra.mxu0 0.0
        %3060 = vmatprep.subr.mxu0 0.0
        %3061 = vmatpush1.msra.mxu0 0.0
        %3062 = vmatprep.subr.mxu0 0.0
        %3063 = vmatpush1.msra.mxu0 0.0
        %3064 = vmatprep.subr.mxu0 0.0
        %3065 = vmatpush1.msra.mxu0 0.0
        %3066 = vmatprep.subr.mxu0 0.0
        %3067 = vmatpush1.msra.mxu0 0.0
        %3068 = vmatprep.subr.mxu0 0.0
        %3069 = vmatpush1.msra.mxu0 0.0
        %3070 = vmatprep.subr.mxu0 0.0
        %3071 = vmatpush1.msra.mxu0 0.0
        %3072 = vmatprep.subr.mxu0 0.0
        %3073 = vmatpush1.msra.mxu0 0.0
        %3074 = vmatprep.subr.mxu0 0.0
        %3075 = vmatpush1.msra.mxu0 0.0
        %3076 = vmatprep.subr.mxu0 0.0
        %3077 = vmatpush1.msra.mxu0 0.0
        %3078 = vmatprep.subr.mxu0 0.0
        %3079 = vmatpush1.msra.mxu0 0.0
        %3080 = vmatprep.subr.mxu0 0.0
        %3081 = vmatpush1.msra.mxu0 0.0
        %3082 = vmatprep.subr.mxu0 0.0
        %3083 = vmatpush1.msra.mxu0 0.0
        %3084 = vmatprep.subr.mxu0 0.0
        %3085 = vmatpush1.msra.mxu0 0.0
        %3086 = vmatprep.subr.mxu0 0.0
        %3087 = vmatpush1.msra.mxu0 0.0
        %3088 = vmatprep.subr.mxu0 0.0
        %3089 = vmatpush1.msra.mxu0 0.0
        %3090 = vmatprep.subr.mxu0 0.0
        %3091 = vmatpush1.msra.mxu0 0.0
        %3092 = vmatprep.subr.mxu0 0.0
        %3093 = vmatpush1.msra.mxu0 0.0
        %3094 = vmatprep.mubr.f32.mxu0 0.0
        %3095 = vmatmul.mubr.f32.gmra.mrb[0].mxu0 %v2807
        %v3096 = vpop.f32.mrb[0].mxu0
        %v3097 = vadd.f32 0.0, %v3096
        %v3098 = vpop.f32.mrb[0].mxu0
        %3099 = vmatprep.mubr.f32.mxu0 0.0
        %3100 = vmatmul.mubr.f32.gmra.mrb[0].mxu0 %v2810
        %v3101 = vpop.f32.mrb[0].mxu0
        %v3102 = vadd.f32 0.0, %v3101
        %v3103 = vpop.f32.mrb[0].mxu0
        %3104 = vmatprep.mubr.f32.mxu0 0.0
        %3105 = vmatmul.mubr.f32.gmra.mrb[0].mxu0 %v2813
        %v3106 = vpop.f32.mrb[0].mxu0
        %v3107 = vadd.f32 0.0, %v3106
        %v3108 = vpop.f32.mrb[0].mxu0
        %3109 = vmatprep.mubr.f32.mxu0 0.0
        %3110 = vmatmul.mubr.f32.gmra.mrb[0].mxu0 %v2816
        %v3111 = vpop.f32.mrb[0].mxu0
        %v3112 = vadd.f32 0.0, %v3111
        %v3113 = vpop.f32.mrb[0].mxu0
        %3114 = vmatprep.mubr.f32.mxu0 0.0
        %3115 = vmatmul.mubr.f32.gmra.mrb[0].mxu0 %v2819
        %v3116 = vpop.f32.mrb[0].mxu0
        %v3117 = vadd.f32 0.0, %v3116
        %v3118 = vpop.f32.mrb[0].mxu0
        %3119 = vmatprep.mubr.f32.mxu0 0.0
        %3120 = vmatmul.mubr.f32.gmra.mrb[0].mxu0 %v2822
        %v3121 = vpop.f32.mrb[0].mxu0
        %v3122 = vadd.f32 0.0, %v3121
        %v3123 = vpop.f32.mrb[0].mxu0
        %3124 = vmatprep.mubr.f32.mxu0 0.0
        %3125 = vmatmul.mubr.f32.gmra.mrb[0].mxu0 %v2825
        %v3126 = vpop.f32.mrb[0].mxu0
        %v3127 = vadd.f32 0.0, %v3126
        %v3128 = vpop.f32.mrb[0].mxu0
        %3129 = vmatprep.mubr.f32.mxu0 0.0
        %3130 = vmatmul.mubr.f32.gmra.mrb[0].mxu0 %v2828
        %v3131 = vpop.f32.mrb[0].mxu0
        %v3132 = vadd.f32 0.0, %v3131
        %v3133 = vpop.f32.mrb[0].mxu0
        %3134 = vdwg.mxu0
        %v3135 = vsel %vm838, %v3097, -inf
        %3136 = vmax.xlane.f32.xlu0 %v3135
        %v3137 = vpop.xlane.xlu0 %3136
        %v3138 = vsel %vm838, %v3102, -inf
        %3139 = vmax.xlane.f32.xlu0 %v3138
        %v3140 = vpop.xlane.xlu0 %3139
        %v3141 = vsel %vm838, %v3107, -inf
        %3142 = vmax.xlane.f32.xlu0 %v3141
        %v3143 = vpop.xlane.xlu0 %3142
        %v3144 = vsel %vm838, %v3112, -inf
        %3145 = vmax.xlane.f32.xlu0 %v3144
        %v3146 = vpop.xlane.xlu0 %3145
        %v3147 = vsel %vm838, %v3117, -inf
        %3148 = vmax.xlane.f32.xlu0 %v3147
        %v3149 = vpop.xlane.xlu0 %3148
        %v3150 = vsel %vm838, %v3122, -inf
        %3151 = vmax.xlane.f32.xlu0 %v3150
        %v3152 = vpop.xlane.xlu0 %3151
        %v3153 = vsel %vm838, %v3127, -inf
        %3154 = vmax.xlane.f32.xlu0 %v3153
        %v3155 = vpop.xlane.xlu0 %3154
        %v3156 = vsel %vm838, %v3132, -inf
        %3157 = vmax.xlane.f32.xlu0 %v3156
        %v3158 = vpop.xlane.xlu0 %3157
        %v3159 = vsub.f32 %v3097, %v3137
        %v3160 = vsub.f32 %v3102, %v3140
        %v3161 = vsub.f32 %v3107, %v3143
        %v3162 = vsub.f32 %v3112, %v3146
        %v3163 = vsub.f32 %v3117, %v3149
        %v3164 = vsub.f32 %v3122, %v3152
        %v3165 = vsub.f32 %v3127, %v3155
        %v3166 = vsub.f32 %v3132, %v3158
        %v3167 = vmul.f32 %v3159, 1.442695
        %v3168 = vpow.pop %v3167
        %v3169 = vmul.f32 %v3160, 1.442695
        %v3170 = vpow.pop %v3169
        %v3171 = vmul.f32 %v3161, 1.442695
        %v3172 = vpow.pop %v3171
        %v3173 = vmul.f32 %v3162, 1.442695
        %v3174 = vpow.pop %v3173
        %v3175 = vmul.f32 %v3163, 1.442695
        %v3176 = vpow.pop %v3175
        %v3177 = vmul.f32 %v3164, 1.442695
        %v3178 = vpow.pop %v3177
        %v3179 = vmul.f32 %v3165, 1.442695
        %v3180 = vpow.pop %v3179
        %v3181 = vmul.f32 %v3166, 1.442695
        %v3182 = vpow.pop %v3181
        %v3183 = vsel %vm838, %v3168, 0.0
        %3184 = vadd.xlane.f32.xlu0 %v3183
        %v3185 = vpop.xlane.xlu0 %3184
        %v3186 = vsel %vm838, %v3170, 0.0
        %3187 = vadd.xlane.f32.xlu0 %v3186
        %v3188 = vpop.xlane.xlu0 %3187
        %v3189 = vsel %vm838, %v3172, 0.0
        %3190 = vadd.xlane.f32.xlu0 %v3189
        %v3191 = vpop.xlane.xlu0 %3190
        %v3192 = vsel %vm838, %v3174, 0.0
        %3193 = vadd.xlane.f32.xlu0 %v3192
        %v3194 = vpop.xlane.xlu0 %3193
        %v3195 = vsel %vm838, %v3176, 0.0
        %3196 = vadd.xlane.f32.xlu0 %v3195
        %v3197 = vpop.xlane.xlu0 %3196
        %v3198 = vsel %vm838, %v3178, 0.0
        %3199 = vadd.xlane.f32.xlu0 %v3198
        %v3200 = vpop.xlane.xlu0 %3199
        %v3201 = vsel %vm838, %v3180, 0.0
        %3202 = vadd.xlane.f32.xlu0 %v3201
        %v3203 = vpop.xlane.xlu0 %3202
        %v3204 = vsel %vm838, %v3182, 0.0
        %3205 = vadd.xlane.f32.xlu0 %v3204
        %v3206 = vpop.xlane.xlu0 %3205
        %v3207 = vrcp.pop %v3185
        %v3208 = vrcp.pop %v3188
        %v3209 = vrcp.pop %v3191
        %v3210 = vrcp.pop %v3194
        %v3211 = vrcp.pop %v3197
        %v3212 = vrcp.pop %v3200
        %v3213 = vrcp.pop %v3203
        %v3214 = vrcp.pop %v3206
        %v3215 = vmul.f32 %v3168, %v3207
        %v3216 = vmul.f32 %v3170, %v3208
        %v3217 = vmul.f32 %v3172, %v3209
        %v3218 = vmul.f32 %v3174, %v3210
        %v3219 = vmul.f32 %v3176, %v3211
        %v3220 = vmul.f32 %v3178, %v3212
        %v3221 = vmul.f32 %v3180, %v3213
        %v3222 = vmul.f32 %v3182, %v3214
        %v3224 = vsel %vm838, %v2769, 0
        %v3227 = vsel %vm838, %v2770, 0
        %v3230 = vsel %vm838, %v3019, 0
        %v3233 = vsel %vm838, %v3020, 0
        %v3236 = vsel %vm838, %v3021, 0
        %v3239 = vsel %vm838, %v3022, 0
        %v3242 = vsel %vm838, %v3023, 0
        %v3245 = vsel %vm838, %v3024, 0
        %v3248 = vsel %vm838, %v3025, 0
        %v3251 = vsel %vm838, %v3026, 0
        %3253 = vmatprep.subr.mxu0 0.0
        %3254 = vmatpush1.xpose.msra.mxu0 %v3230
        %3255 = vmatprep.subr.mxu0 0.0
        %3256 = vmatpush1.xpose.msra.mxu0 %v3233
        %3257 = vmatprep.subr.mxu0 0.0
        %3258 = vmatpush1.xpose.msra.mxu0 %v3236
        %3259 = vmatprep.subr.mxu0 0.0
        %3260 = vmatpush1.xpose.msra.mxu0 %v3239
        %3261 = vmatprep.subr.mxu0 0.0
        %3262 = vmatpush1.xpose.msra.mxu0 %v3242
        %3263 = vmatprep.subr.mxu0 0.0
        %3264 = vmatpush1.xpose.msra.mxu0 %v3245
        %3265 = vmatprep.subr.mxu0 0.0
        %3266 = vmatpush1.xpose.msra.mxu0 %v3248
        %3267 = vmatprep.subr.mxu0 0.0
        %3268 = vmatpush1.xpose.msra.mxu0 %v3251
        %3269 = vmatprep.subr.mxu0 0.0
        %3270 = vmatpush1.xpose.msra.mxu0 0.0
        %3271 = vmatprep.subr.mxu0 0.0
        %3272 = vmatpush1.xpose.msra.mxu0 0.0
        %3273 = vmatprep.subr.mxu0 0.0
        %3274 = vmatpush1.xpose.msra.mxu0 0.0
        %3275 = vmatprep.subr.mxu0 0.0
        %3276 = vmatpush1.xpose.msra.mxu0 0.0
        %3277 = vmatprep.subr.mxu0 0.0
        %3278 = vmatpush1.xpose.msra.mxu0 0.0
        %3279 = vmatprep.subr.mxu0 0.0
        %3280 = vmatpush1.xpose.msra.mxu0 0.0
        %3281 = vmatprep.subr.mxu0 0.0
        %3282 = vmatpush1.xpose.msra.mxu0 0.0
        %3283 = vmatprep.subr.mxu0 0.0
        %3284 = vmatpush1.xpose.msra.mxu0 0.0
        %3285 = vmatprep.subr.mxu0 0.0
        %3286 = vmatpush1.xpose.msra.mxu0 0.0
        %3287 = vmatprep.subr.mxu0 0.0
        %3288 = vmatpush1.xpose.msra.mxu0 0.0
        %3289 = vmatprep.subr.mxu0 0.0
        %3290 = vmatpush1.xpose.msra.mxu0 0.0
        %3291 = vmatprep.subr.mxu0 0.0
        %3292 = vmatpush1.xpose.msra.mxu0 0.0
        %3293 = vmatprep.subr.mxu0 0.0
        %3294 = vmatpush1.xpose.msra.mxu0 0.0
        %3295 = vmatprep.subr.mxu0 0.0
        %3296 = vmatpush1.xpose.msra.mxu0 0.0
        %3297 = vmatprep.subr.mxu0 0.0
        %3298 = vmatpush1.xpose.msra.mxu0 0.0
        %3299 = vmatprep.subr.mxu0 0.0
        %3300 = vmatpush1.xpose.msra.mxu0 0.0
        %3301 = vmatprep.subr.mxu0 0.0
        %3302 = vmatpush1.xpose.msra.mxu0 0.0
        %3303 = vmatprep.subr.mxu0 0.0
        %3304 = vmatpush1.xpose.msra.mxu0 0.0
        %3305 = vmatprep.subr.mxu0 0.0
        %3306 = vmatpush1.xpose.msra.mxu0 0.0
        %3307 = vmatprep.subr.mxu0 0.0
        %3308 = vmatpush1.xpose.msra.mxu0 0.0
        %3309 = vmatprep.subr.mxu0 0.0
        %3310 = vmatpush1.xpose.msra.mxu0 0.0
        %3311 = vmatprep.subr.mxu0 0.0
        %3312 = vmatpush1.xpose.msra.mxu0 0.0
        %3313 = vmatprep.subr.mxu0 0.0
        %3314 = vmatpush1.xpose.msra.mxu0 0.0
        %3315 = vmatprep.subr.mxu0 0.0
        %3316 = vmatpush1.xpose.msra.mxu0 0.0
        %3317 = vmatprep.mubr.f32.mxu0 0.0
        %3318 = vmatmul.mubr.f32.gmra.mrb[0].mxu0 %v3224
        %v3319 = vpop.f32.mrb[0].mxu0
        %v3320 = vadd.f32 0.0, %v3319
        %v3321 = vpop.f32.mrb[0].mxu0
        %3322 = vmatprep.mubr.f32.mxu0 0.0
        %3323 = vmatmul.mubr.f32.gmra.mrb[0].mxu0 %v3227
        %v3324 = vpop.f32.mrb[0].mxu0
        %v3325 = vadd.f32 0.0, %v3324
        %v3326 = vpop.f32.mrb[0].mxu0
        %3327 = vdwg.mxu0
        %v3329 = vsel %vm838, %v2771, 0
        %v3332 = vsel %vm838, %v2772, 0
        %v3335 = vsel %vm838, %v3215, 0
        %v3338 = vsel %vm838, %v3216, 0
        %v3341 = vsel %vm838, %v3217, 0
        %v3344 = vsel %vm838, %v3218, 0
        %v3347 = vsel %vm838, %v3219, 0
        %v3350 = vsel %vm838, %v3220, 0
        %v3353 = vsel %vm838, %v3221, 0
        %v3356 = vsel %vm838, %v3222, 0
        %3358 = vmatprep.subr.mxu0 0.0
        %3359 = vmatpush1.xpose.msra.mxu0 %v3335
        %3360 = vmatprep.subr.mxu0 0.0
        %3361 = vmatpush1.xpose.msra.mxu0 %v3338
        %3362 = vmatprep.subr.mxu0 0.0
        %3363 = vmatpush1.xpose.msra.mxu0 %v3341
        %3364 = vmatprep.subr.mxu0 0.0
        %3365 = vmatpush1.xpose.msra.mxu0 %v3344
        %3366 = vmatprep.subr.mxu0 0.0
        %3367 = vmatpush1.xpose.msra.mxu0 %v3347
        %3368 = vmatprep.subr.mxu0 0.0
        %3369 = vmatpush1.xpose.msra.mxu0 %v3350
        %3370 = vmatprep.subr.mxu0 0.0
        %3371 = vmatpush1.xpose.msra.mxu0 %v3353
        %3372 = vmatprep.subr.mxu0 0.0
        %3373 = vmatpush1.xpose.msra.mxu0 %v3356
        %3374 = vmatprep.subr.mxu0 0.0
        %3375 = vmatpush1.xpose.msra.mxu0 0.0
        %3376 = vmatprep.subr.mxu0 0.0
        %3377 = vmatpush1.xpose.msra.mxu0 0.0
        %3378 = vmatprep.subr.mxu0 0.0
        %3379 = vmatpush1.xpose.msra.mxu0 0.0
        %3380 = vmatprep.subr.mxu0 0.0
        %3381 = vmatpush1.xpose.msra.mxu0 0.0
        %3382 = vmatprep.subr.mxu0 0.0
        %3383 = vmatpush1.xpose.msra.mxu0 0.0
        %3384 = vmatprep.subr.mxu0 0.0
        %3385 = vmatpush1.xpose.msra.mxu0 0.0
        %3386 = vmatprep.subr.mxu0 0.0
        %3387 = vmatpush1.xpose.msra.mxu0 0.0
        %3388 = vmatprep.subr.mxu0 0.0
        %3389 = vmatpush1.xpose.msra.mxu0 0.0
        %3390 = vmatprep.subr.mxu0 0.0
        %3391 = vmatpush1.xpose.msra.mxu0 0.0
        %3392 = vmatprep.subr.mxu0 0.0
        %3393 = vmatpush1.xpose.msra.mxu0 0.0
        %3394 = vmatprep.subr.mxu0 0.0
        %3395 = vmatpush1.xpose.msra.mxu0 0.0
        %3396 = vmatprep.subr.mxu0 0.0
        %3397 = vmatpush1.xpose.msra.mxu0 0.0
        %3398 = vmatprep.subr.mxu0 0.0
        %3399 = vmatpush1.xpose.msra.mxu0 0.0
        %3400 = vmatprep.subr.mxu0 0.0
        %3401 = vmatpush1.xpose.msra.mxu0 0.0
        %3402 = vmatprep.subr.mxu0 0.0
        %3403 = vmatpush1.xpose.msra.mxu0 0.0
        %3404 = vmatprep.subr.mxu0 0.0
        %3405 = vmatpush1.xpose.msra.mxu0 0.0
        %3406 = vmatprep.subr.mxu0 0.0
        %3407 = vmatpush1.xpose.msra.mxu0 0.0
        %3408 = vmatprep.subr.mxu0 0.0
        %3409 = vmatpush1.xpose.msra.mxu0 0.0
        %3410 = vmatprep.subr.mxu0 0.0
        %3411 = vmatpush1.xpose.msra.mxu0 0.0
        %3412 = vmatprep.subr.mxu0 0.0
        %3413 = vmatpush1.xpose.msra.mxu0 0.0
        %3414 = vmatprep.subr.mxu0 0.0
        %3415 = vmatpush1.xpose.msra.mxu0 0.0
        %3416 = vmatprep.subr.mxu0 0.0
        %3417 = vmatpush1.xpose.msra.mxu0 0.0
        %3418 = vmatprep.subr.mxu0 0.0
        %3419 = vmatpush1.xpose.msra.mxu0 0.0
        %3420 = vmatprep.subr.mxu0 0.0
        %3421 = vmatpush1.xpose.msra.mxu0 0.0
        %3422 = vmatprep.mubr.f32.mxu0 0.0
        %3423 = vmatmul.mubr.f32.gmra.mrb[0].mxu0 %v3329
        %v3424 = vpop.f32.mrb[0].mxu0
        %v3425 = vadd.f32 0.0, %v3424
        %v3426 = vpop.f32.mrb[0].mxu0
        %3427 = vmatprep.mubr.f32.mxu0 0.0
        %3428 = vmatmul.mubr.f32.gmra.mrb[0].mxu0 %v3332
        %v3429 = vpop.f32.mrb[0].mxu0
        %v3430 = vadd.f32 0.0, %v3429
        %v3431 = vpop.f32.mrb[0].mxu0
        %3432 = vdwg.mxu0
        %v3433 = vstv %s709
        %v3434 = vmul.f32 %v3433, %v3320
        %v3435 = vmul.f32 %v3433, %v3325
        %v3436 = vadd.f32 %v3434, %v710
        %v3437 = vadd.f32 %v3435, %v711
        %v3438 = vmul.f32 %v3433, %v3425
        %v3439 = vmul.f32 %v3433, %v3430
        %v3440 = vadd.f32 %v3438, %v712
        %v3441 = vadd.f32 %v3439, %v713
        %3442 = vst.msk [vmem:[%s691] sm:$0xff] %vm838, %v3436
        %3443 = vst.msk [vmem:[%s691 + $0x8] sm:$0xff] %vm838, %v3437
        %3444 = vst.msk [vmem:[%s698] sm:$0xff] %vm838, %v3440
        %3445 = vst.msk [vmem:[%s698 + $0x8] sm:$0xff] %vm838, %v3441
        %v3446 = vld [vmem:[%s10] sm:$0xff]
        %v3447 = vld [vmem:[%s11] sm:$0xff]
        %v3449 = vsel %vm716, %v3447, 0
        %3451 = vmatprep.subr.mxu0 0.0
        %3452 = vmatpush1.msra.mxu0 %v3440
        %3453 = vmatprep.subr.mxu0 0.0
        %3454 = vmatpush1.msra.mxu0 %v3441
        %3455 = vmatprep.subr.mxu0 0.0
        %3456 = vmatpush1.msra.mxu0 0.0
        %3457 = vmatprep.subr.mxu0 0.0
        %3458 = vmatpush1.msra.mxu0 0.0
        %3459 = vmatprep.subr.mxu0 0.0
        %3460 = vmatpush1.msra.mxu0 0.0
        %3461 = vmatprep.subr.mxu0 0.0
        %3462 = vmatpush1.msra.mxu0 0.0
        %3463 = vmatprep.subr.mxu0 0.0
        %3464 = vmatpush1.msra.mxu0 0.0
        %3465 = vmatprep.subr.mxu0 0.0
        %3466 = vmatpush1.msra.mxu0 0.0
        %3467 = vmatprep.subr.mxu0 0.0
        %3468 = vmatpush1.msra.mxu0 0.0
        %3469 = vmatprep.subr.mxu0 0.0
        %3470 = vmatpush1.msra.mxu0 0.0
        %3471 = vmatprep.subr.mxu0 0.0
        %3472 = vmatpush1.msra.mxu0 0.0
        %3473 = vmatprep.subr.mxu0 0.0
        %3474 = vmatpush1.msra.mxu0 0.0
        %3475 = vmatprep.subr.mxu0 0.0
        %3476 = vmatpush1.msra.mxu0 0.0
        %3477 = vmatprep.subr.mxu0 0.0
        %3478 = vmatpush1.msra.mxu0 0.0
        %3479 = vmatprep.subr.mxu0 0.0
        %3480 = vmatpush1.msra.mxu0 0.0
        %3481 = vmatprep.subr.mxu0 0.0
        %3482 = vmatpush1.msra.mxu0 0.0
        %3483 = vmatprep.subr.mxu0 0.0
        %3484 = vmatpush1.msra.mxu0 0.0
        %3485 = vmatprep.subr.mxu0 0.0
        %3486 = vmatpush1.msra.mxu0 0.0
        %3487 = vmatprep.subr.mxu0 0.0
        %3488 = vmatpush1.msra.mxu0 0.0
        %3489 = vmatprep.subr.mxu0 0.0
        %3490 = vmatpush1.msra.mxu0 0.0
        %3491 = vmatprep.subr.mxu0 0.0
        %3492 = vmatpush1.msra.mxu0 0.0
        %3493 = vmatprep.subr.mxu0 0.0
        %3494 = vmatpush1.msra.mxu0 0.0
        %3495 = vmatprep.subr.mxu0 0.0
        %3496 = vmatpush1.msra.mxu0 0.0
        %3497 = vmatprep.subr.mxu0 0.0
        %3498 = vmatpush1.msra.mxu0 0.0
        %3499 = vmatprep.subr.mxu0 0.0
        %3500 = vmatpush1.msra.mxu0 0.0
        %3501 = vmatprep.subr.mxu0 0.0
        %3502 = vmatpush1.msra.mxu0 0.0
        %3503 = vmatprep.subr.mxu0 0.0
        %3504 = vmatpush1.msra.mxu0 0.0
        %3505 = vmatprep.subr.mxu0 0.0
        %3506 = vmatpush1.msra.mxu0 0.0
        %3507 = vmatprep.subr.mxu0 0.0
        %3508 = vmatpush1.msra.mxu0 0.0
        %3509 = vmatprep.subr.mxu0 0.0
        %3510 = vmatpush1.msra.mxu0 0.0
        %3511 = vmatprep.subr.mxu0 0.0
        %3512 = vmatpush1.msra.mxu0 0.0
        %3513 = vmatprep.subr.mxu0 0.0
        %3514 = vmatpush1.msra.mxu0 0.0
        %3515 = vmatprep.mubr.f32.mxu0 0.0
        %3516 = vmatmul.mubr.f32.gmra.mrb[0].mxu0 %v3449
        %v3517 = vpop.f32.mrb[0].mxu0
        %v3518 = vadd.f32 0.0, %v3517
        %v3519 = vpop.f32.mrb[0].mxu0
        %3520 = vdwg.mxu0
        %v3522 = vsel %vm716, %v3446, 0
        %3524 = vmatprep.subr.mxu0 0.0
        %3525 = vmatpush1.msra.mxu0 %v3436
        %3526 = vmatprep.subr.mxu0 0.0
        %3527 = vmatpush1.msra.mxu0 %v3437
        %3528 = vmatprep.subr.mxu0 0.0
        %3529 = vmatpush1.msra.mxu0 0.0
        %3530 = vmatprep.subr.mxu0 0.0
        %3531 = vmatpush1.msra.mxu0 0.0
        %3532 = vmatprep.subr.mxu0 0.0
        %3533 = vmatpush1.msra.mxu0 0.0
        %3534 = vmatprep.subr.mxu0 0.0
        %3535 = vmatpush1.msra.mxu0 0.0
        %3536 = vmatprep.subr.mxu0 0.0
        %3537 = vmatpush1.msra.mxu0 0.0
        %3538 = vmatprep.subr.mxu0 0.0
        %3539 = vmatpush1.msra.mxu0 0.0
        %3540 = vmatprep.subr.mxu0 0.0
        %3541 = vmatpush1.msra.mxu0 0.0
        %3542 = vmatprep.subr.mxu0 0.0
        %3543 = vmatpush1.msra.mxu0 0.0
        %3544 = vmatprep.subr.mxu0 0.0
        %3545 = vmatpush1.msra.mxu0 0.0
        %3546 = vmatprep.subr.mxu0 0.0
        %3547 = vmatpush1.msra.mxu0 0.0
        %3548 = vmatprep.subr.mxu0 0.0
        %3549 = vmatpush1.msra.mxu0 0.0
        %3550 = vmatprep.subr.mxu0 0.0
        %3551 = vmatpush1.msra.mxu0 0.0
        %3552 = vmatprep.subr.mxu0 0.0
        %3553 = vmatpush1.msra.mxu0 0.0
        %3554 = vmatprep.subr.mxu0 0.0
        %3555 = vmatpush1.msra.mxu0 0.0
        %3556 = vmatprep.subr.mxu0 0.0
        %3557 = vmatpush1.msra.mxu0 0.0
        %3558 = vmatprep.subr.mxu0 0.0
        %3559 = vmatpush1.msra.mxu0 0.0
        %3560 = vmatprep.subr.mxu0 0.0
        %3561 = vmatpush1.msra.mxu0 0.0
        %3562 = vmatprep.subr.mxu0 0.0
        %3563 = vmatpush1.msra.mxu0 0.0
        %3564 = vmatprep.subr.mxu0 0.0
        %3565 = vmatpush1.msra.mxu0 0.0
        %3566 = vmatprep.subr.mxu0 0.0
        %3567 = vmatpush1.msra.mxu0 0.0
        %3568 = vmatprep.subr.mxu0 0.0
        %3569 = vmatpush1.msra.mxu0 0.0
        %3570 = vmatprep.subr.mxu0 0.0
        %3571 = vmatpush1.msra.mxu0 0.0
        %3572 = vmatprep.subr.mxu0 0.0
        %3573 = vmatpush1.msra.mxu0 0.0
        %3574 = vmatprep.subr.mxu0 0.0
        %3575 = vmatpush1.msra.mxu0 0.0
        %3576 = vmatprep.subr.mxu0 0.0
        %3577 = vmatpush1.msra.mxu0 0.0
        %3578 = vmatprep.subr.mxu0 0.0
        %3579 = vmatpush1.msra.mxu0 0.0
        %3580 = vmatprep.subr.mxu0 0.0
        %3581 = vmatpush1.msra.mxu0 0.0
        %3582 = vmatprep.subr.mxu0 0.0
        %3583 = vmatpush1.msra.mxu0 0.0
        %3584 = vmatprep.subr.mxu0 0.0
        %3585 = vmatpush1.msra.mxu0 0.0
        %3586 = vmatprep.subr.mxu0 0.0
        %3587 = vmatpush1.msra.mxu0 0.0
        %3588 = vmatprep.mubr.f32.mxu0 0.0
        %3589 = vmatmul.mubr.f32.gmra.mrb[0].mxu0 %v3522
        %v3590 = vpop.f32.mrb[0].mxu0
        %v3591 = vadd.f32 %v3518, %v3590
        %v3592 = vpop.f32.mrb[0].mxu0
        %3593 = vdwg.mxu0
        %v3594 = vld [vmem:[#allocation4] sm:$0xff]
        %v3595 = vld [vmem:[#allocation4 + $0x8] sm:$0xff]
        %v3596 = vld [vmem:[#allocation4 + $0x10] sm:$0xff]
        %v3597 = vld [vmem:[#allocation4 + $0x18] sm:$0xff]
        %v3598 = vld [vmem:[#allocation4 + $0x20] sm:$0xff]
        %v3599 = vld [vmem:[#allocation4 + $0x28] sm:$0xff]
        %v3600 = vld [vmem:[#allocation4 + $0x30] sm:$0xff]
        %v3601 = vld [vmem:[#allocation4 + $0x38] sm:$0xff]
        %s3602 = scalar_lea.vmem %s10, 8
        %v3603 = vld [vmem:[%s3602] sm:$0xff]
        %s3604 = scalar_lea.vmem %s11, 8
        %v3605 = vld [vmem:[%s3604] sm:$0xff]
        %v3607 = vsel %vm716, %v3605, 0
        %3609 = vmatprep.subr.mxu0 0.0
        %3610 = vmatpush1.msra.mxu0 %v3440
        %3611 = vmatprep.subr.mxu0 0.0
        %3612 = vmatpush1.msra.mxu0 %v3441
        %3613 = vmatprep.subr.mxu0 0.0
        %3614 = vmatpush1.msra.mxu0 0.0
        %3615 = vmatprep.subr.mxu0 0.0
        %3616 = vmatpush1.msra.mxu0 0.0
        %3617 = vmatprep.subr.mxu0 0.0
        %3618 = vmatpush1.msra.mxu0 0.0
        %3619 = vmatprep.subr.mxu0 0.0
        %3620 = vmatpush1.msra.mxu0 0.0
        %3621 = vmatprep.subr.mxu0 0.0
        %3622 = vmatpush1.msra.mxu0 0.0
        %3623 = vmatprep.subr.mxu0 0.0
        %3624 = vmatpush1.msra.mxu0 0.0
        %3625 = vmatprep.subr.mxu0 0.0
        %3626 = vmatpush1.msra.mxu0 0.0
        %3627 = vmatprep.subr.mxu0 0.0
        %3628 = vmatpush1.msra.mxu0 0.0
        %3629 = vmatprep.subr.mxu0 0.0
        %3630 = vmatpush1.msra.mxu0 0.0
        %3631 = vmatprep.subr.mxu0 0.0
        %3632 = vmatpush1.msra.mxu0 0.0
        %3633 = vmatprep.subr.mxu0 0.0
        %3634 = vmatpush1.msra.mxu0 0.0
        %3635 = vmatprep.subr.mxu0 0.0
        %3636 = vmatpush1.msra.mxu0 0.0
        %3637 = vmatprep.subr.mxu0 0.0
        %3638 = vmatpush1.msra.mxu0 0.0
        %3639 = vmatprep.subr.mxu0 0.0
        %3640 = vmatpush1.msra.mxu0 0.0
        %3641 = vmatprep.subr.mxu0 0.0
        %3642 = vmatpush1.msra.mxu0 0.0
        %3643 = vmatprep.subr.mxu0 0.0
        %3644 = vmatpush1.msra.mxu0 0.0
        %3645 = vmatprep.subr.mxu0 0.0
        %3646 = vmatpush1.msra.mxu0 0.0
        %3647 = vmatprep.subr.mxu0 0.0
        %3648 = vmatpush1.msra.mxu0 0.0
        %3649 = vmatprep.subr.mxu0 0.0
        %3650 = vmatpush1.msra.mxu0 0.0
        %3651 = vmatprep.subr.mxu0 0.0
        %3652 = vmatpush1.msra.mxu0 0.0
        %3653 = vmatprep.subr.mxu0 0.0
        %3654 = vmatpush1.msra.mxu0 0.0
        %3655 = vmatprep.subr.mxu0 0.0
        %3656 = vmatpush1.msra.mxu0 0.0
        %3657 = vmatprep.subr.mxu0 0.0
        %3658 = vmatpush1.msra.mxu0 0.0
        %3659 = vmatprep.subr.mxu0 0.0
        %3660 = vmatpush1.msra.mxu0 0.0
        %3661 = vmatprep.subr.mxu0 0.0
        %3662 = vmatpush1.msra.mxu0 0.0
        %3663 = vmatprep.subr.mxu0 0.0
        %3664 = vmatpush1.msra.mxu0 0.0
        %3665 = vmatprep.subr.mxu0 0.0
        %3666 = vmatpush1.msra.mxu0 0.0
        %3667 = vmatprep.subr.mxu0 0.0
        %3668 = vmatpush1.msra.mxu0 0.0
        %3669 = vmatprep.subr.mxu0 0.0
        %3670 = vmatpush1.msra.mxu0 0.0
        %3671 = vmatprep.subr.mxu0 0.0
        %3672 = vmatpush1.msra.mxu0 0.0
        %3673 = vmatprep.mubr.f32.mxu0 0.0
        %3674 = vmatmul.mubr.f32.gmra.mrb[0].mxu0 %v3607
        %v3675 = vpop.f32.mrb[0].mxu0
        %v3676 = vadd.f32 0.0, %v3675
        %v3677 = vpop.f32.mrb[0].mxu0
        %3678 = vdwg.mxu0
        %v3680 = vsel %vm716, %v3603, 0
        %3682 = vmatprep.subr.mxu0 0.0
        %3683 = vmatpush1.msra.mxu0 %v3436
        %3684 = vmatprep.subr.mxu0 0.0
        %3685 = vmatpush1.msra.mxu0 %v3437
        %3686 = vmatprep.subr.mxu0 0.0
        %3687 = vmatpush1.msra.mxu0 0.0
        %3688 = vmatprep.subr.mxu0 0.0
        %3689 = vmatpush1.msra.mxu0 0.0
        %3690 = vmatprep.subr.mxu0 0.0
        %3691 = vmatpush1.msra.mxu0 0.0
        %3692 = vmatprep.subr.mxu0 0.0
        %3693 = vmatpush1.msra.mxu0 0.0
        %3694 = vmatprep.subr.mxu0 0.0
        %3695 = vmatpush1.msra.mxu0 0.0
        %3696 = vmatprep.subr.mxu0 0.0
        %3697 = vmatpush1.msra.mxu0 0.0
        %3698 = vmatprep.subr.mxu0 0.0
        %3699 = vmatpush1.msra.mxu0 0.0
        %3700 = vmatprep.subr.mxu0 0.0
        %3701 = vmatpush1.msra.mxu0 0.0
        %3702 = vmatprep.subr.mxu0 0.0
        %3703 = vmatpush1.msra.mxu0 0.0
        %3704 = vmatprep.subr.mxu0 0.0
        %3705 = vmatpush1.msra.mxu0 0.0
        %3706 = vmatprep.subr.mxu0 0.0
        %3707 = vmatpush1.msra.mxu0 0.0
        %3708 = vmatprep.subr.mxu0 0.0
        %3709 = vmatpush1.msra.mxu0 0.0
        %3710 = vmatprep.subr.mxu0 0.0
        %3711 = vmatpush1.msra.mxu0 0.0
        %3712 = vmatprep.subr.mxu0 0.0
        %3713 = vmatpush1.msra.mxu0 0.0
        %3714 = vmatprep.subr.mxu0 0.0
        %3715 = vmatpush1.msra.mxu0 0.0
        %3716 = vmatprep.subr.mxu0 0.0
        %3717 = vmatpush1.msra.mxu0 0.0
        %3718 = vmatprep.subr.mxu0 0.0
        %3719 = vmatpush1.msra.mxu0 0.0
        %3720 = vmatprep.subr.mxu0 0.0
        %3721 = vmatpush1.msra.mxu0 0.0
        %3722 = vmatprep.subr.mxu0 0.0
        %3723 = vmatpush1.msra.mxu0 0.0
        %3724 = vmatprep.subr.mxu0 0.0
        %3725 = vmatpush1.msra.mxu0 0.0
        %3726 = vmatprep.subr.mxu0 0.0
        %3727 = vmatpush1.msra.mxu0 0.0
        %3728 = vmatprep.subr.mxu0 0.0
        %3729 = vmatpush1.msra.mxu0 0.0
        %3730 = vmatprep.subr.mxu0 0.0
        %3731 = vmatpush1.msra.mxu0 0.0
        %3732 = vmatprep.subr.mxu0 0.0
        %3733 = vmatpush1.msra.mxu0 0.0
        %3734 = vmatprep.subr.mxu0 0.0
        %3735 = vmatpush1.msra.mxu0 0.0
        %3736 = vmatprep.subr.mxu0 0.0
        %3737 = vmatpush1.msra.mxu0 0.0
        %3738 = vmatprep.subr.mxu0 0.0
        %3739 = vmatpush1.msra.mxu0 0.0
        %3740 = vmatprep.subr.mxu0 0.0
        %3741 = vmatpush1.msra.mxu0 0.0
        %3742 = vmatprep.subr.mxu0 0.0
        %3743 = vmatpush1.msra.mxu0 0.0
        %3744 = vmatprep.subr.mxu0 0.0
        %3745 = vmatpush1.msra.mxu0 0.0
        %3746 = vmatprep.mubr.f32.mxu0 0.0
        %3747 = vmatmul.mubr.f32.gmra.mrb[0].mxu0 %v3680
        %v3748 = vpop.f32.mrb[0].mxu0
        %v3749 = vadd.f32 %v3676, %v3748
        %v3750 = vpop.f32.mrb[0].mxu0
        %3751 = vdwg.mxu0
        %v3752 = vld [vmem:[%s934] sm:$0xff]
        %v3753 = vld [vmem:[%s934 + $0x8] sm:$0xff]
        %v3754 = vld [vmem:[%s934 + $0x10] sm:$0xff]
        %v3755 = vld [vmem:[%s934 + $0x18] sm:$0xff]
        %v3756 = vld [vmem:[%s934 + $0x20] sm:$0xff]
        %v3757 = vld [vmem:[%s934 + $0x28] sm:$0xff]
        %v3758 = vld [vmem:[%s934 + $0x30] sm:$0xff]
        %v3759 = vld [vmem:[%s934 + $0x38] sm:$0xff]
        %v3761 = vsel %vm838, %v3749, 0
        %3763 = vmatprep.subr.mxu0 0.0
        %3764 = vmatpush1.msra.mxu0 %v3752
        %3765 = vmatprep.subr.mxu0 0.0
        %3766 = vmatpush1.msra.mxu0 %v3753
        %3767 = vmatprep.subr.mxu0 0.0
        %3768 = vmatpush1.msra.mxu0 %v3754
        %3769 = vmatprep.subr.mxu0 0.0
        %3770 = vmatpush1.msra.mxu0 %v3755
        %3771 = vmatprep.subr.mxu0 0.0
        %3772 = vmatpush1.msra.mxu0 %v3756
        %3773 = vmatprep.subr.mxu0 0.0
        %3774 = vmatpush1.msra.mxu0 %v3757
        %3775 = vmatprep.subr.mxu0 0.0
        %3776 = vmatpush1.msra.mxu0 %v3758
        %3777 = vmatprep.subr.mxu0 0.0
        %3778 = vmatpush1.msra.mxu0 %v3759
        %3779 = vmatprep.subr.mxu0 0.0
        %3780 = vmatpush1.msra.mxu0 0.0
        %3781 = vmatprep.subr.mxu0 0.0
        %3782 = vmatpush1.msra.mxu0 0.0
        %3783 = vmatprep.subr.mxu0 0.0
        %3784 = vmatpush1.msra.mxu0 0.0
        %3785 = vmatprep.subr.mxu0 0.0
        %3786 = vmatpush1.msra.mxu0 0.0
        %3787 = vmatprep.subr.mxu0 0.0
        %3788 = vmatpush1.msra.mxu0 0.0
        %3789 = vmatprep.subr.mxu0 0.0
        %3790 = vmatpush1.msra.mxu0 0.0
        %3791 = vmatprep.subr.mxu0 0.0
        %3792 = vmatpush1.msra.mxu0 0.0
        %3793 = vmatprep.subr.mxu0 0.0
        %3794 = vmatpush1.msra.mxu0 0.0
        %3795 = vmatprep.subr.mxu0 0.0
        %3796 = vmatpush1.msra.mxu0 0.0
        %3797 = vmatprep.subr.mxu0 0.0
        %3798 = vmatpush1.msra.mxu0 0.0
        %3799 = vmatprep.subr.mxu0 0.0
        %3800 = vmatpush1.msra.mxu0 0.0
        %3801 = vmatprep.subr.mxu0 0.0
        %3802 = vmatpush1.msra.mxu0 0.0
        %3803 = vmatprep.subr.mxu0 0.0
        %3804 = vmatpush1.msra.mxu0 0.0
        %3805 = vmatprep.subr.mxu0 0.0
        %3806 = vmatpush1.msra.mxu0 0.0
        %3807 = vmatprep.subr.mxu0 0.0
        %3808 = vmatpush1.msra.mxu0 0.0
        %3809 = vmatprep.subr.mxu0 0.0
        %3810 = vmatpush1.msra.mxu0 0.0
        %3811 = vmatprep.subr.mxu0 0.0
        %3812 = vmatpush1.msra.mxu0 0.0
        %3813 = vmatprep.subr.mxu0 0.0
        %3814 = vmatpush1.msra.mxu0 0.0
        %3815 = vmatprep.subr.mxu0 0.0
        %3816 = vmatpush1.msra.mxu0 0.0
        %3817 = vmatprep.subr.mxu0 0.0
        %3818 = vmatpush1.msra.mxu0 0.0
        %3819 = vmatprep.subr.mxu0 0.0
        %3820 = vmatpush1.msra.mxu0 0.0
        %3821 = vmatprep.subr.mxu0 0.0
        %3822 = vmatpush1.msra.mxu0 0.0
        %3823 = vmatprep.subr.mxu0 0.0
        %3824 = vmatpush1.msra.mxu0 0.0
        %3825 = vmatprep.subr.mxu0 0.0
        %3826 = vmatpush1.msra.mxu0 0.0
        %3827 = vmatprep.mubr.f32.mxu0 0.0
        %3828 = vmatmul.mubr.f32.gmra.mrb[0].mxu0 %v3761
        %v3829 = vpop.f32.mrb[0].mxu0
        %v3830 = vadd.f32 0.0, %v3829
        %v3831 = vpop.f32.mrb[0].mxu0
        %3832 = vdwg.mxu0
        %v3834 = vsel %vm838, %v3591, 0
        %3836 = vmatprep.subr.mxu0 0.0
        %3837 = vmatpush1.msra.mxu0 %v3594
        %3838 = vmatprep.subr.mxu0 0.0
        %3839 = vmatpush1.msra.mxu0 %v3595
        %3840 = vmatprep.subr.mxu0 0.0
        %3841 = vmatpush1.msra.mxu0 %v3596
        %3842 = vmatprep.subr.mxu0 0.0
        %3843 = vmatpush1.msra.mxu0 %v3597
        %3844 = vmatprep.subr.mxu0 0.0
        %3845 = vmatpush1.msra.mxu0 %v3598
        %3846 = vmatprep.subr.mxu0 0.0
        %3847 = vmatpush1.msra.mxu0 %v3599
        %3848 = vmatprep.subr.mxu0 0.0
        %3849 = vmatpush1.msra.mxu0 %v3600
        %3850 = vmatprep.subr.mxu0 0.0
        %3851 = vmatpush1.msra.mxu0 %v3601
        %3852 = vmatprep.subr.mxu0 0.0
        %3853 = vmatpush1.msra.mxu0 0.0
        %3854 = vmatprep.subr.mxu0 0.0
        %3855 = vmatpush1.msra.mxu0 0.0
        %3856 = vmatprep.subr.mxu0 0.0
        %3857 = vmatpush1.msra.mxu0 0.0
        %3858 = vmatprep.subr.mxu0 0.0
        %3859 = vmatpush1.msra.mxu0 0.0
        %3860 = vmatprep.subr.mxu0 0.0
        %3861 = vmatpush1.msra.mxu0 0.0
        %3862 = vmatprep.subr.mxu0 0.0
        %3863 = vmatpush1.msra.mxu0 0.0
        %3864 = vmatprep.subr.mxu0 0.0
        %3865 = vmatpush1.msra.mxu0 0.0
        %3866 = vmatprep.subr.mxu0 0.0
        %3867 = vmatpush1.msra.mxu0 0.0
        %3868 = vmatprep.subr.mxu0 0.0
        %3869 = vmatpush1.msra.mxu0 0.0
        %3870 = vmatprep.subr.mxu0 0.0
        %3871 = vmatpush1.msra.mxu0 0.0
        %3872 = vmatprep.subr.mxu0 0.0
        %3873 = vmatpush1.msra.mxu0 0.0
        %3874 = vmatprep.subr.mxu0 0.0
        %3875 = vmatpush1.msra.mxu0 0.0
        %3876 = vmatprep.subr.mxu0 0.0
        %3877 = vmatpush1.msra.mxu0 0.0
        %3878 = vmatprep.subr.mxu0 0.0
        %3879 = vmatpush1.msra.mxu0 0.0
        %3880 = vmatprep.subr.mxu0 0.0
        %3881 = vmatpush1.msra.mxu0 0.0
        %3882 = vmatprep.subr.mxu0 0.0
        %3883 = vmatpush1.msra.mxu0 0.0
        %3884 = vmatprep.subr.mxu0 0.0
        %3885 = vmatpush1.msra.mxu0 0.0
        %3886 = vmatprep.subr.mxu0 0.0
        %3887 = vmatpush1.msra.mxu0 0.0
        %3888 = vmatprep.subr.mxu0 0.0
        %3889 = vmatpush1.msra.mxu0 0.0
        %3890 = vmatprep.subr.mxu0 0.0
        %3891 = vmatpush1.msra.mxu0 0.0
        %3892 = vmatprep.subr.mxu0 0.0
        %3893 = vmatpush1.msra.mxu0 0.0
        %3894 = vmatprep.subr.mxu0 0.0
        %3895 = vmatpush1.msra.mxu0 0.0
        %3896 = vmatprep.subr.mxu0 0.0
        %3897 = vmatpush1.msra.mxu0 0.0
        %3898 = vmatprep.subr.mxu0 0.0
        %3899 = vmatpush1.msra.mxu0 0.0
        %3900 = vmatprep.mubr.f32.mxu0 0.0
        %3901 = vmatmul.mubr.f32.gmra.mrb[0].mxu0 %v3834
        %v3902 = vpop.f32.mrb[0].mxu0
        %v3903 = vadd.f32 %v3830, %v3902
        %v3904 = vpop.f32.mrb[0].mxu0
        %3905 = vdwg.mxu0
        %s3906 = scalar_lea.vmem %s10, 16
        %v3907 = vld [vmem:[%s3906] sm:$0xff]
        %s3908 = scalar_lea.vmem %s11, 16
        %v3909 = vld [vmem:[%s3908] sm:$0xff]
        %v3911 = vsel %vm716, %v3909, 0
        %3913 = vmatprep.subr.mxu0 0.0
        %3914 = vmatpush1.msra.mxu0 %v3440
        %3915 = vmatprep.subr.mxu0 0.0
        %3916 = vmatpush1.msra.mxu0 %v3441
        %3917 = vmatprep.subr.mxu0 0.0
        %3918 = vmatpush1.msra.mxu0 0.0
        %3919 = vmatprep.subr.mxu0 0.0
        %3920 = vmatpush1.msra.mxu0 0.0
        %3921 = vmatprep.subr.mxu0 0.0
        %3922 = vmatpush1.msra.mxu0 0.0
        %3923 = vmatprep.subr.mxu0 0.0
        %3924 = vmatpush1.msra.mxu0 0.0
        %3925 = vmatprep.subr.mxu0 0.0
        %3926 = vmatpush1.msra.mxu0 0.0
        %3927 = vmatprep.subr.mxu0 0.0
        %3928 = vmatpush1.msra.mxu0 0.0
        %3929 = vmatprep.subr.mxu0 0.0
        %3930 = vmatpush1.msra.mxu0 0.0
        %3931 = vmatprep.subr.mxu0 0.0
        %3932 = vmatpush1.msra.mxu0 0.0
        %3933 = vmatprep.subr.mxu0 0.0
        %3934 = vmatpush1.msra.mxu0 0.0
        %3935 = vmatprep.subr.mxu0 0.0
        %3936 = vmatpush1.msra.mxu0 0.0
        %3937 = vmatprep.subr.mxu0 0.0
        %3938 = vmatpush1.msra.mxu0 0.0
        %3939 = vmatprep.subr.mxu0 0.0
        %3940 = vmatpush1.msra.mxu0 0.0
        %3941 = vmatprep.subr.mxu0 0.0
        %3942 = vmatpush1.msra.mxu0 0.0
        %3943 = vmatprep.subr.mxu0 0.0
        %3944 = vmatpush1.msra.mxu0 0.0
        %3945 = vmatprep.subr.mxu0 0.0
        %3946 = vmatpush1.msra.mxu0 0.0
        %3947 = vmatprep.subr.mxu0 0.0
        %3948 = vmatpush1.msra.mxu0 0.0
        %3949 = vmatprep.subr.mxu0 0.0
        %3950 = vmatpush1.msra.mxu0 0.0
        %3951 = vmatprep.subr.mxu0 0.0
        %3952 = vmatpush1.msra.mxu0 0.0
        %3953 = vmatprep.subr.mxu0 0.0
        %3954 = vmatpush1.msra.mxu0 0.0
        %3955 = vmatprep.subr.mxu0 0.0
        %3956 = vmatpush1.msra.mxu0 0.0
        %3957 = vmatprep.subr.mxu0 0.0
        %3958 = vmatpush1.msra.mxu0 0.0
        %3959 = vmatprep.subr.mxu0 0.0
        %3960 = vmatpush1.msra.mxu0 0.0
        %3961 = vmatprep.subr.mxu0 0.0
        %3962 = vmatpush1.msra.mxu0 0.0
        %3963 = vmatprep.subr.mxu0 0.0
        %3964 = vmatpush1.msra.mxu0 0.0
        %3965 = vmatprep.subr.mxu0 0.0
        %3966 = vmatpush1.msra.mxu0 0.0
        %3967 = vmatprep.subr.mxu0 0.0
        %3968 = vmatpush1.msra.mxu0 0.0
        %3969 = vmatprep.subr.mxu0 0.0
        %3970 = vmatpush1.msra.mxu0 0.0
        %3971 = vmatprep.subr.mxu0 0.0
        %3972 = vmatpush1.msra.mxu0 0.0
        %3973 = vmatprep.subr.mxu0 0.0
        %3974 = vmatpush1.msra.mxu0 0.0
        %3975 = vmatprep.subr.mxu0 0.0
        %3976 = vmatpush1.msra.mxu0 0.0
        %3977 = vmatprep.mubr.f32.mxu0 0.0
        %3978 = vmatmul.mubr.f32.gmra.mrb[0].mxu0 %v3911
        %v3979 = vpop.f32.mrb[0].mxu0
        %v3980 = vadd.f32 0.0, %v3979
        %v3981 = vpop.f32.mrb[0].mxu0
        %3982 = vdwg.mxu0
        %v3984 = vsel %vm716, %v3907, 0
        %3986 = vmatprep.subr.mxu0 0.0
        %3987 = vmatpush1.msra.mxu0 %v3436
        %3988 = vmatprep.subr.mxu0 0.0
        %3989 = vmatpush1.msra.mxu0 %v3437
        %3990 = vmatprep.subr.mxu0 0.0
        %3991 = vmatpush1.msra.mxu0 0.0
        %3992 = vmatprep.subr.mxu0 0.0
        %3993 = vmatpush1.msra.mxu0 0.0
        %3994 = vmatprep.subr.mxu0 0.0
        %3995 = vmatpush1.msra.mxu0 0.0
        %3996 = vmatprep.subr.mxu0 0.0
        %3997 = vmatpush1.msra.mxu0 0.0
        %3998 = vmatprep.subr.mxu0 0.0
        %3999 = vmatpush1.msra.mxu0 0.0
        %4000 = vmatprep.subr.mxu0 0.0
        %4001 = vmatpush1.msra.mxu0 0.0
        %4002 = vmatprep.subr.mxu0 0.0
        %4003 = vmatpush1.msra.mxu0 0.0
        %4004 = vmatprep.subr.mxu0 0.0
        %4005 = vmatpush1.msra.mxu0 0.0
        %4006 = vmatprep.subr.mxu0 0.0
        %4007 = vmatpush1.msra.mxu0 0.0
        %4008 = vmatprep.subr.mxu0 0.0
        %4009 = vmatpush1.msra.mxu0 0.0
        %4010 = vmatprep.subr.mxu0 0.0
        %4011 = vmatpush1.msra.mxu0 0.0
        %4012 = vmatprep.subr.mxu0 0.0
        %4013 = vmatpush1.msra.mxu0 0.0
        %4014 = vmatprep.subr.mxu0 0.0
        %4015 = vmatpush1.msra.mxu0 0.0
        %4016 = vmatprep.subr.mxu0 0.0
        %4017 = vmatpush1.msra.mxu0 0.0
        %4018 = vmatprep.subr.mxu0 0.0
        %4019 = vmatpush1.msra.mxu0 0.0
        %4020 = vmatprep.subr.mxu0 0.0
        %4021 = vmatpush1.msra.mxu0 0.0
        %4022 = vmatprep.subr.mxu0 0.0
        %4023 = vmatpush1.msra.mxu0 0.0
        %4024 = vmatprep.subr.mxu0 0.0
        %4025 = vmatpush1.msra.mxu0 0.0
        %4026 = vmatprep.subr.mxu0 0.0
        %4027 = vmatpush1.msra.mxu0 0.0
        %4028 = vmatprep.subr.mxu0 0.0
        %4029 = vmatpush1.msra.mxu0 0.0
        %4030 = vmatprep.subr.mxu0 0.0
        %4031 = vmatpush1.msra.mxu0 0.0
        %4032 = vmatprep.subr.mxu0 0.0
        %4033 = vmatpush1.msra.mxu0 0.0
        %4034 = vmatprep.subr.mxu0 0.0
        %4035 = vmatpush1.msra.mxu0 0.0
        %4036 = vmatprep.subr.mxu0 0.0
        %4037 = vmatpush1.msra.mxu0 0.0
        %4038 = vmatprep.subr.mxu0 0.0
        %4039 = vmatpush1.msra.mxu0 0.0
        %4040 = vmatprep.subr.mxu0 0.0
        %4041 = vmatpush1.msra.mxu0 0.0
        %4042 = vmatprep.subr.mxu0 0.0
        %4043 = vmatpush1.msra.mxu0 0.0
        %4044 = vmatprep.subr.mxu0 0.0
        %4045 = vmatpush1.msra.mxu0 0.0
        %4046 = vmatprep.subr.mxu0 0.0
        %4047 = vmatpush1.msra.mxu0 0.0
        %4048 = vmatprep.subr.mxu0 0.0
        %4049 = vmatpush1.msra.mxu0 0.0
        %4050 = vmatprep.mubr.f32.mxu0 0.0
        %4051 = vmatmul.mubr.f32.gmra.mrb[0].mxu0 %v3984
        %v4052 = vpop.f32.mrb[0].mxu0
        %v4053 = vadd.f32 %v3980, %v4052
        %v4054 = vpop.f32.mrb[0].mxu0
        %4055 = vdwg.mxu0
        %v4056 = vld [vmem:[%s1030] sm:$0xff]
        %v4057 = vld [vmem:[%s1030 + $0x8] sm:$0xff]
        %v4058 = vld [vmem:[%s1030 + $0x10] sm:$0xff]
        %v4059 = vld [vmem:[%s1030 + $0x18] sm:$0xff]
        %v4060 = vld [vmem:[%s1030 + $0x20] sm:$0xff]
        %v4061 = vld [vmem:[%s1030 + $0x28] sm:$0xff]
        %v4062 = vld [vmem:[%s1030 + $0x30] sm:$0xff]
        %v4063 = vld [vmem:[%s1030 + $0x38] sm:$0xff]
        %v4065 = vsel %vm838, %v4053, 0
        %4067 = vmatprep.subr.mxu0 0.0
        %4068 = vmatpush1.msra.mxu0 %v4056
        %4069 = vmatprep.subr.mxu0 0.0
        %4070 = vmatpush1.msra.mxu0 %v4057
        %4071 = vmatprep.subr.mxu0 0.0
        %4072 = vmatpush1.msra.mxu0 %v4058
        %4073 = vmatprep.subr.mxu0 0.0
        %4074 = vmatpush1.msra.mxu0 %v4059
        %4075 = vmatprep.subr.mxu0 0.0
        %4076 = vmatpush1.msra.mxu0 %v4060
        %4077 = vmatprep.subr.mxu0 0.0
        %4078 = vmatpush1.msra.mxu0 %v4061
        %4079 = vmatprep.subr.mxu0 0.0
        %4080 = vmatpush1.msra.mxu0 %v4062
        %4081 = vmatprep.subr.mxu0 0.0
        %4082 = vmatpush1.msra.mxu0 %v4063
        %4083 = vmatprep.subr.mxu0 0.0
        %4084 = vmatpush1.msra.mxu0 0.0
        %4085 = vmatprep.subr.mxu0 0.0
        %4086 = vmatpush1.msra.mxu0 0.0
        %4087 = vmatprep.subr.mxu0 0.0
        %4088 = vmatpush1.msra.mxu0 0.0
        %4089 = vmatprep.subr.mxu0 0.0
        %4090 = vmatpush1.msra.mxu0 0.0
        %4091 = vmatprep.subr.mxu0 0.0
        %4092 = vmatpush1.msra.mxu0 0.0
        %4093 = vmatprep.subr.mxu0 0.0
        %4094 = vmatpush1.msra.mxu0 0.0
        %4095 = vmatprep.subr.mxu0 0.0
        %4096 = vmatpush1.msra.mxu0 0.0
        %4097 = vmatprep.subr.mxu0 0.0
        %4098 = vmatpush1.msra.mxu0 0.0
        %4099 = vmatprep.subr.mxu0 0.0
        %4100 = vmatpush1.msra.mxu0 0.0
        %4101 = vmatprep.subr.mxu0 0.0
        %4102 = vmatpush1.msra.mxu0 0.0
        %4103 = vmatprep.subr.mxu0 0.0
        %4104 = vmatpush1.msra.mxu0 0.0
        %4105 = vmatprep.subr.mxu0 0.0
        %4106 = vmatpush1.msra.mxu0 0.0
        %4107 = vmatprep.subr.mxu0 0.0
        %4108 = vmatpush1.msra.mxu0 0.0
        %4109 = vmatprep.subr.mxu0 0.0
        %4110 = vmatpush1.msra.mxu0 0.0
        %4111 = vmatprep.subr.mxu0 0.0
        %4112 = vmatpush1.msra.mxu0 0.0
        %4113 = vmatprep.subr.mxu0 0.0
        %4114 = vmatpush1.msra.mxu0 0.0
        %4115 = vmatprep.subr.mxu0 0.0
        %4116 = vmatpush1.msra.mxu0 0.0
        %4117 = vmatprep.subr.mxu0 0.0
        %4118 = vmatpush1.msra.mxu0 0.0
        %4119 = vmatprep.subr.mxu0 0.0
        %4120 = vmatpush1.msra.mxu0 0.0
        %4121 = vmatprep.subr.mxu0 0.0
        %4122 = vmatpush1.msra.mxu0 0.0
        %4123 = vmatprep.subr.mxu0 0.0
        %4124 = vmatpush1.msra.mxu0 0.0
        %4125 = vmatprep.subr.mxu0 0.0
        %4126 = vmatpush1.msra.mxu0 0.0
        %4127 = vmatprep.subr.mxu0 0.0
        %4128 = vmatpush1.msra.mxu0 0.0
        %4129 = vmatprep.subr.mxu0 0.0
        %4130 = vmatpush1.msra.mxu0 0.0
        %4131 = vmatprep.mubr.f32.mxu0 0.0
        %4132 = vmatmul.mubr.f32.gmra.mrb[0].mxu0 %v4065
        %v4133 = vpop.f32.mrb[0].mxu0
        %v4134 = vadd.f32 0.0, %v4133
        %v4135 = vpop.f32.mrb[0].mxu0
        %4136 = vdwg.mxu0
        %v4137 = vadd.f32 %v3903, %v4134
        %s4138 = scalar_lea.vmem %s10, 24
        %v4139 = vld [vmem:[%s4138] sm:$0xff]
        %s4140 = scalar_lea.vmem %s11, 24
        %v4141 = vld [vmem:[%s4140] sm:$0xff]
        %v4143 = vsel %vm716, %v4141, 0
        %4145 = vmatprep.subr.mxu0 0.0
        %4146 = vmatpush1.msra.mxu0 %v3440
        %4147 = vmatprep.subr.mxu0 0.0
        %4148 = vmatpush1.msra.mxu0 %v3441
        %4149 = vmatprep.subr.mxu0 0.0
        %4150 = vmatpush1.msra.mxu0 0.0
        %4151 = vmatprep.subr.mxu0 0.0
        %4152 = vmatpush1.msra.mxu0 0.0
        %4153 = vmatprep.subr.mxu0 0.0
        %4154 = vmatpush1.msra.mxu0 0.0
        %4155 = vmatprep.subr.mxu0 0.0
        %4156 = vmatpush1.msra.mxu0 0.0
        %4157 = vmatprep.subr.mxu0 0.0
        %4158 = vmatpush1.msra.mxu0 0.0
        %4159 = vmatprep.subr.mxu0 0.0
        %4160 = vmatpush1.msra.mxu0 0.0
        %4161 = vmatprep.subr.mxu0 0.0
        %4162 = vmatpush1.msra.mxu0 0.0
        %4163 = vmatprep.subr.mxu0 0.0
        %4164 = vmatpush1.msra.mxu0 0.0
        %4165 = vmatprep.subr.mxu0 0.0
        %4166 = vmatpush1.msra.mxu0 0.0
        %4167 = vmatprep.subr.mxu0 0.0
        %4168 = vmatpush1.msra.mxu0 0.0
        %4169 = vmatprep.subr.mxu0 0.0
        %4170 = vmatpush1.msra.mxu0 0.0
        %4171 = vmatprep.subr.mxu0 0.0
        %4172 = vmatpush1.msra.mxu0 0.0
        %4173 = vmatprep.subr.mxu0 0.0
        %4174 = vmatpush1.msra.mxu0 0.0
        %4175 = vmatprep.subr.mxu0 0.0
        %4176 = vmatpush1.msra.mxu0 0.0
        %4177 = vmatprep.subr.mxu0 0.0
        %4178 = vmatpush1.msra.mxu0 0.0
        %4179 = vmatprep.subr.mxu0 0.0
        %4180 = vmatpush1.msra.mxu0 0.0
        %4181 = vmatprep.subr.mxu0 0.0
        %4182 = vmatpush1.msra.mxu0 0.0
        %4183 = vmatprep.subr.mxu0 0.0
        %4184 = vmatpush1.msra.mxu0 0.0
        %4185 = vmatprep.subr.mxu0 0.0
        %4186 = vmatpush1.msra.mxu0 0.0
        %4187 = vmatprep.subr.mxu0 0.0
        %4188 = vmatpush1.msra.mxu0 0.0
        %4189 = vmatprep.subr.mxu0 0.0
        %4190 = vmatpush1.msra.mxu0 0.0
        %4191 = vmatprep.subr.mxu0 0.0
        %4192 = vmatpush1.msra.mxu0 0.0
        %4193 = vmatprep.subr.mxu0 0.0
        %4194 = vmatpush1.msra.mxu0 0.0
        %4195 = vmatprep.subr.mxu0 0.0
        %4196 = vmatpush1.msra.mxu0 0.0
        %4197 = vmatprep.subr.mxu0 0.0
        %4198 = vmatpush1.msra.mxu0 0.0
        %4199 = vmatprep.subr.mxu0 0.0
        %4200 = vmatpush1.msra.mxu0 0.0
        %4201 = vmatprep.subr.mxu0 0.0
        %4202 = vmatpush1.msra.mxu0 0.0
        %4203 = vmatprep.subr.mxu0 0.0
        %4204 = vmatpush1.msra.mxu0 0.0
        %4205 = vmatprep.subr.mxu0 0.0
        %4206 = vmatpush1.msra.mxu0 0.0
        %4207 = vmatprep.subr.mxu0 0.0
        %4208 = vmatpush1.msra.mxu0 0.0
        %4209 = vmatprep.mubr.f32.mxu0 0.0
        %4210 = vmatmul.mubr.f32.gmra.mrb[0].mxu0 %v4143
        %v4211 = vpop.f32.mrb[0].mxu0
        %v4212 = vadd.f32 0.0, %v4211
        %v4213 = vpop.f32.mrb[0].mxu0
        %4214 = vdwg.mxu0
        %v4216 = vsel %vm716, %v4139, 0
        %4218 = vmatprep.subr.mxu0 0.0
        %4219 = vmatpush1.msra.mxu0 %v3436
        %4220 = vmatprep.subr.mxu0 0.0
        %4221 = vmatpush1.msra.mxu0 %v3437
        %4222 = vmatprep.subr.mxu0 0.0
        %4223 = vmatpush1.msra.mxu0 0.0
        %4224 = vmatprep.subr.mxu0 0.0
        %4225 = vmatpush1.msra.mxu0 0.0
        %4226 = vmatprep.subr.mxu0 0.0
        %4227 = vmatpush1.msra.mxu0 0.0
        %4228 = vmatprep.subr.mxu0 0.0
        %4229 = vmatpush1.msra.mxu0 0.0
        %4230 = vmatprep.subr.mxu0 0.0
        %4231 = vmatpush1.msra.mxu0 0.0
        %4232 = vmatprep.subr.mxu0 0.0
        %4233 = vmatpush1.msra.mxu0 0.0
        %4234 = vmatprep.subr.mxu0 0.0
        %4235 = vmatpush1.msra.mxu0 0.0
        %4236 = vmatprep.subr.mxu0 0.0
        %4237 = vmatpush1.msra.mxu0 0.0
        %4238 = vmatprep.subr.mxu0 0.0
        %4239 = vmatpush1.msra.mxu0 0.0
        %4240 = vmatprep.subr.mxu0 0.0
        %4241 = vmatpush1.msra.mxu0 0.0
        %4242 = vmatprep.subr.mxu0 0.0
        %4243 = vmatpush1.msra.mxu0 0.0
        %4244 = vmatprep.subr.mxu0 0.0
        %4245 = vmatpush1.msra.mxu0 0.0
        %4246 = vmatprep.subr.mxu0 0.0
        %4247 = vmatpush1.msra.mxu0 0.0
        %4248 = vmatprep.subr.mxu0 0.0
        %4249 = vmatpush1.msra.mxu0 0.0
        %4250 = vmatprep.subr.mxu0 0.0
        %4251 = vmatpush1.msra.mxu0 0.0
        %4252 = vmatprep.subr.mxu0 0.0
        %4253 = vmatpush1.msra.mxu0 0.0
        %4254 = vmatprep.subr.mxu0 0.0
        %4255 = vmatpush1.msra.mxu0 0.0
        %4256 = vmatprep.subr.mxu0 0.0
        %4257 = vmatpush1.msra.mxu0 0.0
        %4258 = vmatprep.subr.mxu0 0.0
        %4259 = vmatpush1.msra.mxu0 0.0
        %4260 = vmatprep.subr.mxu0 0.0
        %4261 = vmatpush1.msra.mxu0 0.0
        %4262 = vmatprep.subr.mxu0 0.0
        %4263 = vmatpush1.msra.mxu0 0.0
        %4264 = vmatprep.subr.mxu0 0.0
        %4265 = vmatpush1.msra.mxu0 0.0
        %4266 = vmatprep.subr.mxu0 0.0
        %4267 = vmatpush1.msra.mxu0 0.0
        %4268 = vmatprep.subr.mxu0 0.0
        %4269 = vmatpush1.msra.mxu0 0.0
        %4270 = vmatprep.subr.mxu0 0.0
        %4271 = vmatpush1.msra.mxu0 0.0
        %4272 = vmatprep.subr.mxu0 0.0
        %4273 = vmatpush1.msra.mxu0 0.0
        %4274 = vmatprep.subr.mxu0 0.0
        %4275 = vmatpush1.msra.mxu0 0.0
        %4276 = vmatprep.subr.mxu0 0.0
        %4277 = vmatpush1.msra.mxu0 0.0
        %4278 = vmatprep.subr.mxu0 0.0
        %4279 = vmatpush1.msra.mxu0 0.0
        %4280 = vmatprep.subr.mxu0 0.0
        %4281 = vmatpush1.msra.mxu0 0.0
        %4282 = vmatprep.mubr.f32.mxu0 0.0
        %4283 = vmatmul.mubr.f32.gmra.mrb[0].mxu0 %v4216
        %v4284 = vpop.f32.mrb[0].mxu0
        %v4285 = vadd.f32 %v4212, %v4284
        %v4286 = vpop.f32.mrb[0].mxu0
        %4287 = vdwg.mxu0
        %v4288 = vld [vmem:[%s1126] sm:$0xff]
        %v4289 = vld [vmem:[%s1126 + $0x8] sm:$0xff]
        %v4290 = vld [vmem:[%s1126 + $0x10] sm:$0xff]
        %v4291 = vld [vmem:[%s1126 + $0x18] sm:$0xff]
        %v4292 = vld [vmem:[%s1126 + $0x20] sm:$0xff]
        %v4293 = vld [vmem:[%s1126 + $0x28] sm:$0xff]
        %v4294 = vld [vmem:[%s1126 + $0x30] sm:$0xff]
        %v4295 = vld [vmem:[%s1126 + $0x38] sm:$0xff]
        %v4297 = vsel %vm838, %v4285, 0
        %4299 = vmatprep.subr.mxu0 0.0
        %4300 = vmatpush1.msra.mxu0 %v4288
        %4301 = vmatprep.subr.mxu0 0.0
        %4302 = vmatpush1.msra.mxu0 %v4289
        %4303 = vmatprep.subr.mxu0 0.0
        %4304 = vmatpush1.msra.mxu0 %v4290
        %4305 = vmatprep.subr.mxu0 0.0
        %4306 = vmatpush1.msra.mxu0 %v4291
        %4307 = vmatprep.subr.mxu0 0.0
        %4308 = vmatpush1.msra.mxu0 %v4292
        %4309 = vmatprep.subr.mxu0 0.0
        %4310 = vmatpush1.msra.mxu0 %v4293
        %4311 = vmatprep.subr.mxu0 0.0
        %4312 = vmatpush1.msra.mxu0 %v4294
        %4313 = vmatprep.subr.mxu0 0.0
        %4314 = vmatpush1.msra.mxu0 %v4295
        %4315 = vmatprep.subr.mxu0 0.0
        %4316 = vmatpush1.msra.mxu0 0.0
        %4317 = vmatprep.subr.mxu0 0.0
        %4318 = vmatpush1.msra.mxu0 0.0
        %4319 = vmatprep.subr.mxu0 0.0
        %4320 = vmatpush1.msra.mxu0 0.0
        %4321 = vmatprep.subr.mxu0 0.0
        %4322 = vmatpush1.msra.mxu0 0.0
        %4323 = vmatprep.subr.mxu0 0.0
        %4324 = vmatpush1.msra.mxu0 0.0
        %4325 = vmatprep.subr.mxu0 0.0
        %4326 = vmatpush1.msra.mxu0 0.0
        %4327 = vmatprep.subr.mxu0 0.0
        %4328 = vmatpush1.msra.mxu0 0.0
        %4329 = vmatprep.subr.mxu0 0.0
        %4330 = vmatpush1.msra.mxu0 0.0
        %4331 = vmatprep.subr.mxu0 0.0
        %4332 = vmatpush1.msra.mxu0 0.0
        %4333 = vmatprep.subr.mxu0 0.0
        %4334 = vmatpush1.msra.mxu0 0.0
        %4335 = vmatprep.subr.mxu0 0.0
        %4336 = vmatpush1.msra.mxu0 0.0
        %4337 = vmatprep.subr.mxu0 0.0
        %4338 = vmatpush1.msra.mxu0 0.0
        %4339 = vmatprep.subr.mxu0 0.0
        %4340 = vmatpush1.msra.mxu0 0.0
        %4341 = vmatprep.subr.mxu0 0.0
        %4342 = vmatpush1.msra.mxu0 0.0
        %4343 = vmatprep.subr.mxu0 0.0
        %4344 = vmatpush1.msra.mxu0 0.0
        %4345 = vmatprep.subr.mxu0 0.0
        %4346 = vmatpush1.msra.mxu0 0.0
        %4347 = vmatprep.subr.mxu0 0.0
        %4348 = vmatpush1.msra.mxu0 0.0
        %4349 = vmatprep.subr.mxu0 0.0
        %4350 = vmatpush1.msra.mxu0 0.0
        %4351 = vmatprep.subr.mxu0 0.0
        %4352 = vmatpush1.msra.mxu0 0.0
        %4353 = vmatprep.subr.mxu0 0.0
        %4354 = vmatpush1.msra.mxu0 0.0
        %4355 = vmatprep.subr.mxu0 0.0
        %4356 = vmatpush1.msra.mxu0 0.0
        %4357 = vmatprep.subr.mxu0 0.0
        %4358 = vmatpush1.msra.mxu0 0.0
        %4359 = vmatprep.subr.mxu0 0.0
        %4360 = vmatpush1.msra.mxu0 0.0
        %4361 = vmatprep.subr.mxu0 0.0
        %4362 = vmatpush1.msra.mxu0 0.0
        %4363 = vmatprep.mubr.f32.mxu0 0.0
        %4364 = vmatmul.mubr.f32.gmra.mrb[0].mxu0 %v4297
        %v4365 = vpop.f32.mrb[0].mxu0
        %v4366 = vadd.f32 0.0, %v4365
        %v4367 = vpop.f32.mrb[0].mxu0
        %4368 = vdwg.mxu0
        %v4369 = vadd.f32 %v4137, %v4366
        %s4370 = scalar_lea.vmem %s10, 32
        %v4371 = vld [vmem:[%s4370] sm:$0xff]
        %s4372 = scalar_lea.vmem %s11, 32
        %v4373 = vld [vmem:[%s4372] sm:$0xff]
        %v4375 = vsel %vm716, %v4373, 0
        %4377 = vmatprep.subr.mxu0 0.0
        %4378 = vmatpush1.msra.mxu0 %v3440
        %4379 = vmatprep.subr.mxu0 0.0
        %4380 = vmatpush1.msra.mxu0 %v3441
        %4381 = vmatprep.subr.mxu0 0.0
        %4382 = vmatpush1.msra.mxu0 0.0
        %4383 = vmatprep.subr.mxu0 0.0
        %4384 = vmatpush1.msra.mxu0 0.0
        %4385 = vmatprep.subr.mxu0 0.0
        %4386 = vmatpush1.msra.mxu0 0.0
        %4387 = vmatprep.subr.mxu0 0.0
        %4388 = vmatpush1.msra.mxu0 0.0
        %4389 = vmatprep.subr.mxu0 0.0
        %4390 = vmatpush1.msra.mxu0 0.0
        %4391 = vmatprep.subr.mxu0 0.0
        %4392 = vmatpush1.msra.mxu0 0.0
        %4393 = vmatprep.subr.mxu0 0.0
        %4394 = vmatpush1.msra.mxu0 0.0
        %4395 = vmatprep.subr.mxu0 0.0
        %4396 = vmatpush1.msra.mxu0 0.0
        %4397 = vmatprep.subr.mxu0 0.0
        %4398 = vmatpush1.msra.mxu0 0.0
        %4399 = vmatprep.subr.mxu0 0.0
        %4400 = vmatpush1.msra.mxu0 0.0
        %4401 = vmatprep.subr.mxu0 0.0
        %4402 = vmatpush1.msra.mxu0 0.0
        %4403 = vmatprep.subr.mxu0 0.0
        %4404 = vmatpush1.msra.mxu0 0.0
        %4405 = vmatprep.subr.mxu0 0.0
        %4406 = vmatpush1.msra.mxu0 0.0
        %4407 = vmatprep.subr.mxu0 0.0
        %4408 = vmatpush1.msra.mxu0 0.0
        %4409 = vmatprep.subr.mxu0 0.0
        %4410 = vmatpush1.msra.mxu0 0.0
        %4411 = vmatprep.subr.mxu0 0.0
        %4412 = vmatpush1.msra.mxu0 0.0
        %4413 = vmatprep.subr.mxu0 0.0
        %4414 = vmatpush1.msra.mxu0 0.0
        %4415 = vmatprep.subr.mxu0 0.0
        %4416 = vmatpush1.msra.mxu0 0.0
        %4417 = vmatprep.subr.mxu0 0.0
        %4418 = vmatpush1.msra.mxu0 0.0
        %4419 = vmatprep.subr.mxu0 0.0
        %4420 = vmatpush1.msra.mxu0 0.0
        %4421 = vmatprep.subr.mxu0 0.0
        %4422 = vmatpush1.msra.mxu0 0.0
        %4423 = vmatprep.subr.mxu0 0.0
        %4424 = vmatpush1.msra.mxu0 0.0
        %4425 = vmatprep.subr.mxu0 0.0
        %4426 = vmatpush1.msra.mxu0 0.0
        %4427 = vmatprep.subr.mxu0 0.0
        %4428 = vmatpush1.msra.mxu0 0.0
        %4429 = vmatprep.subr.mxu0 0.0
        %4430 = vmatpush1.msra.mxu0 0.0
        %4431 = vmatprep.subr.mxu0 0.0
        %4432 = vmatpush1.msra.mxu0 0.0
        %4433 = vmatprep.subr.mxu0 0.0
        %4434 = vmatpush1.msra.mxu0 0.0
        %4435 = vmatprep.subr.mxu0 0.0
        %4436 = vmatpush1.msra.mxu0 0.0
        %4437 = vmatprep.subr.mxu0 0.0
        %4438 = vmatpush1.msra.mxu0 0.0
        %4439 = vmatprep.subr.mxu0 0.0
        %4440 = vmatpush1.msra.mxu0 0.0
        %4441 = vmatprep.mubr.f32.mxu0 0.0
        %4442 = vmatmul.mubr.f32.gmra.mrb[0].mxu0 %v4375
        %v4443 = vpop.f32.mrb[0].mxu0
        %v4444 = vadd.f32 0.0, %v4443
        %v4445 = vpop.f32.mrb[0].mxu0
        %4446 = vdwg.mxu0
        %v4448 = vsel %vm716, %v4371, 0
        %4450 = vmatprep.subr.mxu0 0.0
        %4451 = vmatpush1.msra.mxu0 %v3436
        %4452 = vmatprep.subr.mxu0 0.0
        %4453 = vmatpush1.msra.mxu0 %v3437
        %4454 = vmatprep.subr.mxu0 0.0
        %4455 = vmatpush1.msra.mxu0 0.0
        %4456 = vmatprep.subr.mxu0 0.0
        %4457 = vmatpush1.msra.mxu0 0.0
        %4458 = vmatprep.subr.mxu0 0.0
        %4459 = vmatpush1.msra.mxu0 0.0
        %4460 = vmatprep.subr.mxu0 0.0
        %4461 = vmatpush1.msra.mxu0 0.0
        %4462 = vmatprep.subr.mxu0 0.0
        %4463 = vmatpush1.msra.mxu0 0.0
        %4464 = vmatprep.subr.mxu0 0.0
        %4465 = vmatpush1.msra.mxu0 0.0
        %4466 = vmatprep.subr.mxu0 0.0
        %4467 = vmatpush1.msra.mxu0 0.0
        %4468 = vmatprep.subr.mxu0 0.0
        %4469 = vmatpush1.msra.mxu0 0.0
        %4470 = vmatprep.subr.mxu0 0.0
        %4471 = vmatpush1.msra.mxu0 0.0
        %4472 = vmatprep.subr.mxu0 0.0
        %4473 = vmatpush1.msra.mxu0 0.0
        %4474 = vmatprep.subr.mxu0 0.0
        %4475 = vmatpush1.msra.mxu0 0.0
        %4476 = vmatprep.subr.mxu0 0.0
        %4477 = vmatpush1.msra.mxu0 0.0
        %4478 = vmatprep.subr.mxu0 0.0
        %4479 = vmatpush1.msra.mxu0 0.0
        %4480 = vmatprep.subr.mxu0 0.0
        %4481 = vmatpush1.msra.mxu0 0.0
        %4482 = vmatprep.subr.mxu0 0.0
        %4483 = vmatpush1.msra.mxu0 0.0
        %4484 = vmatprep.subr.mxu0 0.0
        %4485 = vmatpush1.msra.mxu0 0.0
        %4486 = vmatprep.subr.mxu0 0.0
        %4487 = vmatpush1.msra.mxu0 0.0
        %4488 = vmatprep.subr.mxu0 0.0
        %4489 = vmatpush1.msra.mxu0 0.0
        %4490 = vmatprep.subr.mxu0 0.0
        %4491 = vmatpush1.msra.mxu0 0.0
        %4492 = vmatprep.subr.mxu0 0.0
        %4493 = vmatpush1.msra.mxu0 0.0
        %4494 = vmatprep.subr.mxu0 0.0
        %4495 = vmatpush1.msra.mxu0 0.0
        %4496 = vmatprep.subr.mxu0 0.0
        %4497 = vmatpush1.msra.mxu0 0.0
        %4498 = vmatprep.subr.mxu0 0.0
        %4499 = vmatpush1.msra.mxu0 0.0
        %4500 = vmatprep.subr.mxu0 0.0
        %4501 = vmatpush1.msra.mxu0 0.0
        %4502 = vmatprep.subr.mxu0 0.0
        %4503 = vmatpush1.msra.mxu0 0.0
        %4504 = vmatprep.subr.mxu0 0.0
        %4505 = vmatpush1.msra.mxu0 0.0
        %4506 = vmatprep.subr.mxu0 0.0
        %4507 = vmatpush1.msra.mxu0 0.0
        %4508 = vmatprep.subr.mxu0 0.0
        %4509 = vmatpush1.msra.mxu0 0.0
        %4510 = vmatprep.subr.mxu0 0.0
        %4511 = vmatpush1.msra.mxu0 0.0
        %4512 = vmatprep.subr.mxu0 0.0
        %4513 = vmatpush1.msra.mxu0 0.0
        %4514 = vmatprep.mubr.f32.mxu0 0.0
        %4515 = vmatmul.mubr.f32.gmra.mrb[0].mxu0 %v4448
        %v4516 = vpop.f32.mrb[0].mxu0
        %v4517 = vadd.f32 %v4444, %v4516
        %v4518 = vpop.f32.mrb[0].mxu0
        %4519 = vdwg.mxu0
        %v4520 = vld [vmem:[%s1222] sm:$0xff]
        %v4521 = vld [vmem:[%s1222 + $0x8] sm:$0xff]
        %v4522 = vld [vmem:[%s1222 + $0x10] sm:$0xff]
        %v4523 = vld [vmem:[%s1222 + $0x18] sm:$0xff]
        %v4524 = vld [vmem:[%s1222 + $0x20] sm:$0xff]
        %v4525 = vld [vmem:[%s1222 + $0x28] sm:$0xff]
        %v4526 = vld [vmem:[%s1222 + $0x30] sm:$0xff]
        %v4527 = vld [vmem:[%s1222 + $0x38] sm:$0xff]
        %v4529 = vsel %vm838, %v4517, 0
        %4531 = vmatprep.subr.mxu0 0.0
        %4532 = vmatpush1.msra.mxu0 %v4520
        %4533 = vmatprep.subr.mxu0 0.0
        %4534 = vmatpush1.msra.mxu0 %v4521
        %4535 = vmatprep.subr.mxu0 0.0
        %4536 = vmatpush1.msra.mxu0 %v4522
        %4537 = vmatprep.subr.mxu0 0.0
        %4538 = vmatpush1.msra.mxu0 %v4523
        %4539 = vmatprep.subr.mxu0 0.0
        %4540 = vmatpush1.msra.mxu0 %v4524
        %4541 = vmatprep.subr.mxu0 0.0
        %4542 = vmatpush1.msra.mxu0 %v4525
        %4543 = vmatprep.subr.mxu0 0.0
        %4544 = vmatpush1.msra.mxu0 %v4526
        %4545 = vmatprep.subr.mxu0 0.0
        %4546 = vmatpush1.msra.mxu0 %v4527
        %4547 = vmatprep.subr.mxu0 0.0
        %4548 = vmatpush1.msra.mxu0 0.0
        %4549 = vmatprep.subr.mxu0 0.0
        %4550 = vmatpush1.msra.mxu0 0.0
        %4551 = vmatprep.subr.mxu0 0.0
        %4552 = vmatpush1.msra.mxu0 0.0
        %4553 = vmatprep.subr.mxu0 0.0
        %4554 = vmatpush1.msra.mxu0 0.0
        %4555 = vmatprep.subr.mxu0 0.0
        %4556 = vmatpush1.msra.mxu0 0.0
        %4557 = vmatprep.subr.mxu0 0.0
        %4558 = vmatpush1.msra.mxu0 0.0
        %4559 = vmatprep.subr.mxu0 0.0
        %4560 = vmatpush1.msra.mxu0 0.0
        %4561 = vmatprep.subr.mxu0 0.0
        %4562 = vmatpush1.msra.mxu0 0.0
        %4563 = vmatprep.subr.mxu0 0.0
        %4564 = vmatpush1.msra.mxu0 0.0
        %4565 = vmatprep.subr.mxu0 0.0
        %4566 = vmatpush1.msra.mxu0 0.0
        %4567 = vmatprep.subr.mxu0 0.0
        %4568 = vmatpush1.msra.mxu0 0.0
        %4569 = vmatprep.subr.mxu0 0.0
        %4570 = vmatpush1.msra.mxu0 0.0
        %4571 = vmatprep.subr.mxu0 0.0
        %4572 = vmatpush1.msra.mxu0 0.0
        %4573 = vmatprep.subr.mxu0 0.0
        %4574 = vmatpush1.msra.mxu0 0.0
        %4575 = vmatprep.subr.mxu0 0.0
        %4576 = vmatpush1.msra.mxu0 0.0
        %4577 = vmatprep.subr.mxu0 0.0
        %4578 = vmatpush1.msra.mxu0 0.0
        %4579 = vmatprep.subr.mxu0 0.0
        %4580 = vmatpush1.msra.mxu0 0.0
        %4581 = vmatprep.subr.mxu0 0.0
        %4582 = vmatpush1.msra.mxu0 0.0
        %4583 = vmatprep.subr.mxu0 0.0
        %4584 = vmatpush1.msra.mxu0 0.0
        %4585 = vmatprep.subr.mxu0 0.0
        %4586 = vmatpush1.msra.mxu0 0.0
        %4587 = vmatprep.subr.mxu0 0.0
        %4588 = vmatpush1.msra.mxu0 0.0
        %4589 = vmatprep.subr.mxu0 0.0
        %4590 = vmatpush1.msra.mxu0 0.0
        %4591 = vmatprep.subr.mxu0 0.0
        %4592 = vmatpush1.msra.mxu0 0.0
        %4593 = vmatprep.subr.mxu0 0.0
        %4594 = vmatpush1.msra.mxu0 0.0
        %4595 = vmatprep.mubr.f32.mxu0 0.0
        %4596 = vmatmul.mubr.f32.gmra.mrb[0].mxu0 %v4529
        %v4597 = vpop.f32.mrb[0].mxu0
        %v4598 = vadd.f32 0.0, %v4597
        %v4599 = vpop.f32.mrb[0].mxu0
        %4600 = vdwg.mxu0
        %v4601 = vadd.f32 %v4369, %v4598
        %s4602 = scalar_lea.vmem %s10, 40
        %v4603 = vld [vmem:[%s4602] sm:$0xff]
        %s4604 = scalar_lea.vmem %s11, 40
        %v4605 = vld [vmem:[%s4604] sm:$0xff]
        %v4607 = vsel %vm716, %v4605, 0
        %4609 = vmatprep.subr.mxu0 0.0
        %4610 = vmatpush1.msra.mxu0 %v3440
        %4611 = vmatprep.subr.mxu0 0.0
        %4612 = vmatpush1.msra.mxu0 %v3441
        %4613 = vmatprep.subr.mxu0 0.0
        %4614 = vmatpush1.msra.mxu0 0.0
        %4615 = vmatprep.subr.mxu0 0.0
        %4616 = vmatpush1.msra.mxu0 0.0
        %4617 = vmatprep.subr.mxu0 0.0
        %4618 = vmatpush1.msra.mxu0 0.0
        %4619 = vmatprep.subr.mxu0 0.0
        %4620 = vmatpush1.msra.mxu0 0.0
        %4621 = vmatprep.subr.mxu0 0.0
        %4622 = vmatpush1.msra.mxu0 0.0
        %4623 = vmatprep.subr.mxu0 0.0
        %4624 = vmatpush1.msra.mxu0 0.0
        %4625 = vmatprep.subr.mxu0 0.0
        %4626 = vmatpush1.msra.mxu0 0.0
        %4627 = vmatprep.subr.mxu0 0.0
        %4628 = vmatpush1.msra.mxu0 0.0
        %4629 = vmatprep.subr.mxu0 0.0
        %4630 = vmatpush1.msra.mxu0 0.0
        %4631 = vmatprep.subr.mxu0 0.0
        %4632 = vmatpush1.msra.mxu0 0.0
        %4633 = vmatprep.subr.mxu0 0.0
        %4634 = vmatpush1.msra.mxu0 0.0
        %4635 = vmatprep.subr.mxu0 0.0
        %4636 = vmatpush1.msra.mxu0 0.0
        %4637 = vmatprep.subr.mxu0 0.0
        %4638 = vmatpush1.msra.mxu0 0.0
        %4639 = vmatprep.subr.mxu0 0.0
        %4640 = vmatpush1.msra.mxu0 0.0
        %4641 = vmatprep.subr.mxu0 0.0
        %4642 = vmatpush1.msra.mxu0 0.0
        %4643 = vmatprep.subr.mxu0 0.0
        %4644 = vmatpush1.msra.mxu0 0.0
        %4645 = vmatprep.subr.mxu0 0.0
        %4646 = vmatpush1.msra.mxu0 0.0
        %4647 = vmatprep.subr.mxu0 0.0
        %4648 = vmatpush1.msra.mxu0 0.0
        %4649 = vmatprep.subr.mxu0 0.0
        %4650 = vmatpush1.msra.mxu0 0.0
        %4651 = vmatprep.subr.mxu0 0.0
        %4652 = vmatpush1.msra.mxu0 0.0
        %4653 = vmatprep.subr.mxu0 0.0
        %4654 = vmatpush1.msra.mxu0 0.0
        %4655 = vmatprep.subr.mxu0 0.0
        %4656 = vmatpush1.msra.mxu0 0.0
        %4657 = vmatprep.subr.mxu0 0.0
        %4658 = vmatpush1.msra.mxu0 0.0
        %4659 = vmatprep.subr.mxu0 0.0
        %4660 = vmatpush1.msra.mxu0 0.0
        %4661 = vmatprep.subr.mxu0 0.0
        %4662 = vmatpush1.msra.mxu0 0.0
        %4663 = vmatprep.subr.mxu0 0.0
        %4664 = vmatpush1.msra.mxu0 0.0
        %4665 = vmatprep.subr.mxu0 0.0
        %4666 = vmatpush1.msra.mxu0 0.0
        %4667 = vmatprep.subr.mxu0 0.0
        %4668 = vmatpush1.msra.mxu0 0.0
        %4669 = vmatprep.subr.mxu0 0.0
        %4670 = vmatpush1.msra.mxu0 0.0
        %4671 = vmatprep.subr.mxu0 0.0
        %4672 = vmatpush1.msra.mxu0 0.0
        %4673 = vmatprep.mubr.f32.mxu0 0.0
        %4674 = vmatmul.mubr.f32.gmra.mrb[0].mxu0 %v4607
        %v4675 = vpop.f32.mrb[0].mxu0
        %v4676 = vadd.f32 0.0, %v4675
        %v4677 = vpop.f32.mrb[0].mxu0
        %4678 = vdwg.mxu0
        %v4680 = vsel %vm716, %v4603, 0
        %4682 = vmatprep.subr.mxu0 0.0
        %4683 = vmatpush1.msra.mxu0 %v3436
        %4684 = vmatprep.subr.mxu0 0.0
        %4685 = vmatpush1.msra.mxu0 %v3437
        %4686 = vmatprep.subr.mxu0 0.0
        %4687 = vmatpush1.msra.mxu0 0.0
        %4688 = vmatprep.subr.mxu0 0.0
        %4689 = vmatpush1.msra.mxu0 0.0
        %4690 = vmatprep.subr.mxu0 0.0
        %4691 = vmatpush1.msra.mxu0 0.0
        %4692 = vmatprep.subr.mxu0 0.0
        %4693 = vmatpush1.msra.mxu0 0.0
        %4694 = vmatprep.subr.mxu0 0.0
        %4695 = vmatpush1.msra.mxu0 0.0
        %4696 = vmatprep.subr.mxu0 0.0
        %4697 = vmatpush1.msra.mxu0 0.0
        %4698 = vmatprep.subr.mxu0 0.0
        %4699 = vmatpush1.msra.mxu0 0.0
        %4700 = vmatprep.subr.mxu0 0.0
        %4701 = vmatpush1.msra.mxu0 0.0
        %4702 = vmatprep.subr.mxu0 0.0
        %4703 = vmatpush1.msra.mxu0 0.0
        %4704 = vmatprep.subr.mxu0 0.0
        %4705 = vmatpush1.msra.mxu0 0.0
        %4706 = vmatprep.subr.mxu0 0.0
        %4707 = vmatpush1.msra.mxu0 0.0
        %4708 = vmatprep.subr.mxu0 0.0
        %4709 = vmatpush1.msra.mxu0 0.0
        %4710 = vmatprep.subr.mxu0 0.0
        %4711 = vmatpush1.msra.mxu0 0.0
        %4712 = vmatprep.subr.mxu0 0.0
        %4713 = vmatpush1.msra.mxu0 0.0
        %4714 = vmatprep.subr.mxu0 0.0
        %4715 = vmatpush1.msra.mxu0 0.0
        %4716 = vmatprep.subr.mxu0 0.0
        %4717 = vmatpush1.msra.mxu0 0.0
        %4718 = vmatprep.subr.mxu0 0.0
        %4719 = vmatpush1.msra.mxu0 0.0
        %4720 = vmatprep.subr.mxu0 0.0
        %4721 = vmatpush1.msra.mxu0 0.0
        %4722 = vmatprep.subr.mxu0 0.0
        %4723 = vmatpush1.msra.mxu0 0.0
        %4724 = vmatprep.subr.mxu0 0.0
        %4725 = vmatpush1.msra.mxu0 0.0
        %4726 = vmatprep.subr.mxu0 0.0
        %4727 = vmatpush1.msra.mxu0 0.0
        %4728 = vmatprep.subr.mxu0 0.0
        %4729 = vmatpush1.msra.mxu0 0.0
        %4730 = vmatprep.subr.mxu0 0.0
        %4731 = vmatpush1.msra.mxu0 0.0
        %4732 = vmatprep.subr.mxu0 0.0
        %4733 = vmatpush1.msra.mxu0 0.0
        %4734 = vmatprep.subr.mxu0 0.0
        %4735 = vmatpush1.msra.mxu0 0.0
        %4736 = vmatprep.subr.mxu0 0.0
        %4737 = vmatpush1.msra.mxu0 0.0
        %4738 = vmatprep.subr.mxu0 0.0
        %4739 = vmatpush1.msra.mxu0 0.0
        %4740 = vmatprep.subr.mxu0 0.0
        %4741 = vmatpush1.msra.mxu0 0.0
        %4742 = vmatprep.subr.mxu0 0.0
        %4743 = vmatpush1.msra.mxu0 0.0
        %4744 = vmatprep.subr.mxu0 0.0
        %4745 = vmatpush1.msra.mxu0 0.0
        %4746 = vmatprep.mubr.f32.mxu0 0.0
        %4747 = vmatmul.mubr.f32.gmra.mrb[0].mxu0 %v4680
        %v4748 = vpop.f32.mrb[0].mxu0
        %v4749 = vadd.f32 %v4676, %v4748
        %v4750 = vpop.f32.mrb[0].mxu0
        %4751 = vdwg.mxu0
        %v4752 = vld [vmem:[%s1318] sm:$0xff]
        %v4753 = vld [vmem:[%s1318 + $0x8] sm:$0xff]
        %v4754 = vld [vmem:[%s1318 + $0x10] sm:$0xff]
        %v4755 = vld [vmem:[%s1318 + $0x18] sm:$0xff]
        %v4756 = vld [vmem:[%s1318 + $0x20] sm:$0xff]
        %v4757 = vld [vmem:[%s1318 + $0x28] sm:$0xff]
        %v4758 = vld [vmem:[%s1318 + $0x30] sm:$0xff]
        %v4759 = vld [vmem:[%s1318 + $0x38] sm:$0xff]
        %v4761 = vsel %vm838, %v4749, 0
        %4763 = vmatprep.subr.mxu0 0.0
        %4764 = vmatpush1.msra.mxu0 %v4752
        %4765 = vmatprep.subr.mxu0 0.0
        %4766 = vmatpush1.msra.mxu0 %v4753
        %4767 = vmatprep.subr.mxu0 0.0
        %4768 = vmatpush1.msra.mxu0 %v4754
        %4769 = vmatprep.subr.mxu0 0.0
        %4770 = vmatpush1.msra.mxu0 %v4755
        %4771 = vmatprep.subr.mxu0 0.0
        %4772 = vmatpush1.msra.mxu0 %v4756
        %4773 = vmatprep.subr.mxu0 0.0
        %4774 = vmatpush1.msra.mxu0 %v4757
        %4775 = vmatprep.subr.mxu0 0.0
        %4776 = vmatpush1.msra.mxu0 %v4758
        %4777 = vmatprep.subr.mxu0 0.0
        %4778 = vmatpush1.msra.mxu0 %v4759
        %4779 = vmatprep.subr.mxu0 0.0
        %4780 = vmatpush1.msra.mxu0 0.0
        %4781 = vmatprep.subr.mxu0 0.0
        %4782 = vmatpush1.msra.mxu0 0.0
        %4783 = vmatprep.subr.mxu0 0.0
        %4784 = vmatpush1.msra.mxu0 0.0
        %4785 = vmatprep.subr.mxu0 0.0
        %4786 = vmatpush1.msra.mxu0 0.0
        %4787 = vmatprep.subr.mxu0 0.0
        %4788 = vmatpush1.msra.mxu0 0.0
        %4789 = vmatprep.subr.mxu0 0.0
        %4790 = vmatpush1.msra.mxu0 0.0
        %4791 = vmatprep.subr.mxu0 0.0
        %4792 = vmatpush1.msra.mxu0 0.0
        %4793 = vmatprep.subr.mxu0 0.0
        %4794 = vmatpush1.msra.mxu0 0.0
        %4795 = vmatprep.subr.mxu0 0.0
        %4796 = vmatpush1.msra.mxu0 0.0
        %4797 = vmatprep.subr.mxu0 0.0
        %4798 = vmatpush1.msra.mxu0 0.0
        %4799 = vmatprep.subr.mxu0 0.0
        %4800 = vmatpush1.msra.mxu0 0.0
        %4801 = vmatprep.subr.mxu0 0.0
        %4802 = vmatpush1.msra.mxu0 0.0
        %4803 = vmatprep.subr.mxu0 0.0
        %4804 = vmatpush1.msra.mxu0 0.0
        %4805 = vmatprep.subr.mxu0 0.0
        %4806 = vmatpush1.msra.mxu0 0.0
        %4807 = vmatprep.subr.mxu0 0.0
        %4808 = vmatpush1.msra.mxu0 0.0
        %4809 = vmatprep.subr.mxu0 0.0
        %4810 = vmatpush1.msra.mxu0 0.0
        %4811 = vmatprep.subr.mxu0 0.0
        %4812 = vmatpush1.msra.mxu0 0.0
        %4813 = vmatprep.subr.mxu0 0.0
        %4814 = vmatpush1.msra.mxu0 0.0
        %4815 = vmatprep.subr.mxu0 0.0
        %4816 = vmatpush1.msra.mxu0 0.0
        %4817 = vmatprep.subr.mxu0 0.0
        %4818 = vmatpush1.msra.mxu0 0.0
        %4819 = vmatprep.subr.mxu0 0.0
        %4820 = vmatpush1.msra.mxu0 0.0
        %4821 = vmatprep.subr.mxu0 0.0
        %4822 = vmatpush1.msra.mxu0 0.0
        %4823 = vmatprep.subr.mxu0 0.0
        %4824 = vmatpush1.msra.mxu0 0.0
        %4825 = vmatprep.subr.mxu0 0.0
        %4826 = vmatpush1.msra.mxu0 0.0
        %4827 = vmatprep.mubr.f32.mxu0 0.0
        %4828 = vmatmul.mubr.f32.gmra.mrb[0].mxu0 %v4761
        %v4829 = vpop.f32.mrb[0].mxu0
        %v4830 = vadd.f32 0.0, %v4829
        %v4831 = vpop.f32.mrb[0].mxu0
        %4832 = vdwg.mxu0
        %v4833 = vadd.f32 %v4601, %v4830
        %s4834 = scalar_lea.vmem %s10, 48
        %v4835 = vld [vmem:[%s4834] sm:$0xff]
        %s4836 = scalar_lea.vmem %s11, 48
        %v4837 = vld [vmem:[%s4836] sm:$0xff]
        %v4839 = vsel %vm716, %v4837, 0
        %4841 = vmatprep.subr.mxu0 0.0
        %4842 = vmatpush1.msra.mxu0 %v3440
        %4843 = vmatprep.subr.mxu0 0.0
        %4844 = vmatpush1.msra.mxu0 %v3441
        %4845 = vmatprep.subr.mxu0 0.0
        %4846 = vmatpush1.msra.mxu0 0.0
        %4847 = vmatprep.subr.mxu0 0.0
        %4848 = vmatpush1.msra.mxu0 0.0
        %4849 = vmatprep.subr.mxu0 0.0
        %4850 = vmatpush1.msra.mxu0 0.0
        %4851 = vmatprep.subr.mxu0 0.0
        %4852 = vmatpush1.msra.mxu0 0.0
        %4853 = vmatprep.subr.mxu0 0.0
        %4854 = vmatpush1.msra.mxu0 0.0
        %4855 = vmatprep.subr.mxu0 0.0
        %4856 = vmatpush1.msra.mxu0 0.0
        %4857 = vmatprep.subr.mxu0 0.0
        %4858 = vmatpush1.msra.mxu0 0.0
        %4859 = vmatprep.subr.mxu0 0.0
        %4860 = vmatpush1.msra.mxu0 0.0
        %4861 = vmatprep.subr.mxu0 0.0
        %4862 = vmatpush1.msra.mxu0 0.0
        %4863 = vmatprep.subr.mxu0 0.0
        %4864 = vmatpush1.msra.mxu0 0.0
        %4865 = vmatprep.subr.mxu0 0.0
        %4866 = vmatpush1.msra.mxu0 0.0
        %4867 = vmatprep.subr.mxu0 0.0
        %4868 = vmatpush1.msra.mxu0 0.0
        %4869 = vmatprep.subr.mxu0 0.0
        %4870 = vmatpush1.msra.mxu0 0.0
        %4871 = vmatprep.subr.mxu0 0.0
        %4872 = vmatpush1.msra.mxu0 0.0
        %4873 = vmatprep.subr.mxu0 0.0
        %4874 = vmatpush1.msra.mxu0 0.0
        %4875 = vmatprep.subr.mxu0 0.0
        %4876 = vmatpush1.msra.mxu0 0.0
        %4877 = vmatprep.subr.mxu0 0.0
        %4878 = vmatpush1.msra.mxu0 0.0
        %4879 = vmatprep.subr.mxu0 0.0
        %4880 = vmatpush1.msra.mxu0 0.0
        %4881 = vmatprep.subr.mxu0 0.0
        %4882 = vmatpush1.msra.mxu0 0.0
        %4883 = vmatprep.subr.mxu0 0.0
        %4884 = vmatpush1.msra.mxu0 0.0
        %4885 = vmatprep.subr.mxu0 0.0
        %4886 = vmatpush1.msra.mxu0 0.0
        %4887 = vmatprep.subr.mxu0 0.0
        %4888 = vmatpush1.msra.mxu0 0.0
        %4889 = vmatprep.subr.mxu0 0.0
        %4890 = vmatpush1.msra.mxu0 0.0
        %4891 = vmatprep.subr.mxu0 0.0
        %4892 = vmatpush1.msra.mxu0 0.0
        %4893 = vmatprep.subr.mxu0 0.0
        %4894 = vmatpush1.msra.mxu0 0.0
        %4895 = vmatprep.subr.mxu0 0.0
        %4896 = vmatpush1.msra.mxu0 0.0
        %4897 = vmatprep.subr.mxu0 0.0
        %4898 = vmatpush1.msra.mxu0 0.0
        %4899 = vmatprep.subr.mxu0 0.0
        %4900 = vmatpush1.msra.mxu0 0.0
        %4901 = vmatprep.subr.mxu0 0.0
        %4902 = vmatpush1.msra.mxu0 0.0
        %4903 = vmatprep.subr.mxu0 0.0
        %4904 = vmatpush1.msra.mxu0 0.0
        %4905 = vmatprep.mubr.f32.mxu0 0.0
        %4906 = vmatmul.mubr.f32.gmra.mrb[0].mxu0 %v4839
        %v4907 = vpop.f32.mrb[0].mxu0
        %v4908 = vadd.f32 0.0, %v4907
        %v4909 = vpop.f32.mrb[0].mxu0
        %4910 = vdwg.mxu0
        %v4912 = vsel %vm716, %v4835, 0
        %4914 = vmatprep.subr.mxu0 0.0
        %4915 = vmatpush1.msra.mxu0 %v3436
        %4916 = vmatprep.subr.mxu0 0.0
        %4917 = vmatpush1.msra.mxu0 %v3437
        %4918 = vmatprep.subr.mxu0 0.0
        %4919 = vmatpush1.msra.mxu0 0.0
        %4920 = vmatprep.subr.mxu0 0.0
        %4921 = vmatpush1.msra.mxu0 0.0
        %4922 = vmatprep.subr.mxu0 0.0
        %4923 = vmatpush1.msra.mxu0 0.0
        %4924 = vmatprep.subr.mxu0 0.0
        %4925 = vmatpush1.msra.mxu0 0.0
        %4926 = vmatprep.subr.mxu0 0.0
        %4927 = vmatpush1.msra.mxu0 0.0
        %4928 = vmatprep.subr.mxu0 0.0
        %4929 = vmatpush1.msra.mxu0 0.0
        %4930 = vmatprep.subr.mxu0 0.0
        %4931 = vmatpush1.msra.mxu0 0.0
        %4932 = vmatprep.subr.mxu0 0.0
        %4933 = vmatpush1.msra.mxu0 0.0
        %4934 = vmatprep.subr.mxu0 0.0
        %4935 = vmatpush1.msra.mxu0 0.0
        %4936 = vmatprep.subr.mxu0 0.0
        %4937 = vmatpush1.msra.mxu0 0.0
        %4938 = vmatprep.subr.mxu0 0.0
        %4939 = vmatpush1.msra.mxu0 0.0
        %4940 = vmatprep.subr.mxu0 0.0
        %4941 = vmatpush1.msra.mxu0 0.0
        %4942 = vmatprep.subr.mxu0 0.0
        %4943 = vmatpush1.msra.mxu0 0.0
        %4944 = vmatprep.subr.mxu0 0.0
        %4945 = vmatpush1.msra.mxu0 0.0
        %4946 = vmatprep.subr.mxu0 0.0
        %4947 = vmatpush1.msra.mxu0 0.0
        %4948 = vmatprep.subr.mxu0 0.0
        %4949 = vmatpush1.msra.mxu0 0.0
        %4950 = vmatprep.subr.mxu0 0.0
        %4951 = vmatpush1.msra.mxu0 0.0
        %4952 = vmatprep.subr.mxu0 0.0
        %4953 = vmatpush1.msra.mxu0 0.0
        %4954 = vmatprep.subr.mxu0 0.0
        %4955 = vmatpush1.msra.mxu0 0.0
        %4956 = vmatprep.subr.mxu0 0.0
        %4957 = vmatpush1.msra.mxu0 0.0
        %4958 = vmatprep.subr.mxu0 0.0
        %4959 = vmatpush1.msra.mxu0 0.0
        %4960 = vmatprep.subr.mxu0 0.0
        %4961 = vmatpush1.msra.mxu0 0.0
        %4962 = vmatprep.subr.mxu0 0.0
        %4963 = vmatpush1.msra.mxu0 0.0
        %4964 = vmatprep.subr.mxu0 0.0
        %4965 = vmatpush1.msra.mxu0 0.0
        %4966 = vmatprep.subr.mxu0 0.0
        %4967 = vmatpush1.msra.mxu0 0.0
        %4968 = vmatprep.subr.mxu0 0.0
        %4969 = vmatpush1.msra.mxu0 0.0
        %4970 = vmatprep.subr.mxu0 0.0
        %4971 = vmatpush1.msra.mxu0 0.0
        %4972 = vmatprep.subr.mxu0 0.0
        %4973 = vmatpush1.msra.mxu0 0.0
        %4974 = vmatprep.subr.mxu0 0.0
        %4975 = vmatpush1.msra.mxu0 0.0
        %4976 = vmatprep.subr.mxu0 0.0
        %4977 = vmatpush1.msra.mxu0 0.0
        %4978 = vmatprep.mubr.f32.mxu0 0.0
        %4979 = vmatmul.mubr.f32.gmra.mrb[0].mxu0 %v4912
        %v4980 = vpop.f32.mrb[0].mxu0
        %v4981 = vadd.f32 %v4908, %v4980
        %v4982 = vpop.f32.mrb[0].mxu0
        %4983 = vdwg.mxu0
        %v4984 = vld [vmem:[%s1414] sm:$0xff]
        %v4985 = vld [vmem:[%s1414 + $0x8] sm:$0xff]
        %v4986 = vld [vmem:[%s1414 + $0x10] sm:$0xff]
        %v4987 = vld [vmem:[%s1414 + $0x18] sm:$0xff]
        %v4988 = vld [vmem:[%s1414 + $0x20] sm:$0xff]
        %v4989 = vld [vmem:[%s1414 + $0x28] sm:$0xff]
        %v4990 = vld [vmem:[%s1414 + $0x30] sm:$0xff]
        %v4991 = vld [vmem:[%s1414 + $0x38] sm:$0xff]
        %v4993 = vsel %vm838, %v4981, 0
        %4995 = vmatprep.subr.mxu0 0.0
        %4996 = vmatpush1.msra.mxu0 %v4984
        %4997 = vmatprep.subr.mxu0 0.0
        %4998 = vmatpush1.msra.mxu0 %v4985
        %4999 = vmatprep.subr.mxu0 0.0
        %5000 = vmatpush1.msra.mxu0 %v4986
        %5001 = vmatprep.subr.mxu0 0.0
        %5002 = vmatpush1.msra.mxu0 %v4987
        %5003 = vmatprep.subr.mxu0 0.0
        %5004 = vmatpush1.msra.mxu0 %v4988
        %5005 = vmatprep.subr.mxu0 0.0
        %5006 = vmatpush1.msra.mxu0 %v4989
        %5007 = vmatprep.subr.mxu0 0.0
        %5008 = vmatpush1.msra.mxu0 %v4990
        %5009 = vmatprep.subr.mxu0 0.0
        %5010 = vmatpush1.msra.mxu0 %v4991
        %5011 = vmatprep.subr.mxu0 0.0
        %5012 = vmatpush1.msra.mxu0 0.0
        %5013 = vmatprep.subr.mxu0 0.0
        %5014 = vmatpush1.msra.mxu0 0.0
        %5015 = vmatprep.subr.mxu0 0.0
        %5016 = vmatpush1.msra.mxu0 0.0
        %5017 = vmatprep.subr.mxu0 0.0
        %5018 = vmatpush1.msra.mxu0 0.0
        %5019 = vmatprep.subr.mxu0 0.0
        %5020 = vmatpush1.msra.mxu0 0.0
        %5021 = vmatprep.subr.mxu0 0.0
        %5022 = vmatpush1.msra.mxu0 0.0
        %5023 = vmatprep.subr.mxu0 0.0
        %5024 = vmatpush1.msra.mxu0 0.0
        %5025 = vmatprep.subr.mxu0 0.0
        %5026 = vmatpush1.msra.mxu0 0.0
        %5027 = vmatprep.subr.mxu0 0.0
        %5028 = vmatpush1.msra.mxu0 0.0
        %5029 = vmatprep.subr.mxu0 0.0
        %5030 = vmatpush1.msra.mxu0 0.0
        %5031 = vmatprep.subr.mxu0 0.0
        %5032 = vmatpush1.msra.mxu0 0.0
        %5033 = vmatprep.subr.mxu0 0.0
        %5034 = vmatpush1.msra.mxu0 0.0
        %5035 = vmatprep.subr.mxu0 0.0
        %5036 = vmatpush1.msra.mxu0 0.0
        %5037 = vmatprep.subr.mxu0 0.0
        %5038 = vmatpush1.msra.mxu0 0.0
        %5039 = vmatprep.subr.mxu0 0.0
        %5040 = vmatpush1.msra.mxu0 0.0
        %5041 = vmatprep.subr.mxu0 0.0
        %5042 = vmatpush1.msra.mxu0 0.0
        %5043 = vmatprep.subr.mxu0 0.0
        %5044 = vmatpush1.msra.mxu0 0.0
        %5045 = vmatprep.subr.mxu0 0.0
        %5046 = vmatpush1.msra.mxu0 0.0
        %5047 = vmatprep.subr.mxu0 0.0
        %5048 = vmatpush1.msra.mxu0 0.0
        %5049 = vmatprep.subr.mxu0 0.0
        %5050 = vmatpush1.msra.mxu0 0.0
        %5051 = vmatprep.subr.mxu0 0.0
        %5052 = vmatpush1.msra.mxu0 0.0
        %5053 = vmatprep.subr.mxu0 0.0
        %5054 = vmatpush1.msra.mxu0 0.0
        %5055 = vmatprep.subr.mxu0 0.0
        %5056 = vmatpush1.msra.mxu0 0.0
        %5057 = vmatprep.subr.mxu0 0.0
        %5058 = vmatpush1.msra.mxu0 0.0
        %5059 = vmatprep.mubr.f32.mxu0 0.0
        %5060 = vmatmul.mubr.f32.gmra.mrb[0].mxu0 %v4993
        %v5061 = vpop.f32.mrb[0].mxu0
        %v5062 = vadd.f32 0.0, %v5061
        %v5063 = vpop.f32.mrb[0].mxu0
        %5064 = vdwg.mxu0
        %v5065 = vadd.f32 %v4833, %v5062
        %s5066 = scalar_lea.vmem %s10, 56
        %v5067 = vld [vmem:[%s5066] sm:$0xff]
        %s5068 = scalar_lea.vmem %s11, 56
        %v5069 = vld [vmem:[%s5068] sm:$0xff]
        %v5071 = vsel %vm716, %v5069, 0
        %5073 = vmatprep.subr.mxu0 0.0
        %5074 = vmatpush1.msra.mxu0 %v3440
        %5075 = vmatprep.subr.mxu0 0.0
        %5076 = vmatpush1.msra.mxu0 %v3441
        %5077 = vmatprep.subr.mxu0 0.0
        %5078 = vmatpush1.msra.mxu0 0.0
        %5079 = vmatprep.subr.mxu0 0.0
        %5080 = vmatpush1.msra.mxu0 0.0
        %5081 = vmatprep.subr.mxu0 0.0
        %5082 = vmatpush1.msra.mxu0 0.0
        %5083 = vmatprep.subr.mxu0 0.0
        %5084 = vmatpush1.msra.mxu0 0.0
        %5085 = vmatprep.subr.mxu0 0.0
        %5086 = vmatpush1.msra.mxu0 0.0
        %5087 = vmatprep.subr.mxu0 0.0
        %5088 = vmatpush1.msra.mxu0 0.0
        %5089 = vmatprep.subr.mxu0 0.0
        %5090 = vmatpush1.msra.mxu0 0.0
        %5091 = vmatprep.subr.mxu0 0.0
        %5092 = vmatpush1.msra.mxu0 0.0
        %5093 = vmatprep.subr.mxu0 0.0
        %5094 = vmatpush1.msra.mxu0 0.0
        %5095 = vmatprep.subr.mxu0 0.0
        %5096 = vmatpush1.msra.mxu0 0.0
        %5097 = vmatprep.subr.mxu0 0.0
        %5098 = vmatpush1.msra.mxu0 0.0
        %5099 = vmatprep.subr.mxu0 0.0
        %5100 = vmatpush1.msra.mxu0 0.0
        %5101 = vmatprep.subr.mxu0 0.0
        %5102 = vmatpush1.msra.mxu0 0.0
        %5103 = vmatprep.subr.mxu0 0.0
        %5104 = vmatpush1.msra.mxu0 0.0
        %5105 = vmatprep.subr.mxu0 0.0
        %5106 = vmatpush1.msra.mxu0 0.0
        %5107 = vmatprep.subr.mxu0 0.0
        %5108 = vmatpush1.msra.mxu0 0.0
        %5109 = vmatprep.subr.mxu0 0.0
        %5110 = vmatpush1.msra.mxu0 0.0
        %5111 = vmatprep.subr.mxu0 0.0
        %5112 = vmatpush1.msra.mxu0 0.0
        %5113 = vmatprep.subr.mxu0 0.0
        %5114 = vmatpush1.msra.mxu0 0.0
        %5115 = vmatprep.subr.mxu0 0.0
        %5116 = vmatpush1.msra.mxu0 0.0
        %5117 = vmatprep.subr.mxu0 0.0
        %5118 = vmatpush1.msra.mxu0 0.0
        %5119 = vmatprep.subr.mxu0 0.0
        %5120 = vmatpush1.msra.mxu0 0.0
        %5121 = vmatprep.subr.mxu0 0.0
        %5122 = vmatpush1.msra.mxu0 0.0
        %5123 = vmatprep.subr.mxu0 0.0
        %5124 = vmatpush1.msra.mxu0 0.0
        %5125 = vmatprep.subr.mxu0 0.0
        %5126 = vmatpush1.msra.mxu0 0.0
        %5127 = vmatprep.subr.mxu0 0.0
        %5128 = vmatpush1.msra.mxu0 0.0
        %5129 = vmatprep.subr.mxu0 0.0
        %5130 = vmatpush1.msra.mxu0 0.0
        %5131 = vmatprep.subr.mxu0 0.0
        %5132 = vmatpush1.msra.mxu0 0.0
        %5133 = vmatprep.subr.mxu0 0.0
        %5134 = vmatpush1.msra.mxu0 0.0
        %5135 = vmatprep.subr.mxu0 0.0
        %5136 = vmatpush1.msra.mxu0 0.0
        %5137 = vmatprep.mubr.f32.mxu0 0.0
        %5138 = vmatmul.mubr.f32.gmra.mrb[0].mxu0 %v5071
        %v5139 = vpop.f32.mrb[0].mxu0
        %v5140 = vadd.f32 0.0, %v5139
        %v5141 = vpop.f32.mrb[0].mxu0
        %5142 = vdwg.mxu0
        %v5144 = vsel %vm716, %v5067, 0
        %5146 = vmatprep.subr.mxu0 0.0
        %5147 = vmatpush1.msra.mxu0 %v3436
        %5148 = vmatprep.subr.mxu0 0.0
        %5149 = vmatpush1.msra.mxu0 %v3437
        %5150 = vmatprep.subr.mxu0 0.0
        %5151 = vmatpush1.msra.mxu0 0.0
        %5152 = vmatprep.subr.mxu0 0.0
        %5153 = vmatpush1.msra.mxu0 0.0
        %5154 = vmatprep.subr.mxu0 0.0
        %5155 = vmatpush1.msra.mxu0 0.0
        %5156 = vmatprep.subr.mxu0 0.0
        %5157 = vmatpush1.msra.mxu0 0.0
        %5158 = vmatprep.subr.mxu0 0.0
        %5159 = vmatpush1.msra.mxu0 0.0
        %5160 = vmatprep.subr.mxu0 0.0
        %5161 = vmatpush1.msra.mxu0 0.0
        %5162 = vmatprep.subr.mxu0 0.0
        %5163 = vmatpush1.msra.mxu0 0.0
        %5164 = vmatprep.subr.mxu0 0.0
        %5165 = vmatpush1.msra.mxu0 0.0
        %5166 = vmatprep.subr.mxu0 0.0
        %5167 = vmatpush1.msra.mxu0 0.0
        %5168 = vmatprep.subr.mxu0 0.0
        %5169 = vmatpush1.msra.mxu0 0.0
        %5170 = vmatprep.subr.mxu0 0.0
        %5171 = vmatpush1.msra.mxu0 0.0
        %5172 = vmatprep.subr.mxu0 0.0
        %5173 = vmatpush1.msra.mxu0 0.0
        %5174 = vmatprep.subr.mxu0 0.0
        %5175 = vmatpush1.msra.mxu0 0.0
        %5176 = vmatprep.subr.mxu0 0.0
        %5177 = vmatpush1.msra.mxu0 0.0
        %5178 = vmatprep.subr.mxu0 0.0
        %5179 = vmatpush1.msra.mxu0 0.0
        %5180 = vmatprep.subr.mxu0 0.0
        %5181 = vmatpush1.msra.mxu0 0.0
        %5182 = vmatprep.subr.mxu0 0.0
        %5183 = vmatpush1.msra.mxu0 0.0
        %5184 = vmatprep.subr.mxu0 0.0
        %5185 = vmatpush1.msra.mxu0 0.0
        %5186 = vmatprep.subr.mxu0 0.0
        %5187 = vmatpush1.msra.mxu0 0.0
        %5188 = vmatprep.subr.mxu0 0.0
        %5189 = vmatpush1.msra.mxu0 0.0
        %5190 = vmatprep.subr.mxu0 0.0
        %5191 = vmatpush1.msra.mxu0 0.0
        %5192 = vmatprep.subr.mxu0 0.0
        %5193 = vmatpush1.msra.mxu0 0.0
        %5194 = vmatprep.subr.mxu0 0.0
        %5195 = vmatpush1.msra.mxu0 0.0
        %5196 = vmatprep.subr.mxu0 0.0
        %5197 = vmatpush1.msra.mxu0 0.0
        %5198 = vmatprep.subr.mxu0 0.0
        %5199 = vmatpush1.msra.mxu0 0.0
        %5200 = vmatprep.subr.mxu0 0.0
        %5201 = vmatpush1.msra.mxu0 0.0
        %5202 = vmatprep.subr.mxu0 0.0
        %5203 = vmatpush1.msra.mxu0 0.0
        %5204 = vmatprep.subr.mxu0 0.0
        %5205 = vmatpush1.msra.mxu0 0.0
        %5206 = vmatprep.subr.mxu0 0.0
        %5207 = vmatpush1.msra.mxu0 0.0
        %5208 = vmatprep.subr.mxu0 0.0
        %5209 = vmatpush1.msra.mxu0 0.0
        %5210 = vmatprep.mubr.f32.mxu0 0.0
        %5211 = vmatmul.mubr.f32.gmra.mrb[0].mxu0 %v5144
        %v5212 = vpop.f32.mrb[0].mxu0
        %v5213 = vadd.f32 %v5140, %v5212
        %v5214 = vpop.f32.mrb[0].mxu0
        %5215 = vdwg.mxu0
        %v5216 = vld [vmem:[%s1510] sm:$0xff]
        %v5217 = vld [vmem:[%s1510 + $0x8] sm:$0xff]
        %v5218 = vld [vmem:[%s1510 + $0x10] sm:$0xff]
        %v5219 = vld [vmem:[%s1510 + $0x18] sm:$0xff]
        %v5220 = vld [vmem:[%s1510 + $0x20] sm:$0xff]
        %v5221 = vld [vmem:[%s1510 + $0x28] sm:$0xff]
        %v5222 = vld [vmem:[%s1510 + $0x30] sm:$0xff]
        %v5223 = vld [vmem:[%s1510 + $0x38] sm:$0xff]
        %v5225 = vsel %vm838, %v5213, 0
        %5227 = vmatprep.subr.mxu0 0.0
        %5228 = vmatpush1.msra.mxu0 %v5216
        %5229 = vmatprep.subr.mxu0 0.0
        %5230 = vmatpush1.msra.mxu0 %v5217
        %5231 = vmatprep.subr.mxu0 0.0
        %5232 = vmatpush1.msra.mxu0 %v5218
        %5233 = vmatprep.subr.mxu0 0.0
        %5234 = vmatpush1.msra.mxu0 %v5219
        %5235 = vmatprep.subr.mxu0 0.0
        %5236 = vmatpush1.msra.mxu0 %v5220
        %5237 = vmatprep.subr.mxu0 0.0
        %5238 = vmatpush1.msra.mxu0 %v5221
        %5239 = vmatprep.subr.mxu0 0.0
        %5240 = vmatpush1.msra.mxu0 %v5222
        %5241 = vmatprep.subr.mxu0 0.0
        %5242 = vmatpush1.msra.mxu0 %v5223
        %5243 = vmatprep.subr.mxu0 0.0
        %5244 = vmatpush1.msra.mxu0 0.0
        %5245 = vmatprep.subr.mxu0 0.0
        %5246 = vmatpush1.msra.mxu0 0.0
        %5247 = vmatprep.subr.mxu0 0.0
        %5248 = vmatpush1.msra.mxu0 0.0
        %5249 = vmatprep.subr.mxu0 0.0
        %5250 = vmatpush1.msra.mxu0 0.0
        %5251 = vmatprep.subr.mxu0 0.0
        %5252 = vmatpush1.msra.mxu0 0.0
        %5253 = vmatprep.subr.mxu0 0.0
        %5254 = vmatpush1.msra.mxu0 0.0
        %5255 = vmatprep.subr.mxu0 0.0
        %5256 = vmatpush1.msra.mxu0 0.0
        %5257 = vmatprep.subr.mxu0 0.0
        %5258 = vmatpush1.msra.mxu0 0.0
        %5259 = vmatprep.subr.mxu0 0.0
        %5260 = vmatpush1.msra.mxu0 0.0
        %5261 = vmatprep.subr.mxu0 0.0
        %5262 = vmatpush1.msra.mxu0 0.0
        %5263 = vmatprep.subr.mxu0 0.0
        %5264 = vmatpush1.msra.mxu0 0.0
        %5265 = vmatprep.subr.mxu0 0.0
        %5266 = vmatpush1.msra.mxu0 0.0
        %5267 = vmatprep.subr.mxu0 0.0
        %5268 = vmatpush1.msra.mxu0 0.0
        %5269 = vmatprep.subr.mxu0 0.0
        %5270 = vmatpush1.msra.mxu0 0.0
        %5271 = vmatprep.subr.mxu0 0.0
        %5272 = vmatpush1.msra.mxu0 0.0
        %5273 = vmatprep.subr.mxu0 0.0
        %5274 = vmatpush1.msra.mxu0 0.0
        %5275 = vmatprep.subr.mxu0 0.0
        %5276 = vmatpush1.msra.mxu0 0.0
        %5277 = vmatprep.subr.mxu0 0.0
        %5278 = vmatpush1.msra.mxu0 0.0
        %5279 = vmatprep.subr.mxu0 0.0
        %5280 = vmatpush1.msra.mxu0 0.0
        %5281 = vmatprep.subr.mxu0 0.0
        %5282 = vmatpush1.msra.mxu0 0.0
        %5283 = vmatprep.subr.mxu0 0.0
        %5284 = vmatpush1.msra.mxu0 0.0
        %5285 = vmatprep.subr.mxu0 0.0
        %5286 = vmatpush1.msra.mxu0 0.0
        %5287 = vmatprep.subr.mxu0 0.0
        %5288 = vmatpush1.msra.mxu0 0.0
        %5289 = vmatprep.subr.mxu0 0.0
        %5290 = vmatpush1.msra.mxu0 0.0
        %5291 = vmatprep.mubr.f32.mxu0 0.0
        %5292 = vmatmul.mubr.f32.gmra.mrb[0].mxu0 %v5225
        %v5293 = vpop.f32.mrb[0].mxu0
        %v5294 = vadd.f32 0.0, %v5293
        %v5295 = vpop.f32.mrb[0].mxu0
        %5296 = vdwg.mxu0
        %v5297 = vadd.f32 %v5065, %v5294
        %s5298 = scalar_lea.vmem %s10, 64
        %v5299 = vld [vmem:[%s5298] sm:$0xff]
        %s5300 = scalar_lea.vmem %s11, 64
        %v5301 = vld [vmem:[%s5300] sm:$0xff]
        %v5303 = vsel %vm716, %v5301, 0
        %5305 = vmatprep.subr.mxu0 0.0
        %5306 = vmatpush1.msra.mxu0 %v3440
        %5307 = vmatprep.subr.mxu0 0.0
        %5308 = vmatpush1.msra.mxu0 %v3441
        %5309 = vmatprep.subr.mxu0 0.0
        %5310 = vmatpush1.msra.mxu0 0.0
        %5311 = vmatprep.subr.mxu0 0.0
        %5312 = vmatpush1.msra.mxu0 0.0
        %5313 = vmatprep.subr.mxu0 0.0
        %5314 = vmatpush1.msra.mxu0 0.0
        %5315 = vmatprep.subr.mxu0 0.0
        %5316 = vmatpush1.msra.mxu0 0.0
        %5317 = vmatprep.subr.mxu0 0.0
        %5318 = vmatpush1.msra.mxu0 0.0
        %5319 = vmatprep.subr.mxu0 0.0
        %5320 = vmatpush1.msra.mxu0 0.0
        %5321 = vmatprep.subr.mxu0 0.0
        %5322 = vmatpush1.msra.mxu0 0.0
        %5323 = vmatprep.subr.mxu0 0.0
        %5324 = vmatpush1.msra.mxu0 0.0
        %5325 = vmatprep.subr.mxu0 0.0
        %5326 = vmatpush1.msra.mxu0 0.0
        %5327 = vmatprep.subr.mxu0 0.0
        %5328 = vmatpush1.msra.mxu0 0.0
        %5329 = vmatprep.subr.mxu0 0.0
        %5330 = vmatpush1.msra.mxu0 0.0
        %5331 = vmatprep.subr.mxu0 0.0
        %5332 = vmatpush1.msra.mxu0 0.0
        %5333 = vmatprep.subr.mxu0 0.0
        %5334 = vmatpush1.msra.mxu0 0.0
        %5335 = vmatprep.subr.mxu0 0.0
        %5336 = vmatpush1.msra.mxu0 0.0
        %5337 = vmatprep.subr.mxu0 0.0
        %5338 = vmatpush1.msra.mxu0 0.0
        %5339 = vmatprep.subr.mxu0 0.0
        %5340 = vmatpush1.msra.mxu0 0.0
        %5341 = vmatprep.subr.mxu0 0.0
        %5342 = vmatpush1.msra.mxu0 0.0
        %5343 = vmatprep.subr.mxu0 0.0
        %5344 = vmatpush1.msra.mxu0 0.0
        %5345 = vmatprep.subr.mxu0 0.0
        %5346 = vmatpush1.msra.mxu0 0.0
        %5347 = vmatprep.subr.mxu0 0.0
        %5348 = vmatpush1.msra.mxu0 0.0
        %5349 = vmatprep.subr.mxu0 0.0
        %5350 = vmatpush1.msra.mxu0 0.0
        %5351 = vmatprep.subr.mxu0 0.0
        %5352 = vmatpush1.msra.mxu0 0.0
        %5353 = vmatprep.subr.mxu0 0.0
        %5354 = vmatpush1.msra.mxu0 0.0
        %5355 = vmatprep.subr.mxu0 0.0
        %5356 = vmatpush1.msra.mxu0 0.0
        %5357 = vmatprep.subr.mxu0 0.0
        %5358 = vmatpush1.msra.mxu0 0.0
        %5359 = vmatprep.subr.mxu0 0.0
        %5360 = vmatpush1.msra.mxu0 0.0
        %5361 = vmatprep.subr.mxu0 0.0
        %5362 = vmatpush1.msra.mxu0 0.0
        %5363 = vmatprep.subr.mxu0 0.0
        %5364 = vmatpush1.msra.mxu0 0.0
        %5365 = vmatprep.subr.mxu0 0.0
        %5366 = vmatpush1.msra.mxu0 0.0
        %5367 = vmatprep.subr.mxu0 0.0
        %5368 = vmatpush1.msra.mxu0 0.0
        %5369 = vmatprep.mubr.f32.mxu0 0.0
        %5370 = vmatmul.mubr.f32.gmra.mrb[0].mxu0 %v5303
        %v5371 = vpop.f32.mrb[0].mxu0
        %v5372 = vadd.f32 0.0, %v5371
        %v5373 = vpop.f32.mrb[0].mxu0
        %5374 = vdwg.mxu0
        %v5376 = vsel %vm716, %v5299, 0
        %5378 = vmatprep.subr.mxu0 0.0
        %5379 = vmatpush1.msra.mxu0 %v3436
        %5380 = vmatprep.subr.mxu0 0.0
        %5381 = vmatpush1.msra.mxu0 %v3437
        %5382 = vmatprep.subr.mxu0 0.0
        %5383 = vmatpush1.msra.mxu0 0.0
        %5384 = vmatprep.subr.mxu0 0.0
        %5385 = vmatpush1.msra.mxu0 0.0
        %5386 = vmatprep.subr.mxu0 0.0
        %5387 = vmatpush1.msra.mxu0 0.0
        %5388 = vmatprep.subr.mxu0 0.0
        %5389 = vmatpush1.msra.mxu0 0.0
        %5390 = vmatprep.subr.mxu0 0.0
        %5391 = vmatpush1.msra.mxu0 0.0
        %5392 = vmatprep.subr.mxu0 0.0
        %5393 = vmatpush1.msra.mxu0 0.0
        %5394 = vmatprep.subr.mxu0 0.0
        %5395 = vmatpush1.msra.mxu0 0.0
        %5396 = vmatprep.subr.mxu0 0.0
        %5397 = vmatpush1.msra.mxu0 0.0
        %5398 = vmatprep.subr.mxu0 0.0
        %5399 = vmatpush1.msra.mxu0 0.0
        %5400 = vmatprep.subr.mxu0 0.0
        %5401 = vmatpush1.msra.mxu0 0.0
        %5402 = vmatprep.subr.mxu0 0.0
        %5403 = vmatpush1.msra.mxu0 0.0
        %5404 = vmatprep.subr.mxu0 0.0
        %5405 = vmatpush1.msra.mxu0 0.0
        %5406 = vmatprep.subr.mxu0 0.0
        %5407 = vmatpush1.msra.mxu0 0.0
        %5408 = vmatprep.subr.mxu0 0.0
        %5409 = vmatpush1.msra.mxu0 0.0
        %5410 = vmatprep.subr.mxu0 0.0
        %5411 = vmatpush1.msra.mxu0 0.0
        %5412 = vmatprep.subr.mxu0 0.0
        %5413 = vmatpush1.msra.mxu0 0.0
        %5414 = vmatprep.subr.mxu0 0.0
        %5415 = vmatpush1.msra.mxu0 0.0
        %5416 = vmatprep.subr.mxu0 0.0
        %5417 = vmatpush1.msra.mxu0 0.0
        %5418 = vmatprep.subr.mxu0 0.0
        %5419 = vmatpush1.msra.mxu0 0.0
        %5420 = vmatprep.subr.mxu0 0.0
        %5421 = vmatpush1.msra.mxu0 0.0
        %5422 = vmatprep.subr.mxu0 0.0
        %5423 = vmatpush1.msra.mxu0 0.0
        %5424 = vmatprep.subr.mxu0 0.0
        %5425 = vmatpush1.msra.mxu0 0.0
        %5426 = vmatprep.subr.mxu0 0.0
        %5427 = vmatpush1.msra.mxu0 0.0
        %5428 = vmatprep.subr.mxu0 0.0
        %5429 = vmatpush1.msra.mxu0 0.0
        %5430 = vmatprep.subr.mxu0 0.0
        %5431 = vmatpush1.msra.mxu0 0.0
        %5432 = vmatprep.subr.mxu0 0.0
        %5433 = vmatpush1.msra.mxu0 0.0
        %5434 = vmatprep.subr.mxu0 0.0
        %5435 = vmatpush1.msra.mxu0 0.0
        %5436 = vmatprep.subr.mxu0 0.0
        %5437 = vmatpush1.msra.mxu0 0.0
        %5438 = vmatprep.subr.mxu0 0.0
        %5439 = vmatpush1.msra.mxu0 0.0
        %5440 = vmatprep.subr.mxu0 0.0
        %5441 = vmatpush1.msra.mxu0 0.0
        %5442 = vmatprep.mubr.f32.mxu0 0.0
        %5443 = vmatmul.mubr.f32.gmra.mrb[0].mxu0 %v5376
        %v5444 = vpop.f32.mrb[0].mxu0
        %v5445 = vadd.f32 %v5372, %v5444
        %v5446 = vpop.f32.mrb[0].mxu0
        %5447 = vdwg.mxu0
        %v5448 = vld [vmem:[%s1606] sm:$0xff]
        %v5449 = vld [vmem:[%s1606 + $0x8] sm:$0xff]
        %v5450 = vld [vmem:[%s1606 + $0x10] sm:$0xff]
        %v5451 = vld [vmem:[%s1606 + $0x18] sm:$0xff]
        %v5452 = vld [vmem:[%s1606 + $0x20] sm:$0xff]
        %v5453 = vld [vmem:[%s1606 + $0x28] sm:$0xff]
        %v5454 = vld [vmem:[%s1606 + $0x30] sm:$0xff]
        %v5455 = vld [vmem:[%s1606 + $0x38] sm:$0xff]
        %v5457 = vsel %vm838, %v5445, 0
        %5459 = vmatprep.subr.mxu0 0.0
        %5460 = vmatpush1.msra.mxu0 %v5448
        %5461 = vmatprep.subr.mxu0 0.0
        %5462 = vmatpush1.msra.mxu0 %v5449
        %5463 = vmatprep.subr.mxu0 0.0
        %5464 = vmatpush1.msra.mxu0 %v5450
        %5465 = vmatprep.subr.mxu0 0.0
        %5466 = vmatpush1.msra.mxu0 %v5451
        %5467 = vmatprep.subr.mxu0 0.0
        %5468 = vmatpush1.msra.mxu0 %v5452
        %5469 = vmatprep.subr.mxu0 0.0
        %5470 = vmatpush1.msra.mxu0 %v5453
        %5471 = vmatprep.subr.mxu0 0.0
        %5472 = vmatpush1.msra.mxu0 %v5454
        %5473 = vmatprep.subr.mxu0 0.0
        %5474 = vmatpush1.msra.mxu0 %v5455
        %5475 = vmatprep.subr.mxu0 0.0
        %5476 = vmatpush1.msra.mxu0 0.0
        %5477 = vmatprep.subr.mxu0 0.0
        %5478 = vmatpush1.msra.mxu0 0.0
        %5479 = vmatprep.subr.mxu0 0.0
        %5480 = vmatpush1.msra.mxu0 0.0
        %5481 = vmatprep.subr.mxu0 0.0
        %5482 = vmatpush1.msra.mxu0 0.0
        %5483 = vmatprep.subr.mxu0 0.0
        %5484 = vmatpush1.msra.mxu0 0.0
        %5485 = vmatprep.subr.mxu0 0.0
        %5486 = vmatpush1.msra.mxu0 0.0
        %5487 = vmatprep.subr.mxu0 0.0
        %5488 = vmatpush1.msra.mxu0 0.0
        %5489 = vmatprep.subr.mxu0 0.0
        %5490 = vmatpush1.msra.mxu0 0.0
        %5491 = vmatprep.subr.mxu0 0.0
        %5492 = vmatpush1.msra.mxu0 0.0
        %5493 = vmatprep.subr.mxu0 0.0
        %5494 = vmatpush1.msra.mxu0 0.0
        %5495 = vmatprep.subr.mxu0 0.0
        %5496 = vmatpush1.msra.mxu0 0.0
        %5497 = vmatprep.subr.mxu0 0.0
        %5498 = vmatpush1.msra.mxu0 0.0
        %5499 = vmatprep.subr.mxu0 0.0
        %5500 = vmatpush1.msra.mxu0 0.0
        %5501 = vmatprep.subr.mxu0 0.0
        %5502 = vmatpush1.msra.mxu0 0.0
        %5503 = vmatprep.subr.mxu0 0.0
        %5504 = vmatpush1.msra.mxu0 0.0
        %5505 = vmatprep.subr.mxu0 0.0
        %5506 = vmatpush1.msra.mxu0 0.0
        %5507 = vmatprep.subr.mxu0 0.0
        %5508 = vmatpush1.msra.mxu0 0.0
        %5509 = vmatprep.subr.mxu0 0.0
        %5510 = vmatpush1.msra.mxu0 0.0
        %5511 = vmatprep.subr.mxu0 0.0
        %5512 = vmatpush1.msra.mxu0 0.0
        %5513 = vmatprep.subr.mxu0 0.0
        %5514 = vmatpush1.msra.mxu0 0.0
        %5515 = vmatprep.subr.mxu0 0.0
        %5516 = vmatpush1.msra.mxu0 0.0
        %5517 = vmatprep.subr.mxu0 0.0
        %5518 = vmatpush1.msra.mxu0 0.0
        %5519 = vmatprep.subr.mxu0 0.0
        %5520 = vmatpush1.msra.mxu0 0.0
        %5521 = vmatprep.subr.mxu0 0.0
        %5522 = vmatpush1.msra.mxu0 0.0
        %5523 = vmatprep.mubr.f32.mxu0 0.0
        %5524 = vmatmul.mubr.f32.gmra.mrb[0].mxu0 %v5457
        %v5525 = vpop.f32.mrb[0].mxu0
        %v5526 = vadd.f32 0.0, %v5525
        %v5527 = vpop.f32.mrb[0].mxu0
        %5528 = vdwg.mxu0
        %v5529 = vadd.f32 %v5297, %v5526
        %v5530 = vld [vmem:[%s12] sm:$0xff]
        %5532 = vset.pattern.permute.xlu0 0
        %5533 = vperm.xlu0 %5532, %v5530
        %v5534 = vpop.permute.xlu0 %5533
        %v5536 = vmul.f32 %v5529, %v5534
        %v5537 = vld [vmem:[%s13] sm:$0xff]
        %5539 = vset.pattern.permute.xlu0 0
        %5540 = vperm.xlu0 %5539, %v5537
        %v5541 = vpop.permute.xlu0 %5540
        %v5543 = vadd.f32 %v5536, %v5541
        %v5544 = vmax.f32 %v5543, 0.0
        %v5545 = vld [vmem:[%s14] sm:$0xff]
        %v5547 = vsel %vm838, %v5544, 0
        %5549 = vmatprep.subr.mxu0 0.0
        %5550 = vmatpush1.msra.mxu0 %v3594
        %5551 = vmatprep.subr.mxu0 0.0
        %5552 = vmatpush1.msra.mxu0 %v3595
        %5553 = vmatprep.subr.mxu0 0.0
        %5554 = vmatpush1.msra.mxu0 %v3596
        %5555 = vmatprep.subr.mxu0 0.0
        %5556 = vmatpush1.msra.mxu0 %v3597
        %5557 = vmatprep.subr.mxu0 0.0
        %5558 = vmatpush1.msra.mxu0 %v3598
        %5559 = vmatprep.subr.mxu0 0.0
        %5560 = vmatpush1.msra.mxu0 %v3599
        %5561 = vmatprep.subr.mxu0 0.0
        %5562 = vmatpush1.msra.mxu0 %v3600
        %5563 = vmatprep.subr.mxu0 0.0
        %5564 = vmatpush1.msra.mxu0 %v3601
        %5565 = vmatprep.subr.mxu0 0.0
        %5566 = vmatpush1.msra.mxu0 0.0
        %5567 = vmatprep.subr.mxu0 0.0
        %5568 = vmatpush1.msra.mxu0 0.0
        %5569 = vmatprep.subr.mxu0 0.0
        %5570 = vmatpush1.msra.mxu0 0.0
        %5571 = vmatprep.subr.mxu0 0.0
        %5572 = vmatpush1.msra.mxu0 0.0
        %5573 = vmatprep.subr.mxu0 0.0
        %5574 = vmatpush1.msra.mxu0 0.0
        %5575 = vmatprep.subr.mxu0 0.0
        %5576 = vmatpush1.msra.mxu0 0.0
        %5577 = vmatprep.subr.mxu0 0.0
        %5578 = vmatpush1.msra.mxu0 0.0
        %5579 = vmatprep.subr.mxu0 0.0
        %5580 = vmatpush1.msra.mxu0 0.0
        %5581 = vmatprep.subr.mxu0 0.0
        %5582 = vmatpush1.msra.mxu0 0.0
        %5583 = vmatprep.subr.mxu0 0.0
        %5584 = vmatpush1.msra.mxu0 0.0
        %5585 = vmatprep.subr.mxu0 0.0
        %5586 = vmatpush1.msra.mxu0 0.0
        %5587 = vmatprep.subr.mxu0 0.0
        %5588 = vmatpush1.msra.mxu0 0.0
        %5589 = vmatprep.subr.mxu0 0.0
        %5590 = vmatpush1.msra.mxu0 0.0
        %5591 = vmatprep.subr.mxu0 0.0
        %5592 = vmatpush1.msra.mxu0 0.0
        %5593 = vmatprep.subr.mxu0 0.0
        %5594 = vmatpush1.msra.mxu0 0.0
        %5595 = vmatprep.subr.mxu0 0.0
        %5596 = vmatpush1.msra.mxu0 0.0
        %5597 = vmatprep.subr.mxu0 0.0
        %5598 = vmatpush1.msra.mxu0 0.0
        %5599 = vmatprep.subr.mxu0 0.0
        %5600 = vmatpush1.msra.mxu0 0.0
        %5601 = vmatprep.subr.mxu0 0.0
        %5602 = vmatpush1.msra.mxu0 0.0
        %5603 = vmatprep.subr.mxu0 0.0
        %5604 = vmatpush1.msra.mxu0 0.0
        %5605 = vmatprep.subr.mxu0 0.0
        %5606 = vmatpush1.msra.mxu0 0.0
        %5607 = vmatprep.subr.mxu0 0.0
        %5608 = vmatpush1.msra.mxu0 0.0
        %5609 = vmatprep.subr.mxu0 0.0
        %5610 = vmatpush1.msra.mxu0 0.0
        %5611 = vmatprep.subr.mxu0 0.0
        %5612 = vmatpush1.msra.mxu0 0.0
        %5613 = vmatprep.mubr.f32.mxu0 0.0
        %5614 = vmatmul.mubr.f32.gmra.mrb[0].mxu0 %v5547
        %v5615 = vpop.f32.mrb[0].mxu0
        %v5616 = vadd.f32 0.0, %v5615
        %v5617 = vpop.f32.mrb[0].mxu0
        %5618 = vdwg.mxu0
        %5620 = vset.pattern.permute.xlu0 0
        %5621 = vperm.xlu0 %5620, %v5545
        %v5622 = vpop.permute.xlu0 %5621
        %v5624 = vmul.f32 %v5616, %v5622
        %v5625 = vadd.f32 %v5624, 0.0
        %5626 = vmatprep.subr.mxu0 0.0
        %5627 = vmatpush1.msra.mxu0 %v3752
        %5628 = vmatprep.subr.mxu0 0.0
        %5629 = vmatpush1.msra.mxu0 %v3753
        %5630 = vmatprep.subr.mxu0 0.0
        %5631 = vmatpush1.msra.mxu0 %v3754
        %5632 = vmatprep.subr.mxu0 0.0
        %5633 = vmatpush1.msra.mxu0 %v3755
        %5634 = vmatprep.subr.mxu0 0.0
        %5635 = vmatpush1.msra.mxu0 %v3756
        %5636 = vmatprep.subr.mxu0 0.0
        %5637 = vmatpush1.msra.mxu0 %v3757
        %5638 = vmatprep.subr.mxu0 0.0
        %5639 = vmatpush1.msra.mxu0 %v3758
        %5640 = vmatprep.subr.mxu0 0.0
        %5641 = vmatpush1.msra.mxu0 %v3759
        %5642 = vmatprep.subr.mxu0 0.0
        %5643 = vmatpush1.msra.mxu0 0.0
        %5644 = vmatprep.subr.mxu0 0.0
        %5645 = vmatpush1.msra.mxu0 0.0
        %5646 = vmatprep.subr.mxu0 0.0
        %5647 = vmatpush1.msra.mxu0 0.0
        %5648 = vmatprep.subr.mxu0 0.0
        %5649 = vmatpush1.msra.mxu0 0.0
        %5650 = vmatprep.subr.mxu0 0.0
        %5651 = vmatpush1.msra.mxu0 0.0
        %5652 = vmatprep.subr.mxu0 0.0
        %5653 = vmatpush1.msra.mxu0 0.0
        %5654 = vmatprep.subr.mxu0 0.0
        %5655 = vmatpush1.msra.mxu0 0.0
        %5656 = vmatprep.subr.mxu0 0.0
        %5657 = vmatpush1.msra.mxu0 0.0
        %5658 = vmatprep.subr.mxu0 0.0
        %5659 = vmatpush1.msra.mxu0 0.0
        %5660 = vmatprep.subr.mxu0 0.0
        %5661 = vmatpush1.msra.mxu0 0.0
        %5662 = vmatprep.subr.mxu0 0.0
        %5663 = vmatpush1.msra.mxu0 0.0
        %5664 = vmatprep.subr.mxu0 0.0
        %5665 = vmatpush1.msra.mxu0 0.0
        %5666 = vmatprep.subr.mxu0 0.0
        %5667 = vmatpush1.msra.mxu0 0.0
        %5668 = vmatprep.subr.mxu0 0.0
        %5669 = vmatpush1.msra.mxu0 0.0
        %5670 = vmatprep.subr.mxu0 0.0
        %5671 = vmatpush1.msra.mxu0 0.0
        %5672 = vmatprep.subr.mxu0 0.0
        %5673 = vmatpush1.msra.mxu0 0.0
        %5674 = vmatprep.subr.mxu0 0.0
        %5675 = vmatpush1.msra.mxu0 0.0
        %5676 = vmatprep.subr.mxu0 0.0
        %5677 = vmatpush1.msra.mxu0 0.0
        %5678 = vmatprep.subr.mxu0 0.0
        %5679 = vmatpush1.msra.mxu0 0.0
        %5680 = vmatprep.subr.mxu0 0.0
        %5681 = vmatpush1.msra.mxu0 0.0
        %5682 = vmatprep.subr.mxu0 0.0
        %5683 = vmatpush1.msra.mxu0 0.0
        %5684 = vmatprep.subr.mxu0 0.0
        %5685 = vmatpush1.msra.mxu0 0.0
        %5686 = vmatprep.subr.mxu0 0.0
        %5687 = vmatpush1.msra.mxu0 0.0
        %5688 = vmatprep.subr.mxu0 0.0
        %5689 = vmatpush1.msra.mxu0 0.0
        %5690 = vmatprep.mubr.f32.mxu0 0.0
        %5691 = vmatmul.mubr.f32.gmra.mrb[0].mxu0 %v5547
        %v5692 = vpop.f32.mrb[0].mxu0
        %v5693 = vadd.f32 0.0, %v5692
        %v5694 = vpop.f32.mrb[0].mxu0
        %5695 = vdwg.mxu0
        %5696 = vset.pattern.permute.xlu0 1
        %5697 = vperm.xlu0 %5696, %v5545
        %v5698 = vpop.permute.xlu0 %5697
        %v5700 = vmul.f32 %v5693, %v5698
        %v5701 = vadd.f32 %v5625, %v5700
        %5702 = vmatprep.subr.mxu0 0.0
        %5703 = vmatpush1.msra.mxu0 %v4056
        %5704 = vmatprep.subr.mxu0 0.0
        %5705 = vmatpush1.msra.mxu0 %v4057
        %5706 = vmatprep.subr.mxu0 0.0
        %5707 = vmatpush1.msra.mxu0 %v4058
        %5708 = vmatprep.subr.mxu0 0.0
        %5709 = vmatpush1.msra.mxu0 %v4059
        %5710 = vmatprep.subr.mxu0 0.0
        %5711 = vmatpush1.msra.mxu0 %v4060
        %5712 = vmatprep.subr.mxu0 0.0
        %5713 = vmatpush1.msra.mxu0 %v4061
        %5714 = vmatprep.subr.mxu0 0.0
        %5715 = vmatpush1.msra.mxu0 %v4062
        %5716 = vmatprep.subr.mxu0 0.0
        %5717 = vmatpush1.msra.mxu0 %v4063
        %5718 = vmatprep.subr.mxu0 0.0
        %5719 = vmatpush1.msra.mxu0 0.0
        %5720 = vmatprep.subr.mxu0 0.0
        %5721 = vmatpush1.msra.mxu0 0.0
        %5722 = vmatprep.subr.mxu0 0.0
        %5723 = vmatpush1.msra.mxu0 0.0
        %5724 = vmatprep.subr.mxu0 0.0
        %5725 = vmatpush1.msra.mxu0 0.0
        %5726 = vmatprep.subr.mxu0 0.0
        %5727 = vmatpush1.msra.mxu0 0.0
        %5728 = vmatprep.subr.mxu0 0.0
        %5729 = vmatpush1.msra.mxu0 0.0
        %5730 = vmatprep.subr.mxu0 0.0
        %5731 = vmatpush1.msra.mxu0 0.0
        %5732 = vmatprep.subr.mxu0 0.0
        %5733 = vmatpush1.msra.mxu0 0.0
        %5734 = vmatprep.subr.mxu0 0.0
        %5735 = vmatpush1.msra.mxu0 0.0
        %5736 = vmatprep.subr.mxu0 0.0
        %5737 = vmatpush1.msra.mxu0 0.0
        %5738 = vmatprep.subr.mxu0 0.0
        %5739 = vmatpush1.msra.mxu0 0.0
        %5740 = vmatprep.subr.mxu0 0.0
        %5741 = vmatpush1.msra.mxu0 0.0
        %5742 = vmatprep.subr.mxu0 0.0
        %5743 = vmatpush1.msra.mxu0 0.0
        %5744 = vmatprep.subr.mxu0 0.0
        %5745 = vmatpush1.msra.mxu0 0.0
        %5746 = vmatprep.subr.mxu0 0.0
        %5747 = vmatpush1.msra.mxu0 0.0
        %5748 = vmatprep.subr.mxu0 0.0
        %5749 = vmatpush1.msra.mxu0 0.0
        %5750 = vmatprep.subr.mxu0 0.0
        %5751 = vmatpush1.msra.mxu0 0.0
        %5752 = vmatprep.subr.mxu0 0.0
        %5753 = vmatpush1.msra.mxu0 0.0
        %5754 = vmatprep.subr.mxu0 0.0
        %5755 = vmatpush1.msra.mxu0 0.0
        %5756 = vmatprep.subr.mxu0 0.0
        %5757 = vmatpush1.msra.mxu0 0.0
        %5758 = vmatprep.subr.mxu0 0.0
        %5759 = vmatpush1.msra.mxu0 0.0
        %5760 = vmatprep.subr.mxu0 0.0
        %5761 = vmatpush1.msra.mxu0 0.0
        %5762 = vmatprep.subr.mxu0 0.0
        %5763 = vmatpush1.msra.mxu0 0.0
        %5764 = vmatprep.subr.mxu0 0.0
        %5765 = vmatpush1.msra.mxu0 0.0
        %5766 = vmatprep.mubr.f32.mxu0 0.0
        %5767 = vmatmul.mubr.f32.gmra.mrb[0].mxu0 %v5547
        %v5768 = vpop.f32.mrb[0].mxu0
        %v5769 = vadd.f32 0.0, %v5768
        %v5770 = vpop.f32.mrb[0].mxu0
        %5771 = vdwg.mxu0
        %5772 = vset.pattern.permute.xlu0 2
        %5773 = vperm.xlu0 %5772, %v5545
        %v5774 = vpop.permute.xlu0 %5773
        %v5776 = vmul.f32 %v5769, %v5774
        %v5777 = vadd.f32 %v5701, %v5776
        %5778 = vmatprep.subr.mxu0 0.0
        %5779 = vmatpush1.msra.mxu0 %v4288
        %5780 = vmatprep.subr.mxu0 0.0
        %5781 = vmatpush1.msra.mxu0 %v4289
        %5782 = vmatprep.subr.mxu0 0.0
        %5783 = vmatpush1.msra.mxu0 %v4290
        %5784 = vmatprep.subr.mxu0 0.0
        %5785 = vmatpush1.msra.mxu0 %v4291
        %5786 = vmatprep.subr.mxu0 0.0
        %5787 = vmatpush1.msra.mxu0 %v4292
        %5788 = vmatprep.subr.mxu0 0.0
        %5789 = vmatpush1.msra.mxu0 %v4293
        %5790 = vmatprep.subr.mxu0 0.0
        %5791 = vmatpush1.msra.mxu0 %v4294
        %5792 = vmatprep.subr.mxu0 0.0
        %5793 = vmatpush1.msra.mxu0 %v4295
        %5794 = vmatprep.subr.mxu0 0.0
        %5795 = vmatpush1.msra.mxu0 0.0
        %5796 = vmatprep.subr.mxu0 0.0
        %5797 = vmatpush1.msra.mxu0 0.0
        %5798 = vmatprep.subr.mxu0 0.0
        %5799 = vmatpush1.msra.mxu0 0.0
        %5800 = vmatprep.subr.mxu0 0.0
        %5801 = vmatpush1.msra.mxu0 0.0
        %5802 = vmatprep.subr.mxu0 0.0
        %5803 = vmatpush1.msra.mxu0 0.0
        %5804 = vmatprep.subr.mxu0 0.0
        %5805 = vmatpush1.msra.mxu0 0.0
        %5806 = vmatprep.subr.mxu0 0.0
        %5807 = vmatpush1.msra.mxu0 0.0
        %5808 = vmatprep.subr.mxu0 0.0
        %5809 = vmatpush1.msra.mxu0 0.0
        %5810 = vmatprep.subr.mxu0 0.0
        %5811 = vmatpush1.msra.mxu0 0.0
        %5812 = vmatprep.subr.mxu0 0.0
        %5813 = vmatpush1.msra.mxu0 0.0
        %5814 = vmatprep.subr.mxu0 0.0
        %5815 = vmatpush1.msra.mxu0 0.0
        %5816 = vmatprep.subr.mxu0 0.0
        %5817 = vmatpush1.msra.mxu0 0.0
        %5818 = vmatprep.subr.mxu0 0.0
        %5819 = vmatpush1.msra.mxu0 0.0
        %5820 = vmatprep.subr.mxu0 0.0
        %5821 = vmatpush1.msra.mxu0 0.0
        %5822 = vmatprep.subr.mxu0 0.0
        %5823 = vmatpush1.msra.mxu0 0.0
        %5824 = vmatprep.subr.mxu0 0.0
        %5825 = vmatpush1.msra.mxu0 0.0
        %5826 = vmatprep.subr.mxu0 0.0
        %5827 = vmatpush1.msra.mxu0 0.0
        %5828 = vmatprep.subr.mxu0 0.0
        %5829 = vmatpush1.msra.mxu0 0.0
        %5830 = vmatprep.subr.mxu0 0.0
        %5831 = vmatpush1.msra.mxu0 0.0
        %5832 = vmatprep.subr.mxu0 0.0
        %5833 = vmatpush1.msra.mxu0 0.0
        %5834 = vmatprep.subr.mxu0 0.0
        %5835 = vmatpush1.msra.mxu0 0.0
        %5836 = vmatprep.subr.mxu0 0.0
        %5837 = vmatpush1.msra.mxu0 0.0
        %5838 = vmatprep.subr.mxu0 0.0
        %5839 = vmatpush1.msra.mxu0 0.0
        %5840 = vmatprep.subr.mxu0 0.0
        %5841 = vmatpush1.msra.mxu0 0.0
        %5842 = vmatprep.mubr.f32.mxu0 0.0
        %5843 = vmatmul.mubr.f32.gmra.mrb[0].mxu0 %v5547
        %v5844 = vpop.f32.mrb[0].mxu0
        %v5845 = vadd.f32 0.0, %v5844
        %v5846 = vpop.f32.mrb[0].mxu0
        %5847 = vdwg.mxu0
        %5848 = vset.pattern.permute.xlu0 3
        %5849 = vperm.xlu0 %5848, %v5545
        %v5850 = vpop.permute.xlu0 %5849
        %v5852 = vmul.f32 %v5845, %v5850
        %v5853 = vadd.f32 %v5777, %v5852
        %5854 = vmatprep.subr.mxu0 0.0
        %5855 = vmatpush1.msra.mxu0 %v4520
        %5856 = vmatprep.subr.mxu0 0.0
        %5857 = vmatpush1.msra.mxu0 %v4521
        %5858 = vmatprep.subr.mxu0 0.0
        %5859 = vmatpush1.msra.mxu0 %v4522
        %5860 = vmatprep.subr.mxu0 0.0
        %5861 = vmatpush1.msra.mxu0 %v4523
        %5862 = vmatprep.subr.mxu0 0.0
        %5863 = vmatpush1.msra.mxu0 %v4524
        %5864 = vmatprep.subr.mxu0 0.0
        %5865 = vmatpush1.msra.mxu0 %v4525
        %5866 = vmatprep.subr.mxu0 0.0
        %5867 = vmatpush1.msra.mxu0 %v4526
        %5868 = vmatprep.subr.mxu0 0.0
        %5869 = vmatpush1.msra.mxu0 %v4527
        %5870 = vmatprep.subr.mxu0 0.0
        %5871 = vmatpush1.msra.mxu0 0.0
        %5872 = vmatprep.subr.mxu0 0.0
        %5873 = vmatpush1.msra.mxu0 0.0
        %5874 = vmatprep.subr.mxu0 0.0
        %5875 = vmatpush1.msra.mxu0 0.0
        %5876 = vmatprep.subr.mxu0 0.0
        %5877 = vmatpush1.msra.mxu0 0.0
        %5878 = vmatprep.subr.mxu0 0.0
        %5879 = vmatpush1.msra.mxu0 0.0
        %5880 = vmatprep.subr.mxu0 0.0
        %5881 = vmatpush1.msra.mxu0 0.0
        %5882 = vmatprep.subr.mxu0 0.0
        %5883 = vmatpush1.msra.mxu0 0.0
        %5884 = vmatprep.subr.mxu0 0.0
        %5885 = vmatpush1.msra.mxu0 0.0
        %5886 = vmatprep.subr.mxu0 0.0
        %5887 = vmatpush1.msra.mxu0 0.0
        %5888 = vmatprep.subr.mxu0 0.0
        %5889 = vmatpush1.msra.mxu0 0.0
        %5890 = vmatprep.subr.mxu0 0.0
        %5891 = vmatpush1.msra.mxu0 0.0
        %5892 = vmatprep.subr.mxu0 0.0
        %5893 = vmatpush1.msra.mxu0 0.0
        %5894 = vmatprep.subr.mxu0 0.0
        %5895 = vmatpush1.msra.mxu0 0.0
        %5896 = vmatprep.subr.mxu0 0.0
        %5897 = vmatpush1.msra.mxu0 0.0
        %5898 = vmatprep.subr.mxu0 0.0
        %5899 = vmatpush1.msra.mxu0 0.0
        %5900 = vmatprep.subr.mxu0 0.0
        %5901 = vmatpush1.msra.mxu0 0.0
        %5902 = vmatprep.subr.mxu0 0.0
        %5903 = vmatpush1.msra.mxu0 0.0
        %5904 = vmatprep.subr.mxu0 0.0
        %5905 = vmatpush1.msra.mxu0 0.0
        %5906 = vmatprep.subr.mxu0 0.0
        %5907 = vmatpush1.msra.mxu0 0.0
        %5908 = vmatprep.subr.mxu0 0.0
        %5909 = vmatpush1.msra.mxu0 0.0
        %5910 = vmatprep.subr.mxu0 0.0
        %5911 = vmatpush1.msra.mxu0 0.0
        %5912 = vmatprep.subr.mxu0 0.0
        %5913 = vmatpush1.msra.mxu0 0.0
        %5914 = vmatprep.subr.mxu0 0.0
        %5915 = vmatpush1.msra.mxu0 0.0
        %5916 = vmatprep.subr.mxu0 0.0
        %5917 = vmatpush1.msra.mxu0 0.0
        %5918 = vmatprep.mubr.f32.mxu0 0.0
        %5919 = vmatmul.mubr.f32.gmra.mrb[0].mxu0 %v5547
        %v5920 = vpop.f32.mrb[0].mxu0
        %v5921 = vadd.f32 0.0, %v5920
        %v5922 = vpop.f32.mrb[0].mxu0
        %5923 = vdwg.mxu0
        %5924 = vset.pattern.permute.xlu0 4
        %5925 = vperm.xlu0 %5924, %v5545
        %v5926 = vpop.permute.xlu0 %5925
        %v5928 = vmul.f32 %v5921, %v5926
        %v5929 = vadd.f32 %v5853, %v5928
        %5930 = vmatprep.subr.mxu0 0.0
        %5931 = vmatpush1.msra.mxu0 %v4752
        %5932 = vmatprep.subr.mxu0 0.0
        %5933 = vmatpush1.msra.mxu0 %v4753
        %5934 = vmatprep.subr.mxu0 0.0
        %5935 = vmatpush1.msra.mxu0 %v4754
        %5936 = vmatprep.subr.mxu0 0.0
        %5937 = vmatpush1.msra.mxu0 %v4755
        %5938 = vmatprep.subr.mxu0 0.0
        %5939 = vmatpush1.msra.mxu0 %v4756
        %5940 = vmatprep.subr.mxu0 0.0
        %5941 = vmatpush1.msra.mxu0 %v4757
        %5942 = vmatprep.subr.mxu0 0.0
        %5943 = vmatpush1.msra.mxu0 %v4758
        %5944 = vmatprep.subr.mxu0 0.0
        %5945 = vmatpush1.msra.mxu0 %v4759
        %5946 = vmatprep.subr.mxu0 0.0
        %5947 = vmatpush1.msra.mxu0 0.0
        %5948 = vmatprep.subr.mxu0 0.0
        %5949 = vmatpush1.msra.mxu0 0.0
        %5950 = vmatprep.subr.mxu0 0.0
        %5951 = vmatpush1.msra.mxu0 0.0
        %5952 = vmatprep.subr.mxu0 0.0
        %5953 = vmatpush1.msra.mxu0 0.0
        %5954 = vmatprep.subr.mxu0 0.0
        %5955 = vmatpush1.msra.mxu0 0.0
        %5956 = vmatprep.subr.mxu0 0.0
        %5957 = vmatpush1.msra.mxu0 0.0
        %5958 = vmatprep.subr.mxu0 0.0
        %5959 = vmatpush1.msra.mxu0 0.0
        %5960 = vmatprep.subr.mxu0 0.0
        %5961 = vmatpush1.msra.mxu0 0.0
        %5962 = vmatprep.subr.mxu0 0.0
        %5963 = vmatpush1.msra.mxu0 0.0
        %5964 = vmatprep.subr.mxu0 0.0
        %5965 = vmatpush1.msra.mxu0 0.0
        %5966 = vmatprep.subr.mxu0 0.0
        %5967 = vmatpush1.msra.mxu0 0.0
        %5968 = vmatprep.subr.mxu0 0.0
        %5969 = vmatpush1.msra.mxu0 0.0
        %5970 = vmatprep.subr.mxu0 0.0
        %5971 = vmatpush1.msra.mxu0 0.0
        %5972 = vmatprep.subr.mxu0 0.0
        %5973 = vmatpush1.msra.mxu0 0.0
        %5974 = vmatprep.subr.mxu0 0.0
        %5975 = vmatpush1.msra.mxu0 0.0
        %5976 = vmatprep.subr.mxu0 0.0
        %5977 = vmatpush1.msra.mxu0 0.0
        %5978 = vmatprep.subr.mxu0 0.0
        %5979 = vmatpush1.msra.mxu0 0.0
        %5980 = vmatprep.subr.mxu0 0.0
        %5981 = vmatpush1.msra.mxu0 0.0
        %5982 = vmatprep.subr.mxu0 0.0
        %5983 = vmatpush1.msra.mxu0 0.0
        %5984 = vmatprep.subr.mxu0 0.0
        %5985 = vmatpush1.msra.mxu0 0.0
        %5986 = vmatprep.subr.mxu0 0.0
        %5987 = vmatpush1.msra.mxu0 0.0
        %5988 = vmatprep.subr.mxu0 0.0
        %5989 = vmatpush1.msra.mxu0 0.0
        %5990 = vmatprep.subr.mxu0 0.0
        %5991 = vmatpush1.msra.mxu0 0.0
        %5992 = vmatprep.subr.mxu0 0.0
        %5993 = vmatpush1.msra.mxu0 0.0
        %5994 = vmatprep.mubr.f32.mxu0 0.0
        %5995 = vmatmul.mubr.f32.gmra.mrb[0].mxu0 %v5547
        %v5996 = vpop.f32.mrb[0].mxu0
        %v5997 = vadd.f32 0.0, %v5996
        %v5998 = vpop.f32.mrb[0].mxu0
        %5999 = vdwg.mxu0
        %6000 = vset.pattern.permute.xlu0 5
        %6001 = vperm.xlu0 %6000, %v5545
        %v6002 = vpop.permute.xlu0 %6001
        %v6004 = vmul.f32 %v5997, %v6002
        %v6005 = vadd.f32 %v5929, %v6004
        %6006 = vmatprep.subr.mxu0 0.0
        %6007 = vmatpush1.msra.mxu0 %v4984
        %6008 = vmatprep.subr.mxu0 0.0
        %6009 = vmatpush1.msra.mxu0 %v4985
        %6010 = vmatprep.subr.mxu0 0.0
        %6011 = vmatpush1.msra.mxu0 %v4986
        %6012 = vmatprep.subr.mxu0 0.0
        %6013 = vmatpush1.msra.mxu0 %v4987
        %6014 = vmatprep.subr.mxu0 0.0
        %6015 = vmatpush1.msra.mxu0 %v4988
        %6016 = vmatprep.subr.mxu0 0.0
        %6017 = vmatpush1.msra.mxu0 %v4989
        %6018 = vmatprep.subr.mxu0 0.0
        %6019 = vmatpush1.msra.mxu0 %v4990
        %6020 = vmatprep.subr.mxu0 0.0
        %6021 = vmatpush1.msra.mxu0 %v4991
        %6022 = vmatprep.subr.mxu0 0.0
        %6023 = vmatpush1.msra.mxu0 0.0
        %6024 = vmatprep.subr.mxu0 0.0
        %6025 = vmatpush1.msra.mxu0 0.0
        %6026 = vmatprep.subr.mxu0 0.0
        %6027 = vmatpush1.msra.mxu0 0.0
        %6028 = vmatprep.subr.mxu0 0.0
        %6029 = vmatpush1.msra.mxu0 0.0
        %6030 = vmatprep.subr.mxu0 0.0
        %6031 = vmatpush1.msra.mxu0 0.0
        %6032 = vmatprep.subr.mxu0 0.0
        %6033 = vmatpush1.msra.mxu0 0.0
        %6034 = vmatprep.subr.mxu0 0.0
        %6035 = vmatpush1.msra.mxu0 0.0
        %6036 = vmatprep.subr.mxu0 0.0
        %6037 = vmatpush1.msra.mxu0 0.0
        %6038 = vmatprep.subr.mxu0 0.0
        %6039 = vmatpush1.msra.mxu0 0.0
        %6040 = vmatprep.subr.mxu0 0.0
        %6041 = vmatpush1.msra.mxu0 0.0
        %6042 = vmatprep.subr.mxu0 0.0
        %6043 = vmatpush1.msra.mxu0 0.0
        %6044 = vmatprep.subr.mxu0 0.0
        %6045 = vmatpush1.msra.mxu0 0.0
        %6046 = vmatprep.subr.mxu0 0.0
        %6047 = vmatpush1.msra.mxu0 0.0
        %6048 = vmatprep.subr.mxu0 0.0
        %6049 = vmatpush1.msra.mxu0 0.0
        %6050 = vmatprep.subr.mxu0 0.0
        %6051 = vmatpush1.msra.mxu0 0.0
        %6052 = vmatprep.subr.mxu0 0.0
        %6053 = vmatpush1.msra.mxu0 0.0
        %6054 = vmatprep.subr.mxu0 0.0
        %6055 = vmatpush1.msra.mxu0 0.0
        %6056 = vmatprep.subr.mxu0 0.0
        %6057 = vmatpush1.msra.mxu0 0.0
        %6058 = vmatprep.subr.mxu0 0.0
        %6059 = vmatpush1.msra.mxu0 0.0
        %6060 = vmatprep.subr.mxu0 0.0
        %6061 = vmatpush1.msra.mxu0 0.0
        %6062 = vmatprep.subr.mxu0 0.0
        %6063 = vmatpush1.msra.mxu0 0.0
        %6064 = vmatprep.subr.mxu0 0.0
        %6065 = vmatpush1.msra.mxu0 0.0
        %6066 = vmatprep.subr.mxu0 0.0
        %6067 = vmatpush1.msra.mxu0 0.0
        %6068 = vmatprep.subr.mxu0 0.0
        %6069 = vmatpush1.msra.mxu0 0.0
        %6070 = vmatprep.mubr.f32.mxu0 0.0
        %6071 = vmatmul.mubr.f32.gmra.mrb[0].mxu0 %v5547
        %v6072 = vpop.f32.mrb[0].mxu0
        %v6073 = vadd.f32 0.0, %v6072
        %v6074 = vpop.f32.mrb[0].mxu0
        %6075 = vdwg.mxu0
        %6076 = vset.pattern.permute.xlu0 6
        %6077 = vperm.xlu0 %6076, %v5545
        %v6078 = vpop.permute.xlu0 %6077
        %v6080 = vmul.f32 %v6073, %v6078
        %v6081 = vadd.f32 %v6005, %v6080
        %6082 = vmatprep.subr.mxu0 0.0
        %6083 = vmatpush1.msra.mxu0 %v5216
        %6084 = vmatprep.subr.mxu0 0.0
        %6085 = vmatpush1.msra.mxu0 %v5217
        %6086 = vmatprep.subr.mxu0 0.0
        %6087 = vmatpush1.msra.mxu0 %v5218
        %6088 = vmatprep.subr.mxu0 0.0
        %6089 = vmatpush1.msra.mxu0 %v5219
        %6090 = vmatprep.subr.mxu0 0.0
        %6091 = vmatpush1.msra.mxu0 %v5220
        %6092 = vmatprep.subr.mxu0 0.0
        %6093 = vmatpush1.msra.mxu0 %v5221
        %6094 = vmatprep.subr.mxu0 0.0
        %6095 = vmatpush1.msra.mxu0 %v5222
        %6096 = vmatprep.subr.mxu0 0.0
        %6097 = vmatpush1.msra.mxu0 %v5223
        %6098 = vmatprep.subr.mxu0 0.0
        %6099 = vmatpush1.msra.mxu0 0.0
        %6100 = vmatprep.subr.mxu0 0.0
        %6101 = vmatpush1.msra.mxu0 0.0
        %6102 = vmatprep.subr.mxu0 0.0
        %6103 = vmatpush1.msra.mxu0 0.0
        %6104 = vmatprep.subr.mxu0 0.0
        %6105 = vmatpush1.msra.mxu0 0.0
        %6106 = vmatprep.subr.mxu0 0.0
        %6107 = vmatpush1.msra.mxu0 0.0
        %6108 = vmatprep.subr.mxu0 0.0
        %6109 = vmatpush1.msra.mxu0 0.0
        %6110 = vmatprep.subr.mxu0 0.0
        %6111 = vmatpush1.msra.mxu0 0.0
        %6112 = vmatprep.subr.mxu0 0.0
        %6113 = vmatpush1.msra.mxu0 0.0
        %6114 = vmatprep.subr.mxu0 0.0
        %6115 = vmatpush1.msra.mxu0 0.0
        %6116 = vmatprep.subr.mxu0 0.0
        %6117 = vmatpush1.msra.mxu0 0.0
        %6118 = vmatprep.subr.mxu0 0.0
        %6119 = vmatpush1.msra.mxu0 0.0
        %6120 = vmatprep.subr.mxu0 0.0
        %6121 = vmatpush1.msra.mxu0 0.0
        %6122 = vmatprep.subr.mxu0 0.0
        %6123 = vmatpush1.msra.mxu0 0.0
        %6124 = vmatprep.subr.mxu0 0.0
        %6125 = vmatpush1.msra.mxu0 0.0
        %6126 = vmatprep.subr.mxu0 0.0
        %6127 = vmatpush1.msra.mxu0 0.0
        %6128 = vmatprep.subr.mxu0 0.0
        %6129 = vmatpush1.msra.mxu0 0.0
        %6130 = vmatprep.subr.mxu0 0.0
        %6131 = vmatpush1.msra.mxu0 0.0
        %6132 = vmatprep.subr.mxu0 0.0
        %6133 = vmatpush1.msra.mxu0 0.0
        %6134 = vmatprep.subr.mxu0 0.0
        %6135 = vmatpush1.msra.mxu0 0.0
        %6136 = vmatprep.subr.mxu0 0.0
        %6137 = vmatpush1.msra.mxu0 0.0
        %6138 = vmatprep.subr.mxu0 0.0
        %6139 = vmatpush1.msra.mxu0 0.0
        %6140 = vmatprep.subr.mxu0 0.0
        %6141 = vmatpush1.msra.mxu0 0.0
        %6142 = vmatprep.subr.mxu0 0.0
        %6143 = vmatpush1.msra.mxu0 0.0
        %6144 = vmatprep.subr.mxu0 0.0
        %6145 = vmatpush1.msra.mxu0 0.0
        %6146 = vmatprep.mubr.f32.mxu0 0.0
        %6147 = vmatmul.mubr.f32.gmra.mrb[0].mxu0 %v5547
        %v6148 = vpop.f32.mrb[0].mxu0
        %v6149 = vadd.f32 0.0, %v6148
        %v6150 = vpop.f32.mrb[0].mxu0
        %6151 = vdwg.mxu0
        %6152 = vset.pattern.permute.xlu0 7
        %6153 = vperm.xlu0 %6152, %v5545
        %v6154 = vpop.permute.xlu0 %6153
        %v6156 = vmul.f32 %v6149, %v6154
        %v6157 = vadd.f32 %v6081, %v6156
        %6158 = vmatprep.subr.mxu0 0.0
        %6159 = vmatpush1.msra.mxu0 %v5448
        %6160 = vmatprep.subr.mxu0 0.0
        %6161 = vmatpush1.msra.mxu0 %v5449
        %6162 = vmatprep.subr.mxu0 0.0
        %6163 = vmatpush1.msra.mxu0 %v5450
        %6164 = vmatprep.subr.mxu0 0.0
        %6165 = vmatpush1.msra.mxu0 %v5451
        %6166 = vmatprep.subr.mxu0 0.0
        %6167 = vmatpush1.msra.mxu0 %v5452
        %6168 = vmatprep.subr.mxu0 0.0
        %6169 = vmatpush1.msra.mxu0 %v5453
        %6170 = vmatprep.subr.mxu0 0.0
        %6171 = vmatpush1.msra.mxu0 %v5454
        %6172 = vmatprep.subr.mxu0 0.0
        %6173 = vmatpush1.msra.mxu0 %v5455
        %6174 = vmatprep.subr.mxu0 0.0
        %6175 = vmatpush1.msra.mxu0 0.0
        %6176 = vmatprep.subr.mxu0 0.0
        %6177 = vmatpush1.msra.mxu0 0.0
        %6178 = vmatprep.subr.mxu0 0.0
        %6179 = vmatpush1.msra.mxu0 0.0
        %6180 = vmatprep.subr.mxu0 0.0
        %6181 = vmatpush1.msra.mxu0 0.0
        %6182 = vmatprep.subr.mxu0 0.0
        %6183 = vmatpush1.msra.mxu0 0.0
        %6184 = vmatprep.subr.mxu0 0.0
        %6185 = vmatpush1.msra.mxu0 0.0
        %6186 = vmatprep.subr.mxu0 0.0
        %6187 = vmatpush1.msra.mxu0 0.0
        %6188 = vmatprep.subr.mxu0 0.0
        %6189 = vmatpush1.msra.mxu0 0.0
        %6190 = vmatprep.subr.mxu0 0.0
        %6191 = vmatpush1.msra.mxu0 0.0
        %6192 = vmatprep.subr.mxu0 0.0
        %6193 = vmatpush1.msra.mxu0 0.0
        %6194 = vmatprep.subr.mxu0 0.0
        %6195 = vmatpush1.msra.mxu0 0.0
        %6196 = vmatprep.subr.mxu0 0.0
        %6197 = vmatpush1.msra.mxu0 0.0
        %6198 = vmatprep.subr.mxu0 0.0
        %6199 = vmatpush1.msra.mxu0 0.0
        %6200 = vmatprep.subr.mxu0 0.0
        %6201 = vmatpush1.msra.mxu0 0.0
        %6202 = vmatprep.subr.mxu0 0.0
        %6203 = vmatpush1.msra.mxu0 0.0
        %6204 = vmatprep.subr.mxu0 0.0
        %6205 = vmatpush1.msra.mxu0 0.0
        %6206 = vmatprep.subr.mxu0 0.0
        %6207 = vmatpush1.msra.mxu0 0.0
        %6208 = vmatprep.subr.mxu0 0.0
        %6209 = vmatpush1.msra.mxu0 0.0
        %6210 = vmatprep.subr.mxu0 0.0
        %6211 = vmatpush1.msra.mxu0 0.0
        %6212 = vmatprep.subr.mxu0 0.0
        %6213 = vmatpush1.msra.mxu0 0.0
        %6214 = vmatprep.subr.mxu0 0.0
        %6215 = vmatpush1.msra.mxu0 0.0
        %6216 = vmatprep.subr.mxu0 0.0
        %6217 = vmatpush1.msra.mxu0 0.0
        %6218 = vmatprep.subr.mxu0 0.0
        %6219 = vmatpush1.msra.mxu0 0.0
        %6220 = vmatprep.subr.mxu0 0.0
        %6221 = vmatpush1.msra.mxu0 0.0
        %6222 = vmatprep.mubr.f32.mxu0 0.0
        %6223 = vmatmul.mubr.f32.gmra.mrb[0].mxu0 %v5547
        %v6224 = vpop.f32.mrb[0].mxu0
        %v6225 = vadd.f32 0.0, %v6224
        %v6226 = vpop.f32.mrb[0].mxu0
        %6227 = vdwg.mxu0
        %6228 = vset.pattern.permute.xlu0 8
        %6229 = vperm.xlu0 %6228, %v5545
        %v6230 = vpop.permute.xlu0 %6229
        %v6232 = vmul.f32 %v6225, %v6230
        %v6233 = vadd.f32 %v6157, %v6232
        %v6234 = vld [vmem:[%s15] sm:$0xff]
        %6236 = vset.pattern.permute.xlu0 0
        %6237 = vperm.xlu0 %6236, %v6234
        %v6238 = vpop.permute.xlu0 %6237
        %v6240 = vmul.f32 %v6233, %v6238
        %v6241 = vld [vmem:[%s16] sm:$0xff]
        %6243 = vset.pattern.permute.xlu0 0
        %6244 = vperm.xlu0 %6243, %v6241
        %v6245 = vpop.permute.xlu0 %6244
        %v6247 = vadd.f32 %v6240, %v6245
        %v6248 = vmax.f32 %v6247, 0.0
        %v6249 = vld [vmem:[%s17] sm:$0xff]
        %6251 = vset.pattern.permute.xlu0 0
        %6252 = vperm.xlu0 %6251, %v6249
        %v6253 = vpop.permute.xlu0 %6252
        %v6255 = vmul.f32 %v5544, %v6253
        %v6256 = vld [vmem:[%s18] sm:$0xff]
        %6258 = vset.pattern.permute.xlu0 0
        %6259 = vperm.xlu0 %6258, %v6256
        %v6260 = vpop.permute.xlu0 %6259
        %v6262 = vadd.f32 %v6255, %v6260
        %v6263 = vmax.f32 %v6262, 0.0
        %6264 = vst.msk [vmem:[%s684] sm:$0xff] %vm838, %v6263
        %s6265 = scalar_lea.vmem %s17, 8
        %v6266 = vld [vmem:[%s6265] sm:$0xff]
        %6268 = vset.pattern.permute.xlu0 0
        %6269 = vperm.xlu0 %6268, %v6266
        %v6270 = vpop.permute.xlu0 %6269
        %v6272 = vmul.f32 %v6248, %v6270
        %s6273 = scalar_lea.vmem %s18, 8
        %v6274 = vld [vmem:[%s6273] sm:$0xff]
        %6276 = vset.pattern.permute.xlu0 0
        %6277 = vperm.xlu0 %6276, %v6274
        %v6278 = vpop.permute.xlu0 %6277
        %v6280 = vadd.f32 %v6272, %v6278
        %v6281 = vmax.f32 %v6280, 0.0
        %6282 = vst.msk [vmem:[%s684 + $0x8] sm:$0xff] %vm838, %v6281
        %s6283 = sand.u32 %s458, 1
        %s6284 = scalar_lea.sflag [#allocation6], %s6283
        %s6285 = sand.u32 %s458, 1
        %s6286 = smul.addr %s6285, 16
        %s6287 = scalar_lea.vmem [#allocation7], %s6286
        %s6288 = sand.u32 %s41, 1
        %s6289 = scalar_lea.sflag [#allocation9], %s6288
        %s6290 = sand.u32 %s484, 1
        %s6291 = smul.addr %s6290, 16
        %s6292 = scalar_lea.vmem [#allocation8], %s6291
        %s6293 = sand.u32 %s41, 1
        %s6294 = scalar_lea.sflag [#allocation9], %s6293
        %s6295 = sand.u32 %s510, 1
        %s6296 = smul.addr %s6295, 16
        %s6297 = scalar_lea.vmem [#allocation10], %s6296
        // Predicated region
        $region101: #{tpu_custom_call.1} parent=95 // pred_check
          %p6298 = pneg %p468
        $region102: #{tpu_custom_call.1} parent=95 // pred_check_branch
          %6300 = sbr.rel (%p6298) target = $region104
        $region103: #{tpu_custom_call.1} parent=95 // pred_region
          %s6302 = ssub.s32 256, 256
          %6303 = vsyncadd %s6284, %s6302
          %s6304 = smul.addr %s41, 2
          %s6305 = smul.addr %s6304, 128
          %s6306 = scalar_lea.hbm %s19, %s6305
          %s6307 = sshll.u32 %s6287, 4
          %s6308 = int_to_ptr.vmem [resolvable:$true] %s6307
          %6313 = dma.vmem_to_hbm [thread:$0]  %s6308, 256, %s6306, %s6284, 128, 128, 8
        $region104: #{tpu_custom_call.1} parent=95 // pred_fallthru
          _
        // Predicated region
        $region105: #{tpu_custom_call.1} parent=95 // pred_check
          %p6314 = pneg %p494
        $region106: #{tpu_custom_call.1} parent=95 // pred_check_branch
          %6316 = sbr.rel (%p6314) target = $region108
        $region107: #{tpu_custom_call.1} parent=95 // pred_region
          %s6318 = ssub.s32 256, 256
          %6319 = vsyncadd %s6289, %s6318
          %s6320 = smul.addr %s41, 2
          %s6321 = smul.addr %s6320, 128
          %s6322 = scalar_lea.hbm %s20, %s6321
          %s6323 = sshll.u32 %s6292, 4
          %s6324 = int_to_ptr.vmem [resolvable:$true] %s6323
          %6329 = dma.vmem_to_hbm [thread:$0]  %s6324, 256, %s6322, %s6289, 128, 128, 8
        $region108: #{tpu_custom_call.1} parent=95 // pred_fallthru
          _
        // Predicated region
        $region109: #{tpu_custom_call.1} parent=95 // pred_check
          %p6330 = pneg %p520
        $region110: #{tpu_custom_call.1} parent=95 // pred_check_branch
          %6332 = sbr.rel (%p6330) target = $region112
        $region111: #{tpu_custom_call.1} parent=95 // pred_region
          %s6334 = ssub.s32 256, 256
          %6335 = vsyncadd %s6294, %s6334
          %s6336 = smul.addr %s41, 2
          %s6337 = smul.addr %s6336, 128
          %s6338 = scalar_lea.hbm %s21, %s6337
          %s6339 = sshll.u32 %s6297, 4
          %s6340 = int_to_ptr.vmem [resolvable:$true] %s6339
          %6345 = dma.vmem_to_hbm [thread:$0]  %s6340, 256, %s6338, %s6294, 128, 128, 8
        $region112: #{tpu_custom_call.1} parent=95 // pred_fallthru
          _
      $region96: #{tpu_custom_call.1} parent=5 // pred_fallthru
        _
      %p6346 = scmp.le.s32.totalorder 2, %s36
      // Predicated region
      $region113: #{tpu_custom_call.1} parent=5 // pred_check
        %p6347 = pneg %p6346
      $region114: #{tpu_custom_call.1} parent=5 // pred_check_branch
        %6349 = sbr.rel (%p6347) target = $region116
      $region115: #{tpu_custom_call.1} parent=5 // pred_region
        %s6350 = ssub.s32 %s36, 2
        // Predicated region
        $region117: #{tpu_custom_call.1} parent=115 // pred_check
          %p6351 = pneg %p474
        $region118: #{tpu_custom_call.1} parent=115 // pred_check_branch
          %6353 = sbr.rel (%p6351) target = $region120
        $region119: #{tpu_custom_call.1} parent=115 // pred_region
          %s6354 = sand.u32 %s459, 1
          %s6355 = scalar_lea.sflag [#allocation6], %s6354
          %s6356 = sand.u32 %s459, 1
          %s6357 = smul.addr %s6356, 16
          %s6358 = scalar_lea.vmem [#allocation7], %s6357
          %6359 = dma.done %s6355, 256
        $region120: #{tpu_custom_call.1} parent=115 // pred_fallthru
          _
        // Predicated region
        $region121: #{tpu_custom_call.1} parent=115 // pred_check
          %p6360 = pneg %p500
        $region122: #{tpu_custom_call.1} parent=115 // pred_check_branch
          %6362 = sbr.rel (%p6360) target = $region124
        $region123: #{tpu_custom_call.1} parent=115 // pred_region
          %s6363 = sand.u32 %s42, 1
          %s6364 = scalar_lea.sflag [#allocation9], %s6363
          %s6365 = sand.u32 %s485, 1
          %s6366 = smul.addr %s6365, 16
          %s6367 = scalar_lea.vmem [#allocation8], %s6366
          %6368 = dma.done %s6364, 256
        $region124: #{tpu_custom_call.1} parent=115 // pred_fallthru
          _
        // Predicated region
        $region125: #{tpu_custom_call.1} parent=115 // pred_check
          %p6369 = pneg %p526
        $region126: #{tpu_custom_call.1} parent=115 // pred_check_branch
          %6371 = sbr.rel (%p6369) target = $region128
        $region127: #{tpu_custom_call.1} parent=115 // pred_region
          %s6372 = sand.u32 %s42, 1
          %s6373 = scalar_lea.sflag [#allocation9], %s6372
          %s6374 = sand.u32 %s511, 1
          %s6375 = smul.addr %s6374, 16
          %s6376 = scalar_lea.vmem [#allocation10], %s6375
          %6377 = dma.done %s6373, 256
        $region128: #{tpu_custom_call.1} parent=115 // pred_fallthru
          _
      $region116: #{tpu_custom_call.1} parent=5 // pred_fallthru
        _
    $region6: #{tpu_custom_call.1} parent=1 // loop_footer
      %s40 = sadd.s32 1, %s36
    $region7: #{tpu_custom_call.1} parent=1 // loop_footer_branch
      %35 = sbr.rel target = $region3
    $region8: #{tpu_custom_call.1} parent=1 // loop_exit
      _
    %6378 = vsyncpa [#allocation5], 1
    %s6379 = scalar_lea.sflag [#allocation5], 1
    %6380 = vsyncpa %s6379, 1
    %6381 = vsyncpa [#allocation6], 1
    %s6382 = scalar_lea.sflag [#allocation6], 1
    %6383 = vsyncpa %s6382, 1
    %6384 = vsyncpa [#allocation9], 1
    %s6385 = scalar_lea.sflag [#allocation9], 1
    %6386 = vsyncpa %s6385, 1

</llo_original>
